<compile_context>
chip_gen: v7x
topology: tpu7x:2x2x1
jax: 0.10.0
libtpu: 0.0.40
codegen_flags: <defaults>
</compile_context>

<pallas_src>
import functools
import numpy as np

import jax
import jax.numpy as jnp
from jax import lax
from jax.experimental import pallas as pl
from jax.experimental.pallas import tpu as pltpu


# Cast MXU operands to bf16 (f32 accumulation): ~1e-3 relative error, comparable
# to the tanh-GELU approximation already accepted.  Set False for f32 validation.
MXU_BF16 = True


# --------------------------------------------------------------------------- host-side helpers
def _gelu(x):
    # TODO(synk): PyTorch nn.GELU defaults to the exact erf form; the tanh
    # approximation is used because erf lowering in Mosaic is not guaranteed.
    return jax.nn.gelu(x, approximate=True)


def build_grid_flat(h, w):
    """PyTorch build_grid, returned flattened NCHW: (1, 4, h*w)."""
    ranges = [np.linspace(0.0, 1.0, num=r) for r in (h, w)]
    grid = np.meshgrid(*ranges, sparse=False, indexing="ij")
    grid = np.stack(grid, axis=-1).reshape(h, w, -1)[None].astype(np.float32)
    grid = np.concatenate([grid, 1.0 - grid], axis=-1)          # (1, h, w, 4)
    return np.transpose(grid, (0, 3, 1, 2)).reshape(1, 4, h * w)


def _make_upsample_matrix(n):
    """PyTorch bilinear (align_corners=False) x2 upsample as a (2n, n) matrix."""
    m = np.zeros((2 * n, n), np.float32)
    for i in range(2 * n):
        src = max((i + 0.5) * 0.5 - 0.5, 0.0)
        i0 = int(np.floor(src))
        i1 = min(i0 + 1, n - 1)
        lam = src - i0
        m[i, i0] += 1.0 - lam
        m[i, i1] += lam
    return m


def _make_upsample2d_T(h, w):
    """(h*w, 4*h*w) matrix M^T so that out_flat = in_flat @ M^T == UH @ in @ UW^T."""
    # TODO(synk): O((H*W)^2) memory; use a separable two-stage contraction for
    # large resolutions on v7x.  At these sizes it is <= ~1 MiB.
    return np.ascontiguousarray(
        np.kron(_make_upsample_matrix(h), _make_upsample_matrix(w)).T)


# --------------------------------------------------------------------------- in-kernel math
def _mxu_dot(a, b):
    """MXU matmul with optional bf16 operands and f32 accumulation."""
    if MXU_BF16:
        a = a.astype(jnp.bfloat16)
        b = b.astype(jnp.bfloat16)
    return jnp.dot(a, b, preferred_element_type=jnp.float32)


def _gn_normalize(x, eps=1e-5):
    """GroupNorm(1, C) normalisation (no affine) over a (C, H*W) slab, single pass."""
    mean = jnp.mean(x)
    var = jnp.maximum(jnp.mean(x * x) - mean * mean, 0.0)
    return (x - mean) * lax.rsqrt(var + eps)


def _make_taps_info(H, W):
    """9 (shift, mask) pairs for a 3x3 'same' conv on row-major flattened data.
    Masks are (1, H*W) (broadcast over channels), factored row-ok x col-ok,
    and reused by every conv at this resolution."""
    n = H * W
    pos = lax.broadcasted_iota(jnp.int32, (1, n), 1)
    col = pos % W
    info = []
    for dy in (-1, 0, 1):
        row_ok = (pos + dy * W >= 0) & (pos + dy * W < n)
        for dx in (-1, 0, 1):
            ok = row_ok & ((col + dx >= 0) & (col + dx < W))
            info.append((dy * W + dx, ok))
    return info


def _conv3x3(x, w, b, taps_info, fused):
    """3x3 same-padding conv on (Cin, H*W) flat data.
    fused=True : w is (Cout, 9*Cin), packed w[co, tap*Cin + ci] == torch_w[co, ci, dy+1, dx+1]
                 with tap = (dy+1)*3 + (dx+1); one K=9*Cin MXU matmul.
    fused=False: w is (9, Cout, Cin), one small matmul per tap (used when Cin % 8 != 0)."""
    n = x.shape[1]
    taps = []
    for s, mask in taps_info:
        shifted = x if s == 0 else pltpu.roll(x, shift=(-s) % n, axis=1)
        taps.append(jnp.where(mask, shifted, 0.0))
    if fused:
        # TODO(synk): stage patches in a persistent VMEM scratch instead of concat
        # once shapes are parameterised per block.
        patches = jnp.concatenate(taps, axis=0)                  # (9*Cin, H*W)
        out = _mxu_dot(w, patches)
    else:
        out = _mxu_dot(w[0], taps[0])
        for t in range(1, 9):
            out = out + _mxu_dot(w[t], taps[t])
    return out + b


# --------------------------------------------------------------------------- fused whole-network kernel
def _build_decoder_kernel(block_cfgs, end_cfg):
    """Builds the single fused kernel.  block_cfgs / end_cfg are static Python config."""

    def kernel(*refs):
        f32 = jnp.float32
        it = iter(refs)

        # Constant grid embedding output, broadcast over the batch.
        x = next(it)[...].astype(f32)                            # (hid, R0*R0)

        for cfg in block_cfgs:
            P, R = cfg["planes"], cfg["res"]
            style_ref = next(it)
            c1w_ref, c2w_ref, vec_ref = next(it), next(it), next(it)
            if cfg["upsample"]:
                upw_ref, upb_ref, upm_ref = next(it), next(it), next(it)

            style = style_ref[0].astype(f32)                     # (2P, 1): [eff_gain; eff_bias]
            eff_gain, eff_bias = style[:P, :], style[P:, :]
            vecs = vec_ref[...].astype(f32)                      # (P, 6)
            c1b, n1w, n1b = vecs[:, 0:1], vecs[:, 1:2], vecs[:, 2:3]
            c2b, n2w, n2b = vecs[:, 3:4], vecs[:, 4:5], vecs[:, 5:6]

            taps_info = _make_taps_info(R, R)                    # shared by conv1 & conv2

            # x = (1 + gain) * GN(x) + bias  (GN affine folded into eff_gain/eff_bias)
            xmod = eff_gain * _gn_normalize(x) + eff_bias

            out = _conv3x3(xmod, c1w_ref[...], c1b, taps_info, cfg["conv_fused"])
            out = _gelu(_gn_normalize(out) * n1w + n1b)
            out = _conv3x3(out, c2w_ref[...], c2b, taps_info, cfg["conv_fused"])
            out = _gn_normalize(out) * n2w + n2b + xmod

            if cfg["upsample"]:                                  # conv1x1 then bilinear x2
                out = _mxu_dot(upw_ref[...], out) + upb_ref[...].astype(f32)
                out = _mxu_dot(out, upm_ref[...])
            x = _gelu(out)

        # ---- end_cnn: conv3x3 -> GN -> GELU -> conv1x1
        ew1_ref, evec_ref, ew2_ref, eb2_ref = next(it), next(it), next(it), next(it)
        o_ref = next(it)

        evecs = evec_ref[...].astype(f32)                        # (mid, 3): [b1, gn_w, gn_b]
        taps_info = _make_taps_info(end_cfg["res"], end_cfg["res"])
        out = _conv3x3(x, ew1_ref[...], evecs[:, 0:1], taps_info, end_cfg["conv_fused"])
        out = _gelu(_gn_normalize(out) * evecs[:, 1:2] + evecs[:, 2:3])
        out = _mxu_dot(ew2_ref[...], out) + eb2_ref[...].astype(f32)
        o_ref[...] = out[None].astype(o_ref.dtype)

    return kernel


# --------------------------------------------------------------------------- wrapper
def _const_spec(a):
    nd = a.ndim
    return pl.BlockSpec(a.shape, lambda i: (0,) * nd)


def decoder_forward(params, slots):
    b = slots.shape[0]
    f32 = jnp.float32
    slots = slots.astype(f32)

    args, in_specs = [], []

    def add_const(a):
        args.append(a)
        in_specs.append(_const_spec(a))

    def add_per_sample(a, block_shape):
        args.append(a)
        in_specs.append(pl.BlockSpec(block_shape, lambda i: (i, 0, 0)))

    # ---- batch-level XLA prelude (tiny): grid embedding + batched style MLPs ---
    # Constant grid embedding (batch independent): (hid, R0*R0).
    x0 = jnp.dot(params["emb_w"], params["grid"][0]) + params["emb_b"]
    add_const(x0)

    block_cfgs = []
    for blk in params["blocks"]:
        P = blk["planes"]
        # Batched style MLP: (B, slot_dim) @ (slot_dim, 2P) -> GELU -> (2P, 2P).
        h = _gelu(slots @ blk["style_w1"].T + blk["style_b1"][:, 0])
        style = h @ blk["style_w2"].T + blk["style_b2"][:, 0]            # (B, 2P)
        gain, bias = style[:, :P], style[:, P:]
        # Fold the GroupNorm affine (gamma/beta) into the per-sample modulation:
        # (1+g)*(xhat*gamma+beta)+bias == xhat*eff_gain + eff_bias.
        eff_gain = (1.0 + gain) * blk["norm_w"][:, 0]
        eff_bias = (1.0 + gain) * blk["norm_b"][:, 0] + bias
        style_col = jnp.concatenate([eff_gain, eff_bias], axis=1)[:, :, None]  # (B, 2P, 1)

        # Pack the six (P,1) per-block vectors into one (P, 6) slab (one DMA).
        vecs = jnp.concatenate(
            [blk["conv1_b"], blk["norm1_w"], blk["norm1_b"],
             blk["conv2_b"], blk["norm2_w"], blk["norm2_b"]], axis=1)

        add_per_sample(style_col, (1, 2 * P, 1))
        add_const(blk["conv1_w"])
        add_const(blk["conv2_w"])
        add_const(vecs)
        if blk["upsample"]:
            add_const(blk["up_w"])
            add_const(blk["up_b"])
            add_const(blk["up_mT"])

        block_cfgs.append(dict(planes=P, res=blk["res"], upsample=blk["upsample"],
                               conv_fused=blk["conv_fused"]))

    end_vecs = jnp.concatenate(
        [params["end_b1"], params["end_gn_w"], params["end_gn_b"]], axis=1)   # (mid, 3)
    add_const(params["end_w1"])
    add_const(end_vecs)
    add_const(params["end_w2"])
    add_const(params["end_b2"])

    end_res = params["end_res"]
    end_cfg = dict(res=end_res, conv_fused=params["end_conv_fused"])
    c_out = params["end_w2"].shape[0]
    n_out = end_res * end_res

    kernel = _build_decoder_kernel(tuple(block_cfgs), end_cfg)

    # TODO(synk): for B == 1 on v7x add a second parallel grid axis over H*W tiles
    # (with a 1-row halo) so both TensorCores are occupied; also consider
    # pipeline_mode=pl.Buffered(1) on the constant-weight specs once hid_dim grows.
    out = pl.pallas_call(
        kernel,
        out_shape=jax.ShapeDtypeStruct((b, c_out, n_out), f32),
        grid=(b,),
        in_specs=in_specs,
        out_specs=pl.BlockSpec((1, c_out, n_out), lambda i: (i, 0, 0)),
        compiler_params=pltpu.CompilerParams(dimension_semantics=("parallel",)),
    )(*args)
    return out.reshape(b, c_out, end_res, end_res)               # NCHW, like PyTorch


# --------------------------------------------------------------------------- parameters
def init_params(key, slot_dim, hid_dim, out_dim, resolution, block_num, target_resolution):
    assert 2 ** block_num * resolution >= target_resolution
    keys = iter(jax.random.split(key, 256))

    def w(shape, scale=0.05):
        return (scale * jax.random.normal(next(keys), shape)).astype(jnp.float32)

    def conv3x3_w(cout, cin):
        # Fused im2col layout (Cout, 9*Cin) when Cin is sublane aligned,
        # else stacked per-tap layout (9, Cout, Cin).  When importing real torch
        # checkpoints, w[co, ((dy+1)*3+(dx+1))*Cin + ci] == torch_w[co, ci, dy+1, dx+1].
        return w((cout, 9 * cin)) if cin % 8 == 0 else w((9, cout, cin))

    params = {"grid": jnp.asarray(build_grid_flat(resolution, resolution)),
              "emb_w": w((hid_dim, 4)),
              "emb_b": w((hid_dim, 1))}

    blocks = []
    res, hd = resolution, hid_dim
    for _ in range(block_num):
        upsample = res < target_resolution
        P = hd
        blk = dict(
            planes=P, res=res, upsample=upsample, conv_fused=(P % 8 == 0),
            style_w1=w((2 * P, slot_dim)), style_b1=w((2 * P, 1)),
            style_w2=w((2 * P, 2 * P)), style_b2=w((2 * P, 1)),
            norm_w=jnp.ones((P, 1), jnp.float32), norm_b=jnp.zeros((P, 1), jnp.float32),
            norm1_w=jnp.ones((P, 1), jnp.float32), norm1_b=jnp.zeros((P, 1), jnp.float32),
            norm2_w=jnp.ones((P, 1), jnp.float32), norm2_b=jnp.zeros((P, 1), jnp.float32),
            conv1_w=conv3x3_w(P, P), conv1_b=w((P, 1)),
            conv2_w=conv3x3_w(P, P), conv2_b=w((P, 1)),
        )
        if upsample:
            blk["up_w"] = w((P // 2, P))
            blk["up_b"] = w((P // 2, 1))
            blk["up_mT"] = jnp.asarray(_make_upsample2d_T(res, res))
            hd, res = P // 2, res * 2
        blocks.append(blk)
    params["blocks"] = blocks

    mid = max(hd, out_dim + 1)
    gn_c = max(hd, out_dim)
    assert gn_c == mid, "end_cnn GroupNorm channel count must match conv output"
    params["end_res"] = res
    params["end_conv_fused"] = (hd % 8 == 0)
    params["end_w1"] = conv3x3_w(mid, hd)
    params["end_b1"] = w((mid, 1))
    params["end_gn_w"] = jnp.ones((mid, 1), jnp.float32)
    params["end_gn_b"] = jnp.zeros((mid, 1), jnp.float32)
    params["end_w2"] = w((out_dim + 1, mid))
    params["end_b2"] = w((out_dim + 1, 1))
    return params


# --------------------------------------------------------------------------- demo
if __name__ == "__main__":
    # Small config consistent with the module: 2 ** 2 * 8 >= 32.
    SLOT_DIM, HID, OUT, RES, BLOCKS, TARGET = 32, 16, 3, 8, 2, 32
    BATCH = 2

    key = jax.random.PRNGKey(0)
    pkey, skey = jax.random.split(key)
    params = init_params(pkey, SLOT_DIM, HID, OUT, RES, BLOCKS, TARGET)
    slots = jax.random.normal(skey, (BATCH, SLOT_DIM), dtype=jnp.float32)

    fwd = jax.jit(functools.partial(decoder_forward, params))
    out = jax.block_until_ready(fwd(slots))
    assert out.shape == (BATCH, OUT + 1, TARGET, TARGET), out.shape
    assert bool(jnp.all(jnp.isfinite(out)))
    print("KERNEL_OK")
</pallas_src>

<mosaic_0001>
module attributes {stable_mosaic.version = 11 : i64} {
  func.func @kernel(%arg0: i32, %arg1: memref<16x64xf32, #tpu.memory_space<vmem>>, %arg2: memref<1x32x1xf32, #tpu.memory_space<vmem>>, %arg3: memref<16x144xf32, #tpu.memory_space<vmem>>, %arg4: memref<16x144xf32, #tpu.memory_space<vmem>>, %arg5: memref<16x6xf32, #tpu.memory_space<vmem>>, %arg6: memref<8x16xf32, #tpu.memory_space<vmem>>, %arg7: memref<8x1xf32, #tpu.memory_space<vmem>>, %arg8: memref<64x256xf32, #tpu.memory_space<vmem>>, %arg9: memref<1x16x1xf32, #tpu.memory_space<vmem>>, %arg10: memref<8x72xf32, #tpu.memory_space<vmem>>, %arg11: memref<8x72xf32, #tpu.memory_space<vmem>>, %arg12: memref<8x6xf32, #tpu.memory_space<vmem>>, %arg13: memref<4x8xf32, #tpu.memory_space<vmem>>, %arg14: memref<4x1xf32, #tpu.memory_space<vmem>>, %arg15: memref<256x1024xf32, #tpu.memory_space<vmem>>, %arg16: memref<9x4x4xf32, #tpu.memory_space<vmem>>, %arg17: memref<4x3xf32, #tpu.memory_space<vmem>>, %arg18: memref<4x4xf32, #tpu.memory_space<vmem>>, %arg19: memref<4x1xf32, #tpu.memory_space<vmem>>, %arg20: memref<1x4x1024xf32, #tpu.memory_space<vmem>>) attributes {dimension_semantics = [#tpu.dimension_semantics<parallel>], iteration_bounds = array<i64: 2>, scalar_prefetch = 0 : i64, scratch_operands = 0 : i64, tpu.core_type = #tpu.core_type<tc>, window_params = [{pipeline_mode = #tpu.pipeline_mode<synchronous>, transform_indices = @transform_0, window_bounds = array<i64: 16, 64>}, {transform_indices = @transform_1, window_bounds = array<i64: 1, 32, 1>}, {pipeline_mode = #tpu.pipeline_mode<synchronous>, transform_indices = @transform_2, window_bounds = array<i64: 16, 144>}, {pipeline_mode = #tpu.pipeline_mode<synchronous>, transform_indices = @transform_3, window_bounds = array<i64: 16, 144>}, {pipeline_mode = #tpu.pipeline_mode<synchronous>, transform_indices = @transform_4, window_bounds = array<i64: 16, 6>}, {pipeline_mode = #tpu.pipeline_mode<synchronous>, transform_indices = @transform_5, window_bounds = array<i64: 8, 16>}, {pipeline_mode = #tpu.pipeline_mode<synchronous>, transform_indices = @transform_6, window_bounds = array<i64: 8, 1>}, {pipeline_mode = #tpu.pipeline_mode<synchronous>, transform_indices = @transform_7, window_bounds = array<i64: 64, 256>}, {transform_indices = @transform_8, window_bounds = array<i64: 1, 16, 1>}, {pipeline_mode = #tpu.pipeline_mode<synchronous>, transform_indices = @transform_9, window_bounds = array<i64: 8, 72>}, {pipeline_mode = #tpu.pipeline_mode<synchronous>, transform_indices = @transform_10, window_bounds = array<i64: 8, 72>}, {pipeline_mode = #tpu.pipeline_mode<synchronous>, transform_indices = @transform_11, window_bounds = array<i64: 8, 6>}, {pipeline_mode = #tpu.pipeline_mode<synchronous>, transform_indices = @transform_12, window_bounds = array<i64: 4, 8>}, {pipeline_mode = #tpu.pipeline_mode<synchronous>, transform_indices = @transform_13, window_bounds = array<i64: 4, 1>}, {pipeline_mode = #tpu.pipeline_mode<synchronous>, transform_indices = @transform_14, window_bounds = array<i64: 256, 1024>}, {pipeline_mode = #tpu.pipeline_mode<synchronous>, transform_indices = @transform_15, window_bounds = array<i64: 9, 4, 4>}, {pipeline_mode = #tpu.pipeline_mode<synchronous>, transform_indices = @transform_16, window_bounds = array<i64: 4, 3>}, {pipeline_mode = #tpu.pipeline_mode<synchronous>, transform_indices = @transform_17, window_bounds = array<i64: 4, 4>}, {pipeline_mode = #tpu.pipeline_mode<synchronous>, transform_indices = @transform_18, window_bounds = array<i64: 4, 1>}, {transform_indices = @transform_19, window_bounds = array<i64: 1, 4, 1024>}]} {
    %c0 = arith.constant 0 : index
    %c0_0 = arith.constant 0 : index
    %0 = vector.load %arg1[%c0, %c0_0] : memref<16x64xf32, #tpu.memory_space<vmem>>, vector<16x64xf32>
    %c0_1 = arith.constant 0 : index
    %c0_2 = arith.constant 0 : index
    %c0_3 = arith.constant 0 : index
    %1 = vector.load %arg2[%c0_1, %c0_2, %c0_3] : memref<1x32x1xf32, #tpu.memory_space<vmem>>, vector<1x32x1xf32>
    %2 = vector.shape_cast %1 : vector<1x32x1xf32> to vector<32x1xf32>
    %3 = vector.extract_strided_slice %2 {offsets = [0, 0], sizes = [16, 1], strides = [1, 1]} : vector<32x1xf32> to vector<16x1xf32>
    %4 = vector.extract_strided_slice %2 {offsets = [16, 0], sizes = [16, 1], strides = [1, 1]} : vector<32x1xf32> to vector<16x1xf32>
    %c0_4 = arith.constant 0 : index
    %c0_5 = arith.constant 0 : index
    %5 = vector.load %arg5[%c0_4, %c0_5] : memref<16x6xf32, #tpu.memory_space<vmem>>, vector<16x6xf32>
    %6 = vector.extract_strided_slice %5 {offsets = [0, 0], sizes = [16, 1], strides = [1, 1]} : vector<16x6xf32> to vector<16x1xf32>
    %7 = vector.extract_strided_slice %5 {offsets = [0, 1], sizes = [16, 1], strides = [1, 1]} : vector<16x6xf32> to vector<16x1xf32>
    %8 = vector.extract_strided_slice %5 {offsets = [0, 2], sizes = [16, 1], strides = [1, 1]} : vector<16x6xf32> to vector<16x1xf32>
    %9 = vector.extract_strided_slice %5 {offsets = [0, 3], sizes = [16, 1], strides = [1, 1]} : vector<16x6xf32> to vector<16x1xf32>
    %10 = vector.extract_strided_slice %5 {offsets = [0, 4], sizes = [16, 1], strides = [1, 1]} : vector<16x6xf32> to vector<16x1xf32>
    %11 = vector.extract_strided_slice %5 {offsets = [0, 5], sizes = [16, 1], strides = [1, 1]} : vector<16x6xf32> to vector<16x1xf32>
    %12 = tpu.iota {dimensions = array<i32: 1>} : vector<1x64xi32>
    %c8_i32 = arith.constant 8 : i32
    %c0_i32 = arith.constant 0 : i32
    %13 = arith.cmpi eq, %c8_i32, %c0_i32 : i32
    %c1_i32 = arith.constant 1 : i32
    %14 = arith.select %13, %c1_i32, %c8_i32 : i32
    %15 = vector.broadcast %14 : i32 to vector<1x64xi32>
    %16 = arith.remsi %12, %15 : vector<1x64xi32>
    %c0_i32_6 = arith.constant 0 : i32
    %17 = vector.broadcast %c0_i32_6 : i32 to vector<1x64xi32>
    %18 = arith.cmpi ne, %16, %17 : vector<1x64xi32>
    %c0_i32_7 = arith.constant 0 : i32
    %19 = vector.broadcast %c0_i32_7 : i32 to vector<1x64xi32>
    %20 = arith.cmpi slt, %16, %19 : vector<1x64xi32>
    %c0_i32_8 = arith.constant 0 : i32
    %21 = arith.cmpi slt, %14, %c0_i32_8 : i32
    %22 = vector.broadcast %21 : i1 to vector<1x64xi1>
    %23 = vector.broadcast %22 : vector<1x64xi1> to vector<1x64xi1>
    %24 = arith.xori %20, %23 : vector<1x64xi1>
    %25 = arith.andi %24, %18 : vector<1x64xi1>
    %26 = vector.broadcast %14 : i32 to vector<1x64xi32>
    %27 = arith.addi %16, %26 : vector<1x64xi32>
    %28 = arith.select %25, %27, %16 : vector<1x64xi1>, vector<1x64xi32>
    %c-8_i32 = arith.constant -8 : i32
    %29 = vector.broadcast %c-8_i32 : i32 to vector<1x64xi32>
    %30 = arith.addi %12, %29 : vector<1x64xi32>
    %c0_i32_9 = arith.constant 0 : i32
    %31 = vector.broadcast %c0_i32_9 : i32 to vector<1x64xi32>
    %32 = arith.cmpi sge, %30, %31 : vector<1x64xi32>
    %c-8_i32_10 = arith.constant -8 : i32
    %33 = vector.broadcast %c-8_i32_10 : i32 to vector<1x64xi32>
    %34 = arith.addi %12, %33 : vector<1x64xi32>
    %c64_i32 = arith.constant 64 : i32
    %35 = vector.broadcast %c64_i32 : i32 to vector<1x64xi32>
    %36 = arith.cmpi slt, %34, %35 : vector<1x64xi32>
    %37 = arith.andi %32, %36 : vector<1x64xi1>
    %c-1_i32 = arith.constant -1 : i32
    %38 = vector.broadcast %c-1_i32 : i32 to vector<1x64xi32>
    %39 = arith.addi %28, %38 : vector<1x64xi32>
    %c0_i32_11 = arith.constant 0 : i32
    %40 = vector.broadcast %c0_i32_11 : i32 to vector<1x64xi32>
    %41 = arith.cmpi sge, %39, %40 : vector<1x64xi32>
    %c-1_i32_12 = arith.constant -1 : i32
    %42 = vector.broadcast %c-1_i32_12 : i32 to vector<1x64xi32>
    %43 = arith.addi %28, %42 : vector<1x64xi32>
    %c8_i32_13 = arith.constant 8 : i32
    %44 = vector.broadcast %c8_i32_13 : i32 to vector<1x64xi32>
    %45 = arith.cmpi slt, %43, %44 : vector<1x64xi32>
    %46 = arith.andi %41, %45 : vector<1x64xi1>
    %47 = arith.andi %37, %46 : vector<1x64xi1>
    %c0_i32_14 = arith.constant 0 : i32
    %48 = vector.broadcast %c0_i32_14 : i32 to vector<1x64xi32>
    %49 = arith.addi %28, %48 : vector<1x64xi32>
    %c0_i32_15 = arith.constant 0 : i32
    %50 = vector.broadcast %c0_i32_15 : i32 to vector<1x64xi32>
    %51 = arith.cmpi sge, %49, %50 : vector<1x64xi32>
    %c0_i32_16 = arith.constant 0 : i32
    %52 = vector.broadcast %c0_i32_16 : i32 to vector<1x64xi32>
    %53 = arith.addi %28, %52 : vector<1x64xi32>
    %c8_i32_17 = arith.constant 8 : i32
    %54 = vector.broadcast %c8_i32_17 : i32 to vector<1x64xi32>
    %55 = arith.cmpi slt, %53, %54 : vector<1x64xi32>
    %56 = arith.andi %51, %55 : vector<1x64xi1>
    %57 = arith.andi %37, %56 : vector<1x64xi1>
    %c1_i32_18 = arith.constant 1 : i32
    %58 = vector.broadcast %c1_i32_18 : i32 to vector<1x64xi32>
    %59 = arith.addi %28, %58 : vector<1x64xi32>
    %c0_i32_19 = arith.constant 0 : i32
    %60 = vector.broadcast %c0_i32_19 : i32 to vector<1x64xi32>
    %61 = arith.cmpi sge, %59, %60 : vector<1x64xi32>
    %c1_i32_20 = arith.constant 1 : i32
    %62 = vector.broadcast %c1_i32_20 : i32 to vector<1x64xi32>
    %63 = arith.addi %28, %62 : vector<1x64xi32>
    %c8_i32_21 = arith.constant 8 : i32
    %64 = vector.broadcast %c8_i32_21 : i32 to vector<1x64xi32>
    %65 = arith.cmpi slt, %63, %64 : vector<1x64xi32>
    %66 = arith.andi %61, %65 : vector<1x64xi1>
    %67 = arith.andi %37, %66 : vector<1x64xi1>
    %c0_i32_22 = arith.constant 0 : i32
    %68 = vector.broadcast %c0_i32_22 : i32 to vector<1x64xi32>
    %69 = arith.addi %12, %68 : vector<1x64xi32>
    %c0_i32_23 = arith.constant 0 : i32
    %70 = vector.broadcast %c0_i32_23 : i32 to vector<1x64xi32>
    %71 = arith.cmpi sge, %69, %70 : vector<1x64xi32>
    %c0_i32_24 = arith.constant 0 : i32
    %72 = vector.broadcast %c0_i32_24 : i32 to vector<1x64xi32>
    %73 = arith.addi %12, %72 : vector<1x64xi32>
    %c64_i32_25 = arith.constant 64 : i32
    %74 = vector.broadcast %c64_i32_25 : i32 to vector<1x64xi32>
    %75 = arith.cmpi slt, %73, %74 : vector<1x64xi32>
    %76 = arith.andi %71, %75 : vector<1x64xi1>
    %c-1_i32_26 = arith.constant -1 : i32
    %77 = vector.broadcast %c-1_i32_26 : i32 to vector<1x64xi32>
    %78 = arith.addi %28, %77 : vector<1x64xi32>
    %c0_i32_27 = arith.constant 0 : i32
    %79 = vector.broadcast %c0_i32_27 : i32 to vector<1x64xi32>
    %80 = arith.cmpi sge, %78, %79 : vector<1x64xi32>
    %c-1_i32_28 = arith.constant -1 : i32
    %81 = vector.broadcast %c-1_i32_28 : i32 to vector<1x64xi32>
    %82 = arith.addi %28, %81 : vector<1x64xi32>
    %c8_i32_29 = arith.constant 8 : i32
    %83 = vector.broadcast %c8_i32_29 : i32 to vector<1x64xi32>
    %84 = arith.cmpi slt, %82, %83 : vector<1x64xi32>
    %85 = arith.andi %80, %84 : vector<1x64xi1>
    %86 = arith.andi %76, %85 : vector<1x64xi1>
    %c0_i32_30 = arith.constant 0 : i32
    %87 = vector.broadcast %c0_i32_30 : i32 to vector<1x64xi32>
    %88 = arith.addi %28, %87 : vector<1x64xi32>
    %c0_i32_31 = arith.constant 0 : i32
    %89 = vector.broadcast %c0_i32_31 : i32 to vector<1x64xi32>
    %90 = arith.cmpi sge, %88, %89 : vector<1x64xi32>
    %c0_i32_32 = arith.constant 0 : i32
    %91 = vector.broadcast %c0_i32_32 : i32 to vector<1x64xi32>
    %92 = arith.addi %28, %91 : vector<1x64xi32>
    %c8_i32_33 = arith.constant 8 : i32
    %93 = vector.broadcast %c8_i32_33 : i32 to vector<1x64xi32>
    %94 = arith.cmpi slt, %92, %93 : vector<1x64xi32>
    %95 = arith.andi %90, %94 : vector<1x64xi1>
    %96 = arith.andi %76, %95 : vector<1x64xi1>
    %c1_i32_34 = arith.constant 1 : i32
    %97 = vector.broadcast %c1_i32_34 : i32 to vector<1x64xi32>
    %98 = arith.addi %28, %97 : vector<1x64xi32>
    %c0_i32_35 = arith.constant 0 : i32
    %99 = vector.broadcast %c0_i32_35 : i32 to vector<1x64xi32>
    %100 = arith.cmpi sge, %98, %99 : vector<1x64xi32>
    %c1_i32_36 = arith.constant 1 : i32
    %101 = vector.broadcast %c1_i32_36 : i32 to vector<1x64xi32>
    %102 = arith.addi %28, %101 : vector<1x64xi32>
    %c8_i32_37 = arith.constant 8 : i32
    %103 = vector.broadcast %c8_i32_37 : i32 to vector<1x64xi32>
    %104 = arith.cmpi slt, %102, %103 : vector<1x64xi32>
    %105 = arith.andi %100, %104 : vector<1x64xi1>
    %106 = arith.andi %76, %105 : vector<1x64xi1>
    %c8_i32_38 = arith.constant 8 : i32
    %107 = vector.broadcast %c8_i32_38 : i32 to vector<1x64xi32>
    %108 = arith.addi %12, %107 : vector<1x64xi32>
    %c0_i32_39 = arith.constant 0 : i32
    %109 = vector.broadcast %c0_i32_39 : i32 to vector<1x64xi32>
    %110 = arith.cmpi sge, %108, %109 : vector<1x64xi32>
    %c8_i32_40 = arith.constant 8 : i32
    %111 = vector.broadcast %c8_i32_40 : i32 to vector<1x64xi32>
    %112 = arith.addi %12, %111 : vector<1x64xi32>
    %c64_i32_41 = arith.constant 64 : i32
    %113 = vector.broadcast %c64_i32_41 : i32 to vector<1x64xi32>
    %114 = arith.cmpi slt, %112, %113 : vector<1x64xi32>
    %115 = arith.andi %110, %114 : vector<1x64xi1>
    %c-1_i32_42 = arith.constant -1 : i32
    %116 = vector.broadcast %c-1_i32_42 : i32 to vector<1x64xi32>
    %117 = arith.addi %28, %116 : vector<1x64xi32>
    %c0_i32_43 = arith.constant 0 : i32
    %118 = vector.broadcast %c0_i32_43 : i32 to vector<1x64xi32>
    %119 = arith.cmpi sge, %117, %118 : vector<1x64xi32>
    %c-1_i32_44 = arith.constant -1 : i32
    %120 = vector.broadcast %c-1_i32_44 : i32 to vector<1x64xi32>
    %121 = arith.addi %28, %120 : vector<1x64xi32>
    %c8_i32_45 = arith.constant 8 : i32
    %122 = vector.broadcast %c8_i32_45 : i32 to vector<1x64xi32>
    %123 = arith.cmpi slt, %121, %122 : vector<1x64xi32>
    %124 = arith.andi %119, %123 : vector<1x64xi1>
    %125 = arith.andi %115, %124 : vector<1x64xi1>
    %c0_i32_46 = arith.constant 0 : i32
    %126 = vector.broadcast %c0_i32_46 : i32 to vector<1x64xi32>
    %127 = arith.addi %28, %126 : vector<1x64xi32>
    %c0_i32_47 = arith.constant 0 : i32
    %128 = vector.broadcast %c0_i32_47 : i32 to vector<1x64xi32>
    %129 = arith.cmpi sge, %127, %128 : vector<1x64xi32>
    %c0_i32_48 = arith.constant 0 : i32
    %130 = vector.broadcast %c0_i32_48 : i32 to vector<1x64xi32>
    %131 = arith.addi %28, %130 : vector<1x64xi32>
    %c8_i32_49 = arith.constant 8 : i32
    %132 = vector.broadcast %c8_i32_49 : i32 to vector<1x64xi32>
    %133 = arith.cmpi slt, %131, %132 : vector<1x64xi32>
    %134 = arith.andi %129, %133 : vector<1x64xi1>
    %135 = arith.andi %115, %134 : vector<1x64xi1>
    %c1_i32_50 = arith.constant 1 : i32
    %136 = vector.broadcast %c1_i32_50 : i32 to vector<1x64xi32>
    %137 = arith.addi %28, %136 : vector<1x64xi32>
    %c0_i32_51 = arith.constant 0 : i32
    %138 = vector.broadcast %c0_i32_51 : i32 to vector<1x64xi32>
    %139 = arith.cmpi sge, %137, %138 : vector<1x64xi32>
    %c1_i32_52 = arith.constant 1 : i32
    %140 = vector.broadcast %c1_i32_52 : i32 to vector<1x64xi32>
    %141 = arith.addi %28, %140 : vector<1x64xi32>
    %c8_i32_53 = arith.constant 8 : i32
    %142 = vector.broadcast %c8_i32_53 : i32 to vector<1x64xi32>
    %143 = arith.cmpi slt, %141, %142 : vector<1x64xi32>
    %144 = arith.andi %139, %143 : vector<1x64xi1>
    %145 = arith.andi %115, %144 : vector<1x64xi1>
    %146 = vector.shape_cast %0 : vector<16x64xf32> to vector<1x16x64xf32>
    %cst = arith.constant dense<0.000000e+00> : vector<1xf32>
    %147 = vector.multi_reduction <add>, %146, %cst [1, 2] : vector<1x16x64xf32> to vector<1xf32>
    %148 = vector.shape_cast %147 : vector<1xf32> to vector<1x1x1xf32>
    %149 = vector.extract %148[0, 0, 0] : f32 from vector<1x1x1xf32>
    %cst_54 = arith.constant 1.024000e+03 : f32
    %150 = arith.divf %149, %cst_54 : f32
    %151 = arith.mulf %0, %0 : vector<16x64xf32>
    %152 = vector.shape_cast %151 : vector<16x64xf32> to vector<1x16x64xf32>
    %cst_55 = arith.constant dense<0.000000e+00> : vector<1xf32>
    %153 = vector.multi_reduction <add>, %152, %cst_55 [1, 2] : vector<1x16x64xf32> to vector<1xf32>
    %154 = vector.shape_cast %153 : vector<1xf32> to vector<1x1x1xf32>
    %155 = vector.extract %154[0, 0, 0] : f32 from vector<1x1x1xf32>
    %cst_56 = arith.constant 1.024000e+03 : f32
    %156 = arith.divf %155, %cst_56 : f32
    %157 = arith.mulf %150, %150 : f32
    %158 = arith.subf %156, %157 : f32
    %cst_57 = arith.constant 0.000000e+00 : f32
    %159 = arith.maximumf %158, %cst_57 : f32
    %160 = vector.broadcast %150 : f32 to vector<16x64xf32>
    %161 = arith.subf %0, %160 : vector<16x64xf32>
    %cst_58 = arith.constant 9.99999974E-6 : f32
    %162 = arith.addf %159, %cst_58 : f32
    %163 = math.rsqrt %162 : f32
    %164 = vector.broadcast %163 : f32 to vector<16x64xf32>
    %165 = arith.mulf %161, %164 : vector<16x64xf32>
    %166 = vector.broadcast %3 : vector<16x1xf32> to vector<16x64xf32>
    %167 = arith.mulf %166, %165 : vector<16x64xf32>
    %168 = vector.broadcast %4 : vector<16x1xf32> to vector<16x64xf32>
    %169 = arith.addf %167, %168 : vector<16x64xf32>
    %c0_59 = arith.constant 0 : index
    %c0_60 = arith.constant 0 : index
    %170 = vector.load %arg3[%c0_59, %c0_60] : memref<16x144xf32, #tpu.memory_space<vmem>>, vector<16x144xf32>
    %c9_i32 = arith.constant 9 : i32
    %171 = tpu.dynamic_rotate %169 by %c9_i32 dim 1 : vector<16x64xf32>, i32 -> vector<16x64xf32>
    %cst_61 = arith.constant 0.000000e+00 : f32
    %172 = vector.shape_cast %47 : vector<1x64xi1> to vector<1x64xi1>
    %173 = vector.broadcast %172 : vector<1x64xi1> to vector<16x64xi1>
    %174 = vector.broadcast %cst_61 : f32 to vector<16x64xf32>
    %175 = arith.select %173, %171, %174 : vector<16x64xi1>, vector<16x64xf32>
    %c8_i32_62 = arith.constant 8 : i32
    %176 = tpu.dynamic_rotate %169 by %c8_i32_62 dim 1 : vector<16x64xf32>, i32 -> vector<16x64xf32>
    %cst_63 = arith.constant 0.000000e+00 : f32
    %177 = vector.shape_cast %57 : vector<1x64xi1> to vector<1x64xi1>
    %178 = vector.broadcast %177 : vector<1x64xi1> to vector<16x64xi1>
    %179 = vector.broadcast %cst_63 : f32 to vector<16x64xf32>
    %180 = arith.select %178, %176, %179 : vector<16x64xi1>, vector<16x64xf32>
    %c7_i32 = arith.constant 7 : i32
    %181 = tpu.dynamic_rotate %169 by %c7_i32 dim 1 : vector<16x64xf32>, i32 -> vector<16x64xf32>
    %cst_64 = arith.constant 0.000000e+00 : f32
    %182 = vector.shape_cast %67 : vector<1x64xi1> to vector<1x64xi1>
    %183 = vector.broadcast %182 : vector<1x64xi1> to vector<16x64xi1>
    %184 = vector.broadcast %cst_64 : f32 to vector<16x64xf32>
    %185 = arith.select %183, %181, %184 : vector<16x64xi1>, vector<16x64xf32>
    %c1_i32_65 = arith.constant 1 : i32
    %186 = tpu.dynamic_rotate %169 by %c1_i32_65 dim 1 : vector<16x64xf32>, i32 -> vector<16x64xf32>
    %cst_66 = arith.constant 0.000000e+00 : f32
    %187 = vector.shape_cast %86 : vector<1x64xi1> to vector<1x64xi1>
    %188 = vector.broadcast %187 : vector<1x64xi1> to vector<16x64xi1>
    %189 = vector.broadcast %cst_66 : f32 to vector<16x64xf32>
    %190 = arith.select %188, %186, %189 : vector<16x64xi1>, vector<16x64xf32>
    %cst_67 = arith.constant 0.000000e+00 : f32
    %191 = vector.shape_cast %96 : vector<1x64xi1> to vector<1x64xi1>
    %192 = vector.broadcast %191 : vector<1x64xi1> to vector<16x64xi1>
    %193 = vector.broadcast %cst_67 : f32 to vector<16x64xf32>
    %194 = arith.select %192, %169, %193 : vector<16x64xi1>, vector<16x64xf32>
    %c63_i32 = arith.constant 63 : i32
    %195 = tpu.dynamic_rotate %169 by %c63_i32 dim 1 : vector<16x64xf32>, i32 -> vector<16x64xf32>
    %cst_68 = arith.constant 0.000000e+00 : f32
    %196 = vector.shape_cast %106 : vector<1x64xi1> to vector<1x64xi1>
    %197 = vector.broadcast %196 : vector<1x64xi1> to vector<16x64xi1>
    %198 = vector.broadcast %cst_68 : f32 to vector<16x64xf32>
    %199 = arith.select %197, %195, %198 : vector<16x64xi1>, vector<16x64xf32>
    %c57_i32 = arith.constant 57 : i32
    %200 = tpu.dynamic_rotate %169 by %c57_i32 dim 1 : vector<16x64xf32>, i32 -> vector<16x64xf32>
    %cst_69 = arith.constant 0.000000e+00 : f32
    %201 = vector.shape_cast %125 : vector<1x64xi1> to vector<1x64xi1>
    %202 = vector.broadcast %201 : vector<1x64xi1> to vector<16x64xi1>
    %203 = vector.broadcast %cst_69 : f32 to vector<16x64xf32>
    %204 = arith.select %202, %200, %203 : vector<16x64xi1>, vector<16x64xf32>
    %c56_i32 = arith.constant 56 : i32
    %205 = tpu.dynamic_rotate %169 by %c56_i32 dim 1 : vector<16x64xf32>, i32 -> vector<16x64xf32>
    %cst_70 = arith.constant 0.000000e+00 : f32
    %206 = vector.shape_cast %135 : vector<1x64xi1> to vector<1x64xi1>
    %207 = vector.broadcast %206 : vector<1x64xi1> to vector<16x64xi1>
    %208 = vector.broadcast %cst_70 : f32 to vector<16x64xf32>
    %209 = arith.select %207, %205, %208 : vector<16x64xi1>, vector<16x64xf32>
    %c55_i32 = arith.constant 55 : i32
    %210 = tpu.dynamic_rotate %169 by %c55_i32 dim 1 : vector<16x64xf32>, i32 -> vector<16x64xf32>
    %cst_71 = arith.constant 0.000000e+00 : f32
    %211 = vector.shape_cast %145 : vector<1x64xi1> to vector<1x64xi1>
    %212 = vector.broadcast %211 : vector<1x64xi1> to vector<16x64xi1>
    %213 = vector.broadcast %cst_71 : f32 to vector<16x64xf32>
    %214 = arith.select %212, %210, %213 : vector<16x64xi1>, vector<16x64xf32>
    %215 = tpu.concatenate %175, %180, %185, %190, %194, %199, %204, %209, %214 in 0 : vector<16x64xf32>, vector<16x64xf32>, vector<16x64xf32>, vector<16x64xf32>, vector<16x64xf32>, vector<16x64xf32>, vector<16x64xf32>, vector<16x64xf32>, vector<16x64xf32> -> vector<144x64xf32>
    %216 = arith.truncf %170 : vector<16x144xf32> to vector<16x144xbf16>
    %217 = arith.truncf %215 : vector<144x64xf32> to vector<144x64xbf16>
    %cst_72 = arith.constant dense<0.000000e+00> : vector<16x64xf32>
    %218 = tpu.matmul %216, %217, %cst_72 {dimension_numbers = #tpu.dot_dimension_numbers<[1], [0], [0], [1], [0, 0, 1, 1], [], []>} : vector<16x144xbf16>, vector<144x64xbf16>, vector<16x64xf32> -> vector<16x64xf32>
    %219 = vector.broadcast %6 : vector<16x1xf32> to vector<16x64xf32>
    %220 = arith.addf %218, %219 : vector<16x64xf32>
    %221 = vector.shape_cast %220 : vector<16x64xf32> to vector<1x16x64xf32>
    %cst_73 = arith.constant dense<0.000000e+00> : vector<1xf32>
    %222 = vector.multi_reduction <add>, %221, %cst_73 [1, 2] : vector<1x16x64xf32> to vector<1xf32>
    %223 = vector.shape_cast %222 : vector<1xf32> to vector<1x1x1xf32>
    %224 = vector.extract %223[0, 0, 0] : f32 from vector<1x1x1xf32>
    %cst_74 = arith.constant 1.024000e+03 : f32
    %225 = arith.divf %224, %cst_74 : f32
    %226 = arith.mulf %220, %220 : vector<16x64xf32>
    %227 = vector.shape_cast %226 : vector<16x64xf32> to vector<1x16x64xf32>
    %cst_75 = arith.constant dense<0.000000e+00> : vector<1xf32>
    %228 = vector.multi_reduction <add>, %227, %cst_75 [1, 2] : vector<1x16x64xf32> to vector<1xf32>
    %229 = vector.shape_cast %228 : vector<1xf32> to vector<1x1x1xf32>
    %230 = vector.extract %229[0, 0, 0] : f32 from vector<1x1x1xf32>
    %cst_76 = arith.constant 1.024000e+03 : f32
    %231 = arith.divf %230, %cst_76 : f32
    %232 = arith.mulf %225, %225 : f32
    %233 = arith.subf %231, %232 : f32
    %cst_77 = arith.constant 0.000000e+00 : f32
    %234 = arith.maximumf %233, %cst_77 : f32
    %235 = vector.broadcast %225 : f32 to vector<16x64xf32>
    %236 = arith.subf %220, %235 : vector<16x64xf32>
    %cst_78 = arith.constant 9.99999974E-6 : f32
    %237 = arith.addf %234, %cst_78 : f32
    %238 = math.rsqrt %237 : f32
    %239 = vector.broadcast %238 : f32 to vector<16x64xf32>
    %240 = arith.mulf %236, %239 : vector<16x64xf32>
    %241 = vector.broadcast %7 : vector<16x1xf32> to vector<16x64xf32>
    %242 = arith.mulf %240, %241 : vector<16x64xf32>
    %243 = vector.broadcast %8 : vector<16x1xf32> to vector<16x64xf32>
    %244 = arith.addf %242, %243 : vector<16x64xf32>
    %245 = arith.mulf %244, %244 : vector<16x64xf32>
    %246 = arith.mulf %244, %245 : vector<16x64xf32>
    %cst_79 = arith.constant 4.471500e-02 : f32
    %247 = vector.broadcast %cst_79 : f32 to vector<16x64xf32>
    %248 = arith.mulf %247, %246 : vector<16x64xf32>
    %249 = arith.addf %244, %248 : vector<16x64xf32>
    %cst_80 = arith.constant 0.797884583 : f32
    %250 = vector.broadcast %cst_80 : f32 to vector<16x64xf32>
    %251 = arith.mulf %250, %249 : vector<16x64xf32>
    %252 = math.tanh %251 : vector<16x64xf32>
    %cst_81 = arith.constant 1.000000e+00 : f32
    %253 = vector.broadcast %cst_81 : f32 to vector<16x64xf32>
    %254 = arith.addf %253, %252 : vector<16x64xf32>
    %cst_82 = arith.constant 5.000000e-01 : f32
    %255 = vector.broadcast %cst_82 : f32 to vector<16x64xf32>
    %256 = arith.mulf %255, %254 : vector<16x64xf32>
    %257 = arith.mulf %244, %256 : vector<16x64xf32>
    %c0_83 = arith.constant 0 : index
    %c0_84 = arith.constant 0 : index
    %258 = vector.load %arg4[%c0_83, %c0_84] : memref<16x144xf32, #tpu.memory_space<vmem>>, vector<16x144xf32>
    %c9_i32_85 = arith.constant 9 : i32
    %259 = tpu.dynamic_rotate %257 by %c9_i32_85 dim 1 : vector<16x64xf32>, i32 -> vector<16x64xf32>
    %cst_86 = arith.constant 0.000000e+00 : f32
    %260 = vector.shape_cast %47 : vector<1x64xi1> to vector<1x64xi1>
    %261 = vector.broadcast %260 : vector<1x64xi1> to vector<16x64xi1>
    %262 = vector.broadcast %cst_86 : f32 to vector<16x64xf32>
    %263 = arith.select %261, %259, %262 : vector<16x64xi1>, vector<16x64xf32>
    %c8_i32_87 = arith.constant 8 : i32
    %264 = tpu.dynamic_rotate %257 by %c8_i32_87 dim 1 : vector<16x64xf32>, i32 -> vector<16x64xf32>
    %cst_88 = arith.constant 0.000000e+00 : f32
    %265 = vector.shape_cast %57 : vector<1x64xi1> to vector<1x64xi1>
    %266 = vector.broadcast %265 : vector<1x64xi1> to vector<16x64xi1>
    %267 = vector.broadcast %cst_88 : f32 to vector<16x64xf32>
    %268 = arith.select %266, %264, %267 : vector<16x64xi1>, vector<16x64xf32>
    %c7_i32_89 = arith.constant 7 : i32
    %269 = tpu.dynamic_rotate %257 by %c7_i32_89 dim 1 : vector<16x64xf32>, i32 -> vector<16x64xf32>
    %cst_90 = arith.constant 0.000000e+00 : f32
    %270 = vector.shape_cast %67 : vector<1x64xi1> to vector<1x64xi1>
    %271 = vector.broadcast %270 : vector<1x64xi1> to vector<16x64xi1>
    %272 = vector.broadcast %cst_90 : f32 to vector<16x64xf32>
    %273 = arith.select %271, %269, %272 : vector<16x64xi1>, vector<16x64xf32>
    %c1_i32_91 = arith.constant 1 : i32
    %274 = tpu.dynamic_rotate %257 by %c1_i32_91 dim 1 : vector<16x64xf32>, i32 -> vector<16x64xf32>
    %cst_92 = arith.constant 0.000000e+00 : f32
    %275 = vector.shape_cast %86 : vector<1x64xi1> to vector<1x64xi1>
    %276 = vector.broadcast %275 : vector<1x64xi1> to vector<16x64xi1>
    %277 = vector.broadcast %cst_92 : f32 to vector<16x64xf32>
    %278 = arith.select %276, %274, %277 : vector<16x64xi1>, vector<16x64xf32>
    %cst_93 = arith.constant 0.000000e+00 : f32
    %279 = vector.shape_cast %96 : vector<1x64xi1> to vector<1x64xi1>
    %280 = vector.broadcast %279 : vector<1x64xi1> to vector<16x64xi1>
    %281 = vector.broadcast %cst_93 : f32 to vector<16x64xf32>
    %282 = arith.select %280, %257, %281 : vector<16x64xi1>, vector<16x64xf32>
    %c63_i32_94 = arith.constant 63 : i32
    %283 = tpu.dynamic_rotate %257 by %c63_i32_94 dim 1 : vector<16x64xf32>, i32 -> vector<16x64xf32>
    %cst_95 = arith.constant 0.000000e+00 : f32
    %284 = vector.shape_cast %106 : vector<1x64xi1> to vector<1x64xi1>
    %285 = vector.broadcast %284 : vector<1x64xi1> to vector<16x64xi1>
    %286 = vector.broadcast %cst_95 : f32 to vector<16x64xf32>
    %287 = arith.select %285, %283, %286 : vector<16x64xi1>, vector<16x64xf32>
    %c57_i32_96 = arith.constant 57 : i32
    %288 = tpu.dynamic_rotate %257 by %c57_i32_96 dim 1 : vector<16x64xf32>, i32 -> vector<16x64xf32>
    %cst_97 = arith.constant 0.000000e+00 : f32
    %289 = vector.shape_cast %125 : vector<1x64xi1> to vector<1x64xi1>
    %290 = vector.broadcast %289 : vector<1x64xi1> to vector<16x64xi1>
    %291 = vector.broadcast %cst_97 : f32 to vector<16x64xf32>
    %292 = arith.select %290, %288, %291 : vector<16x64xi1>, vector<16x64xf32>
    %c56_i32_98 = arith.constant 56 : i32
    %293 = tpu.dynamic_rotate %257 by %c56_i32_98 dim 1 : vector<16x64xf32>, i32 -> vector<16x64xf32>
    %cst_99 = arith.constant 0.000000e+00 : f32
    %294 = vector.shape_cast %135 : vector<1x64xi1> to vector<1x64xi1>
    %295 = vector.broadcast %294 : vector<1x64xi1> to vector<16x64xi1>
    %296 = vector.broadcast %cst_99 : f32 to vector<16x64xf32>
    %297 = arith.select %295, %293, %296 : vector<16x64xi1>, vector<16x64xf32>
    %c55_i32_100 = arith.constant 55 : i32
    %298 = tpu.dynamic_rotate %257 by %c55_i32_100 dim 1 : vector<16x64xf32>, i32 -> vector<16x64xf32>
    %cst_101 = arith.constant 0.000000e+00 : f32
    %299 = vector.shape_cast %145 : vector<1x64xi1> to vector<1x64xi1>
    %300 = vector.broadcast %299 : vector<1x64xi1> to vector<16x64xi1>
    %301 = vector.broadcast %cst_101 : f32 to vector<16x64xf32>
    %302 = arith.select %300, %298, %301 : vector<16x64xi1>, vector<16x64xf32>
    %303 = tpu.concatenate %263, %268, %273, %278, %282, %287, %292, %297, %302 in 0 : vector<16x64xf32>, vector<16x64xf32>, vector<16x64xf32>, vector<16x64xf32>, vector<16x64xf32>, vector<16x64xf32>, vector<16x64xf32>, vector<16x64xf32>, vector<16x64xf32> -> vector<144x64xf32>
    %304 = arith.truncf %258 : vector<16x144xf32> to vector<16x144xbf16>
    %305 = arith.truncf %303 : vector<144x64xf32> to vector<144x64xbf16>
    %cst_102 = arith.constant dense<0.000000e+00> : vector<16x64xf32>
    %306 = tpu.matmul %304, %305, %cst_102 {dimension_numbers = #tpu.dot_dimension_numbers<[1], [0], [0], [1], [0, 0, 1, 1], [], []>} : vector<16x144xbf16>, vector<144x64xbf16>, vector<16x64xf32> -> vector<16x64xf32>
    %307 = vector.broadcast %9 : vector<16x1xf32> to vector<16x64xf32>
    %308 = arith.addf %306, %307 : vector<16x64xf32>
    %309 = vector.shape_cast %308 : vector<16x64xf32> to vector<1x16x64xf32>
    %cst_103 = arith.constant dense<0.000000e+00> : vector<1xf32>
    %310 = vector.multi_reduction <add>, %309, %cst_103 [1, 2] : vector<1x16x64xf32> to vector<1xf32>
    %311 = vector.shape_cast %310 : vector<1xf32> to vector<1x1x1xf32>
    %312 = vector.extract %311[0, 0, 0] : f32 from vector<1x1x1xf32>
    %cst_104 = arith.constant 1.024000e+03 : f32
    %313 = arith.divf %312, %cst_104 : f32
    %314 = arith.mulf %308, %308 : vector<16x64xf32>
    %315 = vector.shape_cast %314 : vector<16x64xf32> to vector<1x16x64xf32>
    %cst_105 = arith.constant dense<0.000000e+00> : vector<1xf32>
    %316 = vector.multi_reduction <add>, %315, %cst_105 [1, 2] : vector<1x16x64xf32> to vector<1xf32>
    %317 = vector.shape_cast %316 : vector<1xf32> to vector<1x1x1xf32>
    %318 = vector.extract %317[0, 0, 0] : f32 from vector<1x1x1xf32>
    %cst_106 = arith.constant 1.024000e+03 : f32
    %319 = arith.divf %318, %cst_106 : f32
    %320 = arith.mulf %313, %313 : f32
    %321 = arith.subf %319, %320 : f32
    %cst_107 = arith.constant 0.000000e+00 : f32
    %322 = arith.maximumf %321, %cst_107 : f32
    %323 = vector.broadcast %313 : f32 to vector<16x64xf32>
    %324 = arith.subf %308, %323 : vector<16x64xf32>
    %cst_108 = arith.constant 9.99999974E-6 : f32
    %325 = arith.addf %322, %cst_108 : f32
    %326 = math.rsqrt %325 : f32
    %327 = vector.broadcast %326 : f32 to vector<16x64xf32>
    %328 = arith.mulf %324, %327 : vector<16x64xf32>
    %329 = vector.broadcast %10 : vector<16x1xf32> to vector<16x64xf32>
    %330 = arith.mulf %328, %329 : vector<16x64xf32>
    %331 = vector.broadcast %11 : vector<16x1xf32> to vector<16x64xf32>
    %332 = arith.addf %330, %331 : vector<16x64xf32>
    %333 = arith.addf %332, %169 : vector<16x64xf32>
    %c0_109 = arith.constant 0 : index
    %c0_110 = arith.constant 0 : index
    %334 = vector.load %arg6[%c0_109, %c0_110] : memref<8x16xf32, #tpu.memory_space<vmem>>, vector<8x16xf32>
    %335 = arith.truncf %334 : vector<8x16xf32> to vector<8x16xbf16>
    %336 = arith.truncf %333 : vector<16x64xf32> to vector<16x64xbf16>
    %cst_111 = arith.constant dense<0.000000e+00> : vector<8x64xf32>
    %337 = tpu.matmul %335, %336, %cst_111 {dimension_numbers = #tpu.dot_dimension_numbers<[1], [0], [0], [1], [0, 0, 1, 1], [], []>} : vector<8x16xbf16>, vector<16x64xbf16>, vector<8x64xf32> -> vector<8x64xf32>
    %c0_112 = arith.constant 0 : index
    %c0_113 = arith.constant 0 : index
    %338 = vector.load %arg7[%c0_112, %c0_113] : memref<8x1xf32, #tpu.memory_space<vmem>>, vector<8x1xf32>
    %339 = vector.broadcast %338 : vector<8x1xf32> to vector<8x64xf32>
    %340 = arith.addf %337, %339 : vector<8x64xf32>
    %c0_114 = arith.constant 0 : index
    %c0_115 = arith.constant 0 : index
    %341 = vector.load %arg8[%c0_114, %c0_115] : memref<64x256xf32, #tpu.memory_space<vmem>>, vector<64x256xf32>
    %342 = arith.truncf %340 : vector<8x64xf32> to vector<8x64xbf16>
    %343 = arith.truncf %341 : vector<64x256xf32> to vector<64x256xbf16>
    %cst_116 = arith.constant dense<0.000000e+00> : vector<8x256xf32>
    %344 = tpu.matmul %342, %343, %cst_116 {dimension_numbers = #tpu.dot_dimension_numbers<[1], [0], [0], [1], [0, 0, 1, 1], [], []>} : vector<8x64xbf16>, vector<64x256xbf16>, vector<8x256xf32> -> vector<8x256xf32>
    %345 = arith.mulf %344, %344 : vector<8x256xf32>
    %346 = arith.mulf %344, %345 : vector<8x256xf32>
    %cst_117 = arith.constant 4.471500e-02 : f32
    %347 = vector.broadcast %cst_117 : f32 to vector<8x256xf32>
    %348 = arith.mulf %347, %346 : vector<8x256xf32>
    %349 = arith.addf %344, %348 : vector<8x256xf32>
    %cst_118 = arith.constant 0.797884583 : f32
    %350 = vector.broadcast %cst_118 : f32 to vector<8x256xf32>
    %351 = arith.mulf %350, %349 : vector<8x256xf32>
    %352 = math.tanh %351 : vector<8x256xf32>
    %cst_119 = arith.constant 1.000000e+00 : f32
    %353 = vector.broadcast %cst_119 : f32 to vector<8x256xf32>
    %354 = arith.addf %353, %352 : vector<8x256xf32>
    %cst_120 = arith.constant 5.000000e-01 : f32
    %355 = vector.broadcast %cst_120 : f32 to vector<8x256xf32>
    %356 = arith.mulf %355, %354 : vector<8x256xf32>
    %357 = arith.mulf %344, %356 : vector<8x256xf32>
    %c0_121 = arith.constant 0 : index
    %c0_122 = arith.constant 0 : index
    %c0_123 = arith.constant 0 : index
    %358 = vector.load %arg9[%c0_121, %c0_122, %c0_123] : memref<1x16x1xf32, #tpu.memory_space<vmem>>, vector<1x16x1xf32>
    %359 = vector.shape_cast %358 : vector<1x16x1xf32> to vector<16x1xf32>
    %360 = vector.extract_strided_slice %359 {offsets = [0, 0], sizes = [8, 1], strides = [1, 1]} : vector<16x1xf32> to vector<8x1xf32>
    %361 = vector.extract_strided_slice %359 {offsets = [8, 0], sizes = [8, 1], strides = [1, 1]} : vector<16x1xf32> to vector<8x1xf32>
    %c0_124 = arith.constant 0 : index
    %c0_125 = arith.constant 0 : index
    %362 = vector.load %arg12[%c0_124, %c0_125] : memref<8x6xf32, #tpu.memory_space<vmem>>, vector<8x6xf32>
    %363 = vector.extract_strided_slice %362 {offsets = [0, 0], sizes = [8, 1], strides = [1, 1]} : vector<8x6xf32> to vector<8x1xf32>
    %364 = vector.extract_strided_slice %362 {offsets = [0, 1], sizes = [8, 1], strides = [1, 1]} : vector<8x6xf32> to vector<8x1xf32>
    %365 = vector.extract_strided_slice %362 {offsets = [0, 2], sizes = [8, 1], strides = [1, 1]} : vector<8x6xf32> to vector<8x1xf32>
    %366 = vector.extract_strided_slice %362 {offsets = [0, 3], sizes = [8, 1], strides = [1, 1]} : vector<8x6xf32> to vector<8x1xf32>
    %367 = vector.extract_strided_slice %362 {offsets = [0, 4], sizes = [8, 1], strides = [1, 1]} : vector<8x6xf32> to vector<8x1xf32>
    %368 = vector.extract_strided_slice %362 {offsets = [0, 5], sizes = [8, 1], strides = [1, 1]} : vector<8x6xf32> to vector<8x1xf32>
    %369 = tpu.iota {dimensions = array<i32: 1>} : vector<1x256xi32>
    %c16_i32 = arith.constant 16 : i32
    %c0_i32_126 = arith.constant 0 : i32
    %370 = arith.cmpi eq, %c16_i32, %c0_i32_126 : i32
    %c1_i32_127 = arith.constant 1 : i32
    %371 = arith.select %370, %c1_i32_127, %c16_i32 : i32
    %372 = vector.broadcast %371 : i32 to vector<1x256xi32>
    %373 = arith.remsi %369, %372 : vector<1x256xi32>
    %c0_i32_128 = arith.constant 0 : i32
    %374 = vector.broadcast %c0_i32_128 : i32 to vector<1x256xi32>
    %375 = arith.cmpi ne, %373, %374 : vector<1x256xi32>
    %c0_i32_129 = arith.constant 0 : i32
    %376 = vector.broadcast %c0_i32_129 : i32 to vector<1x256xi32>
    %377 = arith.cmpi slt, %373, %376 : vector<1x256xi32>
    %c0_i32_130 = arith.constant 0 : i32
    %378 = arith.cmpi slt, %371, %c0_i32_130 : i32
    %379 = vector.broadcast %378 : i1 to vector<1x256xi1>
    %380 = vector.broadcast %379 : vector<1x256xi1> to vector<1x256xi1>
    %381 = arith.xori %377, %380 : vector<1x256xi1>
    %382 = arith.andi %381, %375 : vector<1x256xi1>
    %383 = vector.broadcast %371 : i32 to vector<1x256xi32>
    %384 = arith.addi %373, %383 : vector<1x256xi32>
    %385 = arith.select %382, %384, %373 : vector<1x256xi1>, vector<1x256xi32>
    %c-16_i32 = arith.constant -16 : i32
    %386 = vector.broadcast %c-16_i32 : i32 to vector<1x256xi32>
    %387 = arith.addi %369, %386 : vector<1x256xi32>
    %c0_i32_131 = arith.constant 0 : i32
    %388 = vector.broadcast %c0_i32_131 : i32 to vector<1x256xi32>
    %389 = arith.cmpi sge, %387, %388 : vector<1x256xi32>
    %c-16_i32_132 = arith.constant -16 : i32
    %390 = vector.broadcast %c-16_i32_132 : i32 to vector<1x256xi32>
    %391 = arith.addi %369, %390 : vector<1x256xi32>
    %c256_i32 = arith.constant 256 : i32
    %392 = vector.broadcast %c256_i32 : i32 to vector<1x256xi32>
    %393 = arith.cmpi slt, %391, %392 : vector<1x256xi32>
    %394 = arith.andi %389, %393 : vector<1x256xi1>
    %c-1_i32_133 = arith.constant -1 : i32
    %395 = vector.broadcast %c-1_i32_133 : i32 to vector<1x256xi32>
    %396 = arith.addi %385, %395 : vector<1x256xi32>
    %c0_i32_134 = arith.constant 0 : i32
    %397 = vector.broadcast %c0_i32_134 : i32 to vector<1x256xi32>
    %398 = arith.cmpi sge, %396, %397 : vector<1x256xi32>
    %c-1_i32_135 = arith.constant -1 : i32
    %399 = vector.broadcast %c-1_i32_135 : i32 to vector<1x256xi32>
    %400 = arith.addi %385, %399 : vector<1x256xi32>
    %c16_i32_136 = arith.constant 16 : i32
    %401 = vector.broadcast %c16_i32_136 : i32 to vector<1x256xi32>
    %402 = arith.cmpi slt, %400, %401 : vector<1x256xi32>
    %403 = arith.andi %398, %402 : vector<1x256xi1>
    %404 = arith.andi %394, %403 : vector<1x256xi1>
    %c0_i32_137 = arith.constant 0 : i32
    %405 = vector.broadcast %c0_i32_137 : i32 to vector<1x256xi32>
    %406 = arith.addi %385, %405 : vector<1x256xi32>
    %c0_i32_138 = arith.constant 0 : i32
    %407 = vector.broadcast %c0_i32_138 : i32 to vector<1x256xi32>
    %408 = arith.cmpi sge, %406, %407 : vector<1x256xi32>
    %c0_i32_139 = arith.constant 0 : i32
    %409 = vector.broadcast %c0_i32_139 : i32 to vector<1x256xi32>
    %410 = arith.addi %385, %409 : vector<1x256xi32>
    %c16_i32_140 = arith.constant 16 : i32
    %411 = vector.broadcast %c16_i32_140 : i32 to vector<1x256xi32>
    %412 = arith.cmpi slt, %410, %411 : vector<1x256xi32>
    %413 = arith.andi %408, %412 : vector<1x256xi1>
    %414 = arith.andi %394, %413 : vector<1x256xi1>
    %c1_i32_141 = arith.constant 1 : i32
    %415 = vector.broadcast %c1_i32_141 : i32 to vector<1x256xi32>
    %416 = arith.addi %385, %415 : vector<1x256xi32>
    %c0_i32_142 = arith.constant 0 : i32
    %417 = vector.broadcast %c0_i32_142 : i32 to vector<1x256xi32>
    %418 = arith.cmpi sge, %416, %417 : vector<1x256xi32>
    %c1_i32_143 = arith.constant 1 : i32
    %419 = vector.broadcast %c1_i32_143 : i32 to vector<1x256xi32>
    %420 = arith.addi %385, %419 : vector<1x256xi32>
    %c16_i32_144 = arith.constant 16 : i32
    %421 = vector.broadcast %c16_i32_144 : i32 to vector<1x256xi32>
    %422 = arith.cmpi slt, %420, %421 : vector<1x256xi32>
    %423 = arith.andi %418, %422 : vector<1x256xi1>
    %424 = arith.andi %394, %423 : vector<1x256xi1>
    %c0_i32_145 = arith.constant 0 : i32
    %425 = vector.broadcast %c0_i32_145 : i32 to vector<1x256xi32>
    %426 = arith.addi %369, %425 : vector<1x256xi32>
    %c0_i32_146 = arith.constant 0 : i32
    %427 = vector.broadcast %c0_i32_146 : i32 to vector<1x256xi32>
    %428 = arith.cmpi sge, %426, %427 : vector<1x256xi32>
    %c0_i32_147 = arith.constant 0 : i32
    %429 = vector.broadcast %c0_i32_147 : i32 to vector<1x256xi32>
    %430 = arith.addi %369, %429 : vector<1x256xi32>
    %c256_i32_148 = arith.constant 256 : i32
    %431 = vector.broadcast %c256_i32_148 : i32 to vector<1x256xi32>
    %432 = arith.cmpi slt, %430, %431 : vector<1x256xi32>
    %433 = arith.andi %428, %432 : vector<1x256xi1>
    %c-1_i32_149 = arith.constant -1 : i32
    %434 = vector.broadcast %c-1_i32_149 : i32 to vector<1x256xi32>
    %435 = arith.addi %385, %434 : vector<1x256xi32>
    %c0_i32_150 = arith.constant 0 : i32
    %436 = vector.broadcast %c0_i32_150 : i32 to vector<1x256xi32>
    %437 = arith.cmpi sge, %435, %436 : vector<1x256xi32>
    %c-1_i32_151 = arith.constant -1 : i32
    %438 = vector.broadcast %c-1_i32_151 : i32 to vector<1x256xi32>
    %439 = arith.addi %385, %438 : vector<1x256xi32>
    %c16_i32_152 = arith.constant 16 : i32
    %440 = vector.broadcast %c16_i32_152 : i32 to vector<1x256xi32>
    %441 = arith.cmpi slt, %439, %440 : vector<1x256xi32>
    %442 = arith.andi %437, %441 : vector<1x256xi1>
    %443 = arith.andi %433, %442 : vector<1x256xi1>
    %c0_i32_153 = arith.constant 0 : i32
    %444 = vector.broadcast %c0_i32_153 : i32 to vector<1x256xi32>
    %445 = arith.addi %385, %444 : vector<1x256xi32>
    %c0_i32_154 = arith.constant 0 : i32
    %446 = vector.broadcast %c0_i32_154 : i32 to vector<1x256xi32>
    %447 = arith.cmpi sge, %445, %446 : vector<1x256xi32>
    %c0_i32_155 = arith.constant 0 : i32
    %448 = vector.broadcast %c0_i32_155 : i32 to vector<1x256xi32>
    %449 = arith.addi %385, %448 : vector<1x256xi32>
    %c16_i32_156 = arith.constant 16 : i32
    %450 = vector.broadcast %c16_i32_156 : i32 to vector<1x256xi32>
    %451 = arith.cmpi slt, %449, %450 : vector<1x256xi32>
    %452 = arith.andi %447, %451 : vector<1x256xi1>
    %453 = arith.andi %433, %452 : vector<1x256xi1>
    %c1_i32_157 = arith.constant 1 : i32
    %454 = vector.broadcast %c1_i32_157 : i32 to vector<1x256xi32>
    %455 = arith.addi %385, %454 : vector<1x256xi32>
    %c0_i32_158 = arith.constant 0 : i32
    %456 = vector.broadcast %c0_i32_158 : i32 to vector<1x256xi32>
    %457 = arith.cmpi sge, %455, %456 : vector<1x256xi32>
    %c1_i32_159 = arith.constant 1 : i32
    %458 = vector.broadcast %c1_i32_159 : i32 to vector<1x256xi32>
    %459 = arith.addi %385, %458 : vector<1x256xi32>
    %c16_i32_160 = arith.constant 16 : i32
    %460 = vector.broadcast %c16_i32_160 : i32 to vector<1x256xi32>
    %461 = arith.cmpi slt, %459, %460 : vector<1x256xi32>
    %462 = arith.andi %457, %461 : vector<1x256xi1>
    %463 = arith.andi %433, %462 : vector<1x256xi1>
    %c16_i32_161 = arith.constant 16 : i32
    %464 = vector.broadcast %c16_i32_161 : i32 to vector<1x256xi32>
    %465 = arith.addi %369, %464 : vector<1x256xi32>
    %c0_i32_162 = arith.constant 0 : i32
    %466 = vector.broadcast %c0_i32_162 : i32 to vector<1x256xi32>
    %467 = arith.cmpi sge, %465, %466 : vector<1x256xi32>
    %c16_i32_163 = arith.constant 16 : i32
    %468 = vector.broadcast %c16_i32_163 : i32 to vector<1x256xi32>
    %469 = arith.addi %369, %468 : vector<1x256xi32>
    %c256_i32_164 = arith.constant 256 : i32
    %470 = vector.broadcast %c256_i32_164 : i32 to vector<1x256xi32>
    %471 = arith.cmpi slt, %469, %470 : vector<1x256xi32>
    %472 = arith.andi %467, %471 : vector<1x256xi1>
    %c-1_i32_165 = arith.constant -1 : i32
    %473 = vector.broadcast %c-1_i32_165 : i32 to vector<1x256xi32>
    %474 = arith.addi %385, %473 : vector<1x256xi32>
    %c0_i32_166 = arith.constant 0 : i32
    %475 = vector.broadcast %c0_i32_166 : i32 to vector<1x256xi32>
    %476 = arith.cmpi sge, %474, %475 : vector<1x256xi32>
    %c-1_i32_167 = arith.constant -1 : i32
    %477 = vector.broadcast %c-1_i32_167 : i32 to vector<1x256xi32>
    %478 = arith.addi %385, %477 : vector<1x256xi32>
    %c16_i32_168 = arith.constant 16 : i32
    %479 = vector.broadcast %c16_i32_168 : i32 to vector<1x256xi32>
    %480 = arith.cmpi slt, %478, %479 : vector<1x256xi32>
    %481 = arith.andi %476, %480 : vector<1x256xi1>
    %482 = arith.andi %472, %481 : vector<1x256xi1>
    %c0_i32_169 = arith.constant 0 : i32
    %483 = vector.broadcast %c0_i32_169 : i32 to vector<1x256xi32>
    %484 = arith.addi %385, %483 : vector<1x256xi32>
    %c0_i32_170 = arith.constant 0 : i32
    %485 = vector.broadcast %c0_i32_170 : i32 to vector<1x256xi32>
    %486 = arith.cmpi sge, %484, %485 : vector<1x256xi32>
    %c0_i32_171 = arith.constant 0 : i32
    %487 = vector.broadcast %c0_i32_171 : i32 to vector<1x256xi32>
    %488 = arith.addi %385, %487 : vector<1x256xi32>
    %c16_i32_172 = arith.constant 16 : i32
    %489 = vector.broadcast %c16_i32_172 : i32 to vector<1x256xi32>
    %490 = arith.cmpi slt, %488, %489 : vector<1x256xi32>
    %491 = arith.andi %486, %490 : vector<1x256xi1>
    %492 = arith.andi %472, %491 : vector<1x256xi1>
    %c1_i32_173 = arith.constant 1 : i32
    %493 = vector.broadcast %c1_i32_173 : i32 to vector<1x256xi32>
    %494 = arith.addi %385, %493 : vector<1x256xi32>
    %c0_i32_174 = arith.constant 0 : i32
    %495 = vector.broadcast %c0_i32_174 : i32 to vector<1x256xi32>
    %496 = arith.cmpi sge, %494, %495 : vector<1x256xi32>
    %c1_i32_175 = arith.constant 1 : i32
    %497 = vector.broadcast %c1_i32_175 : i32 to vector<1x256xi32>
    %498 = arith.addi %385, %497 : vector<1x256xi32>
    %c16_i32_176 = arith.constant 16 : i32
    %499 = vector.broadcast %c16_i32_176 : i32 to vector<1x256xi32>
    %500 = arith.cmpi slt, %498, %499 : vector<1x256xi32>
    %501 = arith.andi %496, %500 : vector<1x256xi1>
    %502 = arith.andi %472, %501 : vector<1x256xi1>
    %503 = vector.shape_cast %357 : vector<8x256xf32> to vector<1x8x256xf32>
    %cst_177 = arith.constant dense<0.000000e+00> : vector<1xf32>
    %504 = vector.multi_reduction <add>, %503, %cst_177 [1, 2] : vector<1x8x256xf32> to vector<1xf32>
    %505 = vector.shape_cast %504 : vector<1xf32> to vector<1x1x1xf32>
    %506 = vector.extract %505[0, 0, 0] : f32 from vector<1x1x1xf32>
    %cst_178 = arith.constant 2.048000e+03 : f32
    %507 = arith.divf %506, %cst_178 : f32
    %508 = arith.mulf %357, %357 : vector<8x256xf32>
    %509 = vector.shape_cast %508 : vector<8x256xf32> to vector<1x8x256xf32>
    %cst_179 = arith.constant dense<0.000000e+00> : vector<1xf32>
    %510 = vector.multi_reduction <add>, %509, %cst_179 [1, 2] : vector<1x8x256xf32> to vector<1xf32>
    %511 = vector.shape_cast %510 : vector<1xf32> to vector<1x1x1xf32>
    %512 = vector.extract %511[0, 0, 0] : f32 from vector<1x1x1xf32>
    %cst_180 = arith.constant 2.048000e+03 : f32
    %513 = arith.divf %512, %cst_180 : f32
    %514 = arith.mulf %507, %507 : f32
    %515 = arith.subf %513, %514 : f32
    %cst_181 = arith.constant 0.000000e+00 : f32
    %516 = arith.maximumf %515, %cst_181 : f32
    %517 = vector.broadcast %507 : f32 to vector<8x256xf32>
    %518 = arith.subf %357, %517 : vector<8x256xf32>
    %cst_182 = arith.constant 9.99999974E-6 : f32
    %519 = arith.addf %516, %cst_182 : f32
    %520 = math.rsqrt %519 : f32
    %521 = vector.broadcast %520 : f32 to vector<8x256xf32>
    %522 = arith.mulf %518, %521 : vector<8x256xf32>
    %523 = vector.broadcast %360 : vector<8x1xf32> to vector<8x256xf32>
    %524 = arith.mulf %523, %522 : vector<8x256xf32>
    %525 = vector.broadcast %361 : vector<8x1xf32> to vector<8x256xf32>
    %526 = arith.addf %524, %525 : vector<8x256xf32>
    %c0_183 = arith.constant 0 : index
    %c0_184 = arith.constant 0 : index
    %527 = vector.load %arg10[%c0_183, %c0_184] : memref<8x72xf32, #tpu.memory_space<vmem>>, vector<8x72xf32>
    %c17_i32 = arith.constant 17 : i32
    %528 = tpu.dynamic_rotate %526 by %c17_i32 dim 1 : vector<8x256xf32>, i32 -> vector<8x256xf32>
    %cst_185 = arith.constant 0.000000e+00 : f32
    %529 = vector.shape_cast %404 : vector<1x256xi1> to vector<1x256xi1>
    %530 = vector.broadcast %529 : vector<1x256xi1> to vector<8x256xi1>
    %531 = vector.broadcast %cst_185 : f32 to vector<8x256xf32>
    %532 = arith.select %530, %528, %531 : vector<8x256xi1>, vector<8x256xf32>
    %c16_i32_186 = arith.constant 16 : i32
    %533 = tpu.dynamic_rotate %526 by %c16_i32_186 dim 1 : vector<8x256xf32>, i32 -> vector<8x256xf32>
    %cst_187 = arith.constant 0.000000e+00 : f32
    %534 = vector.shape_cast %414 : vector<1x256xi1> to vector<1x256xi1>
    %535 = vector.broadcast %534 : vector<1x256xi1> to vector<8x256xi1>
    %536 = vector.broadcast %cst_187 : f32 to vector<8x256xf32>
    %537 = arith.select %535, %533, %536 : vector<8x256xi1>, vector<8x256xf32>
    %c15_i32 = arith.constant 15 : i32
    %538 = tpu.dynamic_rotate %526 by %c15_i32 dim 1 : vector<8x256xf32>, i32 -> vector<8x256xf32>
    %cst_188 = arith.constant 0.000000e+00 : f32
    %539 = vector.shape_cast %424 : vector<1x256xi1> to vector<1x256xi1>
    %540 = vector.broadcast %539 : vector<1x256xi1> to vector<8x256xi1>
    %541 = vector.broadcast %cst_188 : f32 to vector<8x256xf32>
    %542 = arith.select %540, %538, %541 : vector<8x256xi1>, vector<8x256xf32>
    %c1_i32_189 = arith.constant 1 : i32
    %543 = tpu.dynamic_rotate %526 by %c1_i32_189 dim 1 : vector<8x256xf32>, i32 -> vector<8x256xf32>
    %cst_190 = arith.constant 0.000000e+00 : f32
    %544 = vector.shape_cast %443 : vector<1x256xi1> to vector<1x256xi1>
    %545 = vector.broadcast %544 : vector<1x256xi1> to vector<8x256xi1>
    %546 = vector.broadcast %cst_190 : f32 to vector<8x256xf32>
    %547 = arith.select %545, %543, %546 : vector<8x256xi1>, vector<8x256xf32>
    %cst_191 = arith.constant 0.000000e+00 : f32
    %548 = vector.shape_cast %453 : vector<1x256xi1> to vector<1x256xi1>
    %549 = vector.broadcast %548 : vector<1x256xi1> to vector<8x256xi1>
    %550 = vector.broadcast %cst_191 : f32 to vector<8x256xf32>
    %551 = arith.select %549, %526, %550 : vector<8x256xi1>, vector<8x256xf32>
    %c255_i32 = arith.constant 255 : i32
    %552 = tpu.dynamic_rotate %526 by %c255_i32 dim 1 : vector<8x256xf32>, i32 -> vector<8x256xf32>
    %cst_192 = arith.constant 0.000000e+00 : f32
    %553 = vector.shape_cast %463 : vector<1x256xi1> to vector<1x256xi1>
    %554 = vector.broadcast %553 : vector<1x256xi1> to vector<8x256xi1>
    %555 = vector.broadcast %cst_192 : f32 to vector<8x256xf32>
    %556 = arith.select %554, %552, %555 : vector<8x256xi1>, vector<8x256xf32>
    %c241_i32 = arith.constant 241 : i32
    %557 = tpu.dynamic_rotate %526 by %c241_i32 dim 1 : vector<8x256xf32>, i32 -> vector<8x256xf32>
    %cst_193 = arith.constant 0.000000e+00 : f32
    %558 = vector.shape_cast %482 : vector<1x256xi1> to vector<1x256xi1>
    %559 = vector.broadcast %558 : vector<1x256xi1> to vector<8x256xi1>
    %560 = vector.broadcast %cst_193 : f32 to vector<8x256xf32>
    %561 = arith.select %559, %557, %560 : vector<8x256xi1>, vector<8x256xf32>
    %c240_i32 = arith.constant 240 : i32
    %562 = tpu.dynamic_rotate %526 by %c240_i32 dim 1 : vector<8x256xf32>, i32 -> vector<8x256xf32>
    %cst_194 = arith.constant 0.000000e+00 : f32
    %563 = vector.shape_cast %492 : vector<1x256xi1> to vector<1x256xi1>
    %564 = vector.broadcast %563 : vector<1x256xi1> to vector<8x256xi1>
    %565 = vector.broadcast %cst_194 : f32 to vector<8x256xf32>
    %566 = arith.select %564, %562, %565 : vector<8x256xi1>, vector<8x256xf32>
    %c239_i32 = arith.constant 239 : i32
    %567 = tpu.dynamic_rotate %526 by %c239_i32 dim 1 : vector<8x256xf32>, i32 -> vector<8x256xf32>
    %cst_195 = arith.constant 0.000000e+00 : f32
    %568 = vector.shape_cast %502 : vector<1x256xi1> to vector<1x256xi1>
    %569 = vector.broadcast %568 : vector<1x256xi1> to vector<8x256xi1>
    %570 = vector.broadcast %cst_195 : f32 to vector<8x256xf32>
    %571 = arith.select %569, %567, %570 : vector<8x256xi1>, vector<8x256xf32>
    %572 = tpu.concatenate %532, %537, %542, %547, %551, %556, %561, %566, %571 in 0 : vector<8x256xf32>, vector<8x256xf32>, vector<8x256xf32>, vector<8x256xf32>, vector<8x256xf32>, vector<8x256xf32>, vector<8x256xf32>, vector<8x256xf32>, vector<8x256xf32> -> vector<72x256xf32>
    %573 = arith.truncf %527 : vector<8x72xf32> to vector<8x72xbf16>
    %574 = arith.truncf %572 : vector<72x256xf32> to vector<72x256xbf16>
    %cst_196 = arith.constant dense<0.000000e+00> : vector<8x256xf32>
    %575 = tpu.matmul %573, %574, %cst_196 {dimension_numbers = #tpu.dot_dimension_numbers<[1], [0], [0], [1], [0, 0, 1, 1], [], []>} : vector<8x72xbf16>, vector<72x256xbf16>, vector<8x256xf32> -> vector<8x256xf32>
    %576 = vector.broadcast %363 : vector<8x1xf32> to vector<8x256xf32>
    %577 = arith.addf %575, %576 : vector<8x256xf32>
    %578 = vector.shape_cast %577 : vector<8x256xf32> to vector<1x8x256xf32>
    %cst_197 = arith.constant dense<0.000000e+00> : vector<1xf32>
    %579 = vector.multi_reduction <add>, %578, %cst_197 [1, 2] : vector<1x8x256xf32> to vector<1xf32>
    %580 = vector.shape_cast %579 : vector<1xf32> to vector<1x1x1xf32>
    %581 = vector.extract %580[0, 0, 0] : f32 from vector<1x1x1xf32>
    %cst_198 = arith.constant 2.048000e+03 : f32
    %582 = arith.divf %581, %cst_198 : f32
    %583 = arith.mulf %577, %577 : vector<8x256xf32>
    %584 = vector.shape_cast %583 : vector<8x256xf32> to vector<1x8x256xf32>
    %cst_199 = arith.constant dense<0.000000e+00> : vector<1xf32>
    %585 = vector.multi_reduction <add>, %584, %cst_199 [1, 2] : vector<1x8x256xf32> to vector<1xf32>
    %586 = vector.shape_cast %585 : vector<1xf32> to vector<1x1x1xf32>
    %587 = vector.extract %586[0, 0, 0] : f32 from vector<1x1x1xf32>
    %cst_200 = arith.constant 2.048000e+03 : f32
    %588 = arith.divf %587, %cst_200 : f32
    %589 = arith.mulf %582, %582 : f32
    %590 = arith.subf %588, %589 : f32
    %cst_201 = arith.constant 0.000000e+00 : f32
    %591 = arith.maximumf %590, %cst_201 : f32
    %592 = vector.broadcast %582 : f32 to vector<8x256xf32>
    %593 = arith.subf %577, %592 : vector<8x256xf32>
    %cst_202 = arith.constant 9.99999974E-6 : f32
    %594 = arith.addf %591, %cst_202 : f32
    %595 = math.rsqrt %594 : f32
    %596 = vector.broadcast %595 : f32 to vector<8x256xf32>
    %597 = arith.mulf %593, %596 : vector<8x256xf32>
    %598 = vector.broadcast %364 : vector<8x1xf32> to vector<8x256xf32>
    %599 = arith.mulf %597, %598 : vector<8x256xf32>
    %600 = vector.broadcast %365 : vector<8x1xf32> to vector<8x256xf32>
    %601 = arith.addf %599, %600 : vector<8x256xf32>
    %602 = arith.mulf %601, %601 : vector<8x256xf32>
    %603 = arith.mulf %601, %602 : vector<8x256xf32>
    %cst_203 = arith.constant 4.471500e-02 : f32
    %604 = vector.broadcast %cst_203 : f32 to vector<8x256xf32>
    %605 = arith.mulf %604, %603 : vector<8x256xf32>
    %606 = arith.addf %601, %605 : vector<8x256xf32>
    %cst_204 = arith.constant 0.797884583 : f32
    %607 = vector.broadcast %cst_204 : f32 to vector<8x256xf32>
    %608 = arith.mulf %607, %606 : vector<8x256xf32>
    %609 = math.tanh %608 : vector<8x256xf32>
    %cst_205 = arith.constant 1.000000e+00 : f32
    %610 = vector.broadcast %cst_205 : f32 to vector<8x256xf32>
    %611 = arith.addf %610, %609 : vector<8x256xf32>
    %cst_206 = arith.constant 5.000000e-01 : f32
    %612 = vector.broadcast %cst_206 : f32 to vector<8x256xf32>
    %613 = arith.mulf %612, %611 : vector<8x256xf32>
    %614 = arith.mulf %601, %613 : vector<8x256xf32>
    %c0_207 = arith.constant 0 : index
    %c0_208 = arith.constant 0 : index
    %615 = vector.load %arg11[%c0_207, %c0_208] : memref<8x72xf32, #tpu.memory_space<vmem>>, vector<8x72xf32>
    %c17_i32_209 = arith.constant 17 : i32
    %616 = tpu.dynamic_rotate %614 by %c17_i32_209 dim 1 : vector<8x256xf32>, i32 -> vector<8x256xf32>
    %cst_210 = arith.constant 0.000000e+00 : f32
    %617 = vector.shape_cast %404 : vector<1x256xi1> to vector<1x256xi1>
    %618 = vector.broadcast %617 : vector<1x256xi1> to vector<8x256xi1>
    %619 = vector.broadcast %cst_210 : f32 to vector<8x256xf32>
    %620 = arith.select %618, %616, %619 : vector<8x256xi1>, vector<8x256xf32>
    %c16_i32_211 = arith.constant 16 : i32
    %621 = tpu.dynamic_rotate %614 by %c16_i32_211 dim 1 : vector<8x256xf32>, i32 -> vector<8x256xf32>
    %cst_212 = arith.constant 0.000000e+00 : f32
    %622 = vector.shape_cast %414 : vector<1x256xi1> to vector<1x256xi1>
    %623 = vector.broadcast %622 : vector<1x256xi1> to vector<8x256xi1>
    %624 = vector.broadcast %cst_212 : f32 to vector<8x256xf32>
    %625 = arith.select %623, %621, %624 : vector<8x256xi1>, vector<8x256xf32>
    %c15_i32_213 = arith.constant 15 : i32
    %626 = tpu.dynamic_rotate %614 by %c15_i32_213 dim 1 : vector<8x256xf32>, i32 -> vector<8x256xf32>
    %cst_214 = arith.constant 0.000000e+00 : f32
    %627 = vector.shape_cast %424 : vector<1x256xi1> to vector<1x256xi1>
    %628 = vector.broadcast %627 : vector<1x256xi1> to vector<8x256xi1>
    %629 = vector.broadcast %cst_214 : f32 to vector<8x256xf32>
    %630 = arith.select %628, %626, %629 : vector<8x256xi1>, vector<8x256xf32>
    %c1_i32_215 = arith.constant 1 : i32
    %631 = tpu.dynamic_rotate %614 by %c1_i32_215 dim 1 : vector<8x256xf32>, i32 -> vector<8x256xf32>
    %cst_216 = arith.constant 0.000000e+00 : f32
    %632 = vector.shape_cast %443 : vector<1x256xi1> to vector<1x256xi1>
    %633 = vector.broadcast %632 : vector<1x256xi1> to vector<8x256xi1>
    %634 = vector.broadcast %cst_216 : f32 to vector<8x256xf32>
    %635 = arith.select %633, %631, %634 : vector<8x256xi1>, vector<8x256xf32>
    %cst_217 = arith.constant 0.000000e+00 : f32
    %636 = vector.shape_cast %453 : vector<1x256xi1> to vector<1x256xi1>
    %637 = vector.broadcast %636 : vector<1x256xi1> to vector<8x256xi1>
    %638 = vector.broadcast %cst_217 : f32 to vector<8x256xf32>
    %639 = arith.select %637, %614, %638 : vector<8x256xi1>, vector<8x256xf32>
    %c255_i32_218 = arith.constant 255 : i32
    %640 = tpu.dynamic_rotate %614 by %c255_i32_218 dim 1 : vector<8x256xf32>, i32 -> vector<8x256xf32>
    %cst_219 = arith.constant 0.000000e+00 : f32
    %641 = vector.shape_cast %463 : vector<1x256xi1> to vector<1x256xi1>
    %642 = vector.broadcast %641 : vector<1x256xi1> to vector<8x256xi1>
    %643 = vector.broadcast %cst_219 : f32 to vector<8x256xf32>
    %644 = arith.select %642, %640, %643 : vector<8x256xi1>, vector<8x256xf32>
    %c241_i32_220 = arith.constant 241 : i32
    %645 = tpu.dynamic_rotate %614 by %c241_i32_220 dim 1 : vector<8x256xf32>, i32 -> vector<8x256xf32>
    %cst_221 = arith.constant 0.000000e+00 : f32
    %646 = vector.shape_cast %482 : vector<1x256xi1> to vector<1x256xi1>
    %647 = vector.broadcast %646 : vector<1x256xi1> to vector<8x256xi1>
    %648 = vector.broadcast %cst_221 : f32 to vector<8x256xf32>
    %649 = arith.select %647, %645, %648 : vector<8x256xi1>, vector<8x256xf32>
    %c240_i32_222 = arith.constant 240 : i32
    %650 = tpu.dynamic_rotate %614 by %c240_i32_222 dim 1 : vector<8x256xf32>, i32 -> vector<8x256xf32>
    %cst_223 = arith.constant 0.000000e+00 : f32
    %651 = vector.shape_cast %492 : vector<1x256xi1> to vector<1x256xi1>
    %652 = vector.broadcast %651 : vector<1x256xi1> to vector<8x256xi1>
    %653 = vector.broadcast %cst_223 : f32 to vector<8x256xf32>
    %654 = arith.select %652, %650, %653 : vector<8x256xi1>, vector<8x256xf32>
    %c239_i32_224 = arith.constant 239 : i32
    %655 = tpu.dynamic_rotate %614 by %c239_i32_224 dim 1 : vector<8x256xf32>, i32 -> vector<8x256xf32>
    %cst_225 = arith.constant 0.000000e+00 : f32
    %656 = vector.shape_cast %502 : vector<1x256xi1> to vector<1x256xi1>
    %657 = vector.broadcast %656 : vector<1x256xi1> to vector<8x256xi1>
    %658 = vector.broadcast %cst_225 : f32 to vector<8x256xf32>
    %659 = arith.select %657, %655, %658 : vector<8x256xi1>, vector<8x256xf32>
    %660 = tpu.concatenate %620, %625, %630, %635, %639, %644, %649, %654, %659 in 0 : vector<8x256xf32>, vector<8x256xf32>, vector<8x256xf32>, vector<8x256xf32>, vector<8x256xf32>, vector<8x256xf32>, vector<8x256xf32>, vector<8x256xf32>, vector<8x256xf32> -> vector<72x256xf32>
    %661 = arith.truncf %615 : vector<8x72xf32> to vector<8x72xbf16>
    %662 = arith.truncf %660 : vector<72x256xf32> to vector<72x256xbf16>
    %cst_226 = arith.constant dense<0.000000e+00> : vector<8x256xf32>
    %663 = tpu.matmul %661, %662, %cst_226 {dimension_numbers = #tpu.dot_dimension_numbers<[1], [0], [0], [1], [0, 0, 1, 1], [], []>} : vector<8x72xbf16>, vector<72x256xbf16>, vector<8x256xf32> -> vector<8x256xf32>
    %664 = vector.broadcast %366 : vector<8x1xf32> to vector<8x256xf32>
    %665 = arith.addf %663, %664 : vector<8x256xf32>
    %666 = vector.shape_cast %665 : vector<8x256xf32> to vector<1x8x256xf32>
    %cst_227 = arith.constant dense<0.000000e+00> : vector<1xf32>
    %667 = vector.multi_reduction <add>, %666, %cst_227 [1, 2] : vector<1x8x256xf32> to vector<1xf32>
    %668 = vector.shape_cast %667 : vector<1xf32> to vector<1x1x1xf32>
    %669 = vector.extract %668[0, 0, 0] : f32 from vector<1x1x1xf32>
    %cst_228 = arith.constant 2.048000e+03 : f32
    %670 = arith.divf %669, %cst_228 : f32
    %671 = arith.mulf %665, %665 : vector<8x256xf32>
    %672 = vector.shape_cast %671 : vector<8x256xf32> to vector<1x8x256xf32>
    %cst_229 = arith.constant dense<0.000000e+00> : vector<1xf32>
    %673 = vector.multi_reduction <add>, %672, %cst_229 [1, 2] : vector<1x8x256xf32> to vector<1xf32>
    %674 = vector.shape_cast %673 : vector<1xf32> to vector<1x1x1xf32>
    %675 = vector.extract %674[0, 0, 0] : f32 from vector<1x1x1xf32>
    %cst_230 = arith.constant 2.048000e+03 : f32
    %676 = arith.divf %675, %cst_230 : f32
    %677 = arith.mulf %670, %670 : f32
    %678 = arith.subf %676, %677 : f32
    %cst_231 = arith.constant 0.000000e+00 : f32
    %679 = arith.maximumf %678, %cst_231 : f32
    %680 = vector.broadcast %670 : f32 to vector<8x256xf32>
    %681 = arith.subf %665, %680 : vector<8x256xf32>
    %cst_232 = arith.constant 9.99999974E-6 : f32
    %682 = arith.addf %679, %cst_232 : f32
    %683 = math.rsqrt %682 : f32
    %684 = vector.broadcast %683 : f32 to vector<8x256xf32>
    %685 = arith.mulf %681, %684 : vector<8x256xf32>
    %686 = vector.broadcast %367 : vector<8x1xf32> to vector<8x256xf32>
    %687 = arith.mulf %685, %686 : vector<8x256xf32>
    %688 = vector.broadcast %368 : vector<8x1xf32> to vector<8x256xf32>
    %689 = arith.addf %687, %688 : vector<8x256xf32>
    %690 = arith.addf %689, %526 : vector<8x256xf32>
    %c0_233 = arith.constant 0 : index
    %c0_234 = arith.constant 0 : index
    %691 = vector.load %arg13[%c0_233, %c0_234] : memref<4x8xf32, #tpu.memory_space<vmem>>, vector<4x8xf32>
    %692 = arith.truncf %691 : vector<4x8xf32> to vector<4x8xbf16>
    %693 = arith.truncf %690 : vector<8x256xf32> to vector<8x256xbf16>
    %cst_235 = arith.constant dense<0.000000e+00> : vector<4x256xf32>
    %694 = tpu.matmul %692, %693, %cst_235 {dimension_numbers = #tpu.dot_dimension_numbers<[1], [0], [0], [1], [0, 0, 1, 1], [], []>} : vector<4x8xbf16>, vector<8x256xbf16>, vector<4x256xf32> -> vector<4x256xf32>
    %c0_236 = arith.constant 0 : index
    %c0_237 = arith.constant 0 : index
    %695 = vector.load %arg14[%c0_236, %c0_237] : memref<4x1xf32, #tpu.memory_space<vmem>>, vector<4x1xf32>
    %696 = vector.broadcast %695 : vector<4x1xf32> to vector<4x256xf32>
    %697 = arith.addf %694, %696 : vector<4x256xf32>
    %c0_238 = arith.constant 0 : index
    %c0_239 = arith.constant 0 : index
    %698 = vector.load %arg15[%c0_238, %c0_239] : memref<256x1024xf32, #tpu.memory_space<vmem>>, vector<256x1024xf32>
    %699 = arith.truncf %697 : vector<4x256xf32> to vector<4x256xbf16>
    %700 = arith.truncf %698 : vector<256x1024xf32> to vector<256x1024xbf16>
    %cst_240 = arith.constant dense<0.000000e+00> : vector<4x1024xf32>
    %701 = tpu.matmul %699, %700, %cst_240 {dimension_numbers = #tpu.dot_dimension_numbers<[1], [0], [0], [1], [0, 0, 1, 1], [], []>} : vector<4x256xbf16>, vector<256x1024xbf16>, vector<4x1024xf32> -> vector<4x1024xf32>
    %702 = arith.mulf %701, %701 : vector<4x1024xf32>
    %703 = arith.mulf %701, %702 : vector<4x1024xf32>
    %cst_241 = arith.constant 4.471500e-02 : f32
    %704 = vector.broadcast %cst_241 : f32 to vector<4x1024xf32>
    %705 = arith.mulf %704, %703 : vector<4x1024xf32>
    %706 = arith.addf %701, %705 : vector<4x1024xf32>
    %cst_242 = arith.constant 0.797884583 : f32
    %707 = vector.broadcast %cst_242 : f32 to vector<4x1024xf32>
    %708 = arith.mulf %707, %706 : vector<4x1024xf32>
    %709 = math.tanh %708 : vector<4x1024xf32>
    %cst_243 = arith.constant 1.000000e+00 : f32
    %710 = vector.broadcast %cst_243 : f32 to vector<4x1024xf32>
    %711 = arith.addf %710, %709 : vector<4x1024xf32>
    %cst_244 = arith.constant 5.000000e-01 : f32
    %712 = vector.broadcast %cst_244 : f32 to vector<4x1024xf32>
    %713 = arith.mulf %712, %711 : vector<4x1024xf32>
    %714 = arith.mulf %701, %713 : vector<4x1024xf32>
    %c0_245 = arith.constant 0 : index
    %c0_246 = arith.constant 0 : index
    %715 = vector.load %arg17[%c0_245, %c0_246] : memref<4x3xf32, #tpu.memory_space<vmem>>, vector<4x3xf32>
    %716 = tpu.iota {dimensions = array<i32: 1>} : vector<1x1024xi32>
    %c32_i32 = arith.constant 32 : i32
    %c0_i32_247 = arith.constant 0 : i32
    %717 = arith.cmpi eq, %c32_i32, %c0_i32_247 : i32
    %c1_i32_248 = arith.constant 1 : i32
    %718 = arith.select %717, %c1_i32_248, %c32_i32 : i32
    %719 = vector.broadcast %718 : i32 to vector<1x1024xi32>
    %720 = arith.remsi %716, %719 : vector<1x1024xi32>
    %c0_i32_249 = arith.constant 0 : i32
    %721 = vector.broadcast %c0_i32_249 : i32 to vector<1x1024xi32>
    %722 = arith.cmpi ne, %720, %721 : vector<1x1024xi32>
    %c0_i32_250 = arith.constant 0 : i32
    %723 = vector.broadcast %c0_i32_250 : i32 to vector<1x1024xi32>
    %724 = arith.cmpi slt, %720, %723 : vector<1x1024xi32>
    %c0_i32_251 = arith.constant 0 : i32
    %725 = arith.cmpi slt, %718, %c0_i32_251 : i32
    %726 = vector.broadcast %725 : i1 to vector<1x1024xi1>
    %727 = vector.broadcast %726 : vector<1x1024xi1> to vector<1x1024xi1>
    %728 = arith.xori %724, %727 : vector<1x1024xi1>
    %729 = arith.andi %728, %722 : vector<1x1024xi1>
    %730 = vector.broadcast %718 : i32 to vector<1x1024xi32>
    %731 = arith.addi %720, %730 : vector<1x1024xi32>
    %732 = arith.select %729, %731, %720 : vector<1x1024xi1>, vector<1x1024xi32>
    %c-32_i32 = arith.constant -32 : i32
    %733 = vector.broadcast %c-32_i32 : i32 to vector<1x1024xi32>
    %734 = arith.addi %716, %733 : vector<1x1024xi32>
    %c0_i32_252 = arith.constant 0 : i32
    %735 = vector.broadcast %c0_i32_252 : i32 to vector<1x1024xi32>
    %736 = arith.cmpi sge, %734, %735 : vector<1x1024xi32>
    %c-32_i32_253 = arith.constant -32 : i32
    %737 = vector.broadcast %c-32_i32_253 : i32 to vector<1x1024xi32>
    %738 = arith.addi %716, %737 : vector<1x1024xi32>
    %c1024_i32 = arith.constant 1024 : i32
    %739 = vector.broadcast %c1024_i32 : i32 to vector<1x1024xi32>
    %740 = arith.cmpi slt, %738, %739 : vector<1x1024xi32>
    %741 = arith.andi %736, %740 : vector<1x1024xi1>
    %c-1_i32_254 = arith.constant -1 : i32
    %742 = vector.broadcast %c-1_i32_254 : i32 to vector<1x1024xi32>
    %743 = arith.addi %732, %742 : vector<1x1024xi32>
    %c0_i32_255 = arith.constant 0 : i32
    %744 = vector.broadcast %c0_i32_255 : i32 to vector<1x1024xi32>
    %745 = arith.cmpi sge, %743, %744 : vector<1x1024xi32>
    %c-1_i32_256 = arith.constant -1 : i32
    %746 = vector.broadcast %c-1_i32_256 : i32 to vector<1x1024xi32>
    %747 = arith.addi %732, %746 : vector<1x1024xi32>
    %c32_i32_257 = arith.constant 32 : i32
    %748 = vector.broadcast %c32_i32_257 : i32 to vector<1x1024xi32>
    %749 = arith.cmpi slt, %747, %748 : vector<1x1024xi32>
    %750 = arith.andi %745, %749 : vector<1x1024xi1>
    %751 = arith.andi %741, %750 : vector<1x1024xi1>
    %c0_i32_258 = arith.constant 0 : i32
    %752 = vector.broadcast %c0_i32_258 : i32 to vector<1x1024xi32>
    %753 = arith.addi %732, %752 : vector<1x1024xi32>
    %c0_i32_259 = arith.constant 0 : i32
    %754 = vector.broadcast %c0_i32_259 : i32 to vector<1x1024xi32>
    %755 = arith.cmpi sge, %753, %754 : vector<1x1024xi32>
    %c0_i32_260 = arith.constant 0 : i32
    %756 = vector.broadcast %c0_i32_260 : i32 to vector<1x1024xi32>
    %757 = arith.addi %732, %756 : vector<1x1024xi32>
    %c32_i32_261 = arith.constant 32 : i32
    %758 = vector.broadcast %c32_i32_261 : i32 to vector<1x1024xi32>
    %759 = arith.cmpi slt, %757, %758 : vector<1x1024xi32>
    %760 = arith.andi %755, %759 : vector<1x1024xi1>
    %761 = arith.andi %741, %760 : vector<1x1024xi1>
    %c1_i32_262 = arith.constant 1 : i32
    %762 = vector.broadcast %c1_i32_262 : i32 to vector<1x1024xi32>
    %763 = arith.addi %732, %762 : vector<1x1024xi32>
    %c0_i32_263 = arith.constant 0 : i32
    %764 = vector.broadcast %c0_i32_263 : i32 to vector<1x1024xi32>
    %765 = arith.cmpi sge, %763, %764 : vector<1x1024xi32>
    %c1_i32_264 = arith.constant 1 : i32
    %766 = vector.broadcast %c1_i32_264 : i32 to vector<1x1024xi32>
    %767 = arith.addi %732, %766 : vector<1x1024xi32>
    %c32_i32_265 = arith.constant 32 : i32
    %768 = vector.broadcast %c32_i32_265 : i32 to vector<1x1024xi32>
    %769 = arith.cmpi slt, %767, %768 : vector<1x1024xi32>
    %770 = arith.andi %765, %769 : vector<1x1024xi1>
    %771 = arith.andi %741, %770 : vector<1x1024xi1>
    %c0_i32_266 = arith.constant 0 : i32
    %772 = vector.broadcast %c0_i32_266 : i32 to vector<1x1024xi32>
    %773 = arith.addi %716, %772 : vector<1x1024xi32>
    %c0_i32_267 = arith.constant 0 : i32
    %774 = vector.broadcast %c0_i32_267 : i32 to vector<1x1024xi32>
    %775 = arith.cmpi sge, %773, %774 : vector<1x1024xi32>
    %c0_i32_268 = arith.constant 0 : i32
    %776 = vector.broadcast %c0_i32_268 : i32 to vector<1x1024xi32>
    %777 = arith.addi %716, %776 : vector<1x1024xi32>
    %c1024_i32_269 = arith.constant 1024 : i32
    %778 = vector.broadcast %c1024_i32_269 : i32 to vector<1x1024xi32>
    %779 = arith.cmpi slt, %777, %778 : vector<1x1024xi32>
    %780 = arith.andi %775, %779 : vector<1x1024xi1>
    %c-1_i32_270 = arith.constant -1 : i32
    %781 = vector.broadcast %c-1_i32_270 : i32 to vector<1x1024xi32>
    %782 = arith.addi %732, %781 : vector<1x1024xi32>
    %c0_i32_271 = arith.constant 0 : i32
    %783 = vector.broadcast %c0_i32_271 : i32 to vector<1x1024xi32>
    %784 = arith.cmpi sge, %782, %783 : vector<1x1024xi32>
    %c-1_i32_272 = arith.constant -1 : i32
    %785 = vector.broadcast %c-1_i32_272 : i32 to vector<1x1024xi32>
    %786 = arith.addi %732, %785 : vector<1x1024xi32>
    %c32_i32_273 = arith.constant 32 : i32
    %787 = vector.broadcast %c32_i32_273 : i32 to vector<1x1024xi32>
    %788 = arith.cmpi slt, %786, %787 : vector<1x1024xi32>
    %789 = arith.andi %784, %788 : vector<1x1024xi1>
    %790 = arith.andi %780, %789 : vector<1x1024xi1>
    %c0_i32_274 = arith.constant 0 : i32
    %791 = vector.broadcast %c0_i32_274 : i32 to vector<1x1024xi32>
    %792 = arith.addi %732, %791 : vector<1x1024xi32>
    %c0_i32_275 = arith.constant 0 : i32
    %793 = vector.broadcast %c0_i32_275 : i32 to vector<1x1024xi32>
    %794 = arith.cmpi sge, %792, %793 : vector<1x1024xi32>
    %c0_i32_276 = arith.constant 0 : i32
    %795 = vector.broadcast %c0_i32_276 : i32 to vector<1x1024xi32>
    %796 = arith.addi %732, %795 : vector<1x1024xi32>
    %c32_i32_277 = arith.constant 32 : i32
    %797 = vector.broadcast %c32_i32_277 : i32 to vector<1x1024xi32>
    %798 = arith.cmpi slt, %796, %797 : vector<1x1024xi32>
    %799 = arith.andi %794, %798 : vector<1x1024xi1>
    %800 = arith.andi %780, %799 : vector<1x1024xi1>
    %c1_i32_278 = arith.constant 1 : i32
    %801 = vector.broadcast %c1_i32_278 : i32 to vector<1x1024xi32>
    %802 = arith.addi %732, %801 : vector<1x1024xi32>
    %c0_i32_279 = arith.constant 0 : i32
    %803 = vector.broadcast %c0_i32_279 : i32 to vector<1x1024xi32>
    %804 = arith.cmpi sge, %802, %803 : vector<1x1024xi32>
    %c1_i32_280 = arith.constant 1 : i32
    %805 = vector.broadcast %c1_i32_280 : i32 to vector<1x1024xi32>
    %806 = arith.addi %732, %805 : vector<1x1024xi32>
    %c32_i32_281 = arith.constant 32 : i32
    %807 = vector.broadcast %c32_i32_281 : i32 to vector<1x1024xi32>
    %808 = arith.cmpi slt, %806, %807 : vector<1x1024xi32>
    %809 = arith.andi %804, %808 : vector<1x1024xi1>
    %810 = arith.andi %780, %809 : vector<1x1024xi1>
    %c32_i32_282 = arith.constant 32 : i32
    %811 = vector.broadcast %c32_i32_282 : i32 to vector<1x1024xi32>
    %812 = arith.addi %716, %811 : vector<1x1024xi32>
    %c0_i32_283 = arith.constant 0 : i32
    %813 = vector.broadcast %c0_i32_283 : i32 to vector<1x1024xi32>
    %814 = arith.cmpi sge, %812, %813 : vector<1x1024xi32>
    %c32_i32_284 = arith.constant 32 : i32
    %815 = vector.broadcast %c32_i32_284 : i32 to vector<1x1024xi32>
    %816 = arith.addi %716, %815 : vector<1x1024xi32>
    %c1024_i32_285 = arith.constant 1024 : i32
    %817 = vector.broadcast %c1024_i32_285 : i32 to vector<1x1024xi32>
    %818 = arith.cmpi slt, %816, %817 : vector<1x1024xi32>
    %819 = arith.andi %814, %818 : vector<1x1024xi1>
    %c-1_i32_286 = arith.constant -1 : i32
    %820 = vector.broadcast %c-1_i32_286 : i32 to vector<1x1024xi32>
    %821 = arith.addi %732, %820 : vector<1x1024xi32>
    %c0_i32_287 = arith.constant 0 : i32
    %822 = vector.broadcast %c0_i32_287 : i32 to vector<1x1024xi32>
    %823 = arith.cmpi sge, %821, %822 : vector<1x1024xi32>
    %c-1_i32_288 = arith.constant -1 : i32
    %824 = vector.broadcast %c-1_i32_288 : i32 to vector<1x1024xi32>
    %825 = arith.addi %732, %824 : vector<1x1024xi32>
    %c32_i32_289 = arith.constant 32 : i32
    %826 = vector.broadcast %c32_i32_289 : i32 to vector<1x1024xi32>
    %827 = arith.cmpi slt, %825, %826 : vector<1x1024xi32>
    %828 = arith.andi %823, %827 : vector<1x1024xi1>
    %829 = arith.andi %819, %828 : vector<1x1024xi1>
    %c0_i32_290 = arith.constant 0 : i32
    %830 = vector.broadcast %c0_i32_290 : i32 to vector<1x1024xi32>
    %831 = arith.addi %732, %830 : vector<1x1024xi32>
    %c0_i32_291 = arith.constant 0 : i32
    %832 = vector.broadcast %c0_i32_291 : i32 to vector<1x1024xi32>
    %833 = arith.cmpi sge, %831, %832 : vector<1x1024xi32>
    %c0_i32_292 = arith.constant 0 : i32
    %834 = vector.broadcast %c0_i32_292 : i32 to vector<1x1024xi32>
    %835 = arith.addi %732, %834 : vector<1x1024xi32>
    %c32_i32_293 = arith.constant 32 : i32
    %836 = vector.broadcast %c32_i32_293 : i32 to vector<1x1024xi32>
    %837 = arith.cmpi slt, %835, %836 : vector<1x1024xi32>
    %838 = arith.andi %833, %837 : vector<1x1024xi1>
    %839 = arith.andi %819, %838 : vector<1x1024xi1>
    %c1_i32_294 = arith.constant 1 : i32
    %840 = vector.broadcast %c1_i32_294 : i32 to vector<1x1024xi32>
    %841 = arith.addi %732, %840 : vector<1x1024xi32>
    %c0_i32_295 = arith.constant 0 : i32
    %842 = vector.broadcast %c0_i32_295 : i32 to vector<1x1024xi32>
    %843 = arith.cmpi sge, %841, %842 : vector<1x1024xi32>
    %c1_i32_296 = arith.constant 1 : i32
    %844 = vector.broadcast %c1_i32_296 : i32 to vector<1x1024xi32>
    %845 = arith.addi %732, %844 : vector<1x1024xi32>
    %c32_i32_297 = arith.constant 32 : i32
    %846 = vector.broadcast %c32_i32_297 : i32 to vector<1x1024xi32>
    %847 = arith.cmpi slt, %845, %846 : vector<1x1024xi32>
    %848 = arith.andi %843, %847 : vector<1x1024xi1>
    %849 = arith.andi %819, %848 : vector<1x1024xi1>
    %c0_298 = arith.constant 0 : index
    %c0_299 = arith.constant 0 : index
    %c0_300 = arith.constant 0 : index
    %850 = vector.load %arg16[%c0_298, %c0_299, %c0_300] : memref<9x4x4xf32, #tpu.memory_space<vmem>>, vector<9x4x4xf32>
    %851 = vector.extract_strided_slice %715 {offsets = [0, 0], sizes = [4, 1], strides = [1, 1]} : vector<4x3xf32> to vector<4x1xf32>
    %c33_i32 = arith.constant 33 : i32
    %852 = tpu.dynamic_rotate %714 by %c33_i32 dim 1 : vector<4x1024xf32>, i32 -> vector<4x1024xf32>
    %cst_301 = arith.constant 0.000000e+00 : f32
    %853 = vector.shape_cast %751 : vector<1x1024xi1> to vector<1x1024xi1>
    %854 = vector.broadcast %853 : vector<1x1024xi1> to vector<4x1024xi1>
    %855 = vector.broadcast %cst_301 : f32 to vector<4x1024xf32>
    %856 = arith.select %854, %852, %855 : vector<4x1024xi1>, vector<4x1024xf32>
    %c32_i32_302 = arith.constant 32 : i32
    %857 = tpu.dynamic_rotate %714 by %c32_i32_302 dim 1 : vector<4x1024xf32>, i32 -> vector<4x1024xf32>
    %cst_303 = arith.constant 0.000000e+00 : f32
    %858 = vector.shape_cast %761 : vector<1x1024xi1> to vector<1x1024xi1>
    %859 = vector.broadcast %858 : vector<1x1024xi1> to vector<4x1024xi1>
    %860 = vector.broadcast %cst_303 : f32 to vector<4x1024xf32>
    %861 = arith.select %859, %857, %860 : vector<4x1024xi1>, vector<4x1024xf32>
    %c31_i32 = arith.constant 31 : i32
    %862 = tpu.dynamic_rotate %714 by %c31_i32 dim 1 : vector<4x1024xf32>, i32 -> vector<4x1024xf32>
    %cst_304 = arith.constant 0.000000e+00 : f32
    %863 = vector.shape_cast %771 : vector<1x1024xi1> to vector<1x1024xi1>
    %864 = vector.broadcast %863 : vector<1x1024xi1> to vector<4x1024xi1>
    %865 = vector.broadcast %cst_304 : f32 to vector<4x1024xf32>
    %866 = arith.select %864, %862, %865 : vector<4x1024xi1>, vector<4x1024xf32>
    %c1_i32_305 = arith.constant 1 : i32
    %867 = tpu.dynamic_rotate %714 by %c1_i32_305 dim 1 : vector<4x1024xf32>, i32 -> vector<4x1024xf32>
    %cst_306 = arith.constant 0.000000e+00 : f32
    %868 = vector.shape_cast %790 : vector<1x1024xi1> to vector<1x1024xi1>
    %869 = vector.broadcast %868 : vector<1x1024xi1> to vector<4x1024xi1>
    %870 = vector.broadcast %cst_306 : f32 to vector<4x1024xf32>
    %871 = arith.select %869, %867, %870 : vector<4x1024xi1>, vector<4x1024xf32>
    %cst_307 = arith.constant 0.000000e+00 : f32
    %872 = vector.shape_cast %800 : vector<1x1024xi1> to vector<1x1024xi1>
    %873 = vector.broadcast %872 : vector<1x1024xi1> to vector<4x1024xi1>
    %874 = vector.broadcast %cst_307 : f32 to vector<4x1024xf32>
    %875 = arith.select %873, %714, %874 : vector<4x1024xi1>, vector<4x1024xf32>
    %c1023_i32 = arith.constant 1023 : i32
    %876 = tpu.dynamic_rotate %714 by %c1023_i32 dim 1 : vector<4x1024xf32>, i32 -> vector<4x1024xf32>
    %cst_308 = arith.constant 0.000000e+00 : f32
    %877 = vector.shape_cast %810 : vector<1x1024xi1> to vector<1x1024xi1>
    %878 = vector.broadcast %877 : vector<1x1024xi1> to vector<4x1024xi1>
    %879 = vector.broadcast %cst_308 : f32 to vector<4x1024xf32>
    %880 = arith.select %878, %876, %879 : vector<4x1024xi1>, vector<4x1024xf32>
    %c993_i32 = arith.constant 993 : i32
    %881 = tpu.dynamic_rotate %714 by %c993_i32 dim 1 : vector<4x1024xf32>, i32 -> vector<4x1024xf32>
    %cst_309 = arith.constant 0.000000e+00 : f32
    %882 = vector.shape_cast %829 : vector<1x1024xi1> to vector<1x1024xi1>
    %883 = vector.broadcast %882 : vector<1x1024xi1> to vector<4x1024xi1>
    %884 = vector.broadcast %cst_309 : f32 to vector<4x1024xf32>
    %885 = arith.select %883, %881, %884 : vector<4x1024xi1>, vector<4x1024xf32>
    %c992_i32 = arith.constant 992 : i32
    %886 = tpu.dynamic_rotate %714 by %c992_i32 dim 1 : vector<4x1024xf32>, i32 -> vector<4x1024xf32>
    %cst_310 = arith.constant 0.000000e+00 : f32
    %887 = vector.shape_cast %839 : vector<1x1024xi1> to vector<1x1024xi1>
    %888 = vector.broadcast %887 : vector<1x1024xi1> to vector<4x1024xi1>
    %889 = vector.broadcast %cst_310 : f32 to vector<4x1024xf32>
    %890 = arith.select %888, %886, %889 : vector<4x1024xi1>, vector<4x1024xf32>
    %c991_i32 = arith.constant 991 : i32
    %891 = tpu.dynamic_rotate %714 by %c991_i32 dim 1 : vector<4x1024xf32>, i32 -> vector<4x1024xf32>
    %cst_311 = arith.constant 0.000000e+00 : f32
    %892 = vector.shape_cast %849 : vector<1x1024xi1> to vector<1x1024xi1>
    %893 = vector.broadcast %892 : vector<1x1024xi1> to vector<4x1024xi1>
    %894 = vector.broadcast %cst_311 : f32 to vector<4x1024xf32>
    %895 = arith.select %893, %891, %894 : vector<4x1024xi1>, vector<4x1024xf32>
    %896 = vector.extract_strided_slice %850 {offsets = [0, 0, 0], sizes = [1, 4, 4], strides = [1, 1, 1]} : vector<9x4x4xf32> to vector<1x4x4xf32>
    %897 = vector.shape_cast %896 : vector<1x4x4xf32> to vector<4x4xf32>
    %898 = arith.truncf %897 : vector<4x4xf32> to vector<4x4xbf16>
    %899 = arith.truncf %856 : vector<4x1024xf32> to vector<4x1024xbf16>
    %cst_312 = arith.constant dense<0.000000e+00> : vector<4x1024xf32>
    %900 = tpu.matmul %898, %899, %cst_312 {dimension_numbers = #tpu.dot_dimension_numbers<[1], [0], [0], [1], [0, 0, 1, 1], [], []>} : vector<4x4xbf16>, vector<4x1024xbf16>, vector<4x1024xf32> -> vector<4x1024xf32>
    %901 = vector.extract_strided_slice %850 {offsets = [1, 0, 0], sizes = [1, 4, 4], strides = [1, 1, 1]} : vector<9x4x4xf32> to vector<1x4x4xf32>
    %902 = vector.shape_cast %901 : vector<1x4x4xf32> to vector<4x4xf32>
    %903 = arith.truncf %902 : vector<4x4xf32> to vector<4x4xbf16>
    %904 = arith.truncf %861 : vector<4x1024xf32> to vector<4x1024xbf16>
    %cst_313 = arith.constant dense<0.000000e+00> : vector<4x1024xf32>
    %905 = tpu.matmul %903, %904, %cst_313 {dimension_numbers = #tpu.dot_dimension_numbers<[1], [0], [0], [1], [0, 0, 1, 1], [], []>} : vector<4x4xbf16>, vector<4x1024xbf16>, vector<4x1024xf32> -> vector<4x1024xf32>
    %906 = arith.addf %900, %905 : vector<4x1024xf32>
    %907 = vector.extract_strided_slice %850 {offsets = [2, 0, 0], sizes = [1, 4, 4], strides = [1, 1, 1]} : vector<9x4x4xf32> to vector<1x4x4xf32>
    %908 = vector.shape_cast %907 : vector<1x4x4xf32> to vector<4x4xf32>
    %909 = arith.truncf %908 : vector<4x4xf32> to vector<4x4xbf16>
    %910 = arith.truncf %866 : vector<4x1024xf32> to vector<4x1024xbf16>
    %cst_314 = arith.constant dense<0.000000e+00> : vector<4x1024xf32>
    %911 = tpu.matmul %909, %910, %cst_314 {dimension_numbers = #tpu.dot_dimension_numbers<[1], [0], [0], [1], [0, 0, 1, 1], [], []>} : vector<4x4xbf16>, vector<4x1024xbf16>, vector<4x1024xf32> -> vector<4x1024xf32>
    %912 = arith.addf %906, %911 : vector<4x1024xf32>
    %913 = vector.extract_strided_slice %850 {offsets = [3, 0, 0], sizes = [1, 4, 4], strides = [1, 1, 1]} : vector<9x4x4xf32> to vector<1x4x4xf32>
    %914 = vector.shape_cast %913 : vector<1x4x4xf32> to vector<4x4xf32>
    %915 = arith.truncf %914 : vector<4x4xf32> to vector<4x4xbf16>
    %916 = arith.truncf %871 : vector<4x1024xf32> to vector<4x1024xbf16>
    %cst_315 = arith.constant dense<0.000000e+00> : vector<4x1024xf32>
    %917 = tpu.matmul %915, %916, %cst_315 {dimension_numbers = #tpu.dot_dimension_numbers<[1], [0], [0], [1], [0, 0, 1, 1], [], []>} : vector<4x4xbf16>, vector<4x1024xbf16>, vector<4x1024xf32> -> vector<4x1024xf32>
    %918 = arith.addf %912, %917 : vector<4x1024xf32>
    %919 = vector.extract_strided_slice %850 {offsets = [4, 0, 0], sizes = [1, 4, 4], strides = [1, 1, 1]} : vector<9x4x4xf32> to vector<1x4x4xf32>
    %920 = vector.shape_cast %919 : vector<1x4x4xf32> to vector<4x4xf32>
    %921 = arith.truncf %920 : vector<4x4xf32> to vector<4x4xbf16>
    %922 = arith.truncf %875 : vector<4x1024xf32> to vector<4x1024xbf16>
    %cst_316 = arith.constant dense<0.000000e+00> : vector<4x1024xf32>
    %923 = tpu.matmul %921, %922, %cst_316 {dimension_numbers = #tpu.dot_dimension_numbers<[1], [0], [0], [1], [0, 0, 1, 1], [], []>} : vector<4x4xbf16>, vector<4x1024xbf16>, vector<4x1024xf32> -> vector<4x1024xf32>
    %924 = arith.addf %918, %923 : vector<4x1024xf32>
    %925 = vector.extract_strided_slice %850 {offsets = [5, 0, 0], sizes = [1, 4, 4], strides = [1, 1, 1]} : vector<9x4x4xf32> to vector<1x4x4xf32>
    %926 = vector.shape_cast %925 : vector<1x4x4xf32> to vector<4x4xf32>
    %927 = arith.truncf %926 : vector<4x4xf32> to vector<4x4xbf16>
    %928 = arith.truncf %880 : vector<4x1024xf32> to vector<4x1024xbf16>
    %cst_317 = arith.constant dense<0.000000e+00> : vector<4x1024xf32>
    %929 = tpu.matmul %927, %928, %cst_317 {dimension_numbers = #tpu.dot_dimension_numbers<[1], [0], [0], [1], [0, 0, 1, 1], [], []>} : vector<4x4xbf16>, vector<4x1024xbf16>, vector<4x1024xf32> -> vector<4x1024xf32>
    %930 = arith.addf %924, %929 : vector<4x1024xf32>
    %931 = vector.extract_strided_slice %850 {offsets = [6, 0, 0], sizes = [1, 4, 4], strides = [1, 1, 1]} : vector<9x4x4xf32> to vector<1x4x4xf32>
    %932 = vector.shape_cast %931 : vector<1x4x4xf32> to vector<4x4xf32>
    %933 = arith.truncf %932 : vector<4x4xf32> to vector<4x4xbf16>
    %934 = arith.truncf %885 : vector<4x1024xf32> to vector<4x1024xbf16>
    %cst_318 = arith.constant dense<0.000000e+00> : vector<4x1024xf32>
    %935 = tpu.matmul %933, %934, %cst_318 {dimension_numbers = #tpu.dot_dimension_numbers<[1], [0], [0], [1], [0, 0, 1, 1], [], []>} : vector<4x4xbf16>, vector<4x1024xbf16>, vector<4x1024xf32> -> vector<4x1024xf32>
    %936 = arith.addf %930, %935 : vector<4x1024xf32>
    %937 = vector.extract_strided_slice %850 {offsets = [7, 0, 0], sizes = [1, 4, 4], strides = [1, 1, 1]} : vector<9x4x4xf32> to vector<1x4x4xf32>
    %938 = vector.shape_cast %937 : vector<1x4x4xf32> to vector<4x4xf32>
    %939 = arith.truncf %938 : vector<4x4xf32> to vector<4x4xbf16>
    %940 = arith.truncf %890 : vector<4x1024xf32> to vector<4x1024xbf16>
    %cst_319 = arith.constant dense<0.000000e+00> : vector<4x1024xf32>
    %941 = tpu.matmul %939, %940, %cst_319 {dimension_numbers = #tpu.dot_dimension_numbers<[1], [0], [0], [1], [0, 0, 1, 1], [], []>} : vector<4x4xbf16>, vector<4x1024xbf16>, vector<4x1024xf32> -> vector<4x1024xf32>
    %942 = arith.addf %936, %941 : vector<4x1024xf32>
    %943 = vector.extract_strided_slice %850 {offsets = [8, 0, 0], sizes = [1, 4, 4], strides = [1, 1, 1]} : vector<9x4x4xf32> to vector<1x4x4xf32>
    %944 = vector.shape_cast %943 : vector<1x4x4xf32> to vector<4x4xf32>
    %945 = arith.truncf %944 : vector<4x4xf32> to vector<4x4xbf16>
    %946 = arith.truncf %895 : vector<4x1024xf32> to vector<4x1024xbf16>
    %cst_320 = arith.constant dense<0.000000e+00> : vector<4x1024xf32>
    %947 = tpu.matmul %945, %946, %cst_320 {dimension_numbers = #tpu.dot_dimension_numbers<[1], [0], [0], [1], [0, 0, 1, 1], [], []>} : vector<4x4xbf16>, vector<4x1024xbf16>, vector<4x1024xf32> -> vector<4x1024xf32>
    %948 = arith.addf %942, %947 : vector<4x1024xf32>
    %949 = vector.broadcast %851 : vector<4x1xf32> to vector<4x1024xf32>
    %950 = arith.addf %948, %949 : vector<4x1024xf32>
    %951 = vector.shape_cast %950 : vector<4x1024xf32> to vector<1x4x1024xf32>
    %cst_321 = arith.constant dense<0.000000e+00> : vector<1xf32>
    %952 = vector.multi_reduction <add>, %951, %cst_321 [1, 2] : vector<1x4x1024xf32> to vector<1xf32>
    %953 = vector.shape_cast %952 : vector<1xf32> to vector<1x1x1xf32>
    %954 = vector.extract %953[0, 0, 0] : f32 from vector<1x1x1xf32>
    %cst_322 = arith.constant 4.096000e+03 : f32
    %955 = arith.divf %954, %cst_322 : f32
    %956 = arith.mulf %950, %950 : vector<4x1024xf32>
    %957 = vector.shape_cast %956 : vector<4x1024xf32> to vector<1x4x1024xf32>
    %cst_323 = arith.constant dense<0.000000e+00> : vector<1xf32>
    %958 = vector.multi_reduction <add>, %957, %cst_323 [1, 2] : vector<1x4x1024xf32> to vector<1xf32>
    %959 = vector.shape_cast %958 : vector<1xf32> to vector<1x1x1xf32>
    %960 = vector.extract %959[0, 0, 0] : f32 from vector<1x1x1xf32>
    %cst_324 = arith.constant 4.096000e+03 : f32
    %961 = arith.divf %960, %cst_324 : f32
    %962 = arith.mulf %955, %955 : f32
    %963 = arith.subf %961, %962 : f32
    %cst_325 = arith.constant 0.000000e+00 : f32
    %964 = arith.maximumf %963, %cst_325 : f32
    %965 = vector.broadcast %955 : f32 to vector<4x1024xf32>
    %966 = arith.subf %950, %965 : vector<4x1024xf32>
    %cst_326 = arith.constant 9.99999974E-6 : f32
    %967 = arith.addf %964, %cst_326 : f32
    %968 = math.rsqrt %967 : f32
    %969 = vector.broadcast %968 : f32 to vector<4x1024xf32>
    %970 = arith.mulf %966, %969 : vector<4x1024xf32>
    %971 = vector.extract_strided_slice %715 {offsets = [0, 1], sizes = [4, 1], strides = [1, 1]} : vector<4x3xf32> to vector<4x1xf32>
    %972 = vector.broadcast %971 : vector<4x1xf32> to vector<4x1024xf32>
    %973 = arith.mulf %970, %972 : vector<4x1024xf32>
    %974 = vector.extract_strided_slice %715 {offsets = [0, 2], sizes = [4, 1], strides = [1, 1]} : vector<4x3xf32> to vector<4x1xf32>
    %975 = vector.broadcast %974 : vector<4x1xf32> to vector<4x1024xf32>
    %976 = arith.addf %973, %975 : vector<4x1024xf32>
    %977 = arith.mulf %976, %976 : vector<4x1024xf32>
    %978 = arith.mulf %976, %977 : vector<4x1024xf32>
    %cst_327 = arith.constant 4.471500e-02 : f32
    %979 = vector.broadcast %cst_327 : f32 to vector<4x1024xf32>
    %980 = arith.mulf %979, %978 : vector<4x1024xf32>
    %981 = arith.addf %976, %980 : vector<4x1024xf32>
    %cst_328 = arith.constant 0.797884583 : f32
    %982 = vector.broadcast %cst_328 : f32 to vector<4x1024xf32>
    %983 = arith.mulf %982, %981 : vector<4x1024xf32>
    %984 = math.tanh %983 : vector<4x1024xf32>
    %cst_329 = arith.constant 1.000000e+00 : f32
    %985 = vector.broadcast %cst_329 : f32 to vector<4x1024xf32>
    %986 = arith.addf %985, %984 : vector<4x1024xf32>
    %cst_330 = arith.constant 5.000000e-01 : f32
    %987 = vector.broadcast %cst_330 : f32 to vector<4x1024xf32>
    %988 = arith.mulf %987, %986 : vector<4x1024xf32>
    %989 = arith.mulf %976, %988 : vector<4x1024xf32>
    %c0_331 = arith.constant 0 : index
    %c0_332 = arith.constant 0 : index
    %990 = vector.load %arg18[%c0_331, %c0_332] : memref<4x4xf32, #tpu.memory_space<vmem>>, vector<4x4xf32>
    %991 = arith.truncf %990 : vector<4x4xf32> to vector<4x4xbf16>
    %992 = arith.truncf %989 : vector<4x1024xf32> to vector<4x1024xbf16>
    %cst_333 = arith.constant dense<0.000000e+00> : vector<4x1024xf32>
    %993 = tpu.matmul %991, %992, %cst_333 {dimension_numbers = #tpu.dot_dimension_numbers<[1], [0], [0], [1], [0, 0, 1, 1], [], []>} : vector<4x4xbf16>, vector<4x1024xbf16>, vector<4x1024xf32> -> vector<4x1024xf32>
    %c0_334 = arith.constant 0 : index
    %c0_335 = arith.constant 0 : index
    %994 = vector.load %arg19[%c0_334, %c0_335] : memref<4x1xf32, #tpu.memory_space<vmem>>, vector<4x1xf32>
    %995 = vector.broadcast %994 : vector<4x1xf32> to vector<4x1024xf32>
    %996 = arith.addf %993, %995 : vector<4x1024xf32>
    %997 = vector.shape_cast %996 : vector<4x1024xf32> to vector<1x4x1024xf32>
    %c0_336 = arith.constant 0 : index
    %c0_337 = arith.constant 0 : index
    %c0_338 = arith.constant 0 : index
    %998 = vector.load %arg20[%c0_336, %c0_337, %c0_338] : memref<1x4x1024xf32, #tpu.memory_space<vmem>>, vector<1x4x1024xf32>
    tpu.vector_store %arg20[%c0_336, %c0_337, %c0_338], %997 {strides = array<i32>} : memref<1x4x1024xf32, #tpu.memory_space<vmem>>, vector<1x4x1024xf32>,
    return
  }
  func.func @transform_0(%arg0: i32) -> (i32, i32) {
    %c0_i32 = arith.constant 0 : i32
    %c0_i32_0 = arith.constant 0 : i32
    %c0_i32_1 = arith.constant 0 : i32
    return %c0_i32, %c0_i32_0 : i32, i32
  }
  func.func @transform_1(%arg0: i32) -> (i32, i32, i32) {
    %c0_i32 = arith.constant 0 : i32
    %c0_i32_0 = arith.constant 0 : i32
    %c0_i32_1 = arith.constant 0 : i32
    return %arg0, %c0_i32, %c0_i32_0 : i32, i32, i32
  }
  func.func @transform_2(%arg0: i32) -> (i32, i32) {
    %c0_i32 = arith.constant 0 : i32
    %c0_i32_0 = arith.constant 0 : i32
    %c0_i32_1 = arith.constant 0 : i32
    return %c0_i32, %c0_i32_0 : i32, i32
  }
  func.func @transform_3(%arg0: i32) -> (i32, i32) {
    %c0_i32 = arith.constant 0 : i32
    %c0_i32_0 = arith.constant 0 : i32
    %c0_i32_1 = arith.constant 0 : i32
    return %c0_i32, %c0_i32_0 : i32, i32
  }
  func.func @transform_4(%arg0: i32) -> (i32, i32) {
    %c0_i32 = arith.constant 0 : i32
    %c0_i32_0 = arith.constant 0 : i32
    %c0_i32_1 = arith.constant 0 : i32
    return %c0_i32, %c0_i32_0 : i32, i32
  }
  func.func @transform_5(%arg0: i32) -> (i32, i32) {
    %c0_i32 = arith.constant 0 : i32
    %c0_i32_0 = arith.constant 0 : i32
    %c0_i32_1 = arith.constant 0 : i32
    return %c0_i32, %c0_i32_0 : i32, i32
  }
  func.func @transform_6(%arg0: i32) -> (i32, i32) {
    %c0_i32 = arith.constant 0 : i32
    %c0_i32_0 = arith.constant 0 : i32
    %c0_i32_1 = arith.constant 0 : i32
    return %c0_i32, %c0_i32_0 : i32, i32
  }
  func.func @transform_7(%arg0: i32) -> (i32, i32) {
    %c0_i32 = arith.constant 0 : i32
    %c0_i32_0 = arith.constant 0 : i32
    %c0_i32_1 = arith.constant 0 : i32
    return %c0_i32, %c0_i32_0 : i32, i32
  }
  func.func @transform_8(%arg0: i32) -> (i32, i32, i32) {
    %c0_i32 = arith.constant 0 : i32
    %c0_i32_0 = arith.constant 0 : i32
    %c0_i32_1 = arith.constant 0 : i32
    return %arg0, %c0_i32, %c0_i32_0 : i32, i32, i32
  }
  func.func @transform_9(%arg0: i32) -> (i32, i32) {
    %c0_i32 = arith.constant 0 : i32
    %c0_i32_0 = arith.constant 0 : i32
    %c0_i32_1 = arith.constant 0 : i32
    return %c0_i32, %c0_i32_0 : i32, i32
  }
  func.func @transform_10(%arg0: i32) -> (i32, i32) {
    %c0_i32 = arith.constant 0 : i32
    %c0_i32_0 = arith.constant 0 : i32
    %c0_i32_1 = arith.constant 0 : i32
    return %c0_i32, %c0_i32_0 : i32, i32
  }
  func.func @transform_11(%arg0: i32) -> (i32, i32) {
    %c0_i32 = arith.constant 0 : i32
    %c0_i32_0 = arith.constant 0 : i32
    %c0_i32_1 = arith.constant 0 : i32
    return %c0_i32, %c0_i32_0 : i32, i32
  }
  func.func @transform_12(%arg0: i32) -> (i32, i32) {
    %c0_i32 = arith.constant 0 : i32
    %c0_i32_0 = arith.constant 0 : i32
    %c0_i32_1 = arith.constant 0 : i32
    return %c0_i32, %c0_i32_0 : i32, i32
  }
  func.func @transform_13(%arg0: i32) -> (i32, i32) {
    %c0_i32 = arith.constant 0 : i32
    %c0_i32_0 = arith.constant 0 : i32
    %c0_i32_1 = arith.constant 0 : i32
    return %c0_i32, %c0_i32_0 : i32, i32
  }
  func.func @transform_14(%arg0: i32) -> (i32, i32) {
    %c0_i32 = arith.constant 0 : i32
    %c0_i32_0 = arith.constant 0 : i32
    %c0_i32_1 = arith.constant 0 : i32
    return %c0_i32, %c0_i32_0 : i32, i32
  }
  func.func @transform_15(%arg0: i32) -> (i32, i32, i32) {
    %c0_i32 = arith.constant 0 : i32
    %c0_i32_0 = arith.constant 0 : i32
    %c0_i32_1 = arith.constant 0 : i32
    %c0_i32_2 = arith.constant 0 : i32
    return %c0_i32, %c0_i32_0, %c0_i32_1 : i32, i32, i32
  }
  func.func @transform_16(%arg0: i32) -> (i32, i32) {
    %c0_i32 = arith.constant 0 : i32
    %c0_i32_0 = arith.constant 0 : i32
    %c0_i32_1 = arith.constant 0 : i32
    return %c0_i32, %c0_i32_0 : i32, i32
  }
  func.func @transform_17(%arg0: i32) -> (i32, i32) {
    %c0_i32 = arith.constant 0 : i32
    %c0_i32_0 = arith.constant 0 : i32
    %c0_i32_1 = arith.constant 0 : i32
    return %c0_i32, %c0_i32_0 : i32, i32
  }
  func.func @transform_18(%arg0: i32) -> (i32, i32) {
    %c0_i32 = arith.constant 0 : i32
    %c0_i32_0 = arith.constant 0 : i32
    %c0_i32_1 = arith.constant 0 : i32
    return %c0_i32, %c0_i32_0 : i32, i32
  }
  func.func @transform_19(%arg0: i32) -> (i32, i32, i32) {
    %c0_i32 = arith.constant 0 : i32
    %c0_i32_0 = arith.constant 0 : i32
    %c0_i32_1 = arith.constant 0 : i32
    return %arg0, %c0_i32, %c0_i32_0 : i32, i32, i32
  }
}

</mosaic_0001>

<llo_original>
// kernel: decoder_forward.1
$region0: #{decoder_forward.1}
  #allocation0 [shape = 'u32[]', space=smem, size = 0x4, offset = 0x4, fixed_abs, tag = 'smem constant byte address 0x4 - core index']
  #allocation1 [shape = 'u32[144,128]{1,0:T(1,128)}', space=vmem, size = 0x12000, scoped, tag = 'internal scratch']
  %s0 = inlined_call_operand.vmem [shape: f32[16,64], index: 0, kind: input, shape index: {}]
  %s1 = inlined_call_operand.vmem [shape: f32[2,32,1], index: 1, kind: input, shape index: {}]
  %s2 = inlined_call_operand.vmem [shape: f32[16,144], index: 2, kind: input, shape index: {}]
  %s3 = inlined_call_operand.vmem [shape: f32[16,144], index: 3, kind: input, shape index: {}]
  %s4 = inlined_call_operand.hbm [shape: f32[16,6], index: 4, kind: input, shape index: {}]
  %s5 = inlined_call_operand.hbm [shape: f32[8,16], index: 5, kind: input, shape index: {}]
  %s6 = inlined_call_operand.hbm [shape: f32[8,1], index: 6, kind: input, shape index: {}]
  %s7 = inlined_call_operand.vmem [shape: f32[64,256], index: 7, kind: input, shape index: {}]
  %s8 = inlined_call_operand.vmem [shape: f32[2,16,1], index: 8, kind: input, shape index: {}]
  %s9 = inlined_call_operand.hbm [shape: f32[8,72], index: 9, kind: input, shape index: {}]
  %s10 = inlined_call_operand.hbm [shape: f32[8,72], index: 10, kind: input, shape index: {}]
  %s11 = inlined_call_operand.hbm [shape: f32[8,6], index: 11, kind: input, shape index: {}]
  %s12 = inlined_call_operand.hbm [shape: f32[4,8], index: 12, kind: input, shape index: {}]
  %s13 = inlined_call_operand.hbm [shape: f32[4,1], index: 13, kind: input, shape index: {}]
  %s14 = inlined_call_operand.hbm [shape: f32[256,1024], index: 14, kind: input, shape index: {}]
  %s15 = inlined_call_operand.vmem [shape: f32[9,4,4], index: 15, kind: input, shape index: {}]
  %s16 = inlined_call_operand.hbm [shape: f32[4,3], index: 16, kind: input, shape index: {}]
  %s17 = inlined_call_operand.hbm [shape: f32[4,4], index: 17, kind: input, shape index: {}]
  %s18 = inlined_call_operand.hbm [shape: f32[4,1], index: 18, kind: input, shape index: {}]
  %s19 = inlined_call_operand.vmem [shape: f32[2,4,1024], index: 19, kind: output, shape index: {}]
  %s20 = sld [smem:[#allocation0]]
  $region157: #{decoder_forward.1} parent=0
    _
  %s22 = ssub.s32 1, %s20
  %s23 = scalar_select 0, %s22, %s20
  $region1: #{decoder_forward.1} parent=0
    #allocation2 [shape = 'u8[8192]{0}', space=vmem, size = 0x2000, scoped, tag = 'input window, operand 4, single buffered']
    #allocation3 [shape = 's32[2]{0}', space=sflag, size = 0x8, scoped, tag = 'scoped memory for decoder_forward.1']
    #allocation4 [shape = 'u8[4096]{0}', space=vmem, size = 0x1000, scoped, tag = 'input window, operand 5, single buffered']
    #allocation5 [shape = 's32[1]{0}', space=sflag, size = 0x4, scoped, tag = 'scoped memory for decoder_forward.1']
    #allocation6 [shape = 'u8[4096]{0}', space=vmem, size = 0x1000, scoped, tag = 'input window, operand 6, single buffered']
    #allocation7 [shape = 'u8[4096]{0}', space=vmem, size = 0x1000, scoped, tag = 'input window, operand 9, single buffered']
    #allocation8 [shape = 's32[1]{0}', space=sflag, size = 0x4, scoped, tag = 'scoped memory for decoder_forward.1']
    #allocation9 [shape = 'u8[4096]{0}', space=vmem, size = 0x1000, scoped, tag = 'input window, operand 10, single buffered']
    #allocation10 [shape = 'u8[4096]{0}', space=vmem, size = 0x1000, scoped, tag = 'input window, operand 11, single buffered']
    #allocation11 [shape = 's32[1]{0}', space=sflag, size = 0x4, scoped, tag = 'scoped memory for decoder_forward.1']
    #allocation12 [shape = 'u8[2048]{0}', space=vmem, size = 0x800, scoped, tag = 'input window, operand 12, single buffered']
    #allocation13 [shape = 'u8[2048]{0}', space=vmem, size = 0x800, scoped, tag = 'input window, operand 13, single buffered']
    #allocation14 [shape = 's32[1]{0}', space=sflag, size = 0x4, scoped, tag = 'scoped memory for decoder_forward.1']
    #allocation15 [shape = 'u8[1048576]{0}', space=vmem, size = 0x100000, scoped, tag = 'input window, operand 14, single buffered']
    #allocation16 [shape = 'u8[2048]{0}', space=vmem, size = 0x800, scoped, tag = 'input window, operand 16, single buffered']
    #allocation17 [shape = 's32[1]{0}', space=sflag, size = 0x4, scoped, tag = 'scoped memory for decoder_forward.1']
    #allocation18 [shape = 'u8[2048]{0}', space=vmem, size = 0x800, scoped, tag = 'input window, operand 17, single buffered']
    #allocation19 [shape = 'u8[2048]{0}', space=vmem, size = 0x800, scoped, tag = 'input window, operand 18, single buffered']
    #allocation20 [shape = 's32[1]{0}', space=sflag, size = 0x4, scoped, tag = 'scoped memory for decoder_forward.1']
    %24 = vsyncpa [#allocation3], 0
    %25 = vsyncpa [#allocation5], 0
    %26 = vsyncpa [#allocation8], 0
    %27 = vsyncpa [#allocation11], 0
    %28 = vsyncpa [#allocation14], 0
    %29 = vsyncpa [#allocation17], 0
    %30 = vsyncpa [#allocation20], 0
    loop: start=0, step=1, limit=4
    $region2: #{decoder_forward.1} parent=1 // loop_pre_header
      _
    $region3: #{decoder_forward.1} parent=1 // loop_header
      %s32 = sphi 0, %s36
      %p33 = scmp.ge.s32.totalorder %s32, 4
      %s40 = sphi 0, %s40
      %s42 = sphi 0, %s40
      %s43 = sphi 0, %s42
      %s57 = sphi 0, %s43
      %s63 = sphi 0, %s65
      %s66 = sphi 0, %s63
      %s67 = sphi 0, %s66
      %s83 = sphi 0, %s67
      %s87 = sphi 0, %s87
      %s89 = sphi 0, %s87
      %s90 = sphi 0, %s89
      %s104 = sphi 0, %s90
      %s108 = sphi 0, %s108
      %s110 = sphi 0, %s108
      %s111 = sphi 0, %s110
      %s125 = sphi 0, %s111
      %s129 = sphi 0, %s129
      %s131 = sphi 0, %s129
      %s132 = sphi 0, %s131
      %s146 = sphi 0, %s132
      %s150 = sphi 0, %s150
      %s152 = sphi 0, %s150
      %s153 = sphi 0, %s152
      %s167 = sphi 0, %s153
      %s171 = sphi 0, %s171
      %s173 = sphi 0, %s171
      %s174 = sphi 0, %s173
      %s188 = sphi 0, %s174
      %s192 = sphi 0, %s192
      %s194 = sphi 0, %s192
      %s195 = sphi 0, %s194
      %s209 = sphi 0, %s195
      %s215 = sphi 0, %s217
      %s218 = sphi 0, %s215
      %s219 = sphi 0, %s218
      %s235 = sphi 0, %s219
      %s239 = sphi 0, %s239
      %s241 = sphi 0, %s239
      %s242 = sphi 0, %s241
      %s256 = sphi 0, %s242
      %s260 = sphi 0, %s260
      %s262 = sphi 0, %s260
      %s263 = sphi 0, %s262
      %s277 = sphi 0, %s263
      %s281 = sphi 0, %s281
      %s283 = sphi 0, %s281
      %s284 = sphi 0, %s283
      %s298 = sphi 0, %s284
      %s302 = sphi 0, %s302
      %s304 = sphi 0, %s302
      %s305 = sphi 0, %s304
      %s319 = sphi 0, %s305
      %s323 = sphi 0, %s323
      %s325 = sphi 0, %s323
      %s326 = sphi 0, %s325
      %s340 = sphi 0, %s326
      %s344 = sphi 0, %s344
      %s346 = sphi 0, %s344
      %s347 = sphi 0, %s346
      %s361 = sphi 0, %s347
      %s365 = sphi 0, %s365
      %s367 = sphi 0, %s365
      %s368 = sphi 0, %s367
      %s382 = sphi 0, %s368
      %s386 = sphi 0, %s386
      %s388 = sphi 0, %s386
      %s389 = sphi 0, %s388
      %s403 = sphi 0, %s389
      %s407 = sphi 0, %s407
      %s409 = sphi 0, %s407
      %s410 = sphi 0, %s409
      %s424 = sphi 0, %s410
      %s428 = sphi 0, %s428
      %s430 = sphi 0, %s428
      %s431 = sphi 0, %s430
      %s445 = sphi 0, %s431
      %s451 = sphi 0, %s453
      %s454 = sphi 0, %s451
      %s455 = sphi 0, %s454
      %s471 = sphi 0, %s455
    $region4: #{decoder_forward.1} parent=1 // loop_header_branch
      %35 = sbr.rel (%p33) target = $region8
    $region5: #{decoder_forward.1} parent=1 // loop_body
      %s37 = ssub.s32 %s32, 1
      %s38 = ssub.s32 %s32, 2
      %s39 = sadd.s32 %s32, 1
      %s41 = sadd.s32 %s40, 1
      %p44 = scmp.eq.s32.totalorder %s32, 1
      %p45 = scmp.ne.s32.totalorder %s40, %s42
      %p46 = scmp.eq.s32.totalorder %s32, 0
      %p47 = por %p45, %p46
      %p48 = scmp.ne.s32.totalorder %s40, %s42
      %p49 = scmp.eq.s32.totalorder %s37, 1
      %p50 = por %p48, %p49
      %p51 = scmp.ne.s32.totalorder %s42, %s43
      %p52 = scmp.eq.s32.totalorder %s37, 0
      %p53 = por %p51, %p52
      %p54 = scmp.ne.s32.totalorder %s42, %s43
      %p55 = scmp.eq.s32.totalorder %s38, 1
      %p56 = por %p54, %p55
      %p58 = scmp.ne.s32.totalorder %s43, %s57
      %p59 = scmp.eq.s32.totalorder %s38, 0
      %p60 = por %p58, %p59
      %s61 = ssub.s32 %s32, %s39
      %p62 = scmp.eq.s32.totalorder %s61, 0
      %s64 = sadd.s32 %s63, 1
      %s65 = scalar_select %p62, %s63, %s64
      %p68 = pneg %p62
      %p69 = scmp.eq.s32.totalorder %s32, 1
      %p70 = por %p68, %p69
      %p71 = scmp.ne.s32.totalorder %s63, %s66
      %p72 = scmp.eq.s32.totalorder %s32, 0
      %p73 = por %p71, %p72
      %p74 = scmp.ne.s32.totalorder %s63, %s66
      %p75 = scmp.eq.s32.totalorder %s37, 1
      %p76 = por %p74, %p75
      %p77 = scmp.ne.s32.totalorder %s66, %s67
      %p78 = scmp.eq.s32.totalorder %s37, 0
      %p79 = por %p77, %p78
      %p80 = scmp.ne.s32.totalorder %s66, %s67
      %p81 = scmp.eq.s32.totalorder %s38, 1
      %p82 = por %p80, %p81
      %p84 = scmp.ne.s32.totalorder %s67, %s83
      %p85 = scmp.eq.s32.totalorder %s38, 0
      %p86 = por %p84, %p85
      %s88 = sadd.s32 %s87, 1
      %p91 = scmp.eq.s32.totalorder %s32, 1
      %p92 = scmp.ne.s32.totalorder %s87, %s89
      %p93 = scmp.eq.s32.totalorder %s32, 0
      %p94 = por %p92, %p93
      %p95 = scmp.ne.s32.totalorder %s87, %s89
      %p96 = scmp.eq.s32.totalorder %s37, 1
      %p97 = por %p95, %p96
      %p98 = scmp.ne.s32.totalorder %s89, %s90
      %p99 = scmp.eq.s32.totalorder %s37, 0
      %p100 = por %p98, %p99
      %p101 = scmp.ne.s32.totalorder %s89, %s90
      %p102 = scmp.eq.s32.totalorder %s38, 1
      %p103 = por %p101, %p102
      %p105 = scmp.ne.s32.totalorder %s90, %s104
      %p106 = scmp.eq.s32.totalorder %s38, 0
      %p107 = por %p105, %p106
      %s109 = sadd.s32 %s108, 1
      %p112 = scmp.eq.s32.totalorder %s32, 1
      %p113 = scmp.ne.s32.totalorder %s108, %s110
      %p114 = scmp.eq.s32.totalorder %s32, 0
      %p115 = por %p113, %p114
      %p116 = scmp.ne.s32.totalorder %s108, %s110
      %p117 = scmp.eq.s32.totalorder %s37, 1
      %p118 = por %p116, %p117
      %p119 = scmp.ne.s32.totalorder %s110, %s111
      %p120 = scmp.eq.s32.totalorder %s37, 0
      %p121 = por %p119, %p120
      %p122 = scmp.ne.s32.totalorder %s110, %s111
      %p123 = scmp.eq.s32.totalorder %s38, 1
      %p124 = por %p122, %p123
      %p126 = scmp.ne.s32.totalorder %s111, %s125
      %p127 = scmp.eq.s32.totalorder %s38, 0
      %p128 = por %p126, %p127
      %s130 = sadd.s32 %s129, 1
      %p133 = scmp.eq.s32.totalorder %s32, 1
      %p134 = scmp.ne.s32.totalorder %s129, %s131
      %p135 = scmp.eq.s32.totalorder %s32, 0
      %p136 = por %p134, %p135
      %p137 = scmp.ne.s32.totalorder %s129, %s131
      %p138 = scmp.eq.s32.totalorder %s37, 1
      %p139 = por %p137, %p138
      %p140 = scmp.ne.s32.totalorder %s131, %s132
      %p141 = scmp.eq.s32.totalorder %s37, 0
      %p142 = por %p140, %p141
      %p143 = scmp.ne.s32.totalorder %s131, %s132
      %p144 = scmp.eq.s32.totalorder %s38, 1
      %p145 = por %p143, %p144
      %p147 = scmp.ne.s32.totalorder %s132, %s146
      %p148 = scmp.eq.s32.totalorder %s38, 0
      %p149 = por %p147, %p148
      %s151 = sadd.s32 %s150, 1
      %p154 = scmp.eq.s32.totalorder %s32, 1
      %p155 = scmp.ne.s32.totalorder %s150, %s152
      %p156 = scmp.eq.s32.totalorder %s32, 0
      %p157 = por %p155, %p156
      %p158 = scmp.ne.s32.totalorder %s150, %s152
      %p159 = scmp.eq.s32.totalorder %s37, 1
      %p160 = por %p158, %p159
      %p161 = scmp.ne.s32.totalorder %s152, %s153
      %p162 = scmp.eq.s32.totalorder %s37, 0
      %p163 = por %p161, %p162
      %p164 = scmp.ne.s32.totalorder %s152, %s153
      %p165 = scmp.eq.s32.totalorder %s38, 1
      %p166 = por %p164, %p165
      %p168 = scmp.ne.s32.totalorder %s153, %s167
      %p169 = scmp.eq.s32.totalorder %s38, 0
      %p170 = por %p168, %p169
      %s172 = sadd.s32 %s171, 1
      %p175 = scmp.eq.s32.totalorder %s32, 1
      %p176 = scmp.ne.s32.totalorder %s171, %s173
      %p177 = scmp.eq.s32.totalorder %s32, 0
      %p178 = por %p176, %p177
      %p179 = scmp.ne.s32.totalorder %s171, %s173
      %p180 = scmp.eq.s32.totalorder %s37, 1
      %p181 = por %p179, %p180
      %p182 = scmp.ne.s32.totalorder %s173, %s174
      %p183 = scmp.eq.s32.totalorder %s37, 0
      %p184 = por %p182, %p183
      %p185 = scmp.ne.s32.totalorder %s173, %s174
      %p186 = scmp.eq.s32.totalorder %s38, 1
      %p187 = por %p185, %p186
      %p189 = scmp.ne.s32.totalorder %s174, %s188
      %p190 = scmp.eq.s32.totalorder %s38, 0
      %p191 = por %p189, %p190
      %s193 = sadd.s32 %s192, 1
      %p196 = scmp.eq.s32.totalorder %s32, 1
      %p197 = scmp.ne.s32.totalorder %s192, %s194
      %p198 = scmp.eq.s32.totalorder %s32, 0
      %p199 = por %p197, %p198
      %p200 = scmp.ne.s32.totalorder %s192, %s194
      %p201 = scmp.eq.s32.totalorder %s37, 1
      %p202 = por %p200, %p201
      %p203 = scmp.ne.s32.totalorder %s194, %s195
      %p204 = scmp.eq.s32.totalorder %s37, 0
      %p205 = por %p203, %p204
      %p206 = scmp.ne.s32.totalorder %s194, %s195
      %p207 = scmp.eq.s32.totalorder %s38, 1
      %p208 = por %p206, %p207
      %p210 = scmp.ne.s32.totalorder %s195, %s209
      %p211 = scmp.eq.s32.totalorder %s38, 0
      %p212 = por %p210, %p211
      %s213 = ssub.s32 %s32, %s39
      %p214 = scmp.eq.s32.totalorder %s213, 0
      %s216 = sadd.s32 %s215, 1
      %s217 = scalar_select %p214, %s215, %s216
      %p220 = pneg %p214
      %p221 = scmp.eq.s32.totalorder %s32, 1
      %p222 = por %p220, %p221
      %p223 = scmp.ne.s32.totalorder %s215, %s218
      %p224 = scmp.eq.s32.totalorder %s32, 0
      %p225 = por %p223, %p224
      %p226 = scmp.ne.s32.totalorder %s215, %s218
      %p227 = scmp.eq.s32.totalorder %s37, 1
      %p228 = por %p226, %p227
      %p229 = scmp.ne.s32.totalorder %s218, %s219
      %p230 = scmp.eq.s32.totalorder %s37, 0
      %p231 = por %p229, %p230
      %p232 = scmp.ne.s32.totalorder %s218, %s219
      %p233 = scmp.eq.s32.totalorder %s38, 1
      %p234 = por %p232, %p233
      %p236 = scmp.ne.s32.totalorder %s219, %s235
      %p237 = scmp.eq.s32.totalorder %s38, 0
      %p238 = por %p236, %p237
      %s240 = sadd.s32 %s239, 1
      %p243 = scmp.eq.s32.totalorder %s32, 1
      %p244 = scmp.ne.s32.totalorder %s239, %s241
      %p245 = scmp.eq.s32.totalorder %s32, 0
      %p246 = por %p244, %p245
      %p247 = scmp.ne.s32.totalorder %s239, %s241
      %p248 = scmp.eq.s32.totalorder %s37, 1
      %p249 = por %p247, %p248
      %p250 = scmp.ne.s32.totalorder %s241, %s242
      %p251 = scmp.eq.s32.totalorder %s37, 0
      %p252 = por %p250, %p251
      %p253 = scmp.ne.s32.totalorder %s241, %s242
      %p254 = scmp.eq.s32.totalorder %s38, 1
      %p255 = por %p253, %p254
      %p257 = scmp.ne.s32.totalorder %s242, %s256
      %p258 = scmp.eq.s32.totalorder %s38, 0
      %p259 = por %p257, %p258
      %s261 = sadd.s32 %s260, 1
      %p264 = scmp.eq.s32.totalorder %s32, 1
      %p265 = scmp.ne.s32.totalorder %s260, %s262
      %p266 = scmp.eq.s32.totalorder %s32, 0
      %p267 = por %p265, %p266
      %p268 = scmp.ne.s32.totalorder %s260, %s262
      %p269 = scmp.eq.s32.totalorder %s37, 1
      %p270 = por %p268, %p269
      %p271 = scmp.ne.s32.totalorder %s262, %s263
      %p272 = scmp.eq.s32.totalorder %s37, 0
      %p273 = por %p271, %p272
      %p274 = scmp.ne.s32.totalorder %s262, %s263
      %p275 = scmp.eq.s32.totalorder %s38, 1
      %p276 = por %p274, %p275
      %p278 = scmp.ne.s32.totalorder %s263, %s277
      %p279 = scmp.eq.s32.totalorder %s38, 0
      %p280 = por %p278, %p279
      %s282 = sadd.s32 %s281, 1
      %p285 = scmp.eq.s32.totalorder %s32, 1
      %p286 = scmp.ne.s32.totalorder %s281, %s283
      %p287 = scmp.eq.s32.totalorder %s32, 0
      %p288 = por %p286, %p287
      %p289 = scmp.ne.s32.totalorder %s281, %s283
      %p290 = scmp.eq.s32.totalorder %s37, 1
      %p291 = por %p289, %p290
      %p292 = scmp.ne.s32.totalorder %s283, %s284
      %p293 = scmp.eq.s32.totalorder %s37, 0
      %p294 = por %p292, %p293
      %p295 = scmp.ne.s32.totalorder %s283, %s284
      %p296 = scmp.eq.s32.totalorder %s38, 1
      %p297 = por %p295, %p296
      %p299 = scmp.ne.s32.totalorder %s284, %s298
      %p300 = scmp.eq.s32.totalorder %s38, 0
      %p301 = por %p299, %p300
      %s303 = sadd.s32 %s302, 1
      %p306 = scmp.eq.s32.totalorder %s32, 1
      %p307 = scmp.ne.s32.totalorder %s302, %s304
      %p308 = scmp.eq.s32.totalorder %s32, 0
      %p309 = por %p307, %p308
      %p310 = scmp.ne.s32.totalorder %s302, %s304
      %p311 = scmp.eq.s32.totalorder %s37, 1
      %p312 = por %p310, %p311
      %p313 = scmp.ne.s32.totalorder %s304, %s305
      %p314 = scmp.eq.s32.totalorder %s37, 0
      %p315 = por %p313, %p314
      %p316 = scmp.ne.s32.totalorder %s304, %s305
      %p317 = scmp.eq.s32.totalorder %s38, 1
      %p318 = por %p316, %p317
      %p320 = scmp.ne.s32.totalorder %s305, %s319
      %p321 = scmp.eq.s32.totalorder %s38, 0
      %p322 = por %p320, %p321
      %s324 = sadd.s32 %s323, 1
      %p327 = scmp.eq.s32.totalorder %s32, 1
      %p328 = scmp.ne.s32.totalorder %s323, %s325
      %p329 = scmp.eq.s32.totalorder %s32, 0
      %p330 = por %p328, %p329
      %p331 = scmp.ne.s32.totalorder %s323, %s325
      %p332 = scmp.eq.s32.totalorder %s37, 1
      %p333 = por %p331, %p332
      %p334 = scmp.ne.s32.totalorder %s325, %s326
      %p335 = scmp.eq.s32.totalorder %s37, 0
      %p336 = por %p334, %p335
      %p337 = scmp.ne.s32.totalorder %s325, %s326
      %p338 = scmp.eq.s32.totalorder %s38, 1
      %p339 = por %p337, %p338
      %p341 = scmp.ne.s32.totalorder %s326, %s340
      %p342 = scmp.eq.s32.totalorder %s38, 0
      %p343 = por %p341, %p342
      %s345 = sadd.s32 %s344, 1
      %p348 = scmp.eq.s32.totalorder %s32, 1
      %p349 = scmp.ne.s32.totalorder %s344, %s346
      %p350 = scmp.eq.s32.totalorder %s32, 0
      %p351 = por %p349, %p350
      %p352 = scmp.ne.s32.totalorder %s344, %s346
      %p353 = scmp.eq.s32.totalorder %s37, 1
      %p354 = por %p352, %p353
      %p355 = scmp.ne.s32.totalorder %s346, %s347
      %p356 = scmp.eq.s32.totalorder %s37, 0
      %p357 = por %p355, %p356
      %p358 = scmp.ne.s32.totalorder %s346, %s347
      %p359 = scmp.eq.s32.totalorder %s38, 1
      %p360 = por %p358, %p359
      %p362 = scmp.ne.s32.totalorder %s347, %s361
      %p363 = scmp.eq.s32.totalorder %s38, 0
      %p364 = por %p362, %p363
      %s366 = sadd.s32 %s365, 1
      %p369 = scmp.eq.s32.totalorder %s32, 1
      %p370 = scmp.ne.s32.totalorder %s365, %s367
      %p371 = scmp.eq.s32.totalorder %s32, 0
      %p372 = por %p370, %p371
      %p373 = scmp.ne.s32.totalorder %s365, %s367
      %p374 = scmp.eq.s32.totalorder %s37, 1
      %p375 = por %p373, %p374
      %p376 = scmp.ne.s32.totalorder %s367, %s368
      %p377 = scmp.eq.s32.totalorder %s37, 0
      %p378 = por %p376, %p377
      %p379 = scmp.ne.s32.totalorder %s367, %s368
      %p380 = scmp.eq.s32.totalorder %s38, 1
      %p381 = por %p379, %p380
      %p383 = scmp.ne.s32.totalorder %s368, %s382
      %p384 = scmp.eq.s32.totalorder %s38, 0
      %p385 = por %p383, %p384
      %s387 = sadd.s32 %s386, 1
      %p390 = scmp.eq.s32.totalorder %s32, 1
      %p391 = scmp.ne.s32.totalorder %s386, %s388
      %p392 = scmp.eq.s32.totalorder %s32, 0
      %p393 = por %p391, %p392
      %p394 = scmp.ne.s32.totalorder %s386, %s388
      %p395 = scmp.eq.s32.totalorder %s37, 1
      %p396 = por %p394, %p395
      %p397 = scmp.ne.s32.totalorder %s388, %s389
      %p398 = scmp.eq.s32.totalorder %s37, 0
      %p399 = por %p397, %p398
      %p400 = scmp.ne.s32.totalorder %s388, %s389
      %p401 = scmp.eq.s32.totalorder %s38, 1
      %p402 = por %p400, %p401
      %p404 = scmp.ne.s32.totalorder %s389, %s403
      %p405 = scmp.eq.s32.totalorder %s38, 0
      %p406 = por %p404, %p405
      %s408 = sadd.s32 %s407, 1
      %p411 = scmp.eq.s32.totalorder %s32, 1
      %p412 = scmp.ne.s32.totalorder %s407, %s409
      %p413 = scmp.eq.s32.totalorder %s32, 0
      %p414 = por %p412, %p413
      %p415 = scmp.ne.s32.totalorder %s407, %s409
      %p416 = scmp.eq.s32.totalorder %s37, 1
      %p417 = por %p415, %p416
      %p418 = scmp.ne.s32.totalorder %s409, %s410
      %p419 = scmp.eq.s32.totalorder %s37, 0
      %p420 = por %p418, %p419
      %p421 = scmp.ne.s32.totalorder %s409, %s410
      %p422 = scmp.eq.s32.totalorder %s38, 1
      %p423 = por %p421, %p422
      %p425 = scmp.ne.s32.totalorder %s410, %s424
      %p426 = scmp.eq.s32.totalorder %s38, 0
      %p427 = por %p425, %p426
      %s429 = sadd.s32 %s428, 1
      %p432 = scmp.eq.s32.totalorder %s32, 1
      %p433 = scmp.ne.s32.totalorder %s428, %s430
      %p434 = scmp.eq.s32.totalorder %s32, 0
      %p435 = por %p433, %p434
      %p436 = scmp.ne.s32.totalorder %s428, %s430
      %p437 = scmp.eq.s32.totalorder %s37, 1
      %p438 = por %p436, %p437
      %p439 = scmp.ne.s32.totalorder %s430, %s431
      %p440 = scmp.eq.s32.totalorder %s37, 0
      %p441 = por %p439, %p440
      %p442 = scmp.ne.s32.totalorder %s430, %s431
      %p443 = scmp.eq.s32.totalorder %s38, 1
      %p444 = por %p442, %p443
      %p446 = scmp.ne.s32.totalorder %s431, %s445
      %p447 = scmp.eq.s32.totalorder %s38, 0
      %p448 = por %p446, %p447
      %s449 = ssub.s32 %s32, %s39
      %p450 = scmp.eq.s32.totalorder %s449, 0
      %s452 = sadd.s32 %s451, 1
      %s453 = scalar_select %p450, %s451, %s452
      %p456 = pneg %p450
      %p457 = scmp.eq.s32.totalorder %s32, 1
      %p458 = por %p456, %p457
      %p459 = scmp.ne.s32.totalorder %s451, %s454
      %p460 = scmp.eq.s32.totalorder %s32, 0
      %p461 = por %p459, %p460
      %p462 = scmp.ne.s32.totalorder %s451, %s454
      %p463 = scmp.eq.s32.totalorder %s37, 1
      %p464 = por %p462, %p463
      %p465 = scmp.ne.s32.totalorder %s454, %s455
      %p466 = scmp.eq.s32.totalorder %s37, 0
      %p467 = por %p465, %p466
      %p468 = scmp.ne.s32.totalorder %s454, %s455
      %p469 = scmp.eq.s32.totalorder %s38, 1
      %p470 = por %p468, %p469
      %p472 = scmp.ne.s32.totalorder %s455, %s471
      %p473 = scmp.eq.s32.totalorder %s38, 0
      %p474 = por %p472, %p473
      %p475 = scmp.le.s32.totalorder 1, %s32
      %p476 = scmp.lt.s32.totalorder %s32, 3
      %p477 = pnand %p475, %p476
      %p478 = pneg %p477
      // Predicated region
      $region9: #{decoder_forward.1} parent=5 // pred_check
        _
      $region10: #{decoder_forward.1} parent=5 // pred_check_branch
        %480 = sbr.rel (%p477) target = $region12
      $region11: #{decoder_forward.1} parent=5 // pred_region
        %s481 = ssub.s32 %s32, 1
        // Predicated region
        $region13: #{decoder_forward.1} parent=11 // pred_check
          %p482 = pneg %p53
        $region14: #{decoder_forward.1} parent=11 // pred_check_branch
          %484 = sbr.rel (%p482) target = $region16
        $region15: #{decoder_forward.1} parent=11 // pred_region
          _
        $region16: #{decoder_forward.1} parent=11 // pred_fallthru
          _
        // Predicated region
        $region17: #{decoder_forward.1} parent=11 // pred_check
          %p485 = pneg %p100
        $region18: #{decoder_forward.1} parent=11 // pred_check_branch
          %487 = sbr.rel (%p485) target = $region20
        $region19: #{decoder_forward.1} parent=11 // pred_region
          _
        $region20: #{decoder_forward.1} parent=11 // pred_fallthru
          _
        // Predicated region
        $region21: #{decoder_forward.1} parent=11 // pred_check
          %p488 = pneg %p121
        $region22: #{decoder_forward.1} parent=11 // pred_check_branch
          %490 = sbr.rel (%p488) target = $region24
        $region23: #{decoder_forward.1} parent=11 // pred_region
          _
        $region24: #{decoder_forward.1} parent=11 // pred_fallthru
          _
        // Predicated region
        $region25: #{decoder_forward.1} parent=11 // pred_check
          %p491 = pneg %p142
        $region26: #{decoder_forward.1} parent=11 // pred_check_branch
          %493 = sbr.rel (%p491) target = $region28
        $region27: #{decoder_forward.1} parent=11 // pred_region
          %s495 = ssub.s32 256, 256
          %496 = vsyncadd [#allocation3], %s495
          %s497 = sshll.u32 [#allocation2], 4
          %s498 = int_to_ptr.vmem [resolvable:$true] %s497
          %503 = dma.hbm_to_vmem [thread:$0]  %s4, 256, %s498, [#allocation3], 128, 128, 8
        $region28: #{decoder_forward.1} parent=11 // pred_fallthru
          _
        // Predicated region
        $region29: #{decoder_forward.1} parent=11 // pred_check
          %p504 = pneg %p163
        $region30: #{decoder_forward.1} parent=11 // pred_check_branch
          %506 = sbr.rel (%p504) target = $region32
        $region31: #{decoder_forward.1} parent=11 // pred_region
          %s508 = ssub.s32 128, 128
          %509 = vsyncadd [#allocation5], %s508
          %s511 = sshll.u32 [#allocation4], 4
          %s512 = int_to_ptr.vmem [resolvable:$true] %s511
          %514 = dma.hbm_to_vmem [thread:$0]  %s5, 128, %s512, [#allocation5]
        $region32: #{decoder_forward.1} parent=11 // pred_fallthru
          _
        // Predicated region
        $region33: #{decoder_forward.1} parent=11 // pred_check
          %p515 = pneg %p184
        $region34: #{decoder_forward.1} parent=11 // pred_check_branch
          %517 = sbr.rel (%p515) target = $region36
        $region35: #{decoder_forward.1} parent=11 // pred_region
          %s519 = ssub.s32 128, 128
          %520 = vsyncadd [#allocation5], %s519
          %s522 = sshll.u32 [#allocation6], 4
          %s523 = int_to_ptr.vmem [resolvable:$true] %s522
          %525 = dma.hbm_to_vmem [thread:$0]  %s6, 128, %s523, [#allocation5]
        $region36: #{decoder_forward.1} parent=11 // pred_fallthru
          _
        // Predicated region
        $region37: #{decoder_forward.1} parent=11 // pred_check
          %p526 = pneg %p205
        $region38: #{decoder_forward.1} parent=11 // pred_check_branch
          %528 = sbr.rel (%p526) target = $region40
        $region39: #{decoder_forward.1} parent=11 // pred_region
          _
        $region40: #{decoder_forward.1} parent=11 // pred_fallthru
          _
        // Predicated region
        $region41: #{decoder_forward.1} parent=11 // pred_check
          %p529 = pneg %p252
        $region42: #{decoder_forward.1} parent=11 // pred_check_branch
          %531 = sbr.rel (%p529) target = $region44
        $region43: #{decoder_forward.1} parent=11 // pred_region
          %s533 = ssub.s32 128, 128
          %534 = vsyncadd [#allocation8], %s533
          %s536 = sshll.u32 [#allocation7], 4
          %s537 = int_to_ptr.vmem [resolvable:$true] %s536
          %539 = dma.hbm_to_vmem [thread:$0]  %s9, 128, %s537, [#allocation8]
        $region44: #{decoder_forward.1} parent=11 // pred_fallthru
          _
        // Predicated region
        $region45: #{decoder_forward.1} parent=11 // pred_check
          %p540 = pneg %p273
        $region46: #{decoder_forward.1} parent=11 // pred_check_branch
          %542 = sbr.rel (%p540) target = $region48
        $region47: #{decoder_forward.1} parent=11 // pred_region
          %s544 = ssub.s32 128, 128
          %545 = vsyncadd [#allocation8], %s544
          %s547 = sshll.u32 [#allocation9], 4
          %s548 = int_to_ptr.vmem [resolvable:$true] %s547
          %550 = dma.hbm_to_vmem [thread:$0]  %s10, 128, %s548, [#allocation8]
        $region48: #{decoder_forward.1} parent=11 // pred_fallthru
          _
        // Predicated region
        $region49: #{decoder_forward.1} parent=11 // pred_check
          %p551 = pneg %p294
        $region50: #{decoder_forward.1} parent=11 // pred_check_branch
          %553 = sbr.rel (%p551) target = $region52
        $region51: #{decoder_forward.1} parent=11 // pred_region
          %s555 = ssub.s32 128, 128
          %556 = vsyncadd [#allocation11], %s555
          %s558 = sshll.u32 [#allocation10], 4
          %s559 = int_to_ptr.vmem [resolvable:$true] %s558
          %561 = dma.hbm_to_vmem [thread:$0]  %s11, 128, %s559, [#allocation11]
        $region52: #{decoder_forward.1} parent=11 // pred_fallthru
          _
        // Predicated region
        $region53: #{decoder_forward.1} parent=11 // pred_check
          %p562 = pneg %p315
        $region54: #{decoder_forward.1} parent=11 // pred_check_branch
          %564 = sbr.rel (%p562) target = $region56
        $region55: #{decoder_forward.1} parent=11 // pred_region
          %s566 = ssub.s32 64, 64
          %567 = vsyncadd [#allocation11], %s566
          %s569 = sshll.u32 [#allocation12], 4
          %s570 = int_to_ptr.vmem [resolvable:$true] %s569
          %572 = dma.hbm_to_vmem [thread:$0]  %s12, 64, %s570, [#allocation11]
        $region56: #{decoder_forward.1} parent=11 // pred_fallthru
          _
        // Predicated region
        $region57: #{decoder_forward.1} parent=11 // pred_check
          %p573 = pneg %p336
        $region58: #{decoder_forward.1} parent=11 // pred_check_branch
          %575 = sbr.rel (%p573) target = $region60
        $region59: #{decoder_forward.1} parent=11 // pred_region
          %s577 = ssub.s32 64, 64
          %578 = vsyncadd [#allocation14], %s577
          %s580 = sshll.u32 [#allocation13], 4
          %s581 = int_to_ptr.vmem [resolvable:$true] %s580
          %583 = dma.hbm_to_vmem [thread:$0]  %s13, 64, %s581, [#allocation14]
        $region60: #{decoder_forward.1} parent=11 // pred_fallthru
          _
        // Predicated region
        $region61: #{decoder_forward.1} parent=11 // pred_check
          %p584 = pneg %p357
        $region62: #{decoder_forward.1} parent=11 // pred_check_branch
          %586 = sbr.rel (%p584) target = $region64
        $region63: #{decoder_forward.1} parent=11 // pred_region
          %s588 = ssub.s32 32768, 32768
          %589 = vsyncadd [#allocation14], %s588
          %s590 = sshll.u32 [#allocation15], 4
          %s591 = int_to_ptr.vmem [resolvable:$true] %s590
          %596 = dma.hbm_to_vmem [thread:$0]  %s14, 32768, %s591, [#allocation14], 1024, 1024, 64
        $region64: #{decoder_forward.1} parent=11 // pred_fallthru
          _
        // Predicated region
        $region65: #{decoder_forward.1} parent=11 // pred_check
          %p597 = pneg %p378
        $region66: #{decoder_forward.1} parent=11 // pred_check_branch
          %599 = sbr.rel (%p597) target = $region68
        $region67: #{decoder_forward.1} parent=11 // pred_region
          _
        $region68: #{decoder_forward.1} parent=11 // pred_fallthru
          _
        // Predicated region
        $region69: #{decoder_forward.1} parent=11 // pred_check
          %p600 = pneg %p399
        $region70: #{decoder_forward.1} parent=11 // pred_check_branch
          %602 = sbr.rel (%p600) target = $region72
        $region71: #{decoder_forward.1} parent=11 // pred_region
          %s604 = ssub.s32 64, 64
          %605 = vsyncadd [#allocation17], %s604
          %s607 = sshll.u32 [#allocation16], 4
          %s608 = int_to_ptr.vmem [resolvable:$true] %s607
          %610 = dma.hbm_to_vmem [thread:$0]  %s16, 64, %s608, [#allocation17]
        $region72: #{decoder_forward.1} parent=11 // pred_fallthru
          _
        // Predicated region
        $region73: #{decoder_forward.1} parent=11 // pred_check
          %p611 = pneg %p420
        $region74: #{decoder_forward.1} parent=11 // pred_check_branch
          %613 = sbr.rel (%p611) target = $region76
        $region75: #{decoder_forward.1} parent=11 // pred_region
          %s615 = ssub.s32 64, 64
          %616 = vsyncadd [#allocation17], %s615
          %s618 = sshll.u32 [#allocation18], 4
          %s619 = int_to_ptr.vmem [resolvable:$true] %s618
          %621 = dma.hbm_to_vmem [thread:$0]  %s17, 64, %s619, [#allocation17]
        $region76: #{decoder_forward.1} parent=11 // pred_fallthru
          _
        // Predicated region
        $region77: #{decoder_forward.1} parent=11 // pred_check
          %p622 = pneg %p441
        $region78: #{decoder_forward.1} parent=11 // pred_check_branch
          %624 = sbr.rel (%p622) target = $region80
        $region79: #{decoder_forward.1} parent=11 // pred_region
          %s626 = ssub.s32 64, 64
          %627 = vsyncadd [#allocation20], %s626
          %s629 = sshll.u32 [#allocation19], 4
          %s630 = int_to_ptr.vmem [resolvable:$true] %s629
          %632 = dma.hbm_to_vmem [thread:$0]  %s18, 64, %s630, [#allocation20]
        $region80: #{decoder_forward.1} parent=11 // pred_fallthru
          _
      $region12: #{decoder_forward.1} parent=5 // pred_fallthru
        _
      %p633 = scmp.lt.s32.totalorder %s32, 2
      // Predicated region
      $region81: #{decoder_forward.1} parent=5 // pred_check
        %p634 = pneg %p633
      $region82: #{decoder_forward.1} parent=5 // pred_check_branch
        %636 = sbr.rel (%p634) target = $region84
      $region83: #{decoder_forward.1} parent=5 // pred_region
        // Predicated region
        $region85: #{decoder_forward.1} parent=83 // pred_check
          %p637 = pneg %p73
        $region86: #{decoder_forward.1} parent=83 // pred_check_branch
          %639 = sbr.rel (%p637) target = $region88
        $region87: #{decoder_forward.1} parent=83 // pred_region
          %p640 = scmp.lt.s32.totalorder %s32, 1
          %s641 = scalar_select %p640, %s32, 1
          %s642 = smul.addr %s641, 4
          %s643 = smul.addr %s642, 8
          %s644 = scalar_lea.vmem %s1, %s643
        $region88: #{decoder_forward.1} parent=83 // pred_fallthru
          _
        // Predicated region
        $region89: #{decoder_forward.1} parent=83 // pred_check
          %p645 = pneg %p225
        $region90: #{decoder_forward.1} parent=83 // pred_check_branch
          %647 = sbr.rel (%p645) target = $region92
        $region91: #{decoder_forward.1} parent=83 // pred_region
          %p648 = scmp.lt.s32.totalorder %s32, 1
          %s649 = scalar_select %p648, %s32, 1
          %s650 = smul.addr %s649, 2
          %s651 = smul.addr %s650, 8
          %s652 = scalar_lea.vmem %s8, %s651
        $region92: #{decoder_forward.1} parent=83 // pred_fallthru
          _
      $region84: #{decoder_forward.1} parent=5 // pred_fallthru
        _
      %p653 = scmp.le.s32.totalorder 1, %s32
      %p654 = scmp.lt.s32.totalorder %s32, 3
      %p655 = pnand %p653, %p654
      %p656 = pneg %p655
      // Predicated region
      $region93: #{decoder_forward.1} parent=5 // pred_check
        _
      $region94: #{decoder_forward.1} parent=5 // pred_check_branch
        %658 = sbr.rel (%p655) target = $region96
      $region95: #{decoder_forward.1} parent=5 // pred_region
        %s659 = ssub.s32 %s32, 1
        // Predicated region
        $region97: #{decoder_forward.1} parent=95 // pred_check
          %p660 = pneg %p142
        $region98: #{decoder_forward.1} parent=95 // pred_check_branch
          %662 = sbr.rel (%p660) target = $region100
        $region99: #{decoder_forward.1} parent=95 // pred_region
          %663 = dma.done [#allocation3], 256
        $region100: #{decoder_forward.1} parent=95 // pred_fallthru
          _
        // Predicated region
        $region101: #{decoder_forward.1} parent=95 // pred_check
          %p664 = pneg %p163
        $region102: #{decoder_forward.1} parent=95 // pred_check_branch
          %666 = sbr.rel (%p664) target = $region104
        $region103: #{decoder_forward.1} parent=95 // pred_region
          %667 = dma.done [#allocation5], 128
        $region104: #{decoder_forward.1} parent=95 // pred_fallthru
          _
        // Predicated region
        $region105: #{decoder_forward.1} parent=95 // pred_check
          %p668 = pneg %p184
        $region106: #{decoder_forward.1} parent=95 // pred_check_branch
          %670 = sbr.rel (%p668) target = $region108
        $region107: #{decoder_forward.1} parent=95 // pred_region
          %671 = dma.done [#allocation5], 128
        $region108: #{decoder_forward.1} parent=95 // pred_fallthru
          _
        // Predicated region
        $region109: #{decoder_forward.1} parent=95 // pred_check
          %p672 = pneg %p252
        $region110: #{decoder_forward.1} parent=95 // pred_check_branch
          %674 = sbr.rel (%p672) target = $region112
        $region111: #{decoder_forward.1} parent=95 // pred_region
          %675 = dma.done [#allocation8], 128
        $region112: #{decoder_forward.1} parent=95 // pred_fallthru
          _
        // Predicated region
        $region113: #{decoder_forward.1} parent=95 // pred_check
          %p676 = pneg %p273
        $region114: #{decoder_forward.1} parent=95 // pred_check_branch
          %678 = sbr.rel (%p676) target = $region116
        $region115: #{decoder_forward.1} parent=95 // pred_region
          %679 = dma.done [#allocation8], 128
        $region116: #{decoder_forward.1} parent=95 // pred_fallthru
          _
        // Predicated region
        $region117: #{decoder_forward.1} parent=95 // pred_check
          %p680 = pneg %p294
        $region118: #{decoder_forward.1} parent=95 // pred_check_branch
          %682 = sbr.rel (%p680) target = $region120
        $region119: #{decoder_forward.1} parent=95 // pred_region
          %683 = dma.done [#allocation11], 128
        $region120: #{decoder_forward.1} parent=95 // pred_fallthru
          _
        // Predicated region
        $region121: #{decoder_forward.1} parent=95 // pred_check
          %p684 = pneg %p315
        $region122: #{decoder_forward.1} parent=95 // pred_check_branch
          %686 = sbr.rel (%p684) target = $region124
        $region123: #{decoder_forward.1} parent=95 // pred_region
          %687 = dma.done [#allocation11], 64
        $region124: #{decoder_forward.1} parent=95 // pred_fallthru
          _
        // Predicated region
        $region125: #{decoder_forward.1} parent=95 // pred_check
          %p688 = pneg %p336
        $region126: #{decoder_forward.1} parent=95 // pred_check_branch
          %690 = sbr.rel (%p688) target = $region128
        $region127: #{decoder_forward.1} parent=95 // pred_region
          %691 = dma.done [#allocation14], 64
        $region128: #{decoder_forward.1} parent=95 // pred_fallthru
          _
        // Predicated region
        $region129: #{decoder_forward.1} parent=95 // pred_check
          %p692 = pneg %p357
        $region130: #{decoder_forward.1} parent=95 // pred_check_branch
          %694 = sbr.rel (%p692) target = $region132
        $region131: #{decoder_forward.1} parent=95 // pred_region
          %695 = dma.done [#allocation14], 32768
        $region132: #{decoder_forward.1} parent=95 // pred_fallthru
          _
        // Predicated region
        $region133: #{decoder_forward.1} parent=95 // pred_check
          %p696 = pneg %p399
        $region134: #{decoder_forward.1} parent=95 // pred_check_branch
          %698 = sbr.rel (%p696) target = $region136
        $region135: #{decoder_forward.1} parent=95 // pred_region
          %699 = dma.done [#allocation17], 64
        $region136: #{decoder_forward.1} parent=95 // pred_fallthru
          _
        // Predicated region
        $region137: #{decoder_forward.1} parent=95 // pred_check
          %p700 = pneg %p420
        $region138: #{decoder_forward.1} parent=95 // pred_check_branch
          %702 = sbr.rel (%p700) target = $region140
        $region139: #{decoder_forward.1} parent=95 // pred_region
          %703 = dma.done [#allocation17], 64
        $region140: #{decoder_forward.1} parent=95 // pred_fallthru
          _
        // Predicated region
        $region141: #{decoder_forward.1} parent=95 // pred_check
          %p704 = pneg %p441
        $region142: #{decoder_forward.1} parent=95 // pred_check_branch
          %706 = sbr.rel (%p704) target = $region144
        $region143: #{decoder_forward.1} parent=95 // pred_region
          %707 = dma.done [#allocation20], 64
        $region144: #{decoder_forward.1} parent=95 // pred_fallthru
          _
        %p708 = pneg %p53
        %p709 = pneg %p50
        %p710 = scmp.lt.s32.totalorder %s37, 1
        %s711 = scalar_select %p710, %s37, 1
        %s712 = smul.addr %s711, 4
        %s713 = smul.addr %s712, 8
        %s714 = scalar_lea.vmem %s1, %s713
        %p715 = pneg %p79
        %p716 = pneg %p76
        %p717 = pneg %p100
        %p718 = pneg %p97
        %p719 = pneg %p121
        %p720 = pneg %p118
        %p721 = pneg %p142
        %p722 = pneg %p139
        %p723 = pneg %p163
        %p724 = pneg %p160
        %p725 = pneg %p184
        %p726 = pneg %p181
        %p727 = pneg %p205
        %p728 = pneg %p202
        %p729 = scmp.lt.s32.totalorder %s37, 1
        %s730 = scalar_select %p729, %s37, 1
        %s731 = smul.addr %s730, 2
        %s732 = smul.addr %s731, 8
        %s733 = scalar_lea.vmem %s8, %s732
        %p734 = pneg %p231
        %p735 = pneg %p228
        %p736 = pneg %p252
        %p737 = pneg %p249
        %p738 = pneg %p273
        %p739 = pneg %p270
        %p740 = pneg %p294
        %p741 = pneg %p291
        %p742 = pneg %p315
        %p743 = pneg %p312
        %p744 = pneg %p336
        %p745 = pneg %p333
        %p746 = pneg %p357
        %p747 = pneg %p354
        %p748 = pneg %p378
        %p749 = pneg %p375
        %p750 = pneg %p399
        %p751 = pneg %p396
        %p752 = pneg %p420
        %p753 = pneg %p417
        %p754 = pneg %p441
        %p755 = pneg %p438
        %p756 = pneg %p467
        %p757 = pneg %p464
        %p758 = scmp.lt.s32.totalorder %s37, 1
        %s759 = scalar_select %p758, %s37, 1
        %s760 = smul.addr %s759, 8
        %s761 = smul.addr %s760, 4
        %s762 = scalar_lea.vmem %s19, %s761
        %p763 = scmp.lt.s32.totalorder %s37, 1
        %s764 = scalar_select %p763, %s37, 1
        %s765 = smul.addr %s764, 4
        %s766 = smul.addr %s765, 8
        %s767 = scalar_lea.vmem %s1, %s766
        %p768 = scmp.lt.s32.totalorder %s37, 1
        %s769 = scalar_select %p768, %s37, 1
        %s770 = smul.addr %s769, 2
        %s771 = smul.addr %s770, 8
        %s772 = scalar_lea.vmem %s8, %s771
        %p773 = scmp.lt.s32.totalorder %s37, 1
        %s774 = scalar_select %p773, %s37, 1
        %s775 = smul.addr %s774, 8
        %s776 = smul.addr %s775, 4
        %s777 = scalar_lea.vmem %s19, %s776
        %v779 = vld [vmem:[%s0] sm:$0xff]
        %v780 = vld [vmem:[%s0 + $0x8] sm:$0xff]
        %v781 = vld [vmem:[%s767] sm:$0xff]
        %v782 = vld [vmem:[%s767 + $0x8] sm:$0xff]
        %v783 = vld [vmem:[%s767 + $0x10] sm:$0xff]
        %v784 = vld [vmem:[%s767 + $0x18] sm:$0xff]
        %v785 = vld [vmem:[#allocation2] sm:$0xff]
        %v786 = vld [vmem:[#allocation2 + $0x8] sm:$0xff]
        %v787 = vlaneseq
        %v788 = vand.u32 %v787, 127
        %vm789 = vcmp.lt.s32.totalorder %v788, 0
        %v790 = vsub.s32 0, %v788
        %v791 = vsel %vm789, %v790, %v788
        %v792 = vshrl.u32 %v791, 3
        %v793 = vand.u32 %v791, 7
        %v794 = vsub.s32 0, %v793
        %v795 = vsel %vm789, %v794, %v793
        %vm796 = vcmp.ne.s32.totalorder %v795, 0
        %vm797 = vcmp.lt.s32.totalorder %v795, 0
        %vm798 = vmand %vm797, %vm796
        %v799 = vadd.s32 %v795, 8
        %v800 = vsel %vm798, %v799, %v795
        %v801 = vadd.s32 %v788, 4294967288
        %vm802 = vcmp.ge.s32.totalorder %v801, 0
        %vm803 = vcmp.lt.s32.totalorder %v801, 64
        %vm804 = vmand %vm802, %vm803
        %v805 = vadd.s32 %v800, 4294967295
        %vm806 = vcmp.ge.s32.totalorder %v805, 0
        %vm807 = vcmp.lt.s32.totalorder %v805, 8
        %vm808 = vmand %vm806, %vm807
        %vm809 = vmand %vm804, %vm808
        %vm810 = vcmp.ge.s32.totalorder %v800, 0
        %vm811 = vcmp.lt.s32.totalorder %v800, 8
        %vm812 = vmand %vm810, %vm811
        %vm813 = vmand %vm804, %vm812
        %v814 = vadd.s32 %v800, 1
        %vm815 = vcmp.ge.s32.totalorder %v814, 0
        %vm816 = vcmp.lt.s32.totalorder %v814, 8
        %vm817 = vmand %vm815, %vm816
        %vm818 = vmand %vm804, %vm817
        %vm819 = vcmp.ge.s32.totalorder %v788, 0
        %vm820 = vcmp.lt.s32.totalorder %v788, 64
        %vm821 = vmand %vm819, %vm820
        %vm822 = vmand %vm821, %vm808
        %vm823 = vmand %vm821, %vm812
        %vm824 = vmand %vm821, %vm817
        %v825 = vadd.s32 %v788, 8
        %vm826 = vcmp.ge.s32.totalorder %v825, 0
        %vm827 = vcmp.lt.s32.totalorder %v825, 64
        %vm828 = vmand %vm826, %vm827
        %vm829 = vmand %vm828, %vm808
        %vm830 = vmand %vm828, %vm812
        %vm831 = vmand %vm828, %vm817
        %vm832 = vcmask 523264
        %v833 = vsel %vm832, %v779, 0.0
        %v834 = vsel %vm832, %v780, 0.0
        %v835 = vadd.f32 %v833, %v834
        %836 = vadd.xlane.f32.xlu0 %v835
        %v837 = vpop.xlane.xlu0 %836
        %v838 = vrot.slane %v837, 4
        %v839 = vadd.f32 %v837, %v838
        %v840 = vrot.slane %v839, 2
        %v841 = vadd.f32 %v839, %v840
        %v842 = vrot.slane %v841, 1
        %v843 = vadd.f32 %v841, %v842
        %s844 = vtos %v843
        %v845 = vrcp.pop 1024.0
        %s846 = vtos %v845
        %s847 = smul.f32 %s844, %s846
        %v848 = vmul.f32 %v779, %v779
        %v849 = vmul.f32 %v780, %v780
        %v850 = vsel %vm832, %v848, 0.0
        %v851 = vsel %vm832, %v849, 0.0
        %v852 = vadd.f32 %v850, %v851
        %853 = vadd.xlane.f32.xlu0 %v852
        %v854 = vpop.xlane.xlu0 %853
        %v855 = vrot.slane %v854, 4
        %v856 = vadd.f32 %v854, %v855
        %v857 = vrot.slane %v856, 2
        %v858 = vadd.f32 %v856, %v857
        %v859 = vrot.slane %v858, 1
        %v860 = vadd.f32 %v858, %v859
        %s861 = vtos %v860
        %v862 = vrcp.pop 1024.0
        %s863 = vtos %v862
        %s864 = smul.f32 %s861, %s863
        %s865 = smul.f32 %s847, %s847
        %s866 = ssub.f32 %s864, %s865
        %s867 = smax.f32 %s866, 0.0
        %v868 = vstv %s847
        %v869 = vsub.f32 %v779, %v868
        %v870 = vsub.f32 %v780, %v868
        %s871 = sadd.f32 %s867, 1e-05
        %v872 = vstv %s871
        %v873 = vrsqrt.pop %v872
        %s874 = vtos %v873
        %v875 = vstv %s874
        %v876 = vmul.f32 %v869, %v875
        %v877 = vmul.f32 %v870, %v875
        %879 = vset.pattern.permute.xlu0 0
        %880 = vperm.xlu0 %879, %v781
        %v881 = vpop.permute.xlu0 %880
        %884 = vset.pattern.permute.xlu0 0
        %885 = vperm.xlu0 %884, %v782
        %v886 = vpop.permute.xlu0 %885
        %v888 = vmul.f32 %v881, %v876
        %v889 = vmul.f32 %v886, %v877
        %891 = vset.pattern.permute.xlu0 0
        %892 = vperm.xlu0 %891, %v783
        %v893 = vpop.permute.xlu0 %892
        %896 = vset.pattern.permute.xlu0 0
        %897 = vperm.xlu0 %896, %v784
        %v898 = vpop.permute.xlu0 %897
        %v900 = vadd.f32 %v888, %v893
        %v901 = vadd.f32 %v889, %v898
        %v902 = vld [vmem:[%s2] sm:$0xff]
        %v903 = vld [vmem:[%s2 + $0x8] sm:$0xff]
        %v904 = vld [vmem:[%s2 + $0x10] sm:$0xff]
        %v905 = vld [vmem:[%s2 + $0x18] sm:$0xff]
        %vm906 = vcmask 1048064
        %907 = vrot.lane.b32.xlu0 %v900, 64
        %v908 = vpop.permute.xlu0 %907
        %v909 = vsel %vm906, %v908, %v900
        %910 = vrot.lane.b32.xlu0 %v901, 64
        %v911 = vpop.permute.xlu0 %910
        %v912 = vsel %vm906, %v911, %v901
        %913 = vrot.lane.b32.xlu0 %v909, 64
        %v914 = vpop.permute.xlu0 %913
        %915 = vrot.lane.b32.xlu0 %v912, 64
        %v916 = vpop.permute.xlu0 %915
        %v917 = vsel %vm906, %v914, %v900
        %v918 = vsel %vm906, %v916, %v901
        %v919 = vsel %vm809, 1, 0
        %vm920 = vcmp.eq.s32.totalorder %v919, 1
        %923 = vrot.lane.b32.xlu0 %v917, 73
        %v924 = vpop.permute.xlu0 %923
        %925 = vrot.lane.b32.xlu0 %v918, 73
        %v926 = vpop.permute.xlu0 %925
        %v929 = vsel %vm920, %v924, 0.0
        %v930 = vsel %vm920, %v926, 0.0
        %v931 = vsel %vm813, 1, 0
        %vm932 = vcmp.eq.s32.totalorder %v931, 1
        %933 = vrot.lane.b32.xlu0 %v917, 72
        %v934 = vpop.permute.xlu0 %933
        %935 = vrot.lane.b32.xlu0 %v918, 72
        %v936 = vpop.permute.xlu0 %935
        %v939 = vsel %vm932, %v934, 0.0
        %v940 = vsel %vm932, %v936, 0.0
        %v941 = vsel %vm818, 1, 0
        %vm942 = vcmp.eq.s32.totalorder %v941, 1
        %943 = vrot.lane.b32.xlu0 %v917, 71
        %v944 = vpop.permute.xlu0 %943
        %945 = vrot.lane.b32.xlu0 %v918, 71
        %v946 = vpop.permute.xlu0 %945
        %v949 = vsel %vm942, %v944, 0.0
        %v950 = vsel %vm942, %v946, 0.0
        %v951 = vsel %vm822, 1, 0
        %vm952 = vcmp.eq.s32.totalorder %v951, 1
        %953 = vrot.lane.b32.xlu0 %v917, 65
        %v954 = vpop.permute.xlu0 %953
        %955 = vrot.lane.b32.xlu0 %v918, 65
        %v956 = vpop.permute.xlu0 %955
        %v959 = vsel %vm952, %v954, 0.0
        %v960 = vsel %vm952, %v956, 0.0
        %v961 = vsel %vm823, 1, 0
        %vm962 = vcmp.eq.s32.totalorder %v961, 1
        %v963 = vsel %vm962, %v900, 0.0
        %v964 = vsel %vm962, %v901, 0.0
        %v965 = vsel %vm824, 1, 0
        %vm966 = vcmp.eq.s32.totalorder %v965, 1
        %967 = vrot.lane.b32.xlu0 %v917, 127
        %v968 = vpop.permute.xlu0 %967
        %969 = vrot.lane.b32.xlu0 %v918, 127
        %v970 = vpop.permute.xlu0 %969
        %v973 = vsel %vm966, %v968, 0.0
        %v974 = vsel %vm966, %v970, 0.0
        %v975 = vsel %vm829, 1, 0
        %vm976 = vcmp.eq.s32.totalorder %v975, 1
        %977 = vrot.lane.b32.xlu0 %v917, 121
        %v978 = vpop.permute.xlu0 %977
        %979 = vrot.lane.b32.xlu0 %v918, 121
        %v980 = vpop.permute.xlu0 %979
        %v983 = vsel %vm976, %v978, 0.0
        %v984 = vsel %vm976, %v980, 0.0
        %v985 = vsel %vm830, 1, 0
        %vm986 = vcmp.eq.s32.totalorder %v985, 1
        %987 = vrot.lane.b32.xlu0 %v917, 120
        %v988 = vpop.permute.xlu0 %987
        %989 = vrot.lane.b32.xlu0 %v918, 120
        %v990 = vpop.permute.xlu0 %989
        %v993 = vsel %vm986, %v988, 0.0
        %v994 = vsel %vm986, %v990, 0.0
        %v995 = vsel %vm831, 1, 0
        %vm996 = vcmp.eq.s32.totalorder %v995, 1
        %997 = vrot.lane.b32.xlu0 %v917, 119
        %v998 = vpop.permute.xlu0 %997
        %999 = vrot.lane.b32.xlu0 %v918, 119
        %v1000 = vpop.permute.xlu0 %999
        %v1003 = vsel %vm996, %v998, 0.0
        %v1004 = vsel %vm996, %v1000, 0.0
        %v1005 = vpack.c.bf16 %v904, %v902
        %v1006 = vpack.c.bf16 %v905, %v903
        %v1007 = vpack.c.bf16 %v930, %v929
        %v1008 = vpack.c.bf16 %v940, %v939
        %v1009 = vpack.c.bf16 %v950, %v949
        %v1010 = vpack.c.bf16 %v960, %v959
        %v1011 = vpack.c.bf16 %v964, %v963
        %v1012 = vpack.c.bf16 %v974, %v973
        %v1013 = vpack.c.bf16 %v984, %v983
        %v1014 = vpack.c.bf16 %v994, %v993
        %v1015 = vpack.c.bf16 %v1004, %v1003
        %1017 = vset.pattern.permute.xlu0 0
        %1018 = vperm.xlu0 %1017, %v785
        %v1019 = vpop.permute.xlu0 %1018
        %1022 = vset.pattern.permute.xlu0 0
        %1023 = vperm.xlu0 %1022, %v786
        %v1024 = vpop.permute.xlu0 %1023
        %vm1026 = vcmask 130048
        %v1028 = vsel %vm1026, %v1006, 0
        %1030 = vmatprep.subr.bf16.mxu0 0
        %1031 = vmatpush1.bf16.msra.mxu0 %v1007
        %1032 = vmatprep.subr.bf16.mxu0 0
        %1033 = vmatpush1.bf16.msra.mxu0 %v1008
        %1034 = vmatprep.subr.bf16.mxu0 0
        %1035 = vmatpush1.bf16.msra.mxu0 %v1009
        %1036 = vmatprep.subr.bf16.mxu0 0
        %1037 = vmatpush1.bf16.msra.mxu0 %v1010
        %1038 = vmatprep.subr.bf16.mxu0 0
        %1039 = vmatpush1.bf16.msra.mxu0 %v1011
        %1040 = vmatprep.subr.bf16.mxu0 0
        %1041 = vmatpush1.bf16.msra.mxu0 %v1012
        %1042 = vmatprep.subr.bf16.mxu0 0
        %1043 = vmatpush1.bf16.msra.mxu0 %v1013
        %1044 = vmatprep.subr.bf16.mxu0 0
        %1045 = vmatpush1.bf16.msra.mxu0 %v1014
        %1046 = vmatprep.subr.bf16.mxu0 0
        %1047 = vmatpush1.bf16.msra.mxu0 %v1015
        %1048 = vmatprep.subr.bf16.mxu0 0
        %1049 = vmatpush1.bf16.msra.mxu0 0
        %1050 = vmatprep.subr.bf16.mxu0 0
        %1051 = vmatpush1.bf16.msra.mxu0 0
        %1052 = vmatprep.subr.bf16.mxu0 0
        %1053 = vmatpush1.bf16.msra.mxu0 0
        %1054 = vmatprep.subr.bf16.mxu0 0
        %1055 = vmatpush1.bf16.msra.mxu0 0
        %1056 = vmatprep.subr.bf16.mxu0 0
        %1057 = vmatpush1.bf16.msra.mxu0 0
        %1058 = vmatprep.subr.bf16.mxu0 0
        %1059 = vmatpush1.bf16.msra.mxu0 0
        %1060 = vmatprep.subr.bf16.mxu0 0
        %1061 = vmatpush1.bf16.msra.mxu0 0
        %1062 = vmatprep.mubr.bf16.mxu0 %v1028
        %1063 = vmatmul.mubr.bf16.gmra.mrb[0].mxu0 %v1005
        %v1064 = vpop.f32.mrb[0].mxu0
        %v1065 = vadd.f32 %v1019, %v1064
        %v1066 = vpop.f32.mrb[0].mxu0
        %v1067 = vpop.f32.mrb[0].mxu0
        %v1068 = vadd.f32 %v1024, %v1067
        %v1069 = vpop.f32.mrb[0].mxu0
        %1070 = vdwg.mxu0
        %v1071 = vsel %vm832, %v1065, 0.0
        %v1072 = vsel %vm832, %v1068, 0.0
        %v1073 = vadd.f32 %v1071, %v1072
        %1074 = vadd.xlane.f32.xlu0 %v1073
        %v1075 = vpop.xlane.xlu0 %1074
        %v1076 = vrot.slane %v1075, 4
        %v1077 = vadd.f32 %v1075, %v1076
        %v1078 = vrot.slane %v1077, 2
        %v1079 = vadd.f32 %v1077, %v1078
        %v1080 = vrot.slane %v1079, 1
        %v1081 = vadd.f32 %v1079, %v1080
        %s1082 = vtos %v1081
        %v1083 = vrcp.pop 1024.0
        %s1084 = vtos %v1083
        %s1085 = smul.f32 %s1082, %s1084
        %v1086 = vmul.f32 %v1065, %v1065
        %v1087 = vmul.f32 %v1068, %v1068
        %v1088 = vsel %vm832, %v1086, 0.0
        %v1089 = vsel %vm832, %v1087, 0.0
        %v1090 = vadd.f32 %v1088, %v1089
        %1091 = vadd.xlane.f32.xlu0 %v1090
        %v1092 = vpop.xlane.xlu0 %1091
        %v1093 = vrot.slane %v1092, 4
        %v1094 = vadd.f32 %v1092, %v1093
        %v1095 = vrot.slane %v1094, 2
        %v1096 = vadd.f32 %v1094, %v1095
        %v1097 = vrot.slane %v1096, 1
        %v1098 = vadd.f32 %v1096, %v1097
        %s1099 = vtos %v1098
        %v1100 = vrcp.pop 1024.0
        %s1101 = vtos %v1100
        %s1102 = smul.f32 %s1099, %s1101
        %s1103 = smul.f32 %s1085, %s1085
        %s1104 = ssub.f32 %s1102, %s1103
        %s1105 = smax.f32 %s1104, 0.0
        %v1106 = vstv %s1085
        %v1107 = vsub.f32 %v1065, %v1106
        %v1108 = vsub.f32 %v1068, %v1106
        %s1109 = sadd.f32 %s1105, 1e-05
        %v1110 = vstv %s1109
        %v1111 = vrsqrt.pop %v1110
        %s1112 = vtos %v1111
        %v1113 = vstv %s1112
        %v1114 = vmul.f32 %v1107, %v1113
        %v1115 = vmul.f32 %v1108, %v1113
        %1116 = vset.pattern.permute.xlu0 1
        %1117 = vperm.xlu0 %1116, %v785
        %v1118 = vpop.permute.xlu0 %1117
        %1120 = vset.pattern.permute.xlu0 1
        %1121 = vperm.xlu0 %1120, %v786
        %v1122 = vpop.permute.xlu0 %1121
        %v1124 = vmul.f32 %v1114, %v1118
        %v1125 = vmul.f32 %v1115, %v1122
        %1126 = vset.pattern.permute.xlu0 2
        %1127 = vperm.xlu0 %1126, %v785
        %v1128 = vpop.permute.xlu0 %1127
        %1130 = vset.pattern.permute.xlu0 2
        %1131 = vperm.xlu0 %1130, %v786
        %v1132 = vpop.permute.xlu0 %1131
        %v1134 = vadd.f32 %v1124, %v1128
        %v1135 = vadd.f32 %v1125, %v1132
        %v1136 = vmul.f32 %v1134, %v1134
        %v1137 = vmul.f32 %v1135, %v1135
        %v1138 = vmul.f32 %v1134, %v1136
        %v1139 = vmul.f32 %v1135, %v1137
        %v1140 = vmul.f32 %v1138, 0.044715
        %v1141 = vmul.f32 %v1139, 0.044715
        %v1142 = vadd.f32 %v1134, %v1140
        %v1143 = vadd.f32 %v1135, %v1141
        %v1144 = vmul.f32 %v1142, 0.7978846
        %v1145 = vmul.f32 %v1143, 0.7978846
        %v1146 = vtanh.pop %v1144
        %v1147 = vtanh.pop %v1145
        %v1148 = vadd.f32 %v1146, 1.0
        %v1149 = vadd.f32 %v1147, 1.0
        %v1150 = vmul.f32 %v1148, 0.5
        %v1151 = vmul.f32 %v1149, 0.5
        %v1152 = vmul.f32 %v1134, %v1150
        %v1153 = vmul.f32 %v1135, %v1151
        %v1154 = vld [vmem:[%s3] sm:$0xff]
        %v1155 = vld [vmem:[%s3 + $0x8] sm:$0xff]
        %v1156 = vld [vmem:[%s3 + $0x10] sm:$0xff]
        %v1157 = vld [vmem:[%s3 + $0x18] sm:$0xff]
        %1158 = vrot.lane.b32.xlu0 %v1152, 64
        %v1159 = vpop.permute.xlu0 %1158
        %v1160 = vsel %vm906, %v1159, %v1152
        %1161 = vrot.lane.b32.xlu0 %v1153, 64
        %v1162 = vpop.permute.xlu0 %1161
        %v1163 = vsel %vm906, %v1162, %v1153
        %1164 = vrot.lane.b32.xlu0 %v1160, 64
        %v1165 = vpop.permute.xlu0 %1164
        %1166 = vrot.lane.b32.xlu0 %v1163, 64
        %v1167 = vpop.permute.xlu0 %1166
        %v1168 = vsel %vm906, %v1165, %v1152
        %v1169 = vsel %vm906, %v1167, %v1153
        %1172 = vrot.lane.b32.xlu0 %v1168, 73
        %v1173 = vpop.permute.xlu0 %1172
        %1174 = vrot.lane.b32.xlu0 %v1169, 73
        %v1175 = vpop.permute.xlu0 %1174
        %v1178 = vsel %vm920, %v1173, 0.0
        %v1179 = vsel %vm920, %v1175, 0.0
        %1180 = vrot.lane.b32.xlu0 %v1168, 72
        %v1181 = vpop.permute.xlu0 %1180
        %1182 = vrot.lane.b32.xlu0 %v1169, 72
        %v1183 = vpop.permute.xlu0 %1182
        %v1186 = vsel %vm932, %v1181, 0.0
        %v1187 = vsel %vm932, %v1183, 0.0
        %1188 = vrot.lane.b32.xlu0 %v1168, 71
        %v1189 = vpop.permute.xlu0 %1188
        %1190 = vrot.lane.b32.xlu0 %v1169, 71
        %v1191 = vpop.permute.xlu0 %1190
        %v1194 = vsel %vm942, %v1189, 0.0
        %v1195 = vsel %vm942, %v1191, 0.0
        %1196 = vrot.lane.b32.xlu0 %v1168, 65
        %v1197 = vpop.permute.xlu0 %1196
        %1198 = vrot.lane.b32.xlu0 %v1169, 65
        %v1199 = vpop.permute.xlu0 %1198
        %v1202 = vsel %vm952, %v1197, 0.0
        %v1203 = vsel %vm952, %v1199, 0.0
        %v1204 = vsel %vm962, %v1152, 0.0
        %v1205 = vsel %vm962, %v1153, 0.0
        %1206 = vrot.lane.b32.xlu0 %v1168, 127
        %v1207 = vpop.permute.xlu0 %1206
        %1208 = vrot.lane.b32.xlu0 %v1169, 127
        %v1209 = vpop.permute.xlu0 %1208
        %v1212 = vsel %vm966, %v1207, 0.0
        %v1213 = vsel %vm966, %v1209, 0.0
        %1214 = vrot.lane.b32.xlu0 %v1168, 121
        %v1215 = vpop.permute.xlu0 %1214
        %1216 = vrot.lane.b32.xlu0 %v1169, 121
        %v1217 = vpop.permute.xlu0 %1216
        %v1220 = vsel %vm976, %v1215, 0.0
        %v1221 = vsel %vm976, %v1217, 0.0
        %1222 = vrot.lane.b32.xlu0 %v1168, 120
        %v1223 = vpop.permute.xlu0 %1222
        %1224 = vrot.lane.b32.xlu0 %v1169, 120
        %v1225 = vpop.permute.xlu0 %1224
        %v1228 = vsel %vm986, %v1223, 0.0
        %v1229 = vsel %vm986, %v1225, 0.0
        %1230 = vrot.lane.b32.xlu0 %v1168, 119
        %v1231 = vpop.permute.xlu0 %1230
        %1232 = vrot.lane.b32.xlu0 %v1169, 119
        %v1233 = vpop.permute.xlu0 %1232
        %v1236 = vsel %vm996, %v1231, 0.0
        %v1237 = vsel %vm996, %v1233, 0.0
        %v1238 = vpack.c.bf16 %v1156, %v1154
        %v1239 = vpack.c.bf16 %v1157, %v1155
        %v1240 = vpack.c.bf16 %v1179, %v1178
        %v1241 = vpack.c.bf16 %v1187, %v1186
        %v1242 = vpack.c.bf16 %v1195, %v1194
        %v1243 = vpack.c.bf16 %v1203, %v1202
        %v1244 = vpack.c.bf16 %v1205, %v1204
        %v1245 = vpack.c.bf16 %v1213, %v1212
        %v1246 = vpack.c.bf16 %v1221, %v1220
        %v1247 = vpack.c.bf16 %v1229, %v1228
        %v1248 = vpack.c.bf16 %v1237, %v1236
        %1249 = vset.pattern.permute.xlu0 3
        %1250 = vperm.xlu0 %1249, %v785
        %v1251 = vpop.permute.xlu0 %1250
        %1253 = vset.pattern.permute.xlu0 3
        %1254 = vperm.xlu0 %1253, %v786
        %v1255 = vpop.permute.xlu0 %1254
        %v1258 = vsel %vm1026, %v1239, 0
        %1260 = vmatprep.subr.bf16.mxu0 0
        %1261 = vmatpush1.bf16.msra.mxu0 %v1240
        %1262 = vmatprep.subr.bf16.mxu0 0
        %1263 = vmatpush1.bf16.msra.mxu0 %v1241
        %1264 = vmatprep.subr.bf16.mxu0 0
        %1265 = vmatpush1.bf16.msra.mxu0 %v1242
        %1266 = vmatprep.subr.bf16.mxu0 0
        %1267 = vmatpush1.bf16.msra.mxu0 %v1243
        %1268 = vmatprep.subr.bf16.mxu0 0
        %1269 = vmatpush1.bf16.msra.mxu0 %v1244
        %1270 = vmatprep.subr.bf16.mxu0 0
        %1271 = vmatpush1.bf16.msra.mxu0 %v1245
        %1272 = vmatprep.subr.bf16.mxu0 0
        %1273 = vmatpush1.bf16.msra.mxu0 %v1246
        %1274 = vmatprep.subr.bf16.mxu0 0
        %1275 = vmatpush1.bf16.msra.mxu0 %v1247
        %1276 = vmatprep.subr.bf16.mxu0 0
        %1277 = vmatpush1.bf16.msra.mxu0 %v1248
        %1278 = vmatprep.subr.bf16.mxu0 0
        %1279 = vmatpush1.bf16.msra.mxu0 0
        %1280 = vmatprep.subr.bf16.mxu0 0
        %1281 = vmatpush1.bf16.msra.mxu0 0
        %1282 = vmatprep.subr.bf16.mxu0 0
        %1283 = vmatpush1.bf16.msra.mxu0 0
        %1284 = vmatprep.subr.bf16.mxu0 0
        %1285 = vmatpush1.bf16.msra.mxu0 0
        %1286 = vmatprep.subr.bf16.mxu0 0
        %1287 = vmatpush1.bf16.msra.mxu0 0
        %1288 = vmatprep.subr.bf16.mxu0 0
        %1289 = vmatpush1.bf16.msra.mxu0 0
        %1290 = vmatprep.subr.bf16.mxu0 0
        %1291 = vmatpush1.bf16.msra.mxu0 0
        %1292 = vmatprep.mubr.bf16.mxu0 %v1258
        %1293 = vmatmul.mubr.bf16.gmra.mrb[0].mxu0 %v1238
        %v1294 = vpop.f32.mrb[0].mxu0
        %v1295 = vadd.f32 %v1251, %v1294
        %v1296 = vpop.f32.mrb[0].mxu0
        %v1297 = vpop.f32.mrb[0].mxu0
        %v1298 = vadd.f32 %v1255, %v1297
        %v1299 = vpop.f32.mrb[0].mxu0
        %1300 = vdwg.mxu0
        %v1301 = vsel %vm832, %v1295, 0.0
        %v1302 = vsel %vm832, %v1298, 0.0
        %v1303 = vadd.f32 %v1301, %v1302
        %1304 = vadd.xlane.f32.xlu0 %v1303
        %v1305 = vpop.xlane.xlu0 %1304
        %v1306 = vrot.slane %v1305, 4
        %v1307 = vadd.f32 %v1305, %v1306
        %v1308 = vrot.slane %v1307, 2
        %v1309 = vadd.f32 %v1307, %v1308
        %v1310 = vrot.slane %v1309, 1
        %v1311 = vadd.f32 %v1309, %v1310
        %s1312 = vtos %v1311
        %v1313 = vrcp.pop 1024.0
        %s1314 = vtos %v1313
        %s1315 = smul.f32 %s1312, %s1314
        %v1316 = vmul.f32 %v1295, %v1295
        %v1317 = vmul.f32 %v1298, %v1298
        %v1318 = vsel %vm832, %v1316, 0.0
        %v1319 = vsel %vm832, %v1317, 0.0
        %v1320 = vadd.f32 %v1318, %v1319
        %1321 = vadd.xlane.f32.xlu0 %v1320
        %v1322 = vpop.xlane.xlu0 %1321
        %v1323 = vrot.slane %v1322, 4
        %v1324 = vadd.f32 %v1322, %v1323
        %v1325 = vrot.slane %v1324, 2
        %v1326 = vadd.f32 %v1324, %v1325
        %v1327 = vrot.slane %v1326, 1
        %v1328 = vadd.f32 %v1326, %v1327
        %s1329 = vtos %v1328
        %v1330 = vrcp.pop 1024.0
        %s1331 = vtos %v1330
        %s1332 = smul.f32 %s1329, %s1331
        %s1333 = smul.f32 %s1315, %s1315
        %s1334 = ssub.f32 %s1332, %s1333
        %s1335 = smax.f32 %s1334, 0.0
        %v1336 = vstv %s1315
        %v1337 = vsub.f32 %v1295, %v1336
        %v1338 = vsub.f32 %v1298, %v1336
        %s1339 = sadd.f32 %s1335, 1e-05
        %v1340 = vstv %s1339
        %v1341 = vrsqrt.pop %v1340
        %s1342 = vtos %v1341
        %v1343 = vstv %s1342
        %v1344 = vmul.f32 %v1337, %v1343
        %v1345 = vmul.f32 %v1338, %v1343
        %1346 = vset.pattern.permute.xlu0 4
        %1347 = vperm.xlu0 %1346, %v785
        %v1348 = vpop.permute.xlu0 %1347
        %1350 = vset.pattern.permute.xlu0 4
        %1351 = vperm.xlu0 %1350, %v786
        %v1352 = vpop.permute.xlu0 %1351
        %v1354 = vmul.f32 %v1344, %v1348
        %v1355 = vmul.f32 %v1345, %v1352
        %1356 = vset.pattern.permute.xlu0 5
        %1357 = vperm.xlu0 %1356, %v785
        %v1358 = vpop.permute.xlu0 %1357
        %1360 = vset.pattern.permute.xlu0 5
        %1361 = vperm.xlu0 %1360, %v786
        %v1362 = vpop.permute.xlu0 %1361
        %v1364 = vadd.f32 %v1354, %v1358
        %v1365 = vadd.f32 %v1355, %v1362
        %v1366 = vadd.f32 %v1364, %v900
        %v1367 = vadd.f32 %v1365, %v901
        %v1368 = vld [vmem:[#allocation4] sm:$0xff]
        %v1369 = vpack.c.bf16 %v1368, %v1368
        %v1370 = vpack.c.bf16 %v1367, %v1366
        %v1371 = vld [vmem:[#allocation6] sm:$0xff]
        %1373 = vset.pattern.permute.xlu0 0
        %1374 = vperm.xlu0 %1373, %v1371
        %v1375 = vpop.permute.xlu0 %1374
        %v1378 = vsel %vm1026, %v1369, 0
        %1380 = vmatprep.subr.bf16.mxu0 0
        %1381 = vmatpush1.bf16.msra.mxu0 %v1370
        %1382 = vmatprep.subr.bf16.mxu0 0
        %1383 = vmatpush1.bf16.msra.mxu0 0
        %1384 = vmatprep.subr.bf16.mxu0 0
        %1385 = vmatpush1.bf16.msra.mxu0 0
        %1386 = vmatprep.subr.bf16.mxu0 0
        %1387 = vmatpush1.bf16.msra.mxu0 0
        %1388 = vmatprep.subr.bf16.mxu0 0
        %1389 = vmatpush1.bf16.msra.mxu0 0
        %1390 = vmatprep.subr.bf16.mxu0 0
        %1391 = vmatpush1.bf16.msra.mxu0 0
        %1392 = vmatprep.subr.bf16.mxu0 0
        %1393 = vmatpush1.bf16.msra.mxu0 0
        %1394 = vmatprep.subr.bf16.mxu0 0
        %1395 = vmatpush1.bf16.msra.mxu0 0
        %1396 = vmatprep.subr.bf16.mxu0 0
        %1397 = vmatpush1.bf16.msra.mxu0 0
        %1398 = vmatprep.subr.bf16.mxu0 0
        %1399 = vmatpush1.bf16.msra.mxu0 0
        %1400 = vmatprep.subr.bf16.mxu0 0
        %1401 = vmatpush1.bf16.msra.mxu0 0
        %1402 = vmatprep.subr.bf16.mxu0 0
        %1403 = vmatpush1.bf16.msra.mxu0 0
        %1404 = vmatprep.subr.bf16.mxu0 0
        %1405 = vmatpush1.bf16.msra.mxu0 0
        %1406 = vmatprep.subr.bf16.mxu0 0
        %1407 = vmatpush1.bf16.msra.mxu0 0
        %1408 = vmatprep.subr.bf16.mxu0 0
        %1409 = vmatpush1.bf16.msra.mxu0 0
        %1410 = vmatprep.subr.bf16.mxu0 0
        %1411 = vmatpush1.bf16.msra.mxu0 0
        %1412 = vmatprep.mubr.bf16.mxu0 0
        %1413 = vmatmul.mubr.bf16.gmra.mrb[0].mxu0 %v1378
        %v1414 = vpop.f32.mrb[0].mxu0
        %v1415 = vadd.f32 %v1375, %v1414
        %v1416 = vpop.f32.mrb[0].mxu0
        %v1417 = vpop.f32.mrb[0].mxu0
        %v1418 = vpop.f32.mrb[0].mxu0
        %1419 = vdwg.mxu0
        %v1420 = vld [vmem:[%s7] sm:$0xff]
        %v1421 = vld [vmem:[%s7 + $0x8] sm:$0xff]
        %v1422 = vld [vmem:[%s7 + $0x10] sm:$0xff]
        %v1423 = vld [vmem:[%s7 + $0x18] sm:$0xff]
        %v1424 = vld [vmem:[%s7 + $0x20] sm:$0xff]
        %v1425 = vld [vmem:[%s7 + $0x28] sm:$0xff]
        %v1426 = vld [vmem:[%s7 + $0x30] sm:$0xff]
        %v1427 = vld [vmem:[%s7 + $0x38] sm:$0xff]
        %v1428 = vld [vmem:[%s7 + $0x40] sm:$0xff]
        %v1429 = vld [vmem:[%s7 + $0x48] sm:$0xff]
        %v1430 = vld [vmem:[%s7 + $0x50] sm:$0xff]
        %v1431 = vld [vmem:[%s7 + $0x58] sm:$0xff]
        %v1432 = vld [vmem:[%s7 + $0x60] sm:$0xff]
        %v1433 = vld [vmem:[%s7 + $0x68] sm:$0xff]
        %v1434 = vld [vmem:[%s7 + $0x70] sm:$0xff]
        %v1435 = vld [vmem:[%s7 + $0x78] sm:$0xff]
        %v1436 = vpack.c.bf16 %v1415, %v1415
        %v1437 = vpack.c.bf16 %v1422, %v1420
        %v1438 = vpack.c.bf16 %v1423, %v1421
        %v1439 = vpack.c.bf16 %v1426, %v1424
        %v1440 = vpack.c.bf16 %v1427, %v1425
        %v1441 = vpack.c.bf16 %v1430, %v1428
        %v1442 = vpack.c.bf16 %v1431, %v1429
        %v1443 = vpack.c.bf16 %v1434, %v1432
        %v1444 = vpack.c.bf16 %v1435, %v1433
        %v1446 = vsel %vm832, %v1436, 0
        %1448 = vmatprep.subr.bf16.mxu0 %v1438
        %1449 = vmatpush1.bf16.msra.mxu0 %v1437
        %1450 = vmatprep.subr.bf16.mxu0 %v1440
        %1451 = vmatpush1.bf16.msra.mxu0 %v1439
        %1452 = vmatprep.subr.bf16.mxu0 %v1442
        %1453 = vmatpush1.bf16.msra.mxu0 %v1441
        %1454 = vmatprep.subr.bf16.mxu0 %v1444
        %1455 = vmatpush1.bf16.msra.mxu0 %v1443
        %1456 = vmatprep.subr.bf16.mxu0 0
        %1457 = vmatpush1.bf16.msra.mxu0 0
        %1458 = vmatprep.subr.bf16.mxu0 0
        %1459 = vmatpush1.bf16.msra.mxu0 0
        %1460 = vmatprep.subr.bf16.mxu0 0
        %1461 = vmatpush1.bf16.msra.mxu0 0
        %1462 = vmatprep.subr.bf16.mxu0 0
        %1463 = vmatpush1.bf16.msra.mxu0 0
        %1464 = vmatprep.subr.bf16.mxu0 0
        %1465 = vmatpush1.bf16.msra.mxu0 0
        %1466 = vmatprep.subr.bf16.mxu0 0
        %1467 = vmatpush1.bf16.msra.mxu0 0
        %1468 = vmatprep.subr.bf16.mxu0 0
        %1469 = vmatpush1.bf16.msra.mxu0 0
        %1470 = vmatprep.subr.bf16.mxu0 0
        %1471 = vmatpush1.bf16.msra.mxu0 0
        %1472 = vmatprep.subr.bf16.mxu0 0
        %1473 = vmatpush1.bf16.msra.mxu0 0
        %1474 = vmatprep.subr.bf16.mxu0 0
        %1475 = vmatpush1.bf16.msra.mxu0 0
        %1476 = vmatprep.subr.bf16.mxu0 0
        %1477 = vmatpush1.bf16.msra.mxu0 0
        %1478 = vmatprep.subr.bf16.mxu0 0
        %1479 = vmatpush1.bf16.msra.mxu0 0
        %1480 = vmatprep.mubr.bf16.mxu0 0
        %1481 = vmatmul.mubr.bf16.gmra.mrb[0].mxu0 %v1446
        %v1482 = vpop.f32.mrb[0].mxu0
        %v1483 = vadd.f32 0.0, %v1482
        %v1484 = vpop.f32.mrb[0].mxu0
        %v1485 = vadd.f32 0.0, %v1484
        %v1486 = vpop.f32.mrb[0].mxu0
        %v1487 = vpop.f32.mrb[0].mxu0
        %1488 = vdwg.mxu0
        %v1489 = vmul.f32 %v1483, %v1483
        %v1490 = vmul.f32 %v1485, %v1485
        %v1491 = vmul.f32 %v1483, %v1489
        %v1492 = vmul.f32 %v1485, %v1490
        %v1493 = vmul.f32 %v1491, 0.044715
        %v1494 = vmul.f32 %v1492, 0.044715
        %v1495 = vadd.f32 %v1483, %v1493
        %v1496 = vadd.f32 %v1485, %v1494
        %v1497 = vmul.f32 %v1495, 0.7978846
        %v1498 = vmul.f32 %v1496, 0.7978846
        %v1499 = vtanh.pop %v1497
        %v1500 = vtanh.pop %v1498
        %v1501 = vadd.f32 %v1499, 1.0
        %v1502 = vadd.f32 %v1500, 1.0
        %v1503 = vmul.f32 %v1501, 0.5
        %v1504 = vmul.f32 %v1502, 0.5
        %v1505 = vmul.f32 %v1483, %v1503
        %v1506 = vmul.f32 %v1485, %v1504
        %v1507 = vld [vmem:[%s772] sm:$0xff]
        %v1508 = vld [vmem:[%s772 + $0x8] sm:$0xff]
        %v1509 = vld [vmem:[#allocation10] sm:$0xff]
        %v1510 = vadd.s32 %v788, 128
        %vm1511 = vcmp.lt.s32.totalorder %v788, 0
        %v1512 = vsub.s32 0, %v788
        %v1513 = vsel %vm1511, %v1512, %v788
        %v1514 = vshrl.u32 %v1513, 4
        %v1515 = vand.u32 %v1513, 15
        %v1516 = vsub.s32 0, %v1515
        %v1517 = vsel %vm1511, %v1516, %v1515
        %vm1518 = vcmp.lt.s32.totalorder %v1510, 0
        %v1519 = vsub.s32 0, %v1510
        %v1520 = vsel %vm1518, %v1519, %v1510
        %v1521 = vshrl.u32 %v1520, 4
        %v1522 = vand.u32 %v1520, 15
        %v1523 = vsub.s32 0, %v1522
        %v1524 = vsel %vm1518, %v1523, %v1522
        %vm1525 = vcmp.ne.s32.totalorder %v1517, 0
        %vm1526 = vcmp.ne.s32.totalorder %v1524, 0
        %vm1527 = vcmp.lt.s32.totalorder %v1517, 0
        %vm1528 = vcmp.lt.s32.totalorder %v1524, 0
        %vm1529 = vmand %vm1527, %vm1525
        %vm1530 = vmand %vm1528, %vm1526
        %v1531 = vadd.s32 %v1517, 16
        %v1532 = vadd.s32 %v1524, 16
        %v1533 = vsel %vm1529, %v1531, %v1517
        %v1534 = vsel %vm1530, %v1532, %v1524
        %v1535 = vadd.s32 %v788, 4294967280
        %v1536 = vadd.s32 %v1510, 4294967280
        %vm1537 = vcmp.ge.s32.totalorder %v1535, 0
        %vm1538 = vcmp.ge.s32.totalorder %v1536, 0
        %vm1539 = vcmp.lt.s32.totalorder %v1535, 256
        %vm1540 = vcmp.lt.s32.totalorder %v1536, 256
        %vm1541 = vmand %vm1537, %vm1539
        %vm1542 = vmand %vm1538, %vm1540
        %v1543 = vadd.s32 %v1533, 4294967295
        %v1544 = vadd.s32 %v1534, 4294967295
        %vm1545 = vcmp.ge.s32.totalorder %v1543, 0
        %vm1546 = vcmp.ge.s32.totalorder %v1544, 0
        %vm1547 = vcmp.lt.s32.totalorder %v1543, 16
        %vm1548 = vcmp.lt.s32.totalorder %v1544, 16
        %vm1549 = vmand %vm1545, %vm1547
        %vm1550 = vmand %vm1546, %vm1548
        %vm1551 = vmand %vm1541, %vm1549
        %vm1552 = vmand %vm1542, %vm1550
        %vm1553 = vcmp.ge.s32.totalorder %v1533, 0
        %vm1554 = vcmp.ge.s32.totalorder %v1534, 0
        %vm1555 = vcmp.lt.s32.totalorder %v1533, 16
        %vm1556 = vcmp.lt.s32.totalorder %v1534, 16
        %vm1557 = vmand %vm1553, %vm1555
        %vm1558 = vmand %vm1554, %vm1556
        %vm1559 = vmand %vm1541, %vm1557
        %vm1560 = vmand %vm1542, %vm1558
        %v1561 = vadd.s32 %v1533, 1
        %v1562 = vadd.s32 %v1534, 1
        %vm1563 = vcmp.ge.s32.totalorder %v1561, 0
        %vm1564 = vcmp.ge.s32.totalorder %v1562, 0
        %vm1565 = vcmp.lt.s32.totalorder %v1561, 16
        %vm1566 = vcmp.lt.s32.totalorder %v1562, 16
        %vm1567 = vmand %vm1563, %vm1565
        %vm1568 = vmand %vm1564, %vm1566
        %vm1569 = vmand %vm1541, %vm1567
        %vm1570 = vmand %vm1542, %vm1568
        %vm1571 = vcmp.ge.s32.totalorder %v1510, 0
        %vm1572 = vcmp.lt.s32.totalorder %v788, 256
        %vm1573 = vcmp.lt.s32.totalorder %v1510, 256
        %vm1574 = vmand %vm819, %vm1572
        %vm1575 = vmand %vm1571, %vm1573
        %vm1576 = vmand %vm1574, %vm1549
        %vm1577 = vmand %vm1575, %vm1550
        %vm1578 = vmand %vm1574, %vm1557
        %vm1579 = vmand %vm1575, %vm1558
        %vm1580 = vmand %vm1574, %vm1567
        %vm1581 = vmand %vm1575, %vm1568
        %v1582 = vadd.s32 %v788, 16
        %v1583 = vadd.s32 %v1510, 16
        %vm1584 = vcmp.ge.s32.totalorder %v1582, 0
        %vm1585 = vcmp.ge.s32.totalorder %v1583, 0
        %vm1586 = vcmp.lt.s32.totalorder %v1582, 256
        %vm1587 = vcmp.lt.s32.totalorder %v1583, 256
        %vm1588 = vmand %vm1584, %vm1586
        %vm1589 = vmand %vm1585, %vm1587
        %vm1590 = vmand %vm1588, %vm1549
        %vm1591 = vmand %vm1589, %vm1550
        %vm1592 = vmand %vm1588, %vm1557
        %vm1593 = vmand %vm1589, %vm1558
        %vm1594 = vmand %vm1588, %vm1567
        %vm1595 = vmand %vm1589, %vm1568
        %v1596 = vadd.f32 %v1505, %v1506
        %1597 = vadd.xlane.f32.xlu0 %v1596
        %v1598 = vpop.xlane.xlu0 %1597
        %v1599 = vrot.slane %v1598, 4
        %v1600 = vadd.f32 %v1598, %v1599
        %v1601 = vrot.slane %v1600, 2
        %v1602 = vadd.f32 %v1600, %v1601
        %v1603 = vrot.slane %v1602, 1
        %v1604 = vadd.f32 %v1602, %v1603
        %s1605 = vtos %v1604
        %v1606 = vrcp.pop 2048.0
        %s1607 = vtos %v1606
        %s1608 = smul.f32 %s1605, %s1607
        %v1609 = vmul.f32 %v1505, %v1505
        %v1610 = vmul.f32 %v1506, %v1506
        %v1611 = vadd.f32 %v1609, %v1610
        %1612 = vadd.xlane.f32.xlu0 %v1611
        %v1613 = vpop.xlane.xlu0 %1612
        %v1614 = vrot.slane %v1613, 4
        %v1615 = vadd.f32 %v1613, %v1614
        %v1616 = vrot.slane %v1615, 2
        %v1617 = vadd.f32 %v1615, %v1616
        %v1618 = vrot.slane %v1617, 1
        %v1619 = vadd.f32 %v1617, %v1618
        %s1620 = vtos %v1619
        %v1621 = vrcp.pop 2048.0
        %s1622 = vtos %v1621
        %s1623 = smul.f32 %s1620, %s1622
        %s1624 = smul.f32 %s1608, %s1608
        %s1625 = ssub.f32 %s1623, %s1624
        %s1626 = smax.f32 %s1625, 0.0
        %v1627 = vstv %s1608
        %v1628 = vsub.f32 %v1505, %v1627
        %v1629 = vsub.f32 %v1506, %v1627
        %s1630 = sadd.f32 %s1626, 1e-05
        %v1631 = vstv %s1630
        %v1632 = vrsqrt.pop %v1631
        %s1633 = vtos %v1632
        %v1634 = vstv %s1633
        %v1635 = vmul.f32 %v1628, %v1634
        %v1636 = vmul.f32 %v1629, %v1634
        %1638 = vset.pattern.permute.xlu0 0
        %1639 = vperm.xlu0 %1638, %v1507
        %v1640 = vpop.permute.xlu0 %1639
        %v1642 = vmul.f32 %v1640, %v1635
        %v1643 = vmul.f32 %v1640, %v1636
        %1645 = vset.pattern.permute.xlu0 0
        %1646 = vperm.xlu0 %1645, %v1508
        %v1647 = vpop.permute.xlu0 %1646
        %v1649 = vadd.f32 %v1642, %v1647
        %v1650 = vadd.f32 %v1643, %v1647
        %v1651 = vld [vmem:[#allocation7] sm:$0xff]
        %1652 = vrot.lane.b32.xlu0 %v1649, 17
        %v1653 = vpop.permute.xlu0 %1652
        %1654 = vrot.lane.b32.xlu0 %v1650, 17
        %v1655 = vpop.permute.xlu0 %1654
        %vm1656 = vcmp.lt.s32.totalorder %v788, 17
        %v1657 = vsel %vm1656, %v1653, %v1655
        %v1658 = vsel %vm1656, %v1655, %v1653
        %v1659 = vsel %vm1551, 1, 0
        %v1660 = vsel %vm1552, 1, 0
        %vm1661 = vcmp.eq.s32.totalorder %v1659, 1
        %vm1662 = vcmp.eq.s32.totalorder %v1660, 1
        %v1663 = vsel %vm1661, %v1658, 0.0
        %v1664 = vsel %vm1662, %v1657, 0.0
        %1665 = vrot.lane.b32.xlu0 %v1649, 16
        %v1666 = vpop.permute.xlu0 %1665
        %1667 = vrot.lane.b32.xlu0 %v1650, 16
        %v1668 = vpop.permute.xlu0 %1667
        %vm1669 = vcmp.lt.s32.totalorder %v788, 16
        %v1670 = vsel %vm1669, %v1666, %v1668
        %v1671 = vsel %vm1669, %v1668, %v1666
        %v1672 = vsel %vm1559, 1, 0
        %v1673 = vsel %vm1560, 1, 0
        %vm1674 = vcmp.eq.s32.totalorder %v1672, 1
        %vm1675 = vcmp.eq.s32.totalorder %v1673, 1
        %v1676 = vsel %vm1674, %v1671, 0.0
        %v1677 = vsel %vm1675, %v1670, 0.0
        %1678 = vrot.lane.b32.xlu0 %v1649, 15
        %v1679 = vpop.permute.xlu0 %1678
        %1680 = vrot.lane.b32.xlu0 %v1650, 15
        %v1681 = vpop.permute.xlu0 %1680
        %vm1682 = vcmp.lt.s32.totalorder %v788, 15
        %v1683 = vsel %vm1682, %v1679, %v1681
        %v1684 = vsel %vm1682, %v1681, %v1679
        %v1685 = vsel %vm1569, 1, 0
        %v1686 = vsel %vm1570, 1, 0
        %vm1687 = vcmp.eq.s32.totalorder %v1685, 1
        %vm1688 = vcmp.eq.s32.totalorder %v1686, 1
        %v1689 = vsel %vm1687, %v1684, 0.0
        %v1690 = vsel %vm1688, %v1683, 0.0
        %1691 = vrot.lane.b32.xlu0 %v1649, 1
        %v1692 = vpop.permute.xlu0 %1691
        %1693 = vrot.lane.b32.xlu0 %v1650, 1
        %v1694 = vpop.permute.xlu0 %1693
        %vm1695 = vcmp.lt.s32.totalorder %v788, 1
        %v1696 = vsel %vm1695, %v1692, %v1694
        %v1697 = vsel %vm1695, %v1694, %v1692
        %v1698 = vsel %vm1576, 1, 0
        %v1699 = vsel %vm1577, 1, 0
        %vm1700 = vcmp.eq.s32.totalorder %v1698, 1
        %vm1701 = vcmp.eq.s32.totalorder %v1699, 1
        %v1702 = vsel %vm1700, %v1697, 0.0
        %v1703 = vsel %vm1701, %v1696, 0.0
        %v1704 = vsel %vm1578, 1, 0
        %v1705 = vsel %vm1579, 1, 0
        %vm1706 = vcmp.eq.s32.totalorder %v1704, 1
        %vm1707 = vcmp.eq.s32.totalorder %v1705, 1
        %v1708 = vsel %vm1706, %v1649, 0.0
        %v1709 = vsel %vm1707, %v1650, 0.0
        %1710 = vrot.lane.b32.xlu0 %v1649, 127
        %v1711 = vpop.permute.xlu0 %1710
        %1712 = vrot.lane.b32.xlu0 %v1650, 127
        %v1713 = vpop.permute.xlu0 %1712
        %vm1714 = vcmp.lt.s32.totalorder %v788, 127
        %v1715 = vsel %vm1714, %v1711, %v1713
        %v1716 = vsel %vm1714, %v1713, %v1711
        %v1717 = vsel %vm1580, 1, 0
        %v1718 = vsel %vm1581, 1, 0
        %vm1719 = vcmp.eq.s32.totalorder %v1717, 1
        %vm1720 = vcmp.eq.s32.totalorder %v1718, 1
        %v1721 = vsel %vm1719, %v1715, 0.0
        %v1722 = vsel %vm1720, %v1716, 0.0
        %1723 = vrot.lane.b32.xlu0 %v1649, 113
        %v1724 = vpop.permute.xlu0 %1723
        %1725 = vrot.lane.b32.xlu0 %v1650, 113
        %v1726 = vpop.permute.xlu0 %1725
        %vm1727 = vcmp.lt.s32.totalorder %v788, 113
        %v1728 = vsel %vm1727, %v1724, %v1726
        %v1729 = vsel %vm1727, %v1726, %v1724
        %v1730 = vsel %vm1590, 1, 0
        %v1731 = vsel %vm1591, 1, 0
        %vm1732 = vcmp.eq.s32.totalorder %v1730, 1
        %vm1733 = vcmp.eq.s32.totalorder %v1731, 1
        %v1734 = vsel %vm1732, %v1728, 0.0
        %v1735 = vsel %vm1733, %v1729, 0.0
        %1736 = vrot.lane.b32.xlu0 %v1649, 112
        %v1737 = vpop.permute.xlu0 %1736
        %1738 = vrot.lane.b32.xlu0 %v1650, 112
        %v1739 = vpop.permute.xlu0 %1738
        %vm1740 = vcmp.lt.s32.totalorder %v788, 112
        %v1741 = vsel %vm1740, %v1737, %v1739
        %v1742 = vsel %vm1740, %v1739, %v1737
        %v1743 = vsel %vm1592, 1, 0
        %v1744 = vsel %vm1593, 1, 0
        %vm1745 = vcmp.eq.s32.totalorder %v1743, 1
        %vm1746 = vcmp.eq.s32.totalorder %v1744, 1
        %v1747 = vsel %vm1745, %v1741, 0.0
        %v1748 = vsel %vm1746, %v1742, 0.0
        %1749 = vrot.lane.b32.xlu0 %v1649, 111
        %v1750 = vpop.permute.xlu0 %1749
        %1751 = vrot.lane.b32.xlu0 %v1650, 111
        %v1752 = vpop.permute.xlu0 %1751
        %vm1753 = vcmp.lt.s32.totalorder %v788, 111
        %v1754 = vsel %vm1753, %v1750, %v1752
        %v1755 = vsel %vm1753, %v1752, %v1750
        %v1756 = vsel %vm1594, 1, 0
        %v1757 = vsel %vm1595, 1, 0
        %vm1758 = vcmp.eq.s32.totalorder %v1756, 1
        %vm1759 = vcmp.eq.s32.totalorder %v1757, 1
        %v1760 = vsel %vm1758, %v1754, 0.0
        %v1761 = vsel %vm1759, %v1755, 0.0
        %v1762 = vpack.c.bf16 %v1651, %v1651
        %v1763 = vpack.c.bf16 %v1676, %v1663
        %v1764 = vpack.c.bf16 %v1677, %v1664
        %v1765 = vpack.c.bf16 %v1702, %v1689
        %v1766 = vpack.c.bf16 %v1703, %v1690
        %v1767 = vpack.c.bf16 %v1721, %v1708
        %v1768 = vpack.c.bf16 %v1722, %v1709
        %v1769 = vpack.c.bf16 %v1747, %v1734
        %v1770 = vpack.c.bf16 %v1748, %v1735
        %v1771 = vpack.c.bf16 %v1760, %v1760
        %v1772 = vpack.c.bf16 %v1761, %v1761
        %1774 = vset.pattern.permute.xlu0 0
        %1775 = vperm.xlu0 %1774, %v1509
        %v1776 = vpop.permute.xlu0 %1775
        %vm1778 = vcmask 588800
        %v1780 = vsel %vm1778, %v1762, 0
        %vm1782 = vcmask 1043456
        %v1784 = vsel %vm1782, %v1771, 0
        %v1787 = vsel %vm1782, %v1772, 0
        %1789 = vmatprep.subr.bf16.mxu0 %v1764
        %1790 = vmatpush1.bf16.msra.mxu0 %v1763
        %1791 = vmatprep.subr.bf16.mxu0 %v1766
        %1792 = vmatpush1.bf16.msra.mxu0 %v1765
        %1793 = vmatprep.subr.bf16.mxu0 %v1768
        %1794 = vmatpush1.bf16.msra.mxu0 %v1767
        %1795 = vmatprep.subr.bf16.mxu0 %v1770
        %1796 = vmatpush1.bf16.msra.mxu0 %v1769
        %1797 = vmatprep.subr.bf16.mxu0 %v1787
        %1798 = vmatpush1.bf16.msra.mxu0 %v1784
        %1799 = vmatprep.subr.bf16.mxu0 0
        %1800 = vmatpush1.bf16.msra.mxu0 0
        %1801 = vmatprep.subr.bf16.mxu0 0
        %1802 = vmatpush1.bf16.msra.mxu0 0
        %1803 = vmatprep.subr.bf16.mxu0 0
        %1804 = vmatpush1.bf16.msra.mxu0 0
        %1805 = vmatprep.subr.bf16.mxu0 0
        %1806 = vmatpush1.bf16.msra.mxu0 0
        %1807 = vmatprep.subr.bf16.mxu0 0
        %1808 = vmatpush1.bf16.msra.mxu0 0
        %1809 = vmatprep.subr.bf16.mxu0 0
        %1810 = vmatpush1.bf16.msra.mxu0 0
        %1811 = vmatprep.subr.bf16.mxu0 0
        %1812 = vmatpush1.bf16.msra.mxu0 0
        %1813 = vmatprep.subr.bf16.mxu0 0
        %1814 = vmatpush1.bf16.msra.mxu0 0
        %1815 = vmatprep.subr.bf16.mxu0 0
        %1816 = vmatpush1.bf16.msra.mxu0 0
        %1817 = vmatprep.subr.bf16.mxu0 0
        %1818 = vmatpush1.bf16.msra.mxu0 0
        %1819 = vmatprep.subr.bf16.mxu0 0
        %1820 = vmatpush1.bf16.msra.mxu0 0
        %1821 = vmatprep.mubr.bf16.mxu0 0
        %1822 = vmatmul.mubr.bf16.gmra.mrb[0].mxu0 %v1780
        %v1823 = vpop.f32.mrb[0].mxu0
        %v1824 = vadd.f32 %v1776, %v1823
        %v1825 = vpop.f32.mrb[0].mxu0
        %v1826 = vadd.f32 %v1776, %v1825
        %v1827 = vpop.f32.mrb[0].mxu0
        %v1828 = vpop.f32.mrb[0].mxu0
        %1829 = vdwg.mxu0
        %v1830 = vadd.f32 %v1824, %v1826
        %1831 = vadd.xlane.f32.xlu0 %v1830
        %v1832 = vpop.xlane.xlu0 %1831
        %v1833 = vrot.slane %v1832, 4
        %v1834 = vadd.f32 %v1832, %v1833
        %v1835 = vrot.slane %v1834, 2
        %v1836 = vadd.f32 %v1834, %v1835
        %v1837 = vrot.slane %v1836, 1
        %v1838 = vadd.f32 %v1836, %v1837
        %s1839 = vtos %v1838
        %v1840 = vrcp.pop 2048.0
        %s1841 = vtos %v1840
        %s1842 = smul.f32 %s1839, %s1841
        %v1843 = vmul.f32 %v1824, %v1824
        %v1844 = vmul.f32 %v1826, %v1826
        %v1845 = vadd.f32 %v1843, %v1844
        %1846 = vadd.xlane.f32.xlu0 %v1845
        %v1847 = vpop.xlane.xlu0 %1846
        %v1848 = vrot.slane %v1847, 4
        %v1849 = vadd.f32 %v1847, %v1848
        %v1850 = vrot.slane %v1849, 2
        %v1851 = vadd.f32 %v1849, %v1850
        %v1852 = vrot.slane %v1851, 1
        %v1853 = vadd.f32 %v1851, %v1852
        %s1854 = vtos %v1853
        %v1855 = vrcp.pop 2048.0
        %s1856 = vtos %v1855
        %s1857 = smul.f32 %s1854, %s1856
        %s1858 = smul.f32 %s1842, %s1842
        %s1859 = ssub.f32 %s1857, %s1858
        %s1860 = smax.f32 %s1859, 0.0
        %v1861 = vstv %s1842
        %v1862 = vsub.f32 %v1824, %v1861
        %v1863 = vsub.f32 %v1826, %v1861
        %s1864 = sadd.f32 %s1860, 1e-05
        %v1865 = vstv %s1864
        %v1866 = vrsqrt.pop %v1865
        %s1867 = vtos %v1866
        %v1868 = vstv %s1867
        %v1869 = vmul.f32 %v1862, %v1868
        %v1870 = vmul.f32 %v1863, %v1868
        %1871 = vset.pattern.permute.xlu0 1
        %1872 = vperm.xlu0 %1871, %v1509
        %v1873 = vpop.permute.xlu0 %1872
        %v1875 = vmul.f32 %v1869, %v1873
        %v1876 = vmul.f32 %v1870, %v1873
        %1877 = vset.pattern.permute.xlu0 2
        %1878 = vperm.xlu0 %1877, %v1509
        %v1879 = vpop.permute.xlu0 %1878
        %v1881 = vadd.f32 %v1875, %v1879
        %v1882 = vadd.f32 %v1876, %v1879
        %v1883 = vmul.f32 %v1881, %v1881
        %v1884 = vmul.f32 %v1882, %v1882
        %v1885 = vmul.f32 %v1881, %v1883
        %v1886 = vmul.f32 %v1882, %v1884
        %v1887 = vmul.f32 %v1885, 0.044715
        %v1888 = vmul.f32 %v1886, 0.044715
        %v1889 = vadd.f32 %v1881, %v1887
        %v1890 = vadd.f32 %v1882, %v1888
        %v1891 = vmul.f32 %v1889, 0.7978846
        %v1892 = vmul.f32 %v1890, 0.7978846
        %v1893 = vtanh.pop %v1891
        %v1894 = vtanh.pop %v1892
        %v1895 = vadd.f32 %v1893, 1.0
        %v1896 = vadd.f32 %v1894, 1.0
        %v1897 = vmul.f32 %v1895, 0.5
        %v1898 = vmul.f32 %v1896, 0.5
        %v1899 = vmul.f32 %v1881, %v1897
        %v1900 = vmul.f32 %v1882, %v1898
        %v1901 = vld [vmem:[#allocation9] sm:$0xff]
        %1902 = vrot.lane.b32.xlu0 %v1899, 17
        %v1903 = vpop.permute.xlu0 %1902
        %1904 = vrot.lane.b32.xlu0 %v1900, 17
        %v1905 = vpop.permute.xlu0 %1904
        %v1906 = vsel %vm1656, %v1903, %v1905
        %v1907 = vsel %vm1656, %v1905, %v1903
        %v1908 = vsel %vm1661, %v1907, 0.0
        %v1909 = vsel %vm1662, %v1906, 0.0
        %1910 = vrot.lane.b32.xlu0 %v1899, 16
        %v1911 = vpop.permute.xlu0 %1910
        %1912 = vrot.lane.b32.xlu0 %v1900, 16
        %v1913 = vpop.permute.xlu0 %1912
        %v1914 = vsel %vm1669, %v1911, %v1913
        %v1915 = vsel %vm1669, %v1913, %v1911
        %v1916 = vsel %vm1674, %v1915, 0.0
        %v1917 = vsel %vm1675, %v1914, 0.0
        %1918 = vrot.lane.b32.xlu0 %v1899, 15
        %v1919 = vpop.permute.xlu0 %1918
        %1920 = vrot.lane.b32.xlu0 %v1900, 15
        %v1921 = vpop.permute.xlu0 %1920
        %v1922 = vsel %vm1682, %v1919, %v1921
        %v1923 = vsel %vm1682, %v1921, %v1919
        %v1924 = vsel %vm1687, %v1923, 0.0
        %v1925 = vsel %vm1688, %v1922, 0.0
        %1926 = vrot.lane.b32.xlu0 %v1899, 1
        %v1927 = vpop.permute.xlu0 %1926
        %1928 = vrot.lane.b32.xlu0 %v1900, 1
        %v1929 = vpop.permute.xlu0 %1928
        %v1930 = vsel %vm1695, %v1927, %v1929
        %v1931 = vsel %vm1695, %v1929, %v1927
        %v1932 = vsel %vm1700, %v1931, 0.0
        %v1933 = vsel %vm1701, %v1930, 0.0
        %v1934 = vsel %vm1706, %v1899, 0.0
        %v1935 = vsel %vm1707, %v1900, 0.0
        %1936 = vrot.lane.b32.xlu0 %v1899, 127
        %v1937 = vpop.permute.xlu0 %1936
        %1938 = vrot.lane.b32.xlu0 %v1900, 127
        %v1939 = vpop.permute.xlu0 %1938
        %v1940 = vsel %vm1714, %v1937, %v1939
        %v1941 = vsel %vm1714, %v1939, %v1937
        %v1942 = vsel %vm1719, %v1940, 0.0
        %v1943 = vsel %vm1720, %v1941, 0.0
        %1944 = vrot.lane.b32.xlu0 %v1899, 113
        %v1945 = vpop.permute.xlu0 %1944
        %1946 = vrot.lane.b32.xlu0 %v1900, 113
        %v1947 = vpop.permute.xlu0 %1946
        %v1948 = vsel %vm1727, %v1945, %v1947
        %v1949 = vsel %vm1727, %v1947, %v1945
        %v1950 = vsel %vm1732, %v1948, 0.0
        %v1951 = vsel %vm1733, %v1949, 0.0
        %1952 = vrot.lane.b32.xlu0 %v1899, 112
        %v1953 = vpop.permute.xlu0 %1952
        %1954 = vrot.lane.b32.xlu0 %v1900, 112
        %v1955 = vpop.permute.xlu0 %1954
        %v1956 = vsel %vm1740, %v1953, %v1955
        %v1957 = vsel %vm1740, %v1955, %v1953
        %v1958 = vsel %vm1745, %v1956, 0.0
        %v1959 = vsel %vm1746, %v1957, 0.0
        %1960 = vrot.lane.b32.xlu0 %v1899, 111
        %v1961 = vpop.permute.xlu0 %1960
        %1962 = vrot.lane.b32.xlu0 %v1900, 111
        %v1963 = vpop.permute.xlu0 %1962
        %v1964 = vsel %vm1753, %v1961, %v1963
        %v1965 = vsel %vm1753, %v1963, %v1961
        %v1966 = vsel %vm1758, %v1964, 0.0
        %v1967 = vsel %vm1759, %v1965, 0.0
        %v1968 = vpack.c.bf16 %v1901, %v1901
        %v1969 = vpack.c.bf16 %v1916, %v1908
        %v1970 = vpack.c.bf16 %v1917, %v1909
        %v1971 = vpack.c.bf16 %v1932, %v1924
        %v1972 = vpack.c.bf16 %v1933, %v1925
        %v1973 = vpack.c.bf16 %v1942, %v1934
        %v1974 = vpack.c.bf16 %v1943, %v1935
        %v1975 = vpack.c.bf16 %v1958, %v1950
        %v1976 = vpack.c.bf16 %v1959, %v1951
        %v1977 = vpack.c.bf16 %v1966, %v1966
        %v1978 = vpack.c.bf16 %v1967, %v1967
        %1979 = vset.pattern.permute.xlu0 3
        %1980 = vperm.xlu0 %1979, %v1509
        %v1981 = vpop.permute.xlu0 %1980
        %v1984 = vsel %vm1778, %v1968, 0
        %v1987 = vsel %vm1782, %v1977, 0
        %v1990 = vsel %vm1782, %v1978, 0
        %1992 = vmatprep.subr.bf16.mxu0 %v1970
        %1993 = vmatpush1.bf16.msra.mxu0 %v1969
        %1994 = vmatprep.subr.bf16.mxu0 %v1972
        %1995 = vmatpush1.bf16.msra.mxu0 %v1971
        %1996 = vmatprep.subr.bf16.mxu0 %v1974
        %1997 = vmatpush1.bf16.msra.mxu0 %v1973
        %1998 = vmatprep.subr.bf16.mxu0 %v1976
        %1999 = vmatpush1.bf16.msra.mxu0 %v1975
        %2000 = vmatprep.subr.bf16.mxu0 %v1990
        %2001 = vmatpush1.bf16.msra.mxu0 %v1987
        %2002 = vmatprep.subr.bf16.mxu0 0
        %2003 = vmatpush1.bf16.msra.mxu0 0
        %2004 = vmatprep.subr.bf16.mxu0 0
        %2005 = vmatpush1.bf16.msra.mxu0 0
        %2006 = vmatprep.subr.bf16.mxu0 0
        %2007 = vmatpush1.bf16.msra.mxu0 0
        %2008 = vmatprep.subr.bf16.mxu0 0
        %2009 = vmatpush1.bf16.msra.mxu0 0
        %2010 = vmatprep.subr.bf16.mxu0 0
        %2011 = vmatpush1.bf16.msra.mxu0 0
        %2012 = vmatprep.subr.bf16.mxu0 0
        %2013 = vmatpush1.bf16.msra.mxu0 0
        %2014 = vmatprep.subr.bf16.mxu0 0
        %2015 = vmatpush1.bf16.msra.mxu0 0
        %2016 = vmatprep.subr.bf16.mxu0 0
        %2017 = vmatpush1.bf16.msra.mxu0 0
        %2018 = vmatprep.subr.bf16.mxu0 0
        %2019 = vmatpush1.bf16.msra.mxu0 0
        %2020 = vmatprep.subr.bf16.mxu0 0
        %2021 = vmatpush1.bf16.msra.mxu0 0
        %2022 = vmatprep.subr.bf16.mxu0 0
        %2023 = vmatpush1.bf16.msra.mxu0 0
        %2024 = vmatprep.mubr.bf16.mxu0 0
        %2025 = vmatmul.mubr.bf16.gmra.mrb[0].mxu0 %v1984
        %v2026 = vpop.f32.mrb[0].mxu0
        %v2027 = vadd.f32 %v1981, %v2026
        %v2028 = vpop.f32.mrb[0].mxu0
        %v2029 = vadd.f32 %v1981, %v2028
        %v2030 = vpop.f32.mrb[0].mxu0
        %v2031 = vpop.f32.mrb[0].mxu0
        %2032 = vdwg.mxu0
        %v2033 = vadd.f32 %v2027, %v2029
        %2034 = vadd.xlane.f32.xlu0 %v2033
        %v2035 = vpop.xlane.xlu0 %2034
        %v2036 = vrot.slane %v2035, 4
        %v2037 = vadd.f32 %v2035, %v2036
        %v2038 = vrot.slane %v2037, 2
        %v2039 = vadd.f32 %v2037, %v2038
        %v2040 = vrot.slane %v2039, 1
        %v2041 = vadd.f32 %v2039, %v2040
        %s2042 = vtos %v2041
        %v2043 = vrcp.pop 2048.0
        %s2044 = vtos %v2043
        %s2045 = smul.f32 %s2042, %s2044
        %v2046 = vmul.f32 %v2027, %v2027
        %v2047 = vmul.f32 %v2029, %v2029
        %v2048 = vadd.f32 %v2046, %v2047
        %2049 = vadd.xlane.f32.xlu0 %v2048
        %v2050 = vpop.xlane.xlu0 %2049
        %v2051 = vrot.slane %v2050, 4
        %v2052 = vadd.f32 %v2050, %v2051
        %v2053 = vrot.slane %v2052, 2
        %v2054 = vadd.f32 %v2052, %v2053
        %v2055 = vrot.slane %v2054, 1
        %v2056 = vadd.f32 %v2054, %v2055
        %s2057 = vtos %v2056
        %v2058 = vrcp.pop 2048.0
        %s2059 = vtos %v2058
        %s2060 = smul.f32 %s2057, %s2059
        %s2061 = smul.f32 %s2045, %s2045
        %s2062 = ssub.f32 %s2060, %s2061
        %s2063 = smax.f32 %s2062, 0.0
        %v2064 = vstv %s2045
        %v2065 = vsub.f32 %v2027, %v2064
        %v2066 = vsub.f32 %v2029, %v2064
        %s2067 = sadd.f32 %s2063, 1e-05
        %v2068 = vstv %s2067
        %v2069 = vrsqrt.pop %v2068
        %s2070 = vtos %v2069
        %v2071 = vstv %s2070
        %v2072 = vmul.f32 %v2065, %v2071
        %v2073 = vmul.f32 %v2066, %v2071
        %2074 = vset.pattern.permute.xlu0 4
        %2075 = vperm.xlu0 %2074, %v1509
        %v2076 = vpop.permute.xlu0 %2075
        %v2078 = vmul.f32 %v2072, %v2076
        %v2079 = vmul.f32 %v2073, %v2076
        %2080 = vset.pattern.permute.xlu0 5
        %2081 = vperm.xlu0 %2080, %v1509
        %v2082 = vpop.permute.xlu0 %2081
        %v2084 = vadd.f32 %v2078, %v2082
        %v2085 = vadd.f32 %v2079, %v2082
        %v2086 = vadd.f32 %v2084, %v1649
        %v2087 = vadd.f32 %v2085, %v1650
        %v2088 = vld [vmem:[#allocation12] sm:$0xf]
        %v2089 = vpack.c.bf16 %v2088, %v2088
        %v2090 = vpack.c.bf16 %v2086, %v2086
        %v2091 = vpack.c.bf16 %v2087, %v2087
        %v2092 = vld [vmem:[#allocation13] sm:$0xf]
        %2094 = vset.pattern.permute.xlu0 0
        %2095 = vperm.xlu0 %2094, %v2092
        %v2096 = vpop.permute.xlu0 %2095
        %vm2098 = vcmask 64512
        %v2100 = vsel %vm2098, %v2089, 0
        %v2103 = vsel %vm1782, %v2090, 0
        %v2106 = vsel %vm1782, %v2091, 0
        %2108 = vmatprep.subr.bf16.mxu0 %v2106
        %2109 = vmatpush1.bf16.msra.mxu0 %v2103
        %2110 = vmatprep.subr.bf16.mxu0 0
        %2111 = vmatpush1.bf16.msra.mxu0 0
        %2112 = vmatprep.subr.bf16.mxu0 0
        %2113 = vmatpush1.bf16.msra.mxu0 0
        %2114 = vmatprep.subr.bf16.mxu0 0
        %2115 = vmatpush1.bf16.msra.mxu0 0
        %2116 = vmatprep.subr.bf16.mxu0 0
        %2117 = vmatpush1.bf16.msra.mxu0 0
        %2118 = vmatprep.subr.bf16.mxu0 0
        %2119 = vmatpush1.bf16.msra.mxu0 0
        %2120 = vmatprep.subr.bf16.mxu0 0
        %2121 = vmatpush1.bf16.msra.mxu0 0
        %2122 = vmatprep.subr.bf16.mxu0 0
        %2123 = vmatpush1.bf16.msra.mxu0 0
        %2124 = vmatprep.subr.bf16.mxu0 0
        %2125 = vmatpush1.bf16.msra.mxu0 0
        %2126 = vmatprep.subr.bf16.mxu0 0
        %2127 = vmatpush1.bf16.msra.mxu0 0
        %2128 = vmatprep.subr.bf16.mxu0 0
        %2129 = vmatpush1.bf16.msra.mxu0 0
        %2130 = vmatprep.subr.bf16.mxu0 0
        %2131 = vmatpush1.bf16.msra.mxu0 0
        %2132 = vmatprep.subr.bf16.mxu0 0
        %2133 = vmatpush1.bf16.msra.mxu0 0
        %2134 = vmatprep.subr.bf16.mxu0 0
        %2135 = vmatpush1.bf16.msra.mxu0 0
        %2136 = vmatprep.subr.bf16.mxu0 0
        %2137 = vmatpush1.bf16.msra.mxu0 0
        %2138 = vmatprep.subr.bf16.mxu0 0
        %2139 = vmatpush1.bf16.msra.mxu0 0
        %2140 = vmatprep.mubr.bf16.mxu0 0
        %2141 = vmatmul.mubr.bf16.gmra.mrb[0].mxu0 %v2100
        %v2142 = vpop.f32.mrb[0].mxu0
        %v2143 = vadd.f32 %v2096, %v2142
        %v2144 = vpop.f32.mrb[0].mxu0
        %v2145 = vadd.f32 %v2096, %v2144
        %v2146 = vpop.f32.mrb[0].mxu0
        %v2147 = vpop.f32.mrb[0].mxu0
        %2148 = vdwg.mxu0
        %v2149 = vld [vmem:[#allocation15] sm:$0xff]
        %v2150 = vld [vmem:[#allocation15 + $0x8] sm:$0xff]
        %v2151 = vld [vmem:[#allocation15 + $0x10] sm:$0xff]
        %v2152 = vld [vmem:[#allocation15 + $0x18] sm:$0xff]
        %v2153 = vld [vmem:[#allocation15 + $0x20] sm:$0xff]
        %v2154 = vld [vmem:[#allocation15 + $0x28] sm:$0xff]
        %v2155 = vld [vmem:[#allocation15 + $0x30] sm:$0xff]
        %v2156 = vld [vmem:[#allocation15 + $0x38] sm:$0xff]
        %v2157 = vld [vmem:[#allocation15 + $0x40] sm:$0xff]
        %v2158 = vld [vmem:[#allocation15 + $0x48] sm:$0xff]
        %v2159 = vld [vmem:[#allocation15 + $0x50] sm:$0xff]
        %v2160 = vld [vmem:[#allocation15 + $0x58] sm:$0xff]
        %v2161 = vld [vmem:[#allocation15 + $0x60] sm:$0xff]
        %v2162 = vld [vmem:[#allocation15 + $0x68] sm:$0xff]
        %v2163 = vld [vmem:[#allocation15 + $0x70] sm:$0xff]
        %v2164 = vld [vmem:[#allocation15 + $0x78] sm:$0xff]
        %v2165 = vld [vmem:[#allocation15 + $0x80] sm:$0xff]
        %v2166 = vld [vmem:[#allocation15 + $0x88] sm:$0xff]
        %v2167 = vld [vmem:[#allocation15 + $0x90] sm:$0xff]
        %v2168 = vld [vmem:[#allocation15 + $0x98] sm:$0xff]
        %v2169 = vld [vmem:[#allocation15 + $0xa0] sm:$0xff]
        %v2170 = vld [vmem:[#allocation15 + $0xa8] sm:$0xff]
        %v2171 = vld [vmem:[#allocation15 + $0xb0] sm:$0xff]
        %v2172 = vld [vmem:[#allocation15 + $0xb8] sm:$0xff]
        %v2173 = vld [vmem:[#allocation15 + $0xc0] sm:$0xff]
        %v2174 = vld [vmem:[#allocation15 + $0xc8] sm:$0xff]
        %v2175 = vld [vmem:[#allocation15 + $0xd0] sm:$0xff]
        %v2176 = vld [vmem:[#allocation15 + $0xd8] sm:$0xff]
        %v2177 = vld [vmem:[#allocation15 + $0xe0] sm:$0xff]
        %v2178 = vld [vmem:[#allocation15 + $0xe8] sm:$0xff]
        %v2179 = vld [vmem:[#allocation15 + $0xf0] sm:$0xff]
        %v2180 = vld [vmem:[#allocation15 + $0xf8] sm:$0xff]
        %v2181 = vld [vmem:[#allocation15 + $0x100] sm:$0xff]
        %v2182 = vld [vmem:[#allocation15 + $0x108] sm:$0xff]
        %v2183 = vld [vmem:[#allocation15 + $0x110] sm:$0xff]
        %v2184 = vld [vmem:[#allocation15 + $0x118] sm:$0xff]
        %v2185 = vld [vmem:[#allocation15 + $0x120] sm:$0xff]
        %v2186 = vld [vmem:[#allocation15 + $0x128] sm:$0xff]
        %v2187 = vld [vmem:[#allocation15 + $0x130] sm:$0xff]
        %v2188 = vld [vmem:[#allocation15 + $0x138] sm:$0xff]
        %v2189 = vld [vmem:[#allocation15 + $0x140] sm:$0xff]
        %v2190 = vld [vmem:[#allocation15 + $0x148] sm:$0xff]
        %v2191 = vld [vmem:[#allocation15 + $0x150] sm:$0xff]
        %v2192 = vld [vmem:[#allocation15 + $0x158] sm:$0xff]
        %v2193 = vld [vmem:[#allocation15 + $0x160] sm:$0xff]
        %v2194 = vld [vmem:[#allocation15 + $0x168] sm:$0xff]
        %v2195 = vld [vmem:[#allocation15 + $0x170] sm:$0xff]
        %v2196 = vld [vmem:[#allocation15 + $0x178] sm:$0xff]
        %v2197 = vld [vmem:[#allocation15 + $0x180] sm:$0xff]
        %v2198 = vld [vmem:[#allocation15 + $0x188] sm:$0xff]
        %v2199 = vld [vmem:[#allocation15 + $0x190] sm:$0xff]
        %v2200 = vld [vmem:[#allocation15 + $0x198] sm:$0xff]
        %v2201 = vld [vmem:[#allocation15 + $0x1a0] sm:$0xff]
        %v2202 = vld [vmem:[#allocation15 + $0x1a8] sm:$0xff]
        %v2203 = vld [vmem:[#allocation15 + $0x1b0] sm:$0xff]
        %v2204 = vld [vmem:[#allocation15 + $0x1b8] sm:$0xff]
        %v2205 = vld [vmem:[#allocation15 + $0x1c0] sm:$0xff]
        %v2206 = vld [vmem:[#allocation15 + $0x1c8] sm:$0xff]
        %v2207 = vld [vmem:[#allocation15 + $0x1d0] sm:$0xff]
        %v2208 = vld [vmem:[#allocation15 + $0x1d8] sm:$0xff]
        %v2209 = vld [vmem:[#allocation15 + $0x1e0] sm:$0xff]
        %v2210 = vld [vmem:[#allocation15 + $0x1e8] sm:$0xff]
        %v2211 = vld [vmem:[#allocation15 + $0x1f0] sm:$0xff]
        %v2212 = vld [vmem:[#allocation15 + $0x1f8] sm:$0xff]
        %v2213 = vld [vmem:[#allocation15 + $0x200] sm:$0xff]
        %v2214 = vld [vmem:[#allocation15 + $0x208] sm:$0xff]
        %v2215 = vld [vmem:[#allocation15 + $0x210] sm:$0xff]
        %v2216 = vld [vmem:[#allocation15 + $0x218] sm:$0xff]
        %v2217 = vld [vmem:[#allocation15 + $0x220] sm:$0xff]
        %v2218 = vld [vmem:[#allocation15 + $0x228] sm:$0xff]
        %v2219 = vld [vmem:[#allocation15 + $0x230] sm:$0xff]
        %v2220 = vld [vmem:[#allocation15 + $0x238] sm:$0xff]
        %v2221 = vld [vmem:[#allocation15 + $0x240] sm:$0xff]
        %v2222 = vld [vmem:[#allocation15 + $0x248] sm:$0xff]
        %v2223 = vld [vmem:[#allocation15 + $0x250] sm:$0xff]
        %v2224 = vld [vmem:[#allocation15 + $0x258] sm:$0xff]
        %v2225 = vld [vmem:[#allocation15 + $0x260] sm:$0xff]
        %v2226 = vld [vmem:[#allocation15 + $0x268] sm:$0xff]
        %v2227 = vld [vmem:[#allocation15 + $0x270] sm:$0xff]
        %v2228 = vld [vmem:[#allocation15 + $0x278] sm:$0xff]
        %v2229 = vld [vmem:[#allocation15 + $0x280] sm:$0xff]
        %v2230 = vld [vmem:[#allocation15 + $0x288] sm:$0xff]
        %v2231 = vld [vmem:[#allocation15 + $0x290] sm:$0xff]
        %v2232 = vld [vmem:[#allocation15 + $0x298] sm:$0xff]
        %v2233 = vld [vmem:[#allocation15 + $0x2a0] sm:$0xff]
        %v2234 = vld [vmem:[#allocation15 + $0x2a8] sm:$0xff]
        %v2235 = vld [vmem:[#allocation15 + $0x2b0] sm:$0xff]
        %v2236 = vld [vmem:[#allocation15 + $0x2b8] sm:$0xff]
        %v2237 = vld [vmem:[#allocation15 + $0x2c0] sm:$0xff]
        %v2238 = vld [vmem:[#allocation15 + $0x2c8] sm:$0xff]
        %v2239 = vld [vmem:[#allocation15 + $0x2d0] sm:$0xff]
        %v2240 = vld [vmem:[#allocation15 + $0x2d8] sm:$0xff]
        %v2241 = vld [vmem:[#allocation15 + $0x2e0] sm:$0xff]
        %v2242 = vld [vmem:[#allocation15 + $0x2e8] sm:$0xff]
        %v2243 = vld [vmem:[#allocation15 + $0x2f0] sm:$0xff]
        %v2244 = vld [vmem:[#allocation15 + $0x2f8] sm:$0xff]
        %v2245 = vld [vmem:[#allocation15 + $0x300] sm:$0xff]
        %v2246 = vld [vmem:[#allocation15 + $0x308] sm:$0xff]
        %v2247 = vld [vmem:[#allocation15 + $0x310] sm:$0xff]
        %v2248 = vld [vmem:[#allocation15 + $0x318] sm:$0xff]
        %v2249 = vld [vmem:[#allocation15 + $0x320] sm:$0xff]
        %v2250 = vld [vmem:[#allocation15 + $0x328] sm:$0xff]
        %v2251 = vld [vmem:[#allocation15 + $0x330] sm:$0xff]
        %v2252 = vld [vmem:[#allocation15 + $0x338] sm:$0xff]
        %v2253 = vld [vmem:[#allocation15 + $0x340] sm:$0xff]
        %v2254 = vld [vmem:[#allocation15 + $0x348] sm:$0xff]
        %v2255 = vld [vmem:[#allocation15 + $0x350] sm:$0xff]
        %v2256 = vld [vmem:[#allocation15 + $0x358] sm:$0xff]
        %v2257 = vld [vmem:[#allocation15 + $0x360] sm:$0xff]
        %v2258 = vld [vmem:[#allocation15 + $0x368] sm:$0xff]
        %v2259 = vld [vmem:[#allocation15 + $0x370] sm:$0xff]
        %v2260 = vld [vmem:[#allocation15 + $0x378] sm:$0xff]
        %v2261 = vld [vmem:[#allocation15 + $0x380] sm:$0xff]
        %v2262 = vld [vmem:[#allocation15 + $0x388] sm:$0xff]
        %v2263 = vld [vmem:[#allocation15 + $0x390] sm:$0xff]
        %v2264 = vld [vmem:[#allocation15 + $0x398] sm:$0xff]
        %v2265 = vld [vmem:[#allocation15 + $0x3a0] sm:$0xff]
        %v2266 = vld [vmem:[#allocation15 + $0x3a8] sm:$0xff]
        %v2267 = vld [vmem:[#allocation15 + $0x3b0] sm:$0xff]
        %v2268 = vld [vmem:[#allocation15 + $0x3b8] sm:$0xff]
        %v2269 = vld [vmem:[#allocation15 + $0x3c0] sm:$0xff]
        %v2270 = vld [vmem:[#allocation15 + $0x3c8] sm:$0xff]
        %v2271 = vld [vmem:[#allocation15 + $0x3d0] sm:$0xff]
        %v2272 = vld [vmem:[#allocation15 + $0x3d8] sm:$0xff]
        %v2273 = vld [vmem:[#allocation15 + $0x3e0] sm:$0xff]
        %v2274 = vld [vmem:[#allocation15 + $0x3e8] sm:$0xff]
        %v2275 = vld [vmem:[#allocation15 + $0x3f0] sm:$0xff]
        %v2276 = vld [vmem:[#allocation15 + $0x3f8] sm:$0xff]
        %v2277 = vld [vmem:[#allocation15 + $0x400] sm:$0xff]
        %v2278 = vld [vmem:[#allocation15 + $0x408] sm:$0xff]
        %v2279 = vld [vmem:[#allocation15 + $0x410] sm:$0xff]
        %v2280 = vld [vmem:[#allocation15 + $0x418] sm:$0xff]
        %v2281 = vld [vmem:[#allocation15 + $0x420] sm:$0xff]
        %v2282 = vld [vmem:[#allocation15 + $0x428] sm:$0xff]
        %v2283 = vld [vmem:[#allocation15 + $0x430] sm:$0xff]
        %v2284 = vld [vmem:[#allocation15 + $0x438] sm:$0xff]
        %v2285 = vld [vmem:[#allocation15 + $0x440] sm:$0xff]
        %v2286 = vld [vmem:[#allocation15 + $0x448] sm:$0xff]
        %v2287 = vld [vmem:[#allocation15 + $0x450] sm:$0xff]
        %v2288 = vld [vmem:[#allocation15 + $0x458] sm:$0xff]
        %v2289 = vld [vmem:[#allocation15 + $0x460] sm:$0xff]
        %v2290 = vld [vmem:[#allocation15 + $0x468] sm:$0xff]
        %v2291 = vld [vmem:[#allocation15 + $0x470] sm:$0xff]
        %v2292 = vld [vmem:[#allocation15 + $0x478] sm:$0xff]
        %v2293 = vld [vmem:[#allocation15 + $0x480] sm:$0xff]
        %v2294 = vld [vmem:[#allocation15 + $0x488] sm:$0xff]
        %v2295 = vld [vmem:[#allocation15 + $0x490] sm:$0xff]
        %v2296 = vld [vmem:[#allocation15 + $0x498] sm:$0xff]
        %v2297 = vld [vmem:[#allocation15 + $0x4a0] sm:$0xff]
        %v2298 = vld [vmem:[#allocation15 + $0x4a8] sm:$0xff]
        %v2299 = vld [vmem:[#allocation15 + $0x4b0] sm:$0xff]
        %v2300 = vld [vmem:[#allocation15 + $0x4b8] sm:$0xff]
        %v2301 = vld [vmem:[#allocation15 + $0x4c0] sm:$0xff]
        %v2302 = vld [vmem:[#allocation15 + $0x4c8] sm:$0xff]
        %v2303 = vld [vmem:[#allocation15 + $0x4d0] sm:$0xff]
        %v2304 = vld [vmem:[#allocation15 + $0x4d8] sm:$0xff]
        %v2305 = vld [vmem:[#allocation15 + $0x4e0] sm:$0xff]
        %v2306 = vld [vmem:[#allocation15 + $0x4e8] sm:$0xff]
        %v2307 = vld [vmem:[#allocation15 + $0x4f0] sm:$0xff]
        %v2308 = vld [vmem:[#allocation15 + $0x4f8] sm:$0xff]
        %v2309 = vld [vmem:[#allocation15 + $0x500] sm:$0xff]
        %v2310 = vld [vmem:[#allocation15 + $0x508] sm:$0xff]
        %v2311 = vld [vmem:[#allocation15 + $0x510] sm:$0xff]
        %v2312 = vld [vmem:[#allocation15 + $0x518] sm:$0xff]
        %v2313 = vld [vmem:[#allocation15 + $0x520] sm:$0xff]
        %v2314 = vld [vmem:[#allocation15 + $0x528] sm:$0xff]
        %v2315 = vld [vmem:[#allocation15 + $0x530] sm:$0xff]
        %v2316 = vld [vmem:[#allocation15 + $0x538] sm:$0xff]
        %v2317 = vld [vmem:[#allocation15 + $0x540] sm:$0xff]
        %v2318 = vld [vmem:[#allocation15 + $0x548] sm:$0xff]
        %v2319 = vld [vmem:[#allocation15 + $0x550] sm:$0xff]
        %v2320 = vld [vmem:[#allocation15 + $0x558] sm:$0xff]
        %v2321 = vld [vmem:[#allocation15 + $0x560] sm:$0xff]
        %v2322 = vld [vmem:[#allocation15 + $0x568] sm:$0xff]
        %v2323 = vld [vmem:[#allocation15 + $0x570] sm:$0xff]
        %v2324 = vld [vmem:[#allocation15 + $0x578] sm:$0xff]
        %v2325 = vld [vmem:[#allocation15 + $0x580] sm:$0xff]
        %v2326 = vld [vmem:[#allocation15 + $0x588] sm:$0xff]
        %v2327 = vld [vmem:[#allocation15 + $0x590] sm:$0xff]
        %v2328 = vld [vmem:[#allocation15 + $0x598] sm:$0xff]
        %v2329 = vld [vmem:[#allocation15 + $0x5a0] sm:$0xff]
        %v2330 = vld [vmem:[#allocation15 + $0x5a8] sm:$0xff]
        %v2331 = vld [vmem:[#allocation15 + $0x5b0] sm:$0xff]
        %v2332 = vld [vmem:[#allocation15 + $0x5b8] sm:$0xff]
        %v2333 = vld [vmem:[#allocation15 + $0x5c0] sm:$0xff]
        %v2334 = vld [vmem:[#allocation15 + $0x5c8] sm:$0xff]
        %v2335 = vld [vmem:[#allocation15 + $0x5d0] sm:$0xff]
        %v2336 = vld [vmem:[#allocation15 + $0x5d8] sm:$0xff]
        %v2337 = vld [vmem:[#allocation15 + $0x5e0] sm:$0xff]
        %v2338 = vld [vmem:[#allocation15 + $0x5e8] sm:$0xff]
        %v2339 = vld [vmem:[#allocation15 + $0x5f0] sm:$0xff]
        %v2340 = vld [vmem:[#allocation15 + $0x5f8] sm:$0xff]
        %v2341 = vld [vmem:[#allocation15 + $0x600] sm:$0xff]
        %v2342 = vld [vmem:[#allocation15 + $0x608] sm:$0xff]
        %v2343 = vld [vmem:[#allocation15 + $0x610] sm:$0xff]
        %v2344 = vld [vmem:[#allocation15 + $0x618] sm:$0xff]
        %v2345 = vld [vmem:[#allocation15 + $0x620] sm:$0xff]
        %v2346 = vld [vmem:[#allocation15 + $0x628] sm:$0xff]
        %v2347 = vld [vmem:[#allocation15 + $0x630] sm:$0xff]
        %v2348 = vld [vmem:[#allocation15 + $0x638] sm:$0xff]
        %v2349 = vld [vmem:[#allocation15 + $0x640] sm:$0xff]
        %v2350 = vld [vmem:[#allocation15 + $0x648] sm:$0xff]
        %v2351 = vld [vmem:[#allocation15 + $0x650] sm:$0xff]
        %v2352 = vld [vmem:[#allocation15 + $0x658] sm:$0xff]
        %v2353 = vld [vmem:[#allocation15 + $0x660] sm:$0xff]
        %v2354 = vld [vmem:[#allocation15 + $0x668] sm:$0xff]
        %v2355 = vld [vmem:[#allocation15 + $0x670] sm:$0xff]
        %v2356 = vld [vmem:[#allocation15 + $0x678] sm:$0xff]
        %v2357 = vld [vmem:[#allocation15 + $0x680] sm:$0xff]
        %v2358 = vld [vmem:[#allocation15 + $0x688] sm:$0xff]
        %v2359 = vld [vmem:[#allocation15 + $0x690] sm:$0xff]
        %v2360 = vld [vmem:[#allocation15 + $0x698] sm:$0xff]
        %v2361 = vld [vmem:[#allocation15 + $0x6a0] sm:$0xff]
        %v2362 = vld [vmem:[#allocation15 + $0x6a8] sm:$0xff]
        %v2363 = vld [vmem:[#allocation15 + $0x6b0] sm:$0xff]
        %v2364 = vld [vmem:[#allocation15 + $0x6b8] sm:$0xff]
        %v2365 = vld [vmem:[#allocation15 + $0x6c0] sm:$0xff]
        %v2366 = vld [vmem:[#allocation15 + $0x6c8] sm:$0xff]
        %v2367 = vld [vmem:[#allocation15 + $0x6d0] sm:$0xff]
        %v2368 = vld [vmem:[#allocation15 + $0x6d8] sm:$0xff]
        %v2369 = vld [vmem:[#allocation15 + $0x6e0] sm:$0xff]
        %v2370 = vld [vmem:[#allocation15 + $0x6e8] sm:$0xff]
        %v2371 = vld [vmem:[#allocation15 + $0x6f0] sm:$0xff]
        %v2372 = vld [vmem:[#allocation15 + $0x6f8] sm:$0xff]
        %v2373 = vld [vmem:[#allocation15 + $0x700] sm:$0xff]
        %v2374 = vld [vmem:[#allocation15 + $0x708] sm:$0xff]
        %v2375 = vld [vmem:[#allocation15 + $0x710] sm:$0xff]
        %v2376 = vld [vmem:[#allocation15 + $0x718] sm:$0xff]
        %v2377 = vld [vmem:[#allocation15 + $0x720] sm:$0xff]
        %v2378 = vld [vmem:[#allocation15 + $0x728] sm:$0xff]
        %v2379 = vld [vmem:[#allocation15 + $0x730] sm:$0xff]
        %v2380 = vld [vmem:[#allocation15 + $0x738] sm:$0xff]
        %v2381 = vld [vmem:[#allocation15 + $0x740] sm:$0xff]
        %v2382 = vld [vmem:[#allocation15 + $0x748] sm:$0xff]
        %v2383 = vld [vmem:[#allocation15 + $0x750] sm:$0xff]
        %v2384 = vld [vmem:[#allocation15 + $0x758] sm:$0xff]
        %v2385 = vld [vmem:[#allocation15 + $0x760] sm:$0xff]
        %v2386 = vld [vmem:[#allocation15 + $0x768] sm:$0xff]
        %v2387 = vld [vmem:[#allocation15 + $0x770] sm:$0xff]
        %v2388 = vld [vmem:[#allocation15 + $0x778] sm:$0xff]
        %v2389 = vld [vmem:[#allocation15 + $0x780] sm:$0xff]
        %v2390 = vld [vmem:[#allocation15 + $0x788] sm:$0xff]
        %v2391 = vld [vmem:[#allocation15 + $0x790] sm:$0xff]
        %v2392 = vld [vmem:[#allocation15 + $0x798] sm:$0xff]
        %v2393 = vld [vmem:[#allocation15 + $0x7a0] sm:$0xff]
        %v2394 = vld [vmem:[#allocation15 + $0x7a8] sm:$0xff]
        %v2395 = vld [vmem:[#allocation15 + $0x7b0] sm:$0xff]
        %v2396 = vld [vmem:[#allocation15 + $0x7b8] sm:$0xff]
        %v2397 = vld [vmem:[#allocation15 + $0x7c0] sm:$0xff]
        %v2398 = vld [vmem:[#allocation15 + $0x7c8] sm:$0xff]
        %v2399 = vld [vmem:[#allocation15 + $0x7d0] sm:$0xff]
        %v2400 = vld [vmem:[#allocation15 + $0x7d8] sm:$0xff]
        %v2401 = vld [vmem:[#allocation15 + $0x7e0] sm:$0xff]
        %v2402 = vld [vmem:[#allocation15 + $0x7e8] sm:$0xff]
        %v2403 = vld [vmem:[#allocation15 + $0x7f0] sm:$0xff]
        %v2404 = vld [vmem:[#allocation15 + $0x7f8] sm:$0xff]
        %v2405 = vpack.c.bf16 %v2143, %v2143
        %v2406 = vpack.c.bf16 %v2145, %v2145
        %v2407 = vpack.c.bf16 %v2157, %v2149
        %v2408 = vpack.c.bf16 %v2158, %v2150
        %v2409 = vpack.c.bf16 %v2159, %v2151
        %v2410 = vpack.c.bf16 %v2160, %v2152
        %v2411 = vpack.c.bf16 %v2161, %v2153
        %v2412 = vpack.c.bf16 %v2162, %v2154
        %v2413 = vpack.c.bf16 %v2163, %v2155
        %v2414 = vpack.c.bf16 %v2164, %v2156
        %v2415 = vpack.c.bf16 %v2173, %v2165
        %v2416 = vpack.c.bf16 %v2174, %v2166
        %v2417 = vpack.c.bf16 %v2175, %v2167
        %v2418 = vpack.c.bf16 %v2176, %v2168
        %v2419 = vpack.c.bf16 %v2177, %v2169
        %v2420 = vpack.c.bf16 %v2178, %v2170
        %v2421 = vpack.c.bf16 %v2179, %v2171
        %v2422 = vpack.c.bf16 %v2180, %v2172
        %v2423 = vpack.c.bf16 %v2189, %v2181
        %v2424 = vpack.c.bf16 %v2190, %v2182
        %v2425 = vpack.c.bf16 %v2191, %v2183
        %v2426 = vpack.c.bf16 %v2192, %v2184
        %v2427 = vpack.c.bf16 %v2193, %v2185
        %v2428 = vpack.c.bf16 %v2194, %v2186
        %v2429 = vpack.c.bf16 %v2195, %v2187
        %v2430 = vpack.c.bf16 %v2196, %v2188
        %v2431 = vpack.c.bf16 %v2205, %v2197
        %v2432 = vpack.c.bf16 %v2206, %v2198
        %v2433 = vpack.c.bf16 %v2207, %v2199
        %v2434 = vpack.c.bf16 %v2208, %v2200
        %v2435 = vpack.c.bf16 %v2209, %v2201
        %v2436 = vpack.c.bf16 %v2210, %v2202
        %v2437 = vpack.c.bf16 %v2211, %v2203
        %v2438 = vpack.c.bf16 %v2212, %v2204
        %v2439 = vpack.c.bf16 %v2221, %v2213
        %v2440 = vpack.c.bf16 %v2222, %v2214
        %v2441 = vpack.c.bf16 %v2223, %v2215
        %v2442 = vpack.c.bf16 %v2224, %v2216
        %v2443 = vpack.c.bf16 %v2225, %v2217
        %v2444 = vpack.c.bf16 %v2226, %v2218
        %v2445 = vpack.c.bf16 %v2227, %v2219
        %v2446 = vpack.c.bf16 %v2228, %v2220
        %v2447 = vpack.c.bf16 %v2237, %v2229
        %v2448 = vpack.c.bf16 %v2238, %v2230
        %v2449 = vpack.c.bf16 %v2239, %v2231
        %v2450 = vpack.c.bf16 %v2240, %v2232
        %v2451 = vpack.c.bf16 %v2241, %v2233
        %v2452 = vpack.c.bf16 %v2242, %v2234
        %v2453 = vpack.c.bf16 %v2243, %v2235
        %v2454 = vpack.c.bf16 %v2244, %v2236
        %v2455 = vpack.c.bf16 %v2253, %v2245
        %v2456 = vpack.c.bf16 %v2254, %v2246
        %v2457 = vpack.c.bf16 %v2255, %v2247
        %v2458 = vpack.c.bf16 %v2256, %v2248
        %v2459 = vpack.c.bf16 %v2257, %v2249
        %v2460 = vpack.c.bf16 %v2258, %v2250
        %v2461 = vpack.c.bf16 %v2259, %v2251
        %v2462 = vpack.c.bf16 %v2260, %v2252
        %v2463 = vpack.c.bf16 %v2269, %v2261
        %v2464 = vpack.c.bf16 %v2270, %v2262
        %v2465 = vpack.c.bf16 %v2271, %v2263
        %v2466 = vpack.c.bf16 %v2272, %v2264
        %v2467 = vpack.c.bf16 %v2273, %v2265
        %v2468 = vpack.c.bf16 %v2274, %v2266
        %v2469 = vpack.c.bf16 %v2275, %v2267
        %v2470 = vpack.c.bf16 %v2276, %v2268
        %v2471 = vpack.c.bf16 %v2285, %v2277
        %v2472 = vpack.c.bf16 %v2286, %v2278
        %v2473 = vpack.c.bf16 %v2287, %v2279
        %v2474 = vpack.c.bf16 %v2288, %v2280
        %v2475 = vpack.c.bf16 %v2289, %v2281
        %v2476 = vpack.c.bf16 %v2290, %v2282
        %v2477 = vpack.c.bf16 %v2291, %v2283
        %v2478 = vpack.c.bf16 %v2292, %v2284
        %v2479 = vpack.c.bf16 %v2301, %v2293
        %v2480 = vpack.c.bf16 %v2302, %v2294
        %v2481 = vpack.c.bf16 %v2303, %v2295
        %v2482 = vpack.c.bf16 %v2304, %v2296
        %v2483 = vpack.c.bf16 %v2305, %v2297
        %v2484 = vpack.c.bf16 %v2306, %v2298
        %v2485 = vpack.c.bf16 %v2307, %v2299
        %v2486 = vpack.c.bf16 %v2308, %v2300
        %v2487 = vpack.c.bf16 %v2317, %v2309
        %v2488 = vpack.c.bf16 %v2318, %v2310
        %v2489 = vpack.c.bf16 %v2319, %v2311
        %v2490 = vpack.c.bf16 %v2320, %v2312
        %v2491 = vpack.c.bf16 %v2321, %v2313
        %v2492 = vpack.c.bf16 %v2322, %v2314
        %v2493 = vpack.c.bf16 %v2323, %v2315
        %v2494 = vpack.c.bf16 %v2324, %v2316
        %v2495 = vpack.c.bf16 %v2333, %v2325
        %v2496 = vpack.c.bf16 %v2334, %v2326
        %v2497 = vpack.c.bf16 %v2335, %v2327
        %v2498 = vpack.c.bf16 %v2336, %v2328
        %v2499 = vpack.c.bf16 %v2337, %v2329
        %v2500 = vpack.c.bf16 %v2338, %v2330
        %v2501 = vpack.c.bf16 %v2339, %v2331
        %v2502 = vpack.c.bf16 %v2340, %v2332
        %v2503 = vpack.c.bf16 %v2349, %v2341
        %v2504 = vpack.c.bf16 %v2350, %v2342
        %v2505 = vpack.c.bf16 %v2351, %v2343
        %v2506 = vpack.c.bf16 %v2352, %v2344
        %v2507 = vpack.c.bf16 %v2353, %v2345
        %v2508 = vpack.c.bf16 %v2354, %v2346
        %v2509 = vpack.c.bf16 %v2355, %v2347
        %v2510 = vpack.c.bf16 %v2356, %v2348
        %v2511 = vpack.c.bf16 %v2365, %v2357
        %v2512 = vpack.c.bf16 %v2366, %v2358
        %v2513 = vpack.c.bf16 %v2367, %v2359
        %v2514 = vpack.c.bf16 %v2368, %v2360
        %v2515 = vpack.c.bf16 %v2369, %v2361
        %v2516 = vpack.c.bf16 %v2370, %v2362
        %v2517 = vpack.c.bf16 %v2371, %v2363
        %v2518 = vpack.c.bf16 %v2372, %v2364
        %v2519 = vpack.c.bf16 %v2381, %v2373
        %v2520 = vpack.c.bf16 %v2382, %v2374
        %v2521 = vpack.c.bf16 %v2383, %v2375
        %v2522 = vpack.c.bf16 %v2384, %v2376
        %v2523 = vpack.c.bf16 %v2385, %v2377
        %v2524 = vpack.c.bf16 %v2386, %v2378
        %v2525 = vpack.c.bf16 %v2387, %v2379
        %v2526 = vpack.c.bf16 %v2388, %v2380
        %v2527 = vpack.c.bf16 %v2397, %v2389
        %v2528 = vpack.c.bf16 %v2398, %v2390
        %v2529 = vpack.c.bf16 %v2399, %v2391
        %v2530 = vpack.c.bf16 %v2400, %v2392
        %v2531 = vpack.c.bf16 %v2401, %v2393
        %v2532 = vpack.c.bf16 %v2402, %v2394
        %v2533 = vpack.c.bf16 %v2403, %v2395
        %v2534 = vpack.c.bf16 %v2404, %v2396
        %2535 = vmatprep.subr.bf16.mxu0 %v2408
        %2536 = vmatpush1.bf16.msra.mxu0 %v2407
        %2537 = vmatprep.subr.bf16.mxu0 %v2416
        %2538 = vmatpush1.bf16.msra.mxu0 %v2415
        %2539 = vmatprep.subr.bf16.mxu0 %v2424
        %2540 = vmatpush1.bf16.msra.mxu0 %v2423
        %2541 = vmatprep.subr.bf16.mxu0 %v2432
        %2542 = vmatpush1.bf16.msra.mxu0 %v2431
        %2543 = vmatprep.subr.bf16.mxu0 %v2440
        %2544 = vmatpush1.bf16.msra.mxu0 %v2439
        %2545 = vmatprep.subr.bf16.mxu0 %v2448
        %2546 = vmatpush1.bf16.msra.mxu0 %v2447
        %2547 = vmatprep.subr.bf16.mxu0 %v2456
        %2548 = vmatpush1.bf16.msra.mxu0 %v2455
        %2549 = vmatprep.subr.bf16.mxu0 %v2464
        %2550 = vmatpush1.bf16.msra.mxu0 %v2463
        %2551 = vmatprep.subr.bf16.mxu0 %v2472
        %2552 = vmatpush1.bf16.msra.mxu0 %v2471
        %2553 = vmatprep.subr.bf16.mxu0 %v2480
        %2554 = vmatpush1.bf16.msra.mxu0 %v2479
        %2555 = vmatprep.subr.bf16.mxu0 %v2488
        %2556 = vmatpush1.bf16.msra.mxu0 %v2487
        %2557 = vmatprep.subr.bf16.mxu0 %v2496
        %2558 = vmatpush1.bf16.msra.mxu0 %v2495
        %2559 = vmatprep.subr.bf16.mxu0 %v2504
        %2560 = vmatpush1.bf16.msra.mxu0 %v2503
        %2561 = vmatprep.subr.bf16.mxu0 %v2512
        %2562 = vmatpush1.bf16.msra.mxu0 %v2511
        %2563 = vmatprep.subr.bf16.mxu0 %v2520
        %2564 = vmatpush1.bf16.msra.mxu0 %v2519
        %2565 = vmatprep.subr.bf16.mxu0 %v2528
        %2566 = vmatpush1.bf16.msra.mxu0 %v2527
        %2567 = vmatprep.mubr.bf16.mxu0 %v2406
        %2568 = vmatmul.mubr.bf16.gmra.mrb[0].mxu0 %v2405
        %v2569 = vpop.f32.mrb[0].mxu0
        %v2570 = vadd.f32 0.0, %v2569
        %v2571 = vpop.f32.mrb[0].mxu0
        %v2572 = vadd.f32 0.0, %v2571
        %v2573 = vpop.f32.mrb[0].mxu0
        %v2574 = vpop.f32.mrb[0].mxu0
        %2575 = vdwg.mxu0
        %2576 = vmatprep.subr.bf16.mxu0 %v2410
        %2577 = vmatpush1.bf16.msra.mxu0 %v2409
        %2578 = vmatprep.subr.bf16.mxu0 %v2418
        %2579 = vmatpush1.bf16.msra.mxu0 %v2417
        %2580 = vmatprep.subr.bf16.mxu0 %v2426
        %2581 = vmatpush1.bf16.msra.mxu0 %v2425
        %2582 = vmatprep.subr.bf16.mxu0 %v2434
        %2583 = vmatpush1.bf16.msra.mxu0 %v2433
        %2584 = vmatprep.subr.bf16.mxu0 %v2442
        %2585 = vmatpush1.bf16.msra.mxu0 %v2441
        %2586 = vmatprep.subr.bf16.mxu0 %v2450
        %2587 = vmatpush1.bf16.msra.mxu0 %v2449
        %2588 = vmatprep.subr.bf16.mxu0 %v2458
        %2589 = vmatpush1.bf16.msra.mxu0 %v2457
        %2590 = vmatprep.subr.bf16.mxu0 %v2466
        %2591 = vmatpush1.bf16.msra.mxu0 %v2465
        %2592 = vmatprep.subr.bf16.mxu0 %v2474
        %2593 = vmatpush1.bf16.msra.mxu0 %v2473
        %2594 = vmatprep.subr.bf16.mxu0 %v2482
        %2595 = vmatpush1.bf16.msra.mxu0 %v2481
        %2596 = vmatprep.subr.bf16.mxu0 %v2490
        %2597 = vmatpush1.bf16.msra.mxu0 %v2489
        %2598 = vmatprep.subr.bf16.mxu0 %v2498
        %2599 = vmatpush1.bf16.msra.mxu0 %v2497
        %2600 = vmatprep.subr.bf16.mxu0 %v2506
        %2601 = vmatpush1.bf16.msra.mxu0 %v2505
        %2602 = vmatprep.subr.bf16.mxu0 %v2514
        %2603 = vmatpush1.bf16.msra.mxu0 %v2513
        %2604 = vmatprep.subr.bf16.mxu0 %v2522
        %2605 = vmatpush1.bf16.msra.mxu0 %v2521
        %2606 = vmatprep.subr.bf16.mxu0 %v2530
        %2607 = vmatpush1.bf16.msra.mxu0 %v2529
        %2608 = vmatprep.mubr.bf16.mxu0 %v2406
        %2609 = vmatmul.mubr.bf16.gmra.mrb[0].mxu0 %v2405
        %v2610 = vpop.f32.mrb[0].mxu0
        %v2611 = vadd.f32 0.0, %v2610
        %v2612 = vpop.f32.mrb[0].mxu0
        %v2613 = vadd.f32 0.0, %v2612
        %v2614 = vpop.f32.mrb[0].mxu0
        %v2615 = vpop.f32.mrb[0].mxu0
        %2616 = vdwg.mxu0
        %2617 = vmatprep.subr.bf16.mxu0 %v2412
        %2618 = vmatpush1.bf16.msra.mxu0 %v2411
        %2619 = vmatprep.subr.bf16.mxu0 %v2420
        %2620 = vmatpush1.bf16.msra.mxu0 %v2419
        %2621 = vmatprep.subr.bf16.mxu0 %v2428
        %2622 = vmatpush1.bf16.msra.mxu0 %v2427
        %2623 = vmatprep.subr.bf16.mxu0 %v2436
        %2624 = vmatpush1.bf16.msra.mxu0 %v2435
        %2625 = vmatprep.subr.bf16.mxu0 %v2444
        %2626 = vmatpush1.bf16.msra.mxu0 %v2443
        %2627 = vmatprep.subr.bf16.mxu0 %v2452
        %2628 = vmatpush1.bf16.msra.mxu0 %v2451
        %2629 = vmatprep.subr.bf16.mxu0 %v2460
        %2630 = vmatpush1.bf16.msra.mxu0 %v2459
        %2631 = vmatprep.subr.bf16.mxu0 %v2468
        %2632 = vmatpush1.bf16.msra.mxu0 %v2467
        %2633 = vmatprep.subr.bf16.mxu0 %v2476
        %2634 = vmatpush1.bf16.msra.mxu0 %v2475
        %2635 = vmatprep.subr.bf16.mxu0 %v2484
        %2636 = vmatpush1.bf16.msra.mxu0 %v2483
        %2637 = vmatprep.subr.bf16.mxu0 %v2492
        %2638 = vmatpush1.bf16.msra.mxu0 %v2491
        %2639 = vmatprep.subr.bf16.mxu0 %v2500
        %2640 = vmatpush1.bf16.msra.mxu0 %v2499
        %2641 = vmatprep.subr.bf16.mxu0 %v2508
        %2642 = vmatpush1.bf16.msra.mxu0 %v2507
        %2643 = vmatprep.subr.bf16.mxu0 %v2516
        %2644 = vmatpush1.bf16.msra.mxu0 %v2515
        %2645 = vmatprep.subr.bf16.mxu0 %v2524
        %2646 = vmatpush1.bf16.msra.mxu0 %v2523
        %2647 = vmatprep.subr.bf16.mxu0 %v2532
        %2648 = vmatpush1.bf16.msra.mxu0 %v2531
        %2649 = vmatprep.mubr.bf16.mxu0 %v2406
        %2650 = vmatmul.mubr.bf16.gmra.mrb[0].mxu0 %v2405
        %v2651 = vpop.f32.mrb[0].mxu0
        %v2652 = vadd.f32 0.0, %v2651
        %v2653 = vpop.f32.mrb[0].mxu0
        %v2654 = vadd.f32 0.0, %v2653
        %v2655 = vpop.f32.mrb[0].mxu0
        %v2656 = vpop.f32.mrb[0].mxu0
        %2657 = vdwg.mxu0
        %2658 = vmatprep.subr.bf16.mxu0 %v2414
        %2659 = vmatpush1.bf16.msra.mxu0 %v2413
        %2660 = vmatprep.subr.bf16.mxu0 %v2422
        %2661 = vmatpush1.bf16.msra.mxu0 %v2421
        %2662 = vmatprep.subr.bf16.mxu0 %v2430
        %2663 = vmatpush1.bf16.msra.mxu0 %v2429
        %2664 = vmatprep.subr.bf16.mxu0 %v2438
        %2665 = vmatpush1.bf16.msra.mxu0 %v2437
        %2666 = vmatprep.subr.bf16.mxu0 %v2446
        %2667 = vmatpush1.bf16.msra.mxu0 %v2445
        %2668 = vmatprep.subr.bf16.mxu0 %v2454
        %2669 = vmatpush1.bf16.msra.mxu0 %v2453
        %2670 = vmatprep.subr.bf16.mxu0 %v2462
        %2671 = vmatpush1.bf16.msra.mxu0 %v2461
        %2672 = vmatprep.subr.bf16.mxu0 %v2470
        %2673 = vmatpush1.bf16.msra.mxu0 %v2469
        %2674 = vmatprep.subr.bf16.mxu0 %v2478
        %2675 = vmatpush1.bf16.msra.mxu0 %v2477
        %2676 = vmatprep.subr.bf16.mxu0 %v2486
        %2677 = vmatpush1.bf16.msra.mxu0 %v2485
        %2678 = vmatprep.subr.bf16.mxu0 %v2494
        %2679 = vmatpush1.bf16.msra.mxu0 %v2493
        %2680 = vmatprep.subr.bf16.mxu0 %v2502
        %2681 = vmatpush1.bf16.msra.mxu0 %v2501
        %2682 = vmatprep.subr.bf16.mxu0 %v2510
        %2683 = vmatpush1.bf16.msra.mxu0 %v2509
        %2684 = vmatprep.subr.bf16.mxu0 %v2518
        %2685 = vmatpush1.bf16.msra.mxu0 %v2517
        %2686 = vmatprep.subr.bf16.mxu0 %v2526
        %2687 = vmatpush1.bf16.msra.mxu0 %v2525
        %2688 = vmatprep.subr.bf16.mxu0 %v2534
        %2689 = vmatpush1.bf16.msra.mxu0 %v2533
        %2690 = vmatprep.mubr.bf16.mxu0 %v2406
        %2691 = vmatmul.mubr.bf16.gmra.mrb[0].mxu0 %v2405
        %v2692 = vpop.f32.mrb[0].mxu0
        %v2693 = vadd.f32 0.0, %v2692
        %v2694 = vpop.f32.mrb[0].mxu0
        %v2695 = vadd.f32 0.0, %v2694
        %v2696 = vpop.f32.mrb[0].mxu0
        %v2697 = vpop.f32.mrb[0].mxu0
        %2698 = vdwg.mxu0
        %v2699 = vmul.f32 %v2570, %v2570
        %v2700 = vmul.f32 %v2572, %v2572
        %v2701 = vmul.f32 %v2611, %v2611
        %v2702 = vmul.f32 %v2613, %v2613
        %v2703 = vmul.f32 %v2652, %v2652
        %v2704 = vmul.f32 %v2654, %v2654
        %v2705 = vmul.f32 %v2693, %v2693
        %v2706 = vmul.f32 %v2695, %v2695
        %v2707 = vmul.f32 %v2570, %v2699
        %v2708 = vmul.f32 %v2572, %v2700
        %v2709 = vmul.f32 %v2611, %v2701
        %v2710 = vmul.f32 %v2613, %v2702
        %v2711 = vmul.f32 %v2652, %v2703
        %v2712 = vmul.f32 %v2654, %v2704
        %v2713 = vmul.f32 %v2693, %v2705
        %v2714 = vmul.f32 %v2695, %v2706
        %v2715 = vmul.f32 %v2707, 0.044715
        %v2716 = vmul.f32 %v2708, 0.044715
        %v2717 = vmul.f32 %v2709, 0.044715
        %v2718 = vmul.f32 %v2710, 0.044715
        %v2719 = vmul.f32 %v2711, 0.044715
        %v2720 = vmul.f32 %v2712, 0.044715
        %v2721 = vmul.f32 %v2713, 0.044715
        %v2722 = vmul.f32 %v2714, 0.044715
        %v2723 = vadd.f32 %v2570, %v2715
        %v2724 = vadd.f32 %v2572, %v2716
        %v2725 = vadd.f32 %v2611, %v2717
        %v2726 = vadd.f32 %v2613, %v2718
        %v2727 = vadd.f32 %v2652, %v2719
        %v2728 = vadd.f32 %v2654, %v2720
        %v2729 = vadd.f32 %v2693, %v2721
        %v2730 = vadd.f32 %v2695, %v2722
        %v2731 = vmul.f32 %v2723, 0.7978846
        %v2732 = vmul.f32 %v2724, 0.7978846
        %v2733 = vmul.f32 %v2725, 0.7978846
        %v2734 = vmul.f32 %v2726, 0.7978846
        %v2735 = vmul.f32 %v2727, 0.7978846
        %v2736 = vmul.f32 %v2728, 0.7978846
        %v2737 = vmul.f32 %v2729, 0.7978846
        %v2738 = vmul.f32 %v2730, 0.7978846
        %v2739 = vtanh.pop %v2731
        %v2740 = vtanh.pop %v2732
        %v2741 = vtanh.pop %v2733
        %v2742 = vtanh.pop %v2734
        %v2743 = vtanh.pop %v2735
        %v2744 = vtanh.pop %v2736
        %v2745 = vtanh.pop %v2737
        %v2746 = vtanh.pop %v2738
        %v2747 = vadd.f32 %v2739, 1.0
        %v2748 = vadd.f32 %v2740, 1.0
        %v2749 = vadd.f32 %v2741, 1.0
        %v2750 = vadd.f32 %v2742, 1.0
        %v2751 = vadd.f32 %v2743, 1.0
        %v2752 = vadd.f32 %v2744, 1.0
        %v2753 = vadd.f32 %v2745, 1.0
        %v2754 = vadd.f32 %v2746, 1.0
        %v2755 = vmul.f32 %v2747, 0.5
        %v2756 = vmul.f32 %v2748, 0.5
        %v2757 = vmul.f32 %v2749, 0.5
        %v2758 = vmul.f32 %v2750, 0.5
        %v2759 = vmul.f32 %v2751, 0.5
        %v2760 = vmul.f32 %v2752, 0.5
        %v2761 = vmul.f32 %v2753, 0.5
        %v2762 = vmul.f32 %v2754, 0.5
        %v2763 = vmul.f32 %v2570, %v2755
        %v2764 = vmul.f32 %v2572, %v2756
        %v2765 = vmul.f32 %v2611, %v2757
        %v2766 = vmul.f32 %v2613, %v2758
        %v2767 = vmul.f32 %v2652, %v2759
        %v2768 = vmul.f32 %v2654, %v2760
        %v2769 = vmul.f32 %v2693, %v2761
        %v2770 = vmul.f32 %v2695, %v2762
        %v2771 = vld [vmem:[#allocation16] sm:$0xf]
        %v2772 = vadd.s32 %v788, 256
        %v2773 = vadd.s32 %v788, 384
        %v2774 = vadd.s32 %v788, 512
        %v2775 = vadd.s32 %v788, 640
        %v2776 = vadd.s32 %v788, 768
        %v2777 = vadd.s32 %v788, 896
        %vm2778 = vcmp.lt.s32.totalorder %v788, 0
        %v2779 = vsub.s32 0, %v788
        %v2780 = vsel %vm2778, %v2779, %v788
        %v2781 = vshrl.u32 %v2780, 5
        %v2782 = vand.u32 %v2780, 31
        %v2783 = vsub.s32 0, %v2782
        %v2784 = vsel %vm2778, %v2783, %v2782
        %vm2785 = vcmp.lt.s32.totalorder %v1510, 0
        %v2786 = vsub.s32 0, %v1510
        %v2787 = vsel %vm2785, %v2786, %v1510
        %v2788 = vshrl.u32 %v2787, 5
        %v2789 = vand.u32 %v2787, 31
        %v2790 = vsub.s32 0, %v2789
        %v2791 = vsel %vm2785, %v2790, %v2789
        %vm2792 = vcmp.lt.s32.totalorder %v2772, 0
        %v2793 = vsub.s32 0, %v2772
        %v2794 = vsel %vm2792, %v2793, %v2772
        %v2795 = vshrl.u32 %v2794, 5
        %v2796 = vand.u32 %v2794, 31
        %v2797 = vsub.s32 0, %v2796
        %v2798 = vsel %vm2792, %v2797, %v2796
        %vm2799 = vcmp.lt.s32.totalorder %v2773, 0
        %v2800 = vsub.s32 0, %v2773
        %v2801 = vsel %vm2799, %v2800, %v2773
        %v2802 = vshrl.u32 %v2801, 5
        %v2803 = vand.u32 %v2801, 31
        %v2804 = vsub.s32 0, %v2803
        %v2805 = vsel %vm2799, %v2804, %v2803
        %vm2806 = vcmp.lt.s32.totalorder %v2774, 0
        %v2807 = vsub.s32 0, %v2774
        %v2808 = vsel %vm2806, %v2807, %v2774
        %v2809 = vshrl.u32 %v2808, 5
        %v2810 = vand.u32 %v2808, 31
        %v2811 = vsub.s32 0, %v2810
        %v2812 = vsel %vm2806, %v2811, %v2810
        %vm2813 = vcmp.lt.s32.totalorder %v2775, 0
        %v2814 = vsub.s32 0, %v2775
        %v2815 = vsel %vm2813, %v2814, %v2775
        %v2816 = vshrl.u32 %v2815, 5
        %v2817 = vand.u32 %v2815, 31
        %v2818 = vsub.s32 0, %v2817
        %v2819 = vsel %vm2813, %v2818, %v2817
        %vm2820 = vcmp.lt.s32.totalorder %v2776, 0
        %v2821 = vsub.s32 0, %v2776
        %v2822 = vsel %vm2820, %v2821, %v2776
        %v2823 = vshrl.u32 %v2822, 5
        %v2824 = vand.u32 %v2822, 31
        %v2825 = vsub.s32 0, %v2824
        %v2826 = vsel %vm2820, %v2825, %v2824
        %vm2827 = vcmp.lt.s32.totalorder %v2777, 0
        %v2828 = vsub.s32 0, %v2777
        %v2829 = vsel %vm2827, %v2828, %v2777
        %v2830 = vshrl.u32 %v2829, 5
        %v2831 = vand.u32 %v2829, 31
        %v2832 = vsub.s32 0, %v2831
        %v2833 = vsel %vm2827, %v2832, %v2831
        %vm2834 = vcmp.ne.s32.totalorder %v2784, 0
        %vm2835 = vcmp.ne.s32.totalorder %v2791, 0
        %vm2836 = vcmp.ne.s32.totalorder %v2798, 0
        %vm2837 = vcmp.ne.s32.totalorder %v2805, 0
        %vm2838 = vcmp.ne.s32.totalorder %v2812, 0
        %vm2839 = vcmp.ne.s32.totalorder %v2819, 0
        %vm2840 = vcmp.ne.s32.totalorder %v2826, 0
        %vm2841 = vcmp.ne.s32.totalorder %v2833, 0
        %vm2842 = vcmp.lt.s32.totalorder %v2784, 0
        %vm2843 = vcmp.lt.s32.totalorder %v2791, 0
        %vm2844 = vcmp.lt.s32.totalorder %v2798, 0
        %vm2845 = vcmp.lt.s32.totalorder %v2805, 0
        %vm2846 = vcmp.lt.s32.totalorder %v2812, 0
        %vm2847 = vcmp.lt.s32.totalorder %v2819, 0
        %vm2848 = vcmp.lt.s32.totalorder %v2826, 0
        %vm2849 = vcmp.lt.s32.totalorder %v2833, 0
        %vm2850 = vmand %vm2842, %vm2834
        %vm2851 = vmand %vm2843, %vm2835
        %vm2852 = vmand %vm2844, %vm2836
        %vm2853 = vmand %vm2845, %vm2837
        %vm2854 = vmand %vm2846, %vm2838
        %vm2855 = vmand %vm2847, %vm2839
        %vm2856 = vmand %vm2848, %vm2840
        %vm2857 = vmand %vm2849, %vm2841
        %v2858 = vadd.s32 %v2784, 32
        %v2859 = vadd.s32 %v2791, 32
        %v2860 = vadd.s32 %v2798, 32
        %v2861 = vadd.s32 %v2805, 32
        %v2862 = vadd.s32 %v2812, 32
        %v2863 = vadd.s32 %v2819, 32
        %v2864 = vadd.s32 %v2826, 32
        %v2865 = vadd.s32 %v2833, 32
        %v2866 = vsel %vm2850, %v2858, %v2784
        %v2867 = vsel %vm2851, %v2859, %v2791
        %v2868 = vsel %vm2852, %v2860, %v2798
        %v2869 = vsel %vm2853, %v2861, %v2805
        %v2870 = vsel %vm2854, %v2862, %v2812
        %v2871 = vsel %vm2855, %v2863, %v2819
        %v2872 = vsel %vm2856, %v2864, %v2826
        %v2873 = vsel %vm2857, %v2865, %v2833
        %v2874 = vadd.s32 %v788, 4294967264
        %v2875 = vadd.s32 %v1510, 4294967264
        %v2876 = vadd.s32 %v2772, 4294967264
        %v2877 = vadd.s32 %v2773, 4294967264
        %v2878 = vadd.s32 %v2774, 4294967264
        %v2879 = vadd.s32 %v2775, 4294967264
        %v2880 = vadd.s32 %v2776, 4294967264
        %v2881 = vadd.s32 %v2777, 4294967264
        %vm2882 = vcmp.ge.s32.totalorder %v2874, 0
        %vm2883 = vcmp.ge.s32.totalorder %v2875, 0
        %vm2884 = vcmp.ge.s32.totalorder %v2876, 0
        %vm2885 = vcmp.ge.s32.totalorder %v2877, 0
        %vm2886 = vcmp.ge.s32.totalorder %v2878, 0
        %vm2887 = vcmp.ge.s32.totalorder %v2879, 0
        %vm2888 = vcmp.ge.s32.totalorder %v2880, 0
        %vm2889 = vcmp.ge.s32.totalorder %v2881, 0
        %vm2890 = vcmp.lt.s32.totalorder %v2874, 1024
        %vm2891 = vcmp.lt.s32.totalorder %v2875, 1024
        %vm2892 = vcmp.lt.s32.totalorder %v2876, 1024
        %vm2893 = vcmp.lt.s32.totalorder %v2877, 1024
        %vm2894 = vcmp.lt.s32.totalorder %v2878, 1024
        %vm2895 = vcmp.lt.s32.totalorder %v2879, 1024
        %vm2896 = vcmp.lt.s32.totalorder %v2880, 1024
        %vm2897 = vcmp.lt.s32.totalorder %v2881, 1024
        %vm2898 = vmand %vm2882, %vm2890
        %vm2899 = vmand %vm2883, %vm2891
        %vm2900 = vmand %vm2884, %vm2892
        %vm2901 = vmand %vm2885, %vm2893
        %vm2902 = vmand %vm2886, %vm2894
        %vm2903 = vmand %vm2887, %vm2895
        %vm2904 = vmand %vm2888, %vm2896
        %vm2905 = vmand %vm2889, %vm2897
        %v2906 = vadd.s32 %v2866, 4294967295
        %v2907 = vadd.s32 %v2867, 4294967295
        %v2908 = vadd.s32 %v2868, 4294967295
        %v2909 = vadd.s32 %v2869, 4294967295
        %v2910 = vadd.s32 %v2870, 4294967295
        %v2911 = vadd.s32 %v2871, 4294967295
        %v2912 = vadd.s32 %v2872, 4294967295
        %v2913 = vadd.s32 %v2873, 4294967295
        %vm2914 = vcmp.ge.s32.totalorder %v2906, 0
        %vm2915 = vcmp.ge.s32.totalorder %v2907, 0
        %vm2916 = vcmp.ge.s32.totalorder %v2908, 0
        %vm2917 = vcmp.ge.s32.totalorder %v2909, 0
        %vm2918 = vcmp.ge.s32.totalorder %v2910, 0
        %vm2919 = vcmp.ge.s32.totalorder %v2911, 0
        %vm2920 = vcmp.ge.s32.totalorder %v2912, 0
        %vm2921 = vcmp.ge.s32.totalorder %v2913, 0
        %vm2922 = vcmp.lt.s32.totalorder %v2906, 32
        %vm2923 = vcmp.lt.s32.totalorder %v2907, 32
        %vm2924 = vcmp.lt.s32.totalorder %v2908, 32
        %vm2925 = vcmp.lt.s32.totalorder %v2909, 32
        %vm2926 = vcmp.lt.s32.totalorder %v2910, 32
        %vm2927 = vcmp.lt.s32.totalorder %v2911, 32
        %vm2928 = vcmp.lt.s32.totalorder %v2912, 32
        %vm2929 = vcmp.lt.s32.totalorder %v2913, 32
        %vm2930 = vmand %vm2914, %vm2922
        %vm2931 = vmand %vm2915, %vm2923
        %vm2932 = vmand %vm2916, %vm2924
        %vm2933 = vmand %vm2917, %vm2925
        %vm2934 = vmand %vm2918, %vm2926
        %vm2935 = vmand %vm2919, %vm2927
        %vm2936 = vmand %vm2920, %vm2928
        %vm2937 = vmand %vm2921, %vm2929
        %vm2938 = vmand %vm2898, %vm2930
        %vm2939 = vmand %vm2899, %vm2931
        %vm2940 = vmand %vm2900, %vm2932
        %vm2941 = vmand %vm2901, %vm2933
        %vm2942 = vmand %vm2902, %vm2934
        %vm2943 = vmand %vm2903, %vm2935
        %vm2944 = vmand %vm2904, %vm2936
        %vm2945 = vmand %vm2905, %vm2937
        %vm2946 = vcmp.ge.s32.totalorder %v2866, 0
        %vm2947 = vcmp.ge.s32.totalorder %v2867, 0
        %vm2948 = vcmp.ge.s32.totalorder %v2868, 0
        %vm2949 = vcmp.ge.s32.totalorder %v2869, 0
        %vm2950 = vcmp.ge.s32.totalorder %v2870, 0
        %vm2951 = vcmp.ge.s32.totalorder %v2871, 0
        %vm2952 = vcmp.ge.s32.totalorder %v2872, 0
        %vm2953 = vcmp.ge.s32.totalorder %v2873, 0
        %vm2954 = vcmp.lt.s32.totalorder %v2866, 32
        %vm2955 = vcmp.lt.s32.totalorder %v2867, 32
        %vm2956 = vcmp.lt.s32.totalorder %v2868, 32
        %vm2957 = vcmp.lt.s32.totalorder %v2869, 32
        %vm2958 = vcmp.lt.s32.totalorder %v2870, 32
        %vm2959 = vcmp.lt.s32.totalorder %v2871, 32
        %vm2960 = vcmp.lt.s32.totalorder %v2872, 32
        %vm2961 = vcmp.lt.s32.totalorder %v2873, 32
        %vm2962 = vmand %vm2946, %vm2954
        %vm2963 = vmand %vm2947, %vm2955
        %vm2964 = vmand %vm2948, %vm2956
        %vm2965 = vmand %vm2949, %vm2957
        %vm2966 = vmand %vm2950, %vm2958
        %vm2967 = vmand %vm2951, %vm2959
        %vm2968 = vmand %vm2952, %vm2960
        %vm2969 = vmand %vm2953, %vm2961
        %vm2970 = vmand %vm2898, %vm2962
        %vm2971 = vmand %vm2899, %vm2963
        %vm2972 = vmand %vm2900, %vm2964
        %vm2973 = vmand %vm2901, %vm2965
        %vm2974 = vmand %vm2902, %vm2966
        %vm2975 = vmand %vm2903, %vm2967
        %vm2976 = vmand %vm2904, %vm2968
        %vm2977 = vmand %vm2905, %vm2969
        %v2978 = vadd.s32 %v2866, 1
        %v2979 = vadd.s32 %v2867, 1
        %v2980 = vadd.s32 %v2868, 1
        %v2981 = vadd.s32 %v2869, 1
        %v2982 = vadd.s32 %v2870, 1
        %v2983 = vadd.s32 %v2871, 1
        %v2984 = vadd.s32 %v2872, 1
        %v2985 = vadd.s32 %v2873, 1
        %vm2986 = vcmp.ge.s32.totalorder %v2978, 0
        %vm2987 = vcmp.ge.s32.totalorder %v2979, 0
        %vm2988 = vcmp.ge.s32.totalorder %v2980, 0
        %vm2989 = vcmp.ge.s32.totalorder %v2981, 0
        %vm2990 = vcmp.ge.s32.totalorder %v2982, 0
        %vm2991 = vcmp.ge.s32.totalorder %v2983, 0
        %vm2992 = vcmp.ge.s32.totalorder %v2984, 0
        %vm2993 = vcmp.ge.s32.totalorder %v2985, 0
        %vm2994 = vcmp.lt.s32.totalorder %v2978, 32
        %vm2995 = vcmp.lt.s32.totalorder %v2979, 32
        %vm2996 = vcmp.lt.s32.totalorder %v2980, 32
        %vm2997 = vcmp.lt.s32.totalorder %v2981, 32
        %vm2998 = vcmp.lt.s32.totalorder %v2982, 32
        %vm2999 = vcmp.lt.s32.totalorder %v2983, 32
        %vm3000 = vcmp.lt.s32.totalorder %v2984, 32
        %vm3001 = vcmp.lt.s32.totalorder %v2985, 32
        %vm3002 = vmand %vm2986, %vm2994
        %vm3003 = vmand %vm2987, %vm2995
        %vm3004 = vmand %vm2988, %vm2996
        %vm3005 = vmand %vm2989, %vm2997
        %vm3006 = vmand %vm2990, %vm2998
        %vm3007 = vmand %vm2991, %vm2999
        %vm3008 = vmand %vm2992, %vm3000
        %vm3009 = vmand %vm2993, %vm3001
        %vm3010 = vmand %vm2898, %vm3002
        %vm3011 = vmand %vm2899, %vm3003
        %vm3012 = vmand %vm2900, %vm3004
        %vm3013 = vmand %vm2901, %vm3005
        %vm3014 = vmand %vm2902, %vm3006
        %vm3015 = vmand %vm2903, %vm3007
        %vm3016 = vmand %vm2904, %vm3008
        %vm3017 = vmand %vm2905, %vm3009
        %vm3018 = vcmp.ge.s32.totalorder %v2772, 0
        %vm3019 = vcmp.ge.s32.totalorder %v2773, 0
        %vm3020 = vcmp.ge.s32.totalorder %v2774, 0
        %vm3021 = vcmp.ge.s32.totalorder %v2775, 0
        %vm3022 = vcmp.ge.s32.totalorder %v2776, 0
        %vm3023 = vcmp.ge.s32.totalorder %v2777, 0
        %vm3024 = vcmp.lt.s32.totalorder %v788, 1024
        %vm3025 = vcmp.lt.s32.totalorder %v1510, 1024
        %vm3026 = vcmp.lt.s32.totalorder %v2772, 1024
        %vm3027 = vcmp.lt.s32.totalorder %v2773, 1024
        %vm3028 = vcmp.lt.s32.totalorder %v2774, 1024
        %vm3029 = vcmp.lt.s32.totalorder %v2775, 1024
        %vm3030 = vcmp.lt.s32.totalorder %v2776, 1024
        %vm3031 = vcmp.lt.s32.totalorder %v2777, 1024
        %vm3032 = vmand %vm819, %vm3024
        %vm3033 = vmand %vm1571, %vm3025
        %vm3034 = vmand %vm3018, %vm3026
        %vm3035 = vmand %vm3019, %vm3027
        %vm3036 = vmand %vm3020, %vm3028
        %vm3037 = vmand %vm3021, %vm3029
        %vm3038 = vmand %vm3022, %vm3030
        %vm3039 = vmand %vm3023, %vm3031
        %vm3040 = vmand %vm3032, %vm2930
        %vm3041 = vmand %vm3033, %vm2931
        %vm3042 = vmand %vm3034, %vm2932
        %vm3043 = vmand %vm3035, %vm2933
        %vm3044 = vmand %vm3036, %vm2934
        %vm3045 = vmand %vm3037, %vm2935
        %vm3046 = vmand %vm3038, %vm2936
        %vm3047 = vmand %vm3039, %vm2937
        %vm3048 = vmand %vm3032, %vm2962
        %vm3049 = vmand %vm3033, %vm2963
        %vm3050 = vmand %vm3034, %vm2964
        %vm3051 = vmand %vm3035, %vm2965
        %vm3052 = vmand %vm3036, %vm2966
        %vm3053 = vmand %vm3037, %vm2967
        %vm3054 = vmand %vm3038, %vm2968
        %vm3055 = vmand %vm3039, %vm2969
        %vm3056 = vmand %vm3032, %vm3002
        %vm3057 = vmand %vm3033, %vm3003
        %vm3058 = vmand %vm3034, %vm3004
        %vm3059 = vmand %vm3035, %vm3005
        %vm3060 = vmand %vm3036, %vm3006
        %vm3061 = vmand %vm3037, %vm3007
        %vm3062 = vmand %vm3038, %vm3008
        %vm3063 = vmand %vm3039, %vm3009
        %v3064 = vadd.s32 %v788, 32
        %v3065 = vadd.s32 %v1510, 32
        %v3066 = vadd.s32 %v2772, 32
        %v3067 = vadd.s32 %v2773, 32
        %v3068 = vadd.s32 %v2774, 32
        %v3069 = vadd.s32 %v2775, 32
        %v3070 = vadd.s32 %v2776, 32
        %v3071 = vadd.s32 %v2777, 32
        %vm3072 = vcmp.ge.s32.totalorder %v3064, 0
        %vm3073 = vcmp.ge.s32.totalorder %v3065, 0
        %vm3074 = vcmp.ge.s32.totalorder %v3066, 0
        %vm3075 = vcmp.ge.s32.totalorder %v3067, 0
        %vm3076 = vcmp.ge.s32.totalorder %v3068, 0
        %vm3077 = vcmp.ge.s32.totalorder %v3069, 0
        %vm3078 = vcmp.ge.s32.totalorder %v3070, 0
        %vm3079 = vcmp.ge.s32.totalorder %v3071, 0
        %vm3080 = vcmp.lt.s32.totalorder %v3064, 1024
        %vm3081 = vcmp.lt.s32.totalorder %v3065, 1024
        %vm3082 = vcmp.lt.s32.totalorder %v3066, 1024
        %vm3083 = vcmp.lt.s32.totalorder %v3067, 1024
        %vm3084 = vcmp.lt.s32.totalorder %v3068, 1024
        %vm3085 = vcmp.lt.s32.totalorder %v3069, 1024
        %vm3086 = vcmp.lt.s32.totalorder %v3070, 1024
        %vm3087 = vcmp.lt.s32.totalorder %v3071, 1024
        %vm3088 = vmand %vm3072, %vm3080
        %vm3089 = vmand %vm3073, %vm3081
        %vm3090 = vmand %vm3074, %vm3082
        %vm3091 = vmand %vm3075, %vm3083
        %vm3092 = vmand %vm3076, %vm3084
        %vm3093 = vmand %vm3077, %vm3085
        %vm3094 = vmand %vm3078, %vm3086
        %vm3095 = vmand %vm3079, %vm3087
        %vm3096 = vmand %vm3088, %vm2930
        %vm3097 = vmand %vm3089, %vm2931
        %vm3098 = vmand %vm3090, %vm2932
        %vm3099 = vmand %vm3091, %vm2933
        %vm3100 = vmand %vm3092, %vm2934
        %vm3101 = vmand %vm3093, %vm2935
        %vm3102 = vmand %vm3094, %vm2936
        %vm3103 = vmand %vm3095, %vm2937
        %vm3104 = vmand %vm3088, %vm2962
        %vm3105 = vmand %vm3089, %vm2963
        %vm3106 = vmand %vm3090, %vm2964
        %vm3107 = vmand %vm3091, %vm2965
        %vm3108 = vmand %vm3092, %vm2966
        %vm3109 = vmand %vm3093, %vm2967
        %vm3110 = vmand %vm3094, %vm2968
        %vm3111 = vmand %vm3095, %vm2969
        %vm3112 = vmand %vm3088, %vm3002
        %vm3113 = vmand %vm3089, %vm3003
        %vm3114 = vmand %vm3090, %vm3004
        %vm3115 = vmand %vm3091, %vm3005
        %vm3116 = vmand %vm3092, %vm3006
        %vm3117 = vmand %vm3093, %vm3007
        %vm3118 = vmand %vm3094, %vm3008
        %vm3119 = vmand %vm3095, %vm3009
        %v3120 = vld [vmem:[%s15] sm:$0xf]
        %v3121 = vld [vmem:[%s15 + $0x4] sm:$0xf]
        %v3122 = vld [vmem:[%s15 + $0x8] sm:$0xf]
        %v3123 = vld [vmem:[%s15 + $0xc] sm:$0xf]
        %v3124 = vld [vmem:[%s15 + $0x10] sm:$0xf]
        %v3125 = vld [vmem:[%s15 + $0x14] sm:$0xf]
        %v3126 = vld [vmem:[%s15 + $0x18] sm:$0xf]
        %v3127 = vld [vmem:[%s15 + $0x1c] sm:$0xf]
        %v3128 = vld [vmem:[%s15 + $0x20] sm:$0xf]
        %3129 = vrot.lane.b32.xlu0 %v2763, 33
        %v3130 = vpop.permute.xlu0 %3129
        %3131 = vrot.lane.b32.xlu0 %v2764, 33
        %v3132 = vpop.permute.xlu0 %3131
        %3133 = vrot.lane.b32.xlu0 %v2765, 33
        %v3134 = vpop.permute.xlu0 %3133
        %3135 = vrot.lane.b32.xlu0 %v2766, 33
        %v3136 = vpop.permute.xlu0 %3135
        %3137 = vrot.lane.b32.xlu0 %v2767, 33
        %v3138 = vpop.permute.xlu0 %3137
        %3139 = vrot.lane.b32.xlu0 %v2768, 33
        %v3140 = vpop.permute.xlu0 %3139
        %3141 = vrot.lane.b32.xlu0 %v2769, 33
        %v3142 = vpop.permute.xlu0 %3141
        %3143 = vrot.lane.b32.xlu0 %v2770, 33
        %v3144 = vpop.permute.xlu0 %3143
        %vm3145 = vcmp.lt.s32.totalorder %v788, 33
        %v3146 = vsel %vm3145, %v3142, %v3144
        %v3147 = vsel %vm3145, %v3140, %v3142
        %v3148 = vsel %vm3145, %v3138, %v3140
        %v3149 = vsel %vm3145, %v3136, %v3138
        %v3150 = vsel %vm3145, %v3134, %v3136
        %v3151 = vsel %vm3145, %v3132, %v3134
        %v3152 = vsel %vm3145, %v3130, %v3132
        %v3153 = vsel %vm3145, %v3144, %v3130
        %v3154 = vsel %vm2938, 1, 0
        %v3155 = vsel %vm2939, 1, 0
        %v3156 = vsel %vm2940, 1, 0
        %v3157 = vsel %vm2941, 1, 0
        %v3158 = vsel %vm2942, 1, 0
        %v3159 = vsel %vm2943, 1, 0
        %v3160 = vsel %vm2944, 1, 0
        %v3161 = vsel %vm2945, 1, 0
        %vm3162 = vcmp.eq.s32.totalorder %v3154, 1
        %vm3163 = vcmp.eq.s32.totalorder %v3155, 1
        %vm3164 = vcmp.eq.s32.totalorder %v3156, 1
        %vm3165 = vcmp.eq.s32.totalorder %v3157, 1
        %vm3166 = vcmp.eq.s32.totalorder %v3158, 1
        %vm3167 = vcmp.eq.s32.totalorder %v3159, 1
        %vm3168 = vcmp.eq.s32.totalorder %v3160, 1
        %vm3169 = vcmp.eq.s32.totalorder %v3161, 1
        %v3170 = vsel %vm3162, %v3153, 0.0
        %v3171 = vsel %vm3163, %v3152, 0.0
        %v3172 = vsel %vm3164, %v3151, 0.0
        %v3173 = vsel %vm3165, %v3150, 0.0
        %v3174 = vsel %vm3166, %v3149, 0.0
        %v3175 = vsel %vm3167, %v3148, 0.0
        %v3176 = vsel %vm3168, %v3147, 0.0
        %v3177 = vsel %vm3169, %v3146, 0.0
        %3178 = vrot.lane.b32.xlu0 %v2763, 32
        %v3179 = vpop.permute.xlu0 %3178
        %3180 = vrot.lane.b32.xlu0 %v2764, 32
        %v3181 = vpop.permute.xlu0 %3180
        %3182 = vrot.lane.b32.xlu0 %v2765, 32
        %v3183 = vpop.permute.xlu0 %3182
        %3184 = vrot.lane.b32.xlu0 %v2766, 32
        %v3185 = vpop.permute.xlu0 %3184
        %3186 = vrot.lane.b32.xlu0 %v2767, 32
        %v3187 = vpop.permute.xlu0 %3186
        %3188 = vrot.lane.b32.xlu0 %v2768, 32
        %v3189 = vpop.permute.xlu0 %3188
        %3190 = vrot.lane.b32.xlu0 %v2769, 32
        %v3191 = vpop.permute.xlu0 %3190
        %3192 = vrot.lane.b32.xlu0 %v2770, 32
        %v3193 = vpop.permute.xlu0 %3192
        %vm3194 = vcmp.lt.s32.totalorder %v788, 32
        %v3195 = vsel %vm3194, %v3191, %v3193
        %v3196 = vsel %vm3194, %v3189, %v3191
        %v3197 = vsel %vm3194, %v3187, %v3189
        %v3198 = vsel %vm3194, %v3185, %v3187
        %v3199 = vsel %vm3194, %v3183, %v3185
        %v3200 = vsel %vm3194, %v3181, %v3183
        %v3201 = vsel %vm3194, %v3179, %v3181
        %v3202 = vsel %vm3194, %v3193, %v3179
        %v3203 = vsel %vm2970, 1, 0
        %v3204 = vsel %vm2971, 1, 0
        %v3205 = vsel %vm2972, 1, 0
        %v3206 = vsel %vm2973, 1, 0
        %v3207 = vsel %vm2974, 1, 0
        %v3208 = vsel %vm2975, 1, 0
        %v3209 = vsel %vm2976, 1, 0
        %v3210 = vsel %vm2977, 1, 0
        %vm3211 = vcmp.eq.s32.totalorder %v3203, 1
        %vm3212 = vcmp.eq.s32.totalorder %v3204, 1
        %vm3213 = vcmp.eq.s32.totalorder %v3205, 1
        %vm3214 = vcmp.eq.s32.totalorder %v3206, 1
        %vm3215 = vcmp.eq.s32.totalorder %v3207, 1
        %vm3216 = vcmp.eq.s32.totalorder %v3208, 1
        %vm3217 = vcmp.eq.s32.totalorder %v3209, 1
        %vm3218 = vcmp.eq.s32.totalorder %v3210, 1
        %v3219 = vsel %vm3211, %v3202, 0.0
        %v3220 = vsel %vm3212, %v3201, 0.0
        %v3221 = vsel %vm3213, %v3200, 0.0
        %v3222 = vsel %vm3214, %v3199, 0.0
        %v3223 = vsel %vm3215, %v3198, 0.0
        %v3224 = vsel %vm3216, %v3197, 0.0
        %v3225 = vsel %vm3217, %v3196, 0.0
        %v3226 = vsel %vm3218, %v3195, 0.0
        %3227 = vrot.lane.b32.xlu0 %v2763, 31
        %v3228 = vpop.permute.xlu0 %3227
        %3229 = vrot.lane.b32.xlu0 %v2764, 31
        %v3230 = vpop.permute.xlu0 %3229
        %3231 = vrot.lane.b32.xlu0 %v2765, 31
        %v3232 = vpop.permute.xlu0 %3231
        %3233 = vrot.lane.b32.xlu0 %v2766, 31
        %v3234 = vpop.permute.xlu0 %3233
        %3235 = vrot.lane.b32.xlu0 %v2767, 31
        %v3236 = vpop.permute.xlu0 %3235
        %3237 = vrot.lane.b32.xlu0 %v2768, 31
        %v3238 = vpop.permute.xlu0 %3237
        %3239 = vrot.lane.b32.xlu0 %v2769, 31
        %v3240 = vpop.permute.xlu0 %3239
        %3241 = vrot.lane.b32.xlu0 %v2770, 31
        %v3242 = vpop.permute.xlu0 %3241
        %vm3243 = vcmp.lt.s32.totalorder %v788, 31
        %v3244 = vsel %vm3243, %v3240, %v3242
        %v3245 = vsel %vm3243, %v3238, %v3240
        %v3246 = vsel %vm3243, %v3236, %v3238
        %v3247 = vsel %vm3243, %v3234, %v3236
        %v3248 = vsel %vm3243, %v3232, %v3234
        %v3249 = vsel %vm3243, %v3230, %v3232
        %v3250 = vsel %vm3243, %v3228, %v3230
        %v3251 = vsel %vm3243, %v3242, %v3228
        %v3252 = vsel %vm3010, 1, 0
        %v3253 = vsel %vm3011, 1, 0
        %v3254 = vsel %vm3012, 1, 0
        %v3255 = vsel %vm3013, 1, 0
        %v3256 = vsel %vm3014, 1, 0
        %v3257 = vsel %vm3015, 1, 0
        %v3258 = vsel %vm3016, 1, 0
        %v3259 = vsel %vm3017, 1, 0
        %vm3260 = vcmp.eq.s32.totalorder %v3252, 1
        %vm3261 = vcmp.eq.s32.totalorder %v3253, 1
        %vm3262 = vcmp.eq.s32.totalorder %v3254, 1
        %vm3263 = vcmp.eq.s32.totalorder %v3255, 1
        %vm3264 = vcmp.eq.s32.totalorder %v3256, 1
        %vm3265 = vcmp.eq.s32.totalorder %v3257, 1
        %vm3266 = vcmp.eq.s32.totalorder %v3258, 1
        %vm3267 = vcmp.eq.s32.totalorder %v3259, 1
        %v3268 = vsel %vm3260, %v3251, 0.0
        %v3269 = vsel %vm3261, %v3250, 0.0
        %v3270 = vsel %vm3262, %v3249, 0.0
        %v3271 = vsel %vm3263, %v3248, 0.0
        %v3272 = vsel %vm3264, %v3247, 0.0
        %v3273 = vsel %vm3265, %v3246, 0.0
        %v3274 = vsel %vm3266, %v3245, 0.0
        %v3275 = vsel %vm3267, %v3244, 0.0
        %3276 = vrot.lane.b32.xlu0 %v2763, 1
        %v3277 = vpop.permute.xlu0 %3276
        %3278 = vrot.lane.b32.xlu0 %v2764, 1
        %v3279 = vpop.permute.xlu0 %3278
        %3280 = vrot.lane.b32.xlu0 %v2765, 1
        %v3281 = vpop.permute.xlu0 %3280
        %3282 = vrot.lane.b32.xlu0 %v2766, 1
        %v3283 = vpop.permute.xlu0 %3282
        %3284 = vrot.lane.b32.xlu0 %v2767, 1
        %v3285 = vpop.permute.xlu0 %3284
        %3286 = vrot.lane.b32.xlu0 %v2768, 1
        %v3287 = vpop.permute.xlu0 %3286
        %3288 = vrot.lane.b32.xlu0 %v2769, 1
        %v3289 = vpop.permute.xlu0 %3288
        %3290 = vrot.lane.b32.xlu0 %v2770, 1
        %v3291 = vpop.permute.xlu0 %3290
        %v3292 = vsel %vm1695, %v3289, %v3291
        %v3293 = vsel %vm1695, %v3287, %v3289
        %v3294 = vsel %vm1695, %v3285, %v3287
        %v3295 = vsel %vm1695, %v3283, %v3285
        %v3296 = vsel %vm1695, %v3281, %v3283
        %v3297 = vsel %vm1695, %v3279, %v3281
        %v3298 = vsel %vm1695, %v3277, %v3279
        %v3299 = vsel %vm1695, %v3291, %v3277
        %v3300 = vsel %vm3040, 1, 0
        %v3301 = vsel %vm3041, 1, 0
        %v3302 = vsel %vm3042, 1, 0
        %v3303 = vsel %vm3043, 1, 0
        %v3304 = vsel %vm3044, 1, 0
        %v3305 = vsel %vm3045, 1, 0
        %v3306 = vsel %vm3046, 1, 0
        %v3307 = vsel %vm3047, 1, 0
        %vm3308 = vcmp.eq.s32.totalorder %v3300, 1
        %vm3309 = vcmp.eq.s32.totalorder %v3301, 1
        %vm3310 = vcmp.eq.s32.totalorder %v3302, 1
        %vm3311 = vcmp.eq.s32.totalorder %v3303, 1
        %vm3312 = vcmp.eq.s32.totalorder %v3304, 1
        %vm3313 = vcmp.eq.s32.totalorder %v3305, 1
        %vm3314 = vcmp.eq.s32.totalorder %v3306, 1
        %vm3315 = vcmp.eq.s32.totalorder %v3307, 1
        %v3316 = vsel %vm3308, %v3299, 0.0
        %v3317 = vsel %vm3309, %v3298, 0.0
        %v3318 = vsel %vm3310, %v3297, 0.0
        %v3319 = vsel %vm3311, %v3296, 0.0
        %v3320 = vsel %vm3312, %v3295, 0.0
        %v3321 = vsel %vm3313, %v3294, 0.0
        %v3322 = vsel %vm3314, %v3293, 0.0
        %v3323 = vsel %vm3315, %v3292, 0.0
        %v3324 = vsel %vm3048, 1, 0
        %v3325 = vsel %vm3049, 1, 0
        %v3326 = vsel %vm3050, 1, 0
        %v3327 = vsel %vm3051, 1, 0
        %v3328 = vsel %vm3052, 1, 0
        %v3329 = vsel %vm3053, 1, 0
        %v3330 = vsel %vm3054, 1, 0
        %v3331 = vsel %vm3055, 1, 0
        %vm3332 = vcmp.eq.s32.totalorder %v3324, 1
        %vm3333 = vcmp.eq.s32.totalorder %v3325, 1
        %vm3334 = vcmp.eq.s32.totalorder %v3326, 1
        %vm3335 = vcmp.eq.s32.totalorder %v3327, 1
        %vm3336 = vcmp.eq.s32.totalorder %v3328, 1
        %vm3337 = vcmp.eq.s32.totalorder %v3329, 1
        %vm3338 = vcmp.eq.s32.totalorder %v3330, 1
        %vm3339 = vcmp.eq.s32.totalorder %v3331, 1
        %v3340 = vsel %vm3332, %v2763, 0.0
        %v3341 = vsel %vm3333, %v2764, 0.0
        %v3342 = vsel %vm3334, %v2765, 0.0
        %v3343 = vsel %vm3335, %v2766, 0.0
        %v3344 = vsel %vm3336, %v2767, 0.0
        %v3345 = vsel %vm3337, %v2768, 0.0
        %v3346 = vsel %vm3338, %v2769, 0.0
        %v3347 = vsel %vm3339, %v2770, 0.0
        %3348 = vrot.lane.b32.xlu0 %v2763, 127
        %v3349 = vpop.permute.xlu0 %3348
        %3350 = vrot.lane.b32.xlu0 %v2764, 127
        %v3351 = vpop.permute.xlu0 %3350
        %3352 = vrot.lane.b32.xlu0 %v2765, 127
        %v3353 = vpop.permute.xlu0 %3352
        %3354 = vrot.lane.b32.xlu0 %v2766, 127
        %v3355 = vpop.permute.xlu0 %3354
        %3356 = vrot.lane.b32.xlu0 %v2767, 127
        %v3357 = vpop.permute.xlu0 %3356
        %3358 = vrot.lane.b32.xlu0 %v2768, 127
        %v3359 = vpop.permute.xlu0 %3358
        %3360 = vrot.lane.b32.xlu0 %v2769, 127
        %v3361 = vpop.permute.xlu0 %3360
        %3362 = vrot.lane.b32.xlu0 %v2770, 127
        %v3363 = vpop.permute.xlu0 %3362
        %v3364 = vsel %vm1714, %v3361, %v3363
        %v3365 = vsel %vm1714, %v3359, %v3361
        %v3366 = vsel %vm1714, %v3357, %v3359
        %v3367 = vsel %vm1714, %v3355, %v3357
        %v3368 = vsel %vm1714, %v3353, %v3355
        %v3369 = vsel %vm1714, %v3351, %v3353
        %v3370 = vsel %vm1714, %v3349, %v3351
        %v3371 = vsel %vm1714, %v3363, %v3349
        %v3372 = vsel %vm3056, 1, 0
        %v3373 = vsel %vm3057, 1, 0
        %v3374 = vsel %vm3058, 1, 0
        %v3375 = vsel %vm3059, 1, 0
        %v3376 = vsel %vm3060, 1, 0
        %v3377 = vsel %vm3061, 1, 0
        %v3378 = vsel %vm3062, 1, 0
        %v3379 = vsel %vm3063, 1, 0
        %vm3380 = vcmp.eq.s32.totalorder %v3372, 1
        %vm3381 = vcmp.eq.s32.totalorder %v3373, 1
        %vm3382 = vcmp.eq.s32.totalorder %v3374, 1
        %vm3383 = vcmp.eq.s32.totalorder %v3375, 1
        %vm3384 = vcmp.eq.s32.totalorder %v3376, 1
        %vm3385 = vcmp.eq.s32.totalorder %v3377, 1
        %vm3386 = vcmp.eq.s32.totalorder %v3378, 1
        %vm3387 = vcmp.eq.s32.totalorder %v3379, 1
        %v3388 = vsel %vm3380, %v3370, 0.0
        %v3389 = vsel %vm3381, %v3369, 0.0
        %v3390 = vsel %vm3382, %v3368, 0.0
        %v3391 = vsel %vm3383, %v3367, 0.0
        %v3392 = vsel %vm3384, %v3366, 0.0
        %v3393 = vsel %vm3385, %v3365, 0.0
        %v3394 = vsel %vm3386, %v3364, 0.0
        %v3395 = vsel %vm3387, %v3371, 0.0
        %3396 = vrot.lane.b32.xlu0 %v2763, 97
        %v3397 = vpop.permute.xlu0 %3396
        %3398 = vrot.lane.b32.xlu0 %v2764, 97
        %v3399 = vpop.permute.xlu0 %3398
        %3400 = vrot.lane.b32.xlu0 %v2765, 97
        %v3401 = vpop.permute.xlu0 %3400
        %3402 = vrot.lane.b32.xlu0 %v2766, 97
        %v3403 = vpop.permute.xlu0 %3402
        %3404 = vrot.lane.b32.xlu0 %v2767, 97
        %v3405 = vpop.permute.xlu0 %3404
        %3406 = vrot.lane.b32.xlu0 %v2768, 97
        %v3407 = vpop.permute.xlu0 %3406
        %3408 = vrot.lane.b32.xlu0 %v2769, 97
        %v3409 = vpop.permute.xlu0 %3408
        %3410 = vrot.lane.b32.xlu0 %v2770, 97
        %v3411 = vpop.permute.xlu0 %3410
        %vm3412 = vcmp.lt.s32.totalorder %v788, 97
        %v3413 = vsel %vm3412, %v3409, %v3411
        %v3414 = vsel %vm3412, %v3407, %v3409
        %v3415 = vsel %vm3412, %v3405, %v3407
        %v3416 = vsel %vm3412, %v3403, %v3405
        %v3417 = vsel %vm3412, %v3401, %v3403
        %v3418 = vsel %vm3412, %v3399, %v3401
        %v3419 = vsel %vm3412, %v3397, %v3399
        %v3420 = vsel %vm3412, %v3411, %v3397
        %v3421 = vsel %vm3096, 1, 0
        %v3422 = vsel %vm3097, 1, 0
        %v3423 = vsel %vm3098, 1, 0
        %v3424 = vsel %vm3099, 1, 0
        %v3425 = vsel %vm3100, 1, 0
        %v3426 = vsel %vm3101, 1, 0
        %v3427 = vsel %vm3102, 1, 0
        %v3428 = vsel %vm3103, 1, 0
        %vm3429 = vcmp.eq.s32.totalorder %v3421, 1
        %vm3430 = vcmp.eq.s32.totalorder %v3422, 1
        %vm3431 = vcmp.eq.s32.totalorder %v3423, 1
        %vm3432 = vcmp.eq.s32.totalorder %v3424, 1
        %vm3433 = vcmp.eq.s32.totalorder %v3425, 1
        %vm3434 = vcmp.eq.s32.totalorder %v3426, 1
        %vm3435 = vcmp.eq.s32.totalorder %v3427, 1
        %vm3436 = vcmp.eq.s32.totalorder %v3428, 1
        %v3437 = vsel %vm3429, %v3419, 0.0
        %v3438 = vsel %vm3430, %v3418, 0.0
        %v3439 = vsel %vm3431, %v3417, 0.0
        %v3440 = vsel %vm3432, %v3416, 0.0
        %v3441 = vsel %vm3433, %v3415, 0.0
        %v3442 = vsel %vm3434, %v3414, 0.0
        %v3443 = vsel %vm3435, %v3413, 0.0
        %v3444 = vsel %vm3436, %v3420, 0.0
        %3445 = vrot.lane.b32.xlu0 %v2763, 96
        %v3446 = vpop.permute.xlu0 %3445
        %3447 = vrot.lane.b32.xlu0 %v2764, 96
        %v3448 = vpop.permute.xlu0 %3447
        %3449 = vrot.lane.b32.xlu0 %v2765, 96
        %v3450 = vpop.permute.xlu0 %3449
        %3451 = vrot.lane.b32.xlu0 %v2766, 96
        %v3452 = vpop.permute.xlu0 %3451
        %3453 = vrot.lane.b32.xlu0 %v2767, 96
        %v3454 = vpop.permute.xlu0 %3453
        %3455 = vrot.lane.b32.xlu0 %v2768, 96
        %v3456 = vpop.permute.xlu0 %3455
        %3457 = vrot.lane.b32.xlu0 %v2769, 96
        %v3458 = vpop.permute.xlu0 %3457
        %3459 = vrot.lane.b32.xlu0 %v2770, 96
        %v3460 = vpop.permute.xlu0 %3459
        %vm3461 = vcmp.lt.s32.totalorder %v788, 96
        %v3462 = vsel %vm3461, %v3458, %v3460
        %v3463 = vsel %vm3461, %v3456, %v3458
        %v3464 = vsel %vm3461, %v3454, %v3456
        %v3465 = vsel %vm3461, %v3452, %v3454
        %v3466 = vsel %vm3461, %v3450, %v3452
        %v3467 = vsel %vm3461, %v3448, %v3450
        %v3468 = vsel %vm3461, %v3446, %v3448
        %v3469 = vsel %vm3461, %v3460, %v3446
        %v3470 = vsel %vm3104, 1, 0
        %v3471 = vsel %vm3105, 1, 0
        %v3472 = vsel %vm3106, 1, 0
        %v3473 = vsel %vm3107, 1, 0
        %v3474 = vsel %vm3108, 1, 0
        %v3475 = vsel %vm3109, 1, 0
        %v3476 = vsel %vm3110, 1, 0
        %v3477 = vsel %vm3111, 1, 0
        %vm3478 = vcmp.eq.s32.totalorder %v3470, 1
        %vm3479 = vcmp.eq.s32.totalorder %v3471, 1
        %vm3480 = vcmp.eq.s32.totalorder %v3472, 1
        %vm3481 = vcmp.eq.s32.totalorder %v3473, 1
        %vm3482 = vcmp.eq.s32.totalorder %v3474, 1
        %vm3483 = vcmp.eq.s32.totalorder %v3475, 1
        %vm3484 = vcmp.eq.s32.totalorder %v3476, 1
        %vm3485 = vcmp.eq.s32.totalorder %v3477, 1
        %v3486 = vsel %vm3478, %v3468, 0.0
        %v3487 = vsel %vm3479, %v3467, 0.0
        %v3488 = vsel %vm3480, %v3466, 0.0
        %v3489 = vsel %vm3481, %v3465, 0.0
        %v3490 = vsel %vm3482, %v3464, 0.0
        %v3491 = vsel %vm3483, %v3463, 0.0
        %v3492 = vsel %vm3484, %v3462, 0.0
        %v3493 = vsel %vm3485, %v3469, 0.0
        %3494 = vrot.lane.b32.xlu0 %v2763, 95
        %v3495 = vpop.permute.xlu0 %3494
        %3496 = vrot.lane.b32.xlu0 %v2764, 95
        %v3497 = vpop.permute.xlu0 %3496
        %3498 = vrot.lane.b32.xlu0 %v2765, 95
        %v3499 = vpop.permute.xlu0 %3498
        %3500 = vrot.lane.b32.xlu0 %v2766, 95
        %v3501 = vpop.permute.xlu0 %3500
        %3502 = vrot.lane.b32.xlu0 %v2767, 95
        %v3503 = vpop.permute.xlu0 %3502
        %3504 = vrot.lane.b32.xlu0 %v2768, 95
        %v3505 = vpop.permute.xlu0 %3504
        %3506 = vrot.lane.b32.xlu0 %v2769, 95
        %v3507 = vpop.permute.xlu0 %3506
        %3508 = vrot.lane.b32.xlu0 %v2770, 95
        %v3509 = vpop.permute.xlu0 %3508
        %vm3510 = vcmp.lt.s32.totalorder %v788, 95
        %v3511 = vsel %vm3510, %v3507, %v3509
        %v3512 = vsel %vm3510, %v3505, %v3507
        %v3513 = vsel %vm3510, %v3503, %v3505
        %v3514 = vsel %vm3510, %v3501, %v3503
        %v3515 = vsel %vm3510, %v3499, %v3501
        %v3516 = vsel %vm3510, %v3497, %v3499
        %v3517 = vsel %vm3510, %v3495, %v3497
        %v3518 = vsel %vm3510, %v3509, %v3495
        %v3519 = vsel %vm3112, 1, 0
        %v3520 = vsel %vm3113, 1, 0
        %v3521 = vsel %vm3114, 1, 0
        %v3522 = vsel %vm3115, 1, 0
        %v3523 = vsel %vm3116, 1, 0
        %v3524 = vsel %vm3117, 1, 0
        %v3525 = vsel %vm3118, 1, 0
        %v3526 = vsel %vm3119, 1, 0
        %vm3527 = vcmp.eq.s32.totalorder %v3519, 1
        %vm3528 = vcmp.eq.s32.totalorder %v3520, 1
        %vm3529 = vcmp.eq.s32.totalorder %v3521, 1
        %vm3530 = vcmp.eq.s32.totalorder %v3522, 1
        %vm3531 = vcmp.eq.s32.totalorder %v3523, 1
        %vm3532 = vcmp.eq.s32.totalorder %v3524, 1
        %vm3533 = vcmp.eq.s32.totalorder %v3525, 1
        %vm3534 = vcmp.eq.s32.totalorder %v3526, 1
        %v3535 = vsel %vm3527, %v3517, 0.0
        %v3536 = vsel %vm3528, %v3516, 0.0
        %v3537 = vsel %vm3529, %v3515, 0.0
        %v3538 = vsel %vm3530, %v3514, 0.0
        %v3539 = vsel %vm3531, %v3513, 0.0
        %v3540 = vsel %vm3532, %v3512, 0.0
        %v3541 = vsel %vm3533, %v3511, 0.0
        %v3542 = vsel %vm3534, %v3518, 0.0
        %v3543 = vpack.c.bf16 %v3120, %v3120
        %v3544 = vpack.c.bf16 %v3170, %v3170
        %v3545 = vpack.c.bf16 %v3171, %v3171
        %v3546 = vpack.c.bf16 %v3172, %v3172
        %v3547 = vpack.c.bf16 %v3173, %v3173
        %v3548 = vpack.c.bf16 %v3174, %v3174
        %v3549 = vpack.c.bf16 %v3175, %v3175
        %v3550 = vpack.c.bf16 %v3176, %v3176
        %v3551 = vpack.c.bf16 %v3177, %v3177
        %v3552 = vpack.c.bf16 %v3121, %v3121
        %v3553 = vpack.c.bf16 %v3219, %v3219
        %v3554 = vpack.c.bf16 %v3220, %v3220
        %v3555 = vpack.c.bf16 %v3221, %v3221
        %v3556 = vpack.c.bf16 %v3222, %v3222
        %v3557 = vpack.c.bf16 %v3223, %v3223
        %v3558 = vpack.c.bf16 %v3224, %v3224
        %v3559 = vpack.c.bf16 %v3225, %v3225
        %v3560 = vpack.c.bf16 %v3226, %v3226
        %vm3561 = vcmask 31744
        %v3563 = vsel %vm3561, %v3552, 0
        %vm3565 = vcmask 1041408
        %v3567 = vsel %vm3565, %v3553, 0
        %v3570 = vsel %vm3565, %v3554, 0
        %v3573 = vsel %vm3565, %v3555, 0
        %v3576 = vsel %vm3565, %v3556, 0
        %v3579 = vsel %vm3565, %v3557, 0
        %v3582 = vsel %vm3565, %v3558, 0
        %v3585 = vsel %vm3565, %v3559, 0
        %v3588 = vsel %vm3565, %v3560, 0
        %3590 = vmatprep.subr.bf16.mxu0 %v3570
        %3591 = vmatpush1.bf16.msra.mxu0 %v3567
        %3592 = vmatprep.subr.bf16.mxu0 0
        %3593 = vmatpush1.bf16.msra.mxu0 0
        %3594 = vmatprep.subr.bf16.mxu0 0
        %3595 = vmatpush1.bf16.msra.mxu0 0
        %3596 = vmatprep.subr.bf16.mxu0 0
        %3597 = vmatpush1.bf16.msra.mxu0 0
        %3598 = vmatprep.subr.bf16.mxu0 0
        %3599 = vmatpush1.bf16.msra.mxu0 0
        %3600 = vmatprep.subr.bf16.mxu0 0
        %3601 = vmatpush1.bf16.msra.mxu0 0
        %3602 = vmatprep.subr.bf16.mxu0 0
        %3603 = vmatpush1.bf16.msra.mxu0 0
        %3604 = vmatprep.subr.bf16.mxu0 0
        %3605 = vmatpush1.bf16.msra.mxu0 0
        %3606 = vmatprep.subr.bf16.mxu0 0
        %3607 = vmatpush1.bf16.msra.mxu0 0
        %3608 = vmatprep.subr.bf16.mxu0 0
        %3609 = vmatpush1.bf16.msra.mxu0 0
        %3610 = vmatprep.subr.bf16.mxu0 0
        %3611 = vmatpush1.bf16.msra.mxu0 0
        %3612 = vmatprep.subr.bf16.mxu0 0
        %3613 = vmatpush1.bf16.msra.mxu0 0
        %3614 = vmatprep.subr.bf16.mxu0 0
        %3615 = vmatpush1.bf16.msra.mxu0 0
        %3616 = vmatprep.subr.bf16.mxu0 0
        %3617 = vmatpush1.bf16.msra.mxu0 0
        %3618 = vmatprep.subr.bf16.mxu0 0
        %3619 = vmatpush1.bf16.msra.mxu0 0
        %3620 = vmatprep.subr.bf16.mxu0 0
        %3621 = vmatpush1.bf16.msra.mxu0 0
        %3622 = vmatprep.mubr.bf16.mxu0 0
        %3623 = vmatmul.mubr.bf16.gmra.mrb[0].mxu0 %v3563
        %v3624 = vpop.f32.mrb[0].mxu0
        %v3625 = vadd.f32 0.0, %v3624
        %v3626 = vpop.f32.mrb[0].mxu0
        %v3627 = vadd.f32 0.0, %v3626
        %v3628 = vpop.f32.mrb[0].mxu0
        %v3629 = vpop.f32.mrb[0].mxu0
        %3630 = vdwg.mxu0
        %3631 = vmatprep.subr.bf16.mxu0 %v3576
        %3632 = vmatpush1.bf16.msra.mxu0 %v3573
        %3633 = vmatprep.subr.bf16.mxu0 0
        %3634 = vmatpush1.bf16.msra.mxu0 0
        %3635 = vmatprep.subr.bf16.mxu0 0
        %3636 = vmatpush1.bf16.msra.mxu0 0
        %3637 = vmatprep.subr.bf16.mxu0 0
        %3638 = vmatpush1.bf16.msra.mxu0 0
        %3639 = vmatprep.subr.bf16.mxu0 0
        %3640 = vmatpush1.bf16.msra.mxu0 0
        %3641 = vmatprep.subr.bf16.mxu0 0
        %3642 = vmatpush1.bf16.msra.mxu0 0
        %3643 = vmatprep.subr.bf16.mxu0 0
        %3644 = vmatpush1.bf16.msra.mxu0 0
        %3645 = vmatprep.subr.bf16.mxu0 0
        %3646 = vmatpush1.bf16.msra.mxu0 0
        %3647 = vmatprep.subr.bf16.mxu0 0
        %3648 = vmatpush1.bf16.msra.mxu0 0
        %3649 = vmatprep.subr.bf16.mxu0 0
        %3650 = vmatpush1.bf16.msra.mxu0 0
        %3651 = vmatprep.subr.bf16.mxu0 0
        %3652 = vmatpush1.bf16.msra.mxu0 0
        %3653 = vmatprep.subr.bf16.mxu0 0
        %3654 = vmatpush1.bf16.msra.mxu0 0
        %3655 = vmatprep.subr.bf16.mxu0 0
        %3656 = vmatpush1.bf16.msra.mxu0 0
        %3657 = vmatprep.subr.bf16.mxu0 0
        %3658 = vmatpush1.bf16.msra.mxu0 0
        %3659 = vmatprep.subr.bf16.mxu0 0
        %3660 = vmatpush1.bf16.msra.mxu0 0
        %3661 = vmatprep.subr.bf16.mxu0 0
        %3662 = vmatpush1.bf16.msra.mxu0 0
        %3663 = vmatprep.mubr.bf16.mxu0 0
        %3664 = vmatmul.mubr.bf16.gmra.mrb[0].mxu0 %v3563
        %v3665 = vpop.f32.mrb[0].mxu0
        %v3666 = vadd.f32 0.0, %v3665
        %v3667 = vpop.f32.mrb[0].mxu0
        %v3668 = vadd.f32 0.0, %v3667
        %v3669 = vpop.f32.mrb[0].mxu0
        %v3670 = vpop.f32.mrb[0].mxu0
        %3671 = vdwg.mxu0
        %3672 = vmatprep.subr.bf16.mxu0 %v3582
        %3673 = vmatpush1.bf16.msra.mxu0 %v3579
        %3674 = vmatprep.subr.bf16.mxu0 0
        %3675 = vmatpush1.bf16.msra.mxu0 0
        %3676 = vmatprep.subr.bf16.mxu0 0
        %3677 = vmatpush1.bf16.msra.mxu0 0
        %3678 = vmatprep.subr.bf16.mxu0 0
        %3679 = vmatpush1.bf16.msra.mxu0 0
        %3680 = vmatprep.subr.bf16.mxu0 0
        %3681 = vmatpush1.bf16.msra.mxu0 0
        %3682 = vmatprep.subr.bf16.mxu0 0
        %3683 = vmatpush1.bf16.msra.mxu0 0
        %3684 = vmatprep.subr.bf16.mxu0 0
        %3685 = vmatpush1.bf16.msra.mxu0 0
        %3686 = vmatprep.subr.bf16.mxu0 0
        %3687 = vmatpush1.bf16.msra.mxu0 0
        %3688 = vmatprep.subr.bf16.mxu0 0
        %3689 = vmatpush1.bf16.msra.mxu0 0
        %3690 = vmatprep.subr.bf16.mxu0 0
        %3691 = vmatpush1.bf16.msra.mxu0 0
        %3692 = vmatprep.subr.bf16.mxu0 0
        %3693 = vmatpush1.bf16.msra.mxu0 0
        %3694 = vmatprep.subr.bf16.mxu0 0
        %3695 = vmatpush1.bf16.msra.mxu0 0
        %3696 = vmatprep.subr.bf16.mxu0 0
        %3697 = vmatpush1.bf16.msra.mxu0 0
        %3698 = vmatprep.subr.bf16.mxu0 0
        %3699 = vmatpush1.bf16.msra.mxu0 0
        %3700 = vmatprep.subr.bf16.mxu0 0
        %3701 = vmatpush1.bf16.msra.mxu0 0
        %3702 = vmatprep.subr.bf16.mxu0 0
        %3703 = vmatpush1.bf16.msra.mxu0 0
        %3704 = vmatprep.mubr.bf16.mxu0 0
        %3705 = vmatmul.mubr.bf16.gmra.mrb[0].mxu0 %v3563
        %v3706 = vpop.f32.mrb[0].mxu0
        %v3707 = vadd.f32 0.0, %v3706
        %v3708 = vpop.f32.mrb[0].mxu0
        %v3709 = vadd.f32 0.0, %v3708
        %v3710 = vpop.f32.mrb[0].mxu0
        %v3711 = vpop.f32.mrb[0].mxu0
        %3712 = vdwg.mxu0
        %3713 = vmatprep.subr.bf16.mxu0 %v3588
        %3714 = vmatpush1.bf16.msra.mxu0 %v3585
        %3715 = vmatprep.subr.bf16.mxu0 0
        %3716 = vmatpush1.bf16.msra.mxu0 0
        %3717 = vmatprep.subr.bf16.mxu0 0
        %3718 = vmatpush1.bf16.msra.mxu0 0
        %3719 = vmatprep.subr.bf16.mxu0 0
        %3720 = vmatpush1.bf16.msra.mxu0 0
        %3721 = vmatprep.subr.bf16.mxu0 0
        %3722 = vmatpush1.bf16.msra.mxu0 0
        %3723 = vmatprep.subr.bf16.mxu0 0
        %3724 = vmatpush1.bf16.msra.mxu0 0
        %3725 = vmatprep.subr.bf16.mxu0 0
        %3726 = vmatpush1.bf16.msra.mxu0 0
        %3727 = vmatprep.subr.bf16.mxu0 0
        %3728 = vmatpush1.bf16.msra.mxu0 0
        %3729 = vmatprep.subr.bf16.mxu0 0
        %3730 = vmatpush1.bf16.msra.mxu0 0
        %3731 = vmatprep.subr.bf16.mxu0 0
        %3732 = vmatpush1.bf16.msra.mxu0 0
        %3733 = vmatprep.subr.bf16.mxu0 0
        %3734 = vmatpush1.bf16.msra.mxu0 0
        %3735 = vmatprep.subr.bf16.mxu0 0
        %3736 = vmatpush1.bf16.msra.mxu0 0
        %3737 = vmatprep.subr.bf16.mxu0 0
        %3738 = vmatpush1.bf16.msra.mxu0 0
        %3739 = vmatprep.subr.bf16.mxu0 0
        %3740 = vmatpush1.bf16.msra.mxu0 0
        %3741 = vmatprep.subr.bf16.mxu0 0
        %3742 = vmatpush1.bf16.msra.mxu0 0
        %3743 = vmatprep.subr.bf16.mxu0 0
        %3744 = vmatpush1.bf16.msra.mxu0 0
        %3745 = vmatprep.mubr.bf16.mxu0 0
        %3746 = vmatmul.mubr.bf16.gmra.mrb[0].mxu0 %v3563
        %v3747 = vpop.f32.mrb[0].mxu0
        %v3748 = vadd.f32 0.0, %v3747
        %v3749 = vpop.f32.mrb[0].mxu0
        %v3750 = vadd.f32 0.0, %v3749
        %v3751 = vpop.f32.mrb[0].mxu0
        %v3752 = vpop.f32.mrb[0].mxu0
        %3753 = vdwg.mxu0
        %v3755 = vsel %vm3561, %v3543, 0
        %v3758 = vsel %vm3565, %v3544, 0
        %v3761 = vsel %vm3565, %v3545, 0
        %v3764 = vsel %vm3565, %v3546, 0
        %v3767 = vsel %vm3565, %v3547, 0
        %v3770 = vsel %vm3565, %v3548, 0
        %v3773 = vsel %vm3565, %v3549, 0
        %v3776 = vsel %vm3565, %v3550, 0
        %v3779 = vsel %vm3565, %v3551, 0
        %3781 = vmatprep.subr.bf16.mxu0 %v3761
        %3782 = vmatpush1.bf16.msra.mxu0 %v3758
        %3783 = vmatprep.subr.bf16.mxu0 0
        %3784 = vmatpush1.bf16.msra.mxu0 0
        %3785 = vmatprep.subr.bf16.mxu0 0
        %3786 = vmatpush1.bf16.msra.mxu0 0
        %3787 = vmatprep.subr.bf16.mxu0 0
        %3788 = vmatpush1.bf16.msra.mxu0 0
        %3789 = vmatprep.subr.bf16.mxu0 0
        %3790 = vmatpush1.bf16.msra.mxu0 0
        %3791 = vmatprep.subr.bf16.mxu0 0
        %3792 = vmatpush1.bf16.msra.mxu0 0
        %3793 = vmatprep.subr.bf16.mxu0 0
        %3794 = vmatpush1.bf16.msra.mxu0 0
        %3795 = vmatprep.subr.bf16.mxu0 0
        %3796 = vmatpush1.bf16.msra.mxu0 0
        %3797 = vmatprep.subr.bf16.mxu0 0
        %3798 = vmatpush1.bf16.msra.mxu0 0
        %3799 = vmatprep.subr.bf16.mxu0 0
        %3800 = vmatpush1.bf16.msra.mxu0 0
        %3801 = vmatprep.subr.bf16.mxu0 0
        %3802 = vmatpush1.bf16.msra.mxu0 0
        %3803 = vmatprep.subr.bf16.mxu0 0
        %3804 = vmatpush1.bf16.msra.mxu0 0
        %3805 = vmatprep.subr.bf16.mxu0 0
        %3806 = vmatpush1.bf16.msra.mxu0 0
        %3807 = vmatprep.subr.bf16.mxu0 0
        %3808 = vmatpush1.bf16.msra.mxu0 0
        %3809 = vmatprep.subr.bf16.mxu0 0
        %3810 = vmatpush1.bf16.msra.mxu0 0
        %3811 = vmatprep.subr.bf16.mxu0 0
        %3812 = vmatpush1.bf16.msra.mxu0 0
        %3813 = vmatprep.mubr.bf16.mxu0 0
        %3814 = vmatmul.mubr.bf16.gmra.mrb[0].mxu0 %v3755
        %v3815 = vpop.f32.mrb[0].mxu0
        %v3816 = vadd.f32 %v3625, %v3815
        %v3817 = vpop.f32.mrb[0].mxu0
        %v3818 = vadd.f32 %v3627, %v3817
        %v3819 = vpop.f32.mrb[0].mxu0
        %v3820 = vpop.f32.mrb[0].mxu0
        %3821 = vdwg.mxu0
        %3822 = vmatprep.subr.bf16.mxu0 %v3767
        %3823 = vmatpush1.bf16.msra.mxu0 %v3764
        %3824 = vmatprep.subr.bf16.mxu0 0
        %3825 = vmatpush1.bf16.msra.mxu0 0
        %3826 = vmatprep.subr.bf16.mxu0 0
        %3827 = vmatpush1.bf16.msra.mxu0 0
        %3828 = vmatprep.subr.bf16.mxu0 0
        %3829 = vmatpush1.bf16.msra.mxu0 0
        %3830 = vmatprep.subr.bf16.mxu0 0
        %3831 = vmatpush1.bf16.msra.mxu0 0
        %3832 = vmatprep.subr.bf16.mxu0 0
        %3833 = vmatpush1.bf16.msra.mxu0 0
        %3834 = vmatprep.subr.bf16.mxu0 0
        %3835 = vmatpush1.bf16.msra.mxu0 0
        %3836 = vmatprep.subr.bf16.mxu0 0
        %3837 = vmatpush1.bf16.msra.mxu0 0
        %3838 = vmatprep.subr.bf16.mxu0 0
        %3839 = vmatpush1.bf16.msra.mxu0 0
        %3840 = vmatprep.subr.bf16.mxu0 0
        %3841 = vmatpush1.bf16.msra.mxu0 0
        %3842 = vmatprep.subr.bf16.mxu0 0
        %3843 = vmatpush1.bf16.msra.mxu0 0
        %3844 = vmatprep.subr.bf16.mxu0 0
        %3845 = vmatpush1.bf16.msra.mxu0 0
        %3846 = vmatprep.subr.bf16.mxu0 0
        %3847 = vmatpush1.bf16.msra.mxu0 0
        %3848 = vmatprep.subr.bf16.mxu0 0
        %3849 = vmatpush1.bf16.msra.mxu0 0
        %3850 = vmatprep.subr.bf16.mxu0 0
        %3851 = vmatpush1.bf16.msra.mxu0 0
        %3852 = vmatprep.subr.bf16.mxu0 0
        %3853 = vmatpush1.bf16.msra.mxu0 0
        %3854 = vmatprep.mubr.bf16.mxu0 0
        %3855 = vmatmul.mubr.bf16.gmra.mrb[0].mxu0 %v3755
        %v3856 = vpop.f32.mrb[0].mxu0
        %v3857 = vadd.f32 %v3666, %v3856
        %v3858 = vpop.f32.mrb[0].mxu0
        %v3859 = vadd.f32 %v3668, %v3858
        %v3860 = vpop.f32.mrb[0].mxu0
        %v3861 = vpop.f32.mrb[0].mxu0
        %3862 = vdwg.mxu0
        %3863 = vmatprep.subr.bf16.mxu0 %v3773
        %3864 = vmatpush1.bf16.msra.mxu0 %v3770
        %3865 = vmatprep.subr.bf16.mxu0 0
        %3866 = vmatpush1.bf16.msra.mxu0 0
        %3867 = vmatprep.subr.bf16.mxu0 0
        %3868 = vmatpush1.bf16.msra.mxu0 0
        %3869 = vmatprep.subr.bf16.mxu0 0
        %3870 = vmatpush1.bf16.msra.mxu0 0
        %3871 = vmatprep.subr.bf16.mxu0 0
        %3872 = vmatpush1.bf16.msra.mxu0 0
        %3873 = vmatprep.subr.bf16.mxu0 0
        %3874 = vmatpush1.bf16.msra.mxu0 0
        %3875 = vmatprep.subr.bf16.mxu0 0
        %3876 = vmatpush1.bf16.msra.mxu0 0
        %3877 = vmatprep.subr.bf16.mxu0 0
        %3878 = vmatpush1.bf16.msra.mxu0 0
        %3879 = vmatprep.subr.bf16.mxu0 0
        %3880 = vmatpush1.bf16.msra.mxu0 0
        %3881 = vmatprep.subr.bf16.mxu0 0
        %3882 = vmatpush1.bf16.msra.mxu0 0
        %3883 = vmatprep.subr.bf16.mxu0 0
        %3884 = vmatpush1.bf16.msra.mxu0 0
        %3885 = vmatprep.subr.bf16.mxu0 0
        %3886 = vmatpush1.bf16.msra.mxu0 0
        %3887 = vmatprep.subr.bf16.mxu0 0
        %3888 = vmatpush1.bf16.msra.mxu0 0
        %3889 = vmatprep.subr.bf16.mxu0 0
        %3890 = vmatpush1.bf16.msra.mxu0 0
        %3891 = vmatprep.subr.bf16.mxu0 0
        %3892 = vmatpush1.bf16.msra.mxu0 0
        %3893 = vmatprep.subr.bf16.mxu0 0
        %3894 = vmatpush1.bf16.msra.mxu0 0
        %3895 = vmatprep.mubr.bf16.mxu0 0
        %3896 = vmatmul.mubr.bf16.gmra.mrb[0].mxu0 %v3755
        %v3897 = vpop.f32.mrb[0].mxu0
        %v3898 = vadd.f32 %v3707, %v3897
        %v3899 = vpop.f32.mrb[0].mxu0
        %v3900 = vadd.f32 %v3709, %v3899
        %v3901 = vpop.f32.mrb[0].mxu0
        %v3902 = vpop.f32.mrb[0].mxu0
        %3903 = vdwg.mxu0
        %3904 = vmatprep.subr.bf16.mxu0 %v3779
        %3905 = vmatpush1.bf16.msra.mxu0 %v3776
        %3906 = vmatprep.subr.bf16.mxu0 0
        %3907 = vmatpush1.bf16.msra.mxu0 0
        %3908 = vmatprep.subr.bf16.mxu0 0
        %3909 = vmatpush1.bf16.msra.mxu0 0
        %3910 = vmatprep.subr.bf16.mxu0 0
        %3911 = vmatpush1.bf16.msra.mxu0 0
        %3912 = vmatprep.subr.bf16.mxu0 0
        %3913 = vmatpush1.bf16.msra.mxu0 0
        %3914 = vmatprep.subr.bf16.mxu0 0
        %3915 = vmatpush1.bf16.msra.mxu0 0
        %3916 = vmatprep.subr.bf16.mxu0 0
        %3917 = vmatpush1.bf16.msra.mxu0 0
        %3918 = vmatprep.subr.bf16.mxu0 0
        %3919 = vmatpush1.bf16.msra.mxu0 0
        %3920 = vmatprep.subr.bf16.mxu0 0
        %3921 = vmatpush1.bf16.msra.mxu0 0
        %3922 = vmatprep.subr.bf16.mxu0 0
        %3923 = vmatpush1.bf16.msra.mxu0 0
        %3924 = vmatprep.subr.bf16.mxu0 0
        %3925 = vmatpush1.bf16.msra.mxu0 0
        %3926 = vmatprep.subr.bf16.mxu0 0
        %3927 = vmatpush1.bf16.msra.mxu0 0
        %3928 = vmatprep.subr.bf16.mxu0 0
        %3929 = vmatpush1.bf16.msra.mxu0 0
        %3930 = vmatprep.subr.bf16.mxu0 0
        %3931 = vmatpush1.bf16.msra.mxu0 0
        %3932 = vmatprep.subr.bf16.mxu0 0
        %3933 = vmatpush1.bf16.msra.mxu0 0
        %3934 = vmatprep.subr.bf16.mxu0 0
        %3935 = vmatpush1.bf16.msra.mxu0 0
        %3936 = vmatprep.mubr.bf16.mxu0 0
        %3937 = vmatmul.mubr.bf16.gmra.mrb[0].mxu0 %v3755
        %v3938 = vpop.f32.mrb[0].mxu0
        %v3939 = vadd.f32 %v3748, %v3938
        %v3940 = vpop.f32.mrb[0].mxu0
        %v3941 = vadd.f32 %v3750, %v3940
        %v3942 = vpop.f32.mrb[0].mxu0
        %v3943 = vpop.f32.mrb[0].mxu0
        %3944 = vdwg.mxu0
        %v3945 = vpack.c.bf16 %v3122, %v3122
        %v3946 = vpack.c.bf16 %v3268, %v3268
        %v3947 = vpack.c.bf16 %v3269, %v3269
        %v3948 = vpack.c.bf16 %v3270, %v3270
        %v3949 = vpack.c.bf16 %v3271, %v3271
        %v3950 = vpack.c.bf16 %v3272, %v3272
        %v3951 = vpack.c.bf16 %v3273, %v3273
        %v3952 = vpack.c.bf16 %v3274, %v3274
        %v3953 = vpack.c.bf16 %v3275, %v3275
        %v3955 = vsel %vm3561, %v3945, 0
        %v3958 = vsel %vm3565, %v3946, 0
        %v3961 = vsel %vm3565, %v3947, 0
        %v3964 = vsel %vm3565, %v3948, 0
        %v3967 = vsel %vm3565, %v3949, 0
        %v3970 = vsel %vm3565, %v3950, 0
        %v3973 = vsel %vm3565, %v3951, 0
        %v3976 = vsel %vm3565, %v3952, 0
        %v3979 = vsel %vm3565, %v3953, 0
        %3981 = vmatprep.subr.bf16.mxu0 %v3961
        %3982 = vmatpush1.bf16.msra.mxu0 %v3958
        %3983 = vmatprep.subr.bf16.mxu0 0
        %3984 = vmatpush1.bf16.msra.mxu0 0
        %3985 = vmatprep.subr.bf16.mxu0 0
        %3986 = vmatpush1.bf16.msra.mxu0 0
        %3987 = vmatprep.subr.bf16.mxu0 0
        %3988 = vmatpush1.bf16.msra.mxu0 0
        %3989 = vmatprep.subr.bf16.mxu0 0
        %3990 = vmatpush1.bf16.msra.mxu0 0
        %3991 = vmatprep.subr.bf16.mxu0 0
        %3992 = vmatpush1.bf16.msra.mxu0 0
        %3993 = vmatprep.subr.bf16.mxu0 0
        %3994 = vmatpush1.bf16.msra.mxu0 0
        %3995 = vmatprep.subr.bf16.mxu0 0
        %3996 = vmatpush1.bf16.msra.mxu0 0
        %3997 = vmatprep.subr.bf16.mxu0 0
        %3998 = vmatpush1.bf16.msra.mxu0 0
        %3999 = vmatprep.subr.bf16.mxu0 0
        %4000 = vmatpush1.bf16.msra.mxu0 0
        %4001 = vmatprep.subr.bf16.mxu0 0
        %4002 = vmatpush1.bf16.msra.mxu0 0
        %4003 = vmatprep.subr.bf16.mxu0 0
        %4004 = vmatpush1.bf16.msra.mxu0 0
        %4005 = vmatprep.subr.bf16.mxu0 0
        %4006 = vmatpush1.bf16.msra.mxu0 0
        %4007 = vmatprep.subr.bf16.mxu0 0
        %4008 = vmatpush1.bf16.msra.mxu0 0
        %4009 = vmatprep.subr.bf16.mxu0 0
        %4010 = vmatpush1.bf16.msra.mxu0 0
        %4011 = vmatprep.subr.bf16.mxu0 0
        %4012 = vmatpush1.bf16.msra.mxu0 0
        %4013 = vmatprep.mubr.bf16.mxu0 0
        %4014 = vmatmul.mubr.bf16.gmra.mrb[0].mxu0 %v3955
        %v4015 = vpop.f32.mrb[0].mxu0
        %v4016 = vadd.f32 0.0, %v4015
        %v4017 = vpop.f32.mrb[0].mxu0
        %v4018 = vadd.f32 0.0, %v4017
        %v4019 = vpop.f32.mrb[0].mxu0
        %v4020 = vpop.f32.mrb[0].mxu0
        %4021 = vdwg.mxu0
        %4022 = vmatprep.subr.bf16.mxu0 %v3967
        %4023 = vmatpush1.bf16.msra.mxu0 %v3964
        %4024 = vmatprep.subr.bf16.mxu0 0
        %4025 = vmatpush1.bf16.msra.mxu0 0
        %4026 = vmatprep.subr.bf16.mxu0 0
        %4027 = vmatpush1.bf16.msra.mxu0 0
        %4028 = vmatprep.subr.bf16.mxu0 0
        %4029 = vmatpush1.bf16.msra.mxu0 0
        %4030 = vmatprep.subr.bf16.mxu0 0
        %4031 = vmatpush1.bf16.msra.mxu0 0
        %4032 = vmatprep.subr.bf16.mxu0 0
        %4033 = vmatpush1.bf16.msra.mxu0 0
        %4034 = vmatprep.subr.bf16.mxu0 0
        %4035 = vmatpush1.bf16.msra.mxu0 0
        %4036 = vmatprep.subr.bf16.mxu0 0
        %4037 = vmatpush1.bf16.msra.mxu0 0
        %4038 = vmatprep.subr.bf16.mxu0 0
        %4039 = vmatpush1.bf16.msra.mxu0 0
        %4040 = vmatprep.subr.bf16.mxu0 0
        %4041 = vmatpush1.bf16.msra.mxu0 0
        %4042 = vmatprep.subr.bf16.mxu0 0
        %4043 = vmatpush1.bf16.msra.mxu0 0
        %4044 = vmatprep.subr.bf16.mxu0 0
        %4045 = vmatpush1.bf16.msra.mxu0 0
        %4046 = vmatprep.subr.bf16.mxu0 0
        %4047 = vmatpush1.bf16.msra.mxu0 0
        %4048 = vmatprep.subr.bf16.mxu0 0
        %4049 = vmatpush1.bf16.msra.mxu0 0
        %4050 = vmatprep.subr.bf16.mxu0 0
        %4051 = vmatpush1.bf16.msra.mxu0 0
        %4052 = vmatprep.subr.bf16.mxu0 0
        %4053 = vmatpush1.bf16.msra.mxu0 0
        %4054 = vmatprep.mubr.bf16.mxu0 0
        %4055 = vmatmul.mubr.bf16.gmra.mrb[0].mxu0 %v3955
        %v4056 = vpop.f32.mrb[0].mxu0
        %v4057 = vadd.f32 0.0, %v4056
        %v4058 = vpop.f32.mrb[0].mxu0
        %v4059 = vadd.f32 0.0, %v4058
        %v4060 = vpop.f32.mrb[0].mxu0
        %v4061 = vpop.f32.mrb[0].mxu0
        %4062 = vdwg.mxu0
        %4063 = vmatprep.subr.bf16.mxu0 %v3973
        %4064 = vmatpush1.bf16.msra.mxu0 %v3970
        %4065 = vmatprep.subr.bf16.mxu0 0
        %4066 = vmatpush1.bf16.msra.mxu0 0
        %4067 = vmatprep.subr.bf16.mxu0 0
        %4068 = vmatpush1.bf16.msra.mxu0 0
        %4069 = vmatprep.subr.bf16.mxu0 0
        %4070 = vmatpush1.bf16.msra.mxu0 0
        %4071 = vmatprep.subr.bf16.mxu0 0
        %4072 = vmatpush1.bf16.msra.mxu0 0
        %4073 = vmatprep.subr.bf16.mxu0 0
        %4074 = vmatpush1.bf16.msra.mxu0 0
        %4075 = vmatprep.subr.bf16.mxu0 0
        %4076 = vmatpush1.bf16.msra.mxu0 0
        %4077 = vmatprep.subr.bf16.mxu0 0
        %4078 = vmatpush1.bf16.msra.mxu0 0
        %4079 = vmatprep.subr.bf16.mxu0 0
        %4080 = vmatpush1.bf16.msra.mxu0 0
        %4081 = vmatprep.subr.bf16.mxu0 0
        %4082 = vmatpush1.bf16.msra.mxu0 0
        %4083 = vmatprep.subr.bf16.mxu0 0
        %4084 = vmatpush1.bf16.msra.mxu0 0
        %4085 = vmatprep.subr.bf16.mxu0 0
        %4086 = vmatpush1.bf16.msra.mxu0 0
        %4087 = vmatprep.subr.bf16.mxu0 0
        %4088 = vmatpush1.bf16.msra.mxu0 0
        %4089 = vmatprep.subr.bf16.mxu0 0
        %4090 = vmatpush1.bf16.msra.mxu0 0
        %4091 = vmatprep.subr.bf16.mxu0 0
        %4092 = vmatpush1.bf16.msra.mxu0 0
        %4093 = vmatprep.subr.bf16.mxu0 0
        %4094 = vmatpush1.bf16.msra.mxu0 0
        %4095 = vmatprep.mubr.bf16.mxu0 0
        %4096 = vmatmul.mubr.bf16.gmra.mrb[0].mxu0 %v3955
        %v4097 = vpop.f32.mrb[0].mxu0
        %v4098 = vadd.f32 0.0, %v4097
        %v4099 = vpop.f32.mrb[0].mxu0
        %v4100 = vadd.f32 0.0, %v4099
        %v4101 = vpop.f32.mrb[0].mxu0
        %v4102 = vpop.f32.mrb[0].mxu0
        %4103 = vdwg.mxu0
        %4104 = vmatprep.subr.bf16.mxu0 %v3979
        %4105 = vmatpush1.bf16.msra.mxu0 %v3976
        %4106 = vmatprep.subr.bf16.mxu0 0
        %4107 = vmatpush1.bf16.msra.mxu0 0
        %4108 = vmatprep.subr.bf16.mxu0 0
        %4109 = vmatpush1.bf16.msra.mxu0 0
        %4110 = vmatprep.subr.bf16.mxu0 0
        %4111 = vmatpush1.bf16.msra.mxu0 0
        %4112 = vmatprep.subr.bf16.mxu0 0
        %4113 = vmatpush1.bf16.msra.mxu0 0
        %4114 = vmatprep.subr.bf16.mxu0 0
        %4115 = vmatpush1.bf16.msra.mxu0 0
        %4116 = vmatprep.subr.bf16.mxu0 0
        %4117 = vmatpush1.bf16.msra.mxu0 0
        %4118 = vmatprep.subr.bf16.mxu0 0
        %4119 = vmatpush1.bf16.msra.mxu0 0
        %4120 = vmatprep.subr.bf16.mxu0 0
        %4121 = vmatpush1.bf16.msra.mxu0 0
        %4122 = vmatprep.subr.bf16.mxu0 0
        %4123 = vmatpush1.bf16.msra.mxu0 0
        %4124 = vmatprep.subr.bf16.mxu0 0
        %4125 = vmatpush1.bf16.msra.mxu0 0
        %4126 = vmatprep.subr.bf16.mxu0 0
        %4127 = vmatpush1.bf16.msra.mxu0 0
        %4128 = vmatprep.subr.bf16.mxu0 0
        %4129 = vmatpush1.bf16.msra.mxu0 0
        %4130 = vmatprep.subr.bf16.mxu0 0
        %4131 = vmatpush1.bf16.msra.mxu0 0
        %4132 = vmatprep.subr.bf16.mxu0 0
        %4133 = vmatpush1.bf16.msra.mxu0 0
        %4134 = vmatprep.subr.bf16.mxu0 0
        %4135 = vmatpush1.bf16.msra.mxu0 0
        %4136 = vmatprep.mubr.bf16.mxu0 0
        %4137 = vmatmul.mubr.bf16.gmra.mrb[0].mxu0 %v3955
        %v4138 = vpop.f32.mrb[0].mxu0
        %v4139 = vadd.f32 0.0, %v4138
        %v4140 = vpop.f32.mrb[0].mxu0
        %v4141 = vadd.f32 0.0, %v4140
        %v4142 = vpop.f32.mrb[0].mxu0
        %v4143 = vpop.f32.mrb[0].mxu0
        %4144 = vdwg.mxu0
        %v4145 = vadd.f32 %v3816, %v4016
        %v4146 = vadd.f32 %v3818, %v4018
        %v4147 = vadd.f32 %v3857, %v4057
        %v4148 = vadd.f32 %v3859, %v4059
        %v4149 = vadd.f32 %v3898, %v4098
        %v4150 = vadd.f32 %v3900, %v4100
        %v4151 = vadd.f32 %v3939, %v4139
        %v4152 = vadd.f32 %v3941, %v4141
        %v4153 = vpack.c.bf16 %v3123, %v3123
        %v4154 = vpack.c.bf16 %v3316, %v3316
        %v4155 = vpack.c.bf16 %v3317, %v3317
        %v4156 = vpack.c.bf16 %v3318, %v3318
        %v4157 = vpack.c.bf16 %v3319, %v3319
        %v4158 = vpack.c.bf16 %v3320, %v3320
        %v4159 = vpack.c.bf16 %v3321, %v3321
        %v4160 = vpack.c.bf16 %v3322, %v3322
        %v4161 = vpack.c.bf16 %v3323, %v3323
        %v4163 = vsel %vm3561, %v4153, 0
        %v4166 = vsel %vm3565, %v4154, 0
        %v4169 = vsel %vm3565, %v4155, 0
        %v4172 = vsel %vm3565, %v4156, 0
        %v4175 = vsel %vm3565, %v4157, 0
        %v4178 = vsel %vm3565, %v4158, 0
        %v4181 = vsel %vm3565, %v4159, 0
        %v4184 = vsel %vm3565, %v4160, 0
        %v4187 = vsel %vm3565, %v4161, 0
        %4189 = vmatprep.subr.bf16.mxu0 %v4169
        %4190 = vmatpush1.bf16.msra.mxu0 %v4166
        %4191 = vmatprep.subr.bf16.mxu0 0
        %4192 = vmatpush1.bf16.msra.mxu0 0
        %4193 = vmatprep.subr.bf16.mxu0 0
        %4194 = vmatpush1.bf16.msra.mxu0 0
        %4195 = vmatprep.subr.bf16.mxu0 0
        %4196 = vmatpush1.bf16.msra.mxu0 0
        %4197 = vmatprep.subr.bf16.mxu0 0
        %4198 = vmatpush1.bf16.msra.mxu0 0
        %4199 = vmatprep.subr.bf16.mxu0 0
        %4200 = vmatpush1.bf16.msra.mxu0 0
        %4201 = vmatprep.subr.bf16.mxu0 0
        %4202 = vmatpush1.bf16.msra.mxu0 0
        %4203 = vmatprep.subr.bf16.mxu0 0
        %4204 = vmatpush1.bf16.msra.mxu0 0
        %4205 = vmatprep.subr.bf16.mxu0 0
        %4206 = vmatpush1.bf16.msra.mxu0 0
        %4207 = vmatprep.subr.bf16.mxu0 0
        %4208 = vmatpush1.bf16.msra.mxu0 0
        %4209 = vmatprep.subr.bf16.mxu0 0
        %4210 = vmatpush1.bf16.msra.mxu0 0
        %4211 = vmatprep.subr.bf16.mxu0 0
        %4212 = vmatpush1.bf16.msra.mxu0 0
        %4213 = vmatprep.subr.bf16.mxu0 0
        %4214 = vmatpush1.bf16.msra.mxu0 0
        %4215 = vmatprep.subr.bf16.mxu0 0
        %4216 = vmatpush1.bf16.msra.mxu0 0
        %4217 = vmatprep.subr.bf16.mxu0 0
        %4218 = vmatpush1.bf16.msra.mxu0 0
        %4219 = vmatprep.subr.bf16.mxu0 0
        %4220 = vmatpush1.bf16.msra.mxu0 0
        %4221 = vmatprep.mubr.bf16.mxu0 0
        %4222 = vmatmul.mubr.bf16.gmra.mrb[0].mxu0 %v4163
        %v4223 = vpop.f32.mrb[0].mxu0
        %v4224 = vadd.f32 0.0, %v4223
        %v4225 = vpop.f32.mrb[0].mxu0
        %v4226 = vadd.f32 0.0, %v4225
        %v4227 = vpop.f32.mrb[0].mxu0
        %v4228 = vpop.f32.mrb[0].mxu0
        %4229 = vdwg.mxu0
        %4230 = vmatprep.subr.bf16.mxu0 %v4175
        %4231 = vmatpush1.bf16.msra.mxu0 %v4172
        %4232 = vmatprep.subr.bf16.mxu0 0
        %4233 = vmatpush1.bf16.msra.mxu0 0
        %4234 = vmatprep.subr.bf16.mxu0 0
        %4235 = vmatpush1.bf16.msra.mxu0 0
        %4236 = vmatprep.subr.bf16.mxu0 0
        %4237 = vmatpush1.bf16.msra.mxu0 0
        %4238 = vmatprep.subr.bf16.mxu0 0
        %4239 = vmatpush1.bf16.msra.mxu0 0
        %4240 = vmatprep.subr.bf16.mxu0 0
        %4241 = vmatpush1.bf16.msra.mxu0 0
        %4242 = vmatprep.subr.bf16.mxu0 0
        %4243 = vmatpush1.bf16.msra.mxu0 0
        %4244 = vmatprep.subr.bf16.mxu0 0
        %4245 = vmatpush1.bf16.msra.mxu0 0
        %4246 = vmatprep.subr.bf16.mxu0 0
        %4247 = vmatpush1.bf16.msra.mxu0 0
        %4248 = vmatprep.subr.bf16.mxu0 0
        %4249 = vmatpush1.bf16.msra.mxu0 0
        %4250 = vmatprep.subr.bf16.mxu0 0
        %4251 = vmatpush1.bf16.msra.mxu0 0
        %4252 = vmatprep.subr.bf16.mxu0 0
        %4253 = vmatpush1.bf16.msra.mxu0 0
        %4254 = vmatprep.subr.bf16.mxu0 0
        %4255 = vmatpush1.bf16.msra.mxu0 0
        %4256 = vmatprep.subr.bf16.mxu0 0
        %4257 = vmatpush1.bf16.msra.mxu0 0
        %4258 = vmatprep.subr.bf16.mxu0 0
        %4259 = vmatpush1.bf16.msra.mxu0 0
        %4260 = vmatprep.subr.bf16.mxu0 0
        %4261 = vmatpush1.bf16.msra.mxu0 0
        %4262 = vmatprep.mubr.bf16.mxu0 0
        %4263 = vmatmul.mubr.bf16.gmra.mrb[0].mxu0 %v4163
        %v4264 = vpop.f32.mrb[0].mxu0
        %v4265 = vadd.f32 0.0, %v4264
        %v4266 = vpop.f32.mrb[0].mxu0
        %v4267 = vadd.f32 0.0, %v4266
        %v4268 = vpop.f32.mrb[0].mxu0
        %v4269 = vpop.f32.mrb[0].mxu0
        %4270 = vdwg.mxu0
        %4271 = vmatprep.subr.bf16.mxu0 %v4181
        %4272 = vmatpush1.bf16.msra.mxu0 %v4178
        %4273 = vmatprep.subr.bf16.mxu0 0
        %4274 = vmatpush1.bf16.msra.mxu0 0
        %4275 = vmatprep.subr.bf16.mxu0 0
        %4276 = vmatpush1.bf16.msra.mxu0 0
        %4277 = vmatprep.subr.bf16.mxu0 0
        %4278 = vmatpush1.bf16.msra.mxu0 0
        %4279 = vmatprep.subr.bf16.mxu0 0
        %4280 = vmatpush1.bf16.msra.mxu0 0
        %4281 = vmatprep.subr.bf16.mxu0 0
        %4282 = vmatpush1.bf16.msra.mxu0 0
        %4283 = vmatprep.subr.bf16.mxu0 0
        %4284 = vmatpush1.bf16.msra.mxu0 0
        %4285 = vmatprep.subr.bf16.mxu0 0
        %4286 = vmatpush1.bf16.msra.mxu0 0
        %4287 = vmatprep.subr.bf16.mxu0 0
        %4288 = vmatpush1.bf16.msra.mxu0 0
        %4289 = vmatprep.subr.bf16.mxu0 0
        %4290 = vmatpush1.bf16.msra.mxu0 0
        %4291 = vmatprep.subr.bf16.mxu0 0
        %4292 = vmatpush1.bf16.msra.mxu0 0
        %4293 = vmatprep.subr.bf16.mxu0 0
        %4294 = vmatpush1.bf16.msra.mxu0 0
        %4295 = vmatprep.subr.bf16.mxu0 0
        %4296 = vmatpush1.bf16.msra.mxu0 0
        %4297 = vmatprep.subr.bf16.mxu0 0
        %4298 = vmatpush1.bf16.msra.mxu0 0
        %4299 = vmatprep.subr.bf16.mxu0 0
        %4300 = vmatpush1.bf16.msra.mxu0 0
        %4301 = vmatprep.subr.bf16.mxu0 0
        %4302 = vmatpush1.bf16.msra.mxu0 0
        %4303 = vmatprep.mubr.bf16.mxu0 0
        %4304 = vmatmul.mubr.bf16.gmra.mrb[0].mxu0 %v4163
        %v4305 = vpop.f32.mrb[0].mxu0
        %v4306 = vadd.f32 0.0, %v4305
        %v4307 = vpop.f32.mrb[0].mxu0
        %v4308 = vadd.f32 0.0, %v4307
        %v4309 = vpop.f32.mrb[0].mxu0
        %v4310 = vpop.f32.mrb[0].mxu0
        %4311 = vdwg.mxu0
        %4312 = vmatprep.subr.bf16.mxu0 %v4187
        %4313 = vmatpush1.bf16.msra.mxu0 %v4184
        %4314 = vmatprep.subr.bf16.mxu0 0
        %4315 = vmatpush1.bf16.msra.mxu0 0
        %4316 = vmatprep.subr.bf16.mxu0 0
        %4317 = vmatpush1.bf16.msra.mxu0 0
        %4318 = vmatprep.subr.bf16.mxu0 0
        %4319 = vmatpush1.bf16.msra.mxu0 0
        %4320 = vmatprep.subr.bf16.mxu0 0
        %4321 = vmatpush1.bf16.msra.mxu0 0
        %4322 = vmatprep.subr.bf16.mxu0 0
        %4323 = vmatpush1.bf16.msra.mxu0 0
        %4324 = vmatprep.subr.bf16.mxu0 0
        %4325 = vmatpush1.bf16.msra.mxu0 0
        %4326 = vmatprep.subr.bf16.mxu0 0
        %4327 = vmatpush1.bf16.msra.mxu0 0
        %4328 = vmatprep.subr.bf16.mxu0 0
        %4329 = vmatpush1.bf16.msra.mxu0 0
        %4330 = vmatprep.subr.bf16.mxu0 0
        %4331 = vmatpush1.bf16.msra.mxu0 0
        %4332 = vmatprep.subr.bf16.mxu0 0
        %4333 = vmatpush1.bf16.msra.mxu0 0
        %4334 = vmatprep.subr.bf16.mxu0 0
        %4335 = vmatpush1.bf16.msra.mxu0 0
        %4336 = vmatprep.subr.bf16.mxu0 0
        %4337 = vmatpush1.bf16.msra.mxu0 0
        %4338 = vmatprep.subr.bf16.mxu0 0
        %4339 = vmatpush1.bf16.msra.mxu0 0
        %4340 = vmatprep.subr.bf16.mxu0 0
        %4341 = vmatpush1.bf16.msra.mxu0 0
        %4342 = vmatprep.subr.bf16.mxu0 0
        %4343 = vmatpush1.bf16.msra.mxu0 0
        %4344 = vmatprep.mubr.bf16.mxu0 0
        %4345 = vmatmul.mubr.bf16.gmra.mrb[0].mxu0 %v4163
        %v4346 = vpop.f32.mrb[0].mxu0
        %v4347 = vadd.f32 0.0, %v4346
        %v4348 = vpop.f32.mrb[0].mxu0
        %v4349 = vadd.f32 0.0, %v4348
        %v4350 = vpop.f32.mrb[0].mxu0
        %v4351 = vpop.f32.mrb[0].mxu0
        %4352 = vdwg.mxu0
        %v4353 = vadd.f32 %v4145, %v4224
        %v4354 = vadd.f32 %v4146, %v4226
        %v4355 = vadd.f32 %v4147, %v4265
        %v4356 = vadd.f32 %v4148, %v4267
        %v4357 = vadd.f32 %v4149, %v4306
        %v4358 = vadd.f32 %v4150, %v4308
        %v4359 = vadd.f32 %v4151, %v4347
        %v4360 = vadd.f32 %v4152, %v4349
        %v4361 = vpack.c.bf16 %v3124, %v3124
        %v4362 = vpack.c.bf16 %v3340, %v3340
        %v4363 = vpack.c.bf16 %v3341, %v3341
        %v4364 = vpack.c.bf16 %v3342, %v3342
        %v4365 = vpack.c.bf16 %v3343, %v3343
        %v4366 = vpack.c.bf16 %v3344, %v3344
        %v4367 = vpack.c.bf16 %v3345, %v3345
        %v4368 = vpack.c.bf16 %v3346, %v3346
        %v4369 = vpack.c.bf16 %v3347, %v3347
        %v4371 = vsel %vm3561, %v4361, 0
        %v4374 = vsel %vm3565, %v4362, 0
        %v4377 = vsel %vm3565, %v4363, 0
        %v4380 = vsel %vm3565, %v4364, 0
        %v4383 = vsel %vm3565, %v4365, 0
        %v4386 = vsel %vm3565, %v4366, 0
        %v4389 = vsel %vm3565, %v4367, 0
        %v4392 = vsel %vm3565, %v4368, 0
        %v4395 = vsel %vm3565, %v4369, 0
        %4397 = vmatprep.subr.bf16.mxu0 %v4377
        %4398 = vmatpush1.bf16.msra.mxu0 %v4374
        %4399 = vmatprep.subr.bf16.mxu0 0
        %4400 = vmatpush1.bf16.msra.mxu0 0
        %4401 = vmatprep.subr.bf16.mxu0 0
        %4402 = vmatpush1.bf16.msra.mxu0 0
        %4403 = vmatprep.subr.bf16.mxu0 0
        %4404 = vmatpush1.bf16.msra.mxu0 0
        %4405 = vmatprep.subr.bf16.mxu0 0
        %4406 = vmatpush1.bf16.msra.mxu0 0
        %4407 = vmatprep.subr.bf16.mxu0 0
        %4408 = vmatpush1.bf16.msra.mxu0 0
        %4409 = vmatprep.subr.bf16.mxu0 0
        %4410 = vmatpush1.bf16.msra.mxu0 0
        %4411 = vmatprep.subr.bf16.mxu0 0
        %4412 = vmatpush1.bf16.msra.mxu0 0
        %4413 = vmatprep.subr.bf16.mxu0 0
        %4414 = vmatpush1.bf16.msra.mxu0 0
        %4415 = vmatprep.subr.bf16.mxu0 0
        %4416 = vmatpush1.bf16.msra.mxu0 0
        %4417 = vmatprep.subr.bf16.mxu0 0
        %4418 = vmatpush1.bf16.msra.mxu0 0
        %4419 = vmatprep.subr.bf16.mxu0 0
        %4420 = vmatpush1.bf16.msra.mxu0 0
        %4421 = vmatprep.subr.bf16.mxu0 0
        %4422 = vmatpush1.bf16.msra.mxu0 0
        %4423 = vmatprep.subr.bf16.mxu0 0
        %4424 = vmatpush1.bf16.msra.mxu0 0
        %4425 = vmatprep.subr.bf16.mxu0 0
        %4426 = vmatpush1.bf16.msra.mxu0 0
        %4427 = vmatprep.subr.bf16.mxu0 0
        %4428 = vmatpush1.bf16.msra.mxu0 0
        %4429 = vmatprep.mubr.bf16.mxu0 0
        %4430 = vmatmul.mubr.bf16.gmra.mrb[0].mxu0 %v4371
        %v4431 = vpop.f32.mrb[0].mxu0
        %v4432 = vadd.f32 0.0, %v4431
        %v4433 = vpop.f32.mrb[0].mxu0
        %v4434 = vadd.f32 0.0, %v4433
        %v4435 = vpop.f32.mrb[0].mxu0
        %v4436 = vpop.f32.mrb[0].mxu0
        %4437 = vdwg.mxu0
        %4438 = vmatprep.subr.bf16.mxu0 %v4383
        %4439 = vmatpush1.bf16.msra.mxu0 %v4380
        %4440 = vmatprep.subr.bf16.mxu0 0
        %4441 = vmatpush1.bf16.msra.mxu0 0
        %4442 = vmatprep.subr.bf16.mxu0 0
        %4443 = vmatpush1.bf16.msra.mxu0 0
        %4444 = vmatprep.subr.bf16.mxu0 0
        %4445 = vmatpush1.bf16.msra.mxu0 0
        %4446 = vmatprep.subr.bf16.mxu0 0
        %4447 = vmatpush1.bf16.msra.mxu0 0
        %4448 = vmatprep.subr.bf16.mxu0 0
        %4449 = vmatpush1.bf16.msra.mxu0 0
        %4450 = vmatprep.subr.bf16.mxu0 0
        %4451 = vmatpush1.bf16.msra.mxu0 0
        %4452 = vmatprep.subr.bf16.mxu0 0
        %4453 = vmatpush1.bf16.msra.mxu0 0
        %4454 = vmatprep.subr.bf16.mxu0 0
        %4455 = vmatpush1.bf16.msra.mxu0 0
        %4456 = vmatprep.subr.bf16.mxu0 0
        %4457 = vmatpush1.bf16.msra.mxu0 0
        %4458 = vmatprep.subr.bf16.mxu0 0
        %4459 = vmatpush1.bf16.msra.mxu0 0
        %4460 = vmatprep.subr.bf16.mxu0 0
        %4461 = vmatpush1.bf16.msra.mxu0 0
        %4462 = vmatprep.subr.bf16.mxu0 0
        %4463 = vmatpush1.bf16.msra.mxu0 0
        %4464 = vmatprep.subr.bf16.mxu0 0
        %4465 = vmatpush1.bf16.msra.mxu0 0
        %4466 = vmatprep.subr.bf16.mxu0 0
        %4467 = vmatpush1.bf16.msra.mxu0 0
        %4468 = vmatprep.subr.bf16.mxu0 0
        %4469 = vmatpush1.bf16.msra.mxu0 0
        %4470 = vmatprep.mubr.bf16.mxu0 0
        %4471 = vmatmul.mubr.bf16.gmra.mrb[0].mxu0 %v4371
        %v4472 = vpop.f32.mrb[0].mxu0
        %v4473 = vadd.f32 0.0, %v4472
        %v4474 = vpop.f32.mrb[0].mxu0
        %v4475 = vadd.f32 0.0, %v4474
        %v4476 = vpop.f32.mrb[0].mxu0
        %v4477 = vpop.f32.mrb[0].mxu0
        %4478 = vdwg.mxu0
        %4479 = vmatprep.subr.bf16.mxu0 %v4389
        %4480 = vmatpush1.bf16.msra.mxu0 %v4386
        %4481 = vmatprep.subr.bf16.mxu0 0
        %4482 = vmatpush1.bf16.msra.mxu0 0
        %4483 = vmatprep.subr.bf16.mxu0 0
        %4484 = vmatpush1.bf16.msra.mxu0 0
        %4485 = vmatprep.subr.bf16.mxu0 0
        %4486 = vmatpush1.bf16.msra.mxu0 0
        %4487 = vmatprep.subr.bf16.mxu0 0
        %4488 = vmatpush1.bf16.msra.mxu0 0
        %4489 = vmatprep.subr.bf16.mxu0 0
        %4490 = vmatpush1.bf16.msra.mxu0 0
        %4491 = vmatprep.subr.bf16.mxu0 0
        %4492 = vmatpush1.bf16.msra.mxu0 0
        %4493 = vmatprep.subr.bf16.mxu0 0
        %4494 = vmatpush1.bf16.msra.mxu0 0
        %4495 = vmatprep.subr.bf16.mxu0 0
        %4496 = vmatpush1.bf16.msra.mxu0 0
        %4497 = vmatprep.subr.bf16.mxu0 0
        %4498 = vmatpush1.bf16.msra.mxu0 0
        %4499 = vmatprep.subr.bf16.mxu0 0
        %4500 = vmatpush1.bf16.msra.mxu0 0
        %4501 = vmatprep.subr.bf16.mxu0 0
        %4502 = vmatpush1.bf16.msra.mxu0 0
        %4503 = vmatprep.subr.bf16.mxu0 0
        %4504 = vmatpush1.bf16.msra.mxu0 0
        %4505 = vmatprep.subr.bf16.mxu0 0
        %4506 = vmatpush1.bf16.msra.mxu0 0
        %4507 = vmatprep.subr.bf16.mxu0 0
        %4508 = vmatpush1.bf16.msra.mxu0 0
        %4509 = vmatprep.subr.bf16.mxu0 0
        %4510 = vmatpush1.bf16.msra.mxu0 0
        %4511 = vmatprep.mubr.bf16.mxu0 0
        %4512 = vmatmul.mubr.bf16.gmra.mrb[0].mxu0 %v4371
        %v4513 = vpop.f32.mrb[0].mxu0
        %v4514 = vadd.f32 0.0, %v4513
        %v4515 = vpop.f32.mrb[0].mxu0
        %v4516 = vadd.f32 0.0, %v4515
        %v4517 = vpop.f32.mrb[0].mxu0
        %v4518 = vpop.f32.mrb[0].mxu0
        %4519 = vdwg.mxu0
        %4520 = vmatprep.subr.bf16.mxu0 %v4395
        %4521 = vmatpush1.bf16.msra.mxu0 %v4392
        %4522 = vmatprep.subr.bf16.mxu0 0
        %4523 = vmatpush1.bf16.msra.mxu0 0
        %4524 = vmatprep.subr.bf16.mxu0 0
        %4525 = vmatpush1.bf16.msra.mxu0 0
        %4526 = vmatprep.subr.bf16.mxu0 0
        %4527 = vmatpush1.bf16.msra.mxu0 0
        %4528 = vmatprep.subr.bf16.mxu0 0
        %4529 = vmatpush1.bf16.msra.mxu0 0
        %4530 = vmatprep.subr.bf16.mxu0 0
        %4531 = vmatpush1.bf16.msra.mxu0 0
        %4532 = vmatprep.subr.bf16.mxu0 0
        %4533 = vmatpush1.bf16.msra.mxu0 0
        %4534 = vmatprep.subr.bf16.mxu0 0
        %4535 = vmatpush1.bf16.msra.mxu0 0
        %4536 = vmatprep.subr.bf16.mxu0 0
        %4537 = vmatpush1.bf16.msra.mxu0 0
        %4538 = vmatprep.subr.bf16.mxu0 0
        %4539 = vmatpush1.bf16.msra.mxu0 0
        %4540 = vmatprep.subr.bf16.mxu0 0
        %4541 = vmatpush1.bf16.msra.mxu0 0
        %4542 = vmatprep.subr.bf16.mxu0 0
        %4543 = vmatpush1.bf16.msra.mxu0 0
        %4544 = vmatprep.subr.bf16.mxu0 0
        %4545 = vmatpush1.bf16.msra.mxu0 0
        %4546 = vmatprep.subr.bf16.mxu0 0
        %4547 = vmatpush1.bf16.msra.mxu0 0
        %4548 = vmatprep.subr.bf16.mxu0 0
        %4549 = vmatpush1.bf16.msra.mxu0 0
        %4550 = vmatprep.subr.bf16.mxu0 0
        %4551 = vmatpush1.bf16.msra.mxu0 0
        %4552 = vmatprep.mubr.bf16.mxu0 0
        %4553 = vmatmul.mubr.bf16.gmra.mrb[0].mxu0 %v4371
        %v4554 = vpop.f32.mrb[0].mxu0
        %v4555 = vadd.f32 0.0, %v4554
        %v4556 = vpop.f32.mrb[0].mxu0
        %v4557 = vadd.f32 0.0, %v4556
        %v4558 = vpop.f32.mrb[0].mxu0
        %v4559 = vpop.f32.mrb[0].mxu0
        %4560 = vdwg.mxu0
        %v4561 = vadd.f32 %v4353, %v4432
        %v4562 = vadd.f32 %v4354, %v4434
        %v4563 = vadd.f32 %v4355, %v4473
        %v4564 = vadd.f32 %v4356, %v4475
        %v4565 = vadd.f32 %v4357, %v4514
        %v4566 = vadd.f32 %v4358, %v4516
        %v4567 = vadd.f32 %v4359, %v4555
        %v4568 = vadd.f32 %v4360, %v4557
        %v4569 = vpack.c.bf16 %v3125, %v3125
        %v4570 = vpack.c.bf16 %v3388, %v3388
        %v4571 = vpack.c.bf16 %v3389, %v3389
        %v4572 = vpack.c.bf16 %v3390, %v3390
        %v4573 = vpack.c.bf16 %v3391, %v3391
        %v4574 = vpack.c.bf16 %v3392, %v3392
        %v4575 = vpack.c.bf16 %v3393, %v3393
        %v4576 = vpack.c.bf16 %v3394, %v3394
        %v4577 = vpack.c.bf16 %v3395, %v3395
        %v4579 = vsel %vm3561, %v4569, 0
        %v4582 = vsel %vm3565, %v4570, 0
        %v4585 = vsel %vm3565, %v4571, 0
        %v4588 = vsel %vm3565, %v4572, 0
        %v4591 = vsel %vm3565, %v4573, 0
        %v4594 = vsel %vm3565, %v4574, 0
        %v4597 = vsel %vm3565, %v4575, 0
        %v4600 = vsel %vm3565, %v4576, 0
        %v4603 = vsel %vm3565, %v4577, 0
        %4605 = vmatprep.subr.bf16.mxu0 %v4585
        %4606 = vmatpush1.bf16.msra.mxu0 %v4582
        %4607 = vmatprep.subr.bf16.mxu0 0
        %4608 = vmatpush1.bf16.msra.mxu0 0
        %4609 = vmatprep.subr.bf16.mxu0 0
        %4610 = vmatpush1.bf16.msra.mxu0 0
        %4611 = vmatprep.subr.bf16.mxu0 0
        %4612 = vmatpush1.bf16.msra.mxu0 0
        %4613 = vmatprep.subr.bf16.mxu0 0
        %4614 = vmatpush1.bf16.msra.mxu0 0
        %4615 = vmatprep.subr.bf16.mxu0 0
        %4616 = vmatpush1.bf16.msra.mxu0 0
        %4617 = vmatprep.subr.bf16.mxu0 0
        %4618 = vmatpush1.bf16.msra.mxu0 0
        %4619 = vmatprep.subr.bf16.mxu0 0
        %4620 = vmatpush1.bf16.msra.mxu0 0
        %4621 = vmatprep.subr.bf16.mxu0 0
        %4622 = vmatpush1.bf16.msra.mxu0 0
        %4623 = vmatprep.subr.bf16.mxu0 0
        %4624 = vmatpush1.bf16.msra.mxu0 0
        %4625 = vmatprep.subr.bf16.mxu0 0
        %4626 = vmatpush1.bf16.msra.mxu0 0
        %4627 = vmatprep.subr.bf16.mxu0 0
        %4628 = vmatpush1.bf16.msra.mxu0 0
        %4629 = vmatprep.subr.bf16.mxu0 0
        %4630 = vmatpush1.bf16.msra.mxu0 0
        %4631 = vmatprep.subr.bf16.mxu0 0
        %4632 = vmatpush1.bf16.msra.mxu0 0
        %4633 = vmatprep.subr.bf16.mxu0 0
        %4634 = vmatpush1.bf16.msra.mxu0 0
        %4635 = vmatprep.subr.bf16.mxu0 0
        %4636 = vmatpush1.bf16.msra.mxu0 0
        %4637 = vmatprep.mubr.bf16.mxu0 0
        %4638 = vmatmul.mubr.bf16.gmra.mrb[0].mxu0 %v4579
        %v4639 = vpop.f32.mrb[0].mxu0
        %v4640 = vadd.f32 0.0, %v4639
        %v4641 = vpop.f32.mrb[0].mxu0
        %v4642 = vadd.f32 0.0, %v4641
        %v4643 = vpop.f32.mrb[0].mxu0
        %v4644 = vpop.f32.mrb[0].mxu0
        %4645 = vdwg.mxu0
        %4646 = vmatprep.subr.bf16.mxu0 %v4591
        %4647 = vmatpush1.bf16.msra.mxu0 %v4588
        %4648 = vmatprep.subr.bf16.mxu0 0
        %4649 = vmatpush1.bf16.msra.mxu0 0
        %4650 = vmatprep.subr.bf16.mxu0 0
        %4651 = vmatpush1.bf16.msra.mxu0 0
        %4652 = vmatprep.subr.bf16.mxu0 0
        %4653 = vmatpush1.bf16.msra.mxu0 0
        %4654 = vmatprep.subr.bf16.mxu0 0
        %4655 = vmatpush1.bf16.msra.mxu0 0
        %4656 = vmatprep.subr.bf16.mxu0 0
        %4657 = vmatpush1.bf16.msra.mxu0 0
        %4658 = vmatprep.subr.bf16.mxu0 0
        %4659 = vmatpush1.bf16.msra.mxu0 0
        %4660 = vmatprep.subr.bf16.mxu0 0
        %4661 = vmatpush1.bf16.msra.mxu0 0
        %4662 = vmatprep.subr.bf16.mxu0 0
        %4663 = vmatpush1.bf16.msra.mxu0 0
        %4664 = vmatprep.subr.bf16.mxu0 0
        %4665 = vmatpush1.bf16.msra.mxu0 0
        %4666 = vmatprep.subr.bf16.mxu0 0
        %4667 = vmatpush1.bf16.msra.mxu0 0
        %4668 = vmatprep.subr.bf16.mxu0 0
        %4669 = vmatpush1.bf16.msra.mxu0 0
        %4670 = vmatprep.subr.bf16.mxu0 0
        %4671 = vmatpush1.bf16.msra.mxu0 0
        %4672 = vmatprep.subr.bf16.mxu0 0
        %4673 = vmatpush1.bf16.msra.mxu0 0
        %4674 = vmatprep.subr.bf16.mxu0 0
        %4675 = vmatpush1.bf16.msra.mxu0 0
        %4676 = vmatprep.subr.bf16.mxu0 0
        %4677 = vmatpush1.bf16.msra.mxu0 0
        %4678 = vmatprep.mubr.bf16.mxu0 0
        %4679 = vmatmul.mubr.bf16.gmra.mrb[0].mxu0 %v4579
        %v4680 = vpop.f32.mrb[0].mxu0
        %v4681 = vadd.f32 0.0, %v4680
        %v4682 = vpop.f32.mrb[0].mxu0
        %v4683 = vadd.f32 0.0, %v4682
        %v4684 = vpop.f32.mrb[0].mxu0
        %v4685 = vpop.f32.mrb[0].mxu0
        %4686 = vdwg.mxu0
        %4687 = vmatprep.subr.bf16.mxu0 %v4597
        %4688 = vmatpush1.bf16.msra.mxu0 %v4594
        %4689 = vmatprep.subr.bf16.mxu0 0
        %4690 = vmatpush1.bf16.msra.mxu0 0
        %4691 = vmatprep.subr.bf16.mxu0 0
        %4692 = vmatpush1.bf16.msra.mxu0 0
        %4693 = vmatprep.subr.bf16.mxu0 0
        %4694 = vmatpush1.bf16.msra.mxu0 0
        %4695 = vmatprep.subr.bf16.mxu0 0
        %4696 = vmatpush1.bf16.msra.mxu0 0
        %4697 = vmatprep.subr.bf16.mxu0 0
        %4698 = vmatpush1.bf16.msra.mxu0 0
        %4699 = vmatprep.subr.bf16.mxu0 0
        %4700 = vmatpush1.bf16.msra.mxu0 0
        %4701 = vmatprep.subr.bf16.mxu0 0
        %4702 = vmatpush1.bf16.msra.mxu0 0
        %4703 = vmatprep.subr.bf16.mxu0 0
        %4704 = vmatpush1.bf16.msra.mxu0 0
        %4705 = vmatprep.subr.bf16.mxu0 0
        %4706 = vmatpush1.bf16.msra.mxu0 0
        %4707 = vmatprep.subr.bf16.mxu0 0
        %4708 = vmatpush1.bf16.msra.mxu0 0
        %4709 = vmatprep.subr.bf16.mxu0 0
        %4710 = vmatpush1.bf16.msra.mxu0 0
        %4711 = vmatprep.subr.bf16.mxu0 0
        %4712 = vmatpush1.bf16.msra.mxu0 0
        %4713 = vmatprep.subr.bf16.mxu0 0
        %4714 = vmatpush1.bf16.msra.mxu0 0
        %4715 = vmatprep.subr.bf16.mxu0 0
        %4716 = vmatpush1.bf16.msra.mxu0 0
        %4717 = vmatprep.subr.bf16.mxu0 0
        %4718 = vmatpush1.bf16.msra.mxu0 0
        %4719 = vmatprep.mubr.bf16.mxu0 0
        %4720 = vmatmul.mubr.bf16.gmra.mrb[0].mxu0 %v4579
        %v4721 = vpop.f32.mrb[0].mxu0
        %v4722 = vadd.f32 0.0, %v4721
        %v4723 = vpop.f32.mrb[0].mxu0
        %v4724 = vadd.f32 0.0, %v4723
        %v4725 = vpop.f32.mrb[0].mxu0
        %v4726 = vpop.f32.mrb[0].mxu0
        %4727 = vdwg.mxu0
        %4728 = vmatprep.subr.bf16.mxu0 %v4603
        %4729 = vmatpush1.bf16.msra.mxu0 %v4600
        %4730 = vmatprep.subr.bf16.mxu0 0
        %4731 = vmatpush1.bf16.msra.mxu0 0
        %4732 = vmatprep.subr.bf16.mxu0 0
        %4733 = vmatpush1.bf16.msra.mxu0 0
        %4734 = vmatprep.subr.bf16.mxu0 0
        %4735 = vmatpush1.bf16.msra.mxu0 0
        %4736 = vmatprep.subr.bf16.mxu0 0
        %4737 = vmatpush1.bf16.msra.mxu0 0
        %4738 = vmatprep.subr.bf16.mxu0 0
        %4739 = vmatpush1.bf16.msra.mxu0 0
        %4740 = vmatprep.subr.bf16.mxu0 0
        %4741 = vmatpush1.bf16.msra.mxu0 0
        %4742 = vmatprep.subr.bf16.mxu0 0
        %4743 = vmatpush1.bf16.msra.mxu0 0
        %4744 = vmatprep.subr.bf16.mxu0 0
        %4745 = vmatpush1.bf16.msra.mxu0 0
        %4746 = vmatprep.subr.bf16.mxu0 0
        %4747 = vmatpush1.bf16.msra.mxu0 0
        %4748 = vmatprep.subr.bf16.mxu0 0
        %4749 = vmatpush1.bf16.msra.mxu0 0
        %4750 = vmatprep.subr.bf16.mxu0 0
        %4751 = vmatpush1.bf16.msra.mxu0 0
        %4752 = vmatprep.subr.bf16.mxu0 0
        %4753 = vmatpush1.bf16.msra.mxu0 0
        %4754 = vmatprep.subr.bf16.mxu0 0
        %4755 = vmatpush1.bf16.msra.mxu0 0
        %4756 = vmatprep.subr.bf16.mxu0 0
        %4757 = vmatpush1.bf16.msra.mxu0 0
        %4758 = vmatprep.subr.bf16.mxu0 0
        %4759 = vmatpush1.bf16.msra.mxu0 0
        %4760 = vmatprep.mubr.bf16.mxu0 0
        %4761 = vmatmul.mubr.bf16.gmra.mrb[0].mxu0 %v4579
        %v4762 = vpop.f32.mrb[0].mxu0
        %v4763 = vadd.f32 0.0, %v4762
        %v4764 = vpop.f32.mrb[0].mxu0
        %v4765 = vadd.f32 0.0, %v4764
        %v4766 = vpop.f32.mrb[0].mxu0
        %v4767 = vpop.f32.mrb[0].mxu0
        %4768 = vdwg.mxu0
        %v4769 = vadd.f32 %v4561, %v4640
        %v4770 = vadd.f32 %v4562, %v4642
        %v4771 = vadd.f32 %v4563, %v4681
        %v4772 = vadd.f32 %v4564, %v4683
        %v4773 = vadd.f32 %v4565, %v4722
        %v4774 = vadd.f32 %v4566, %v4724
        %v4775 = vadd.f32 %v4567, %v4763
        %v4776 = vadd.f32 %v4568, %v4765
        %v4777 = vpack.c.bf16 %v3126, %v3126
        %v4778 = vpack.c.bf16 %v3437, %v3437
        %v4779 = vpack.c.bf16 %v3438, %v3438
        %v4780 = vpack.c.bf16 %v3439, %v3439
        %v4781 = vpack.c.bf16 %v3440, %v3440
        %v4782 = vpack.c.bf16 %v3441, %v3441
        %v4783 = vpack.c.bf16 %v3442, %v3442
        %v4784 = vpack.c.bf16 %v3443, %v3443
        %v4785 = vpack.c.bf16 %v3444, %v3444
        %v4787 = vsel %vm3561, %v4777, 0
        %v4790 = vsel %vm3565, %v4778, 0
        %v4793 = vsel %vm3565, %v4779, 0
        %v4796 = vsel %vm3565, %v4780, 0
        %v4799 = vsel %vm3565, %v4781, 0
        %v4802 = vsel %vm3565, %v4782, 0
        %v4805 = vsel %vm3565, %v4783, 0
        %v4808 = vsel %vm3565, %v4784, 0
        %v4811 = vsel %vm3565, %v4785, 0
        %4813 = vmatprep.subr.bf16.mxu0 %v4793
        %4814 = vmatpush1.bf16.msra.mxu0 %v4790
        %4815 = vmatprep.subr.bf16.mxu0 0
        %4816 = vmatpush1.bf16.msra.mxu0 0
        %4817 = vmatprep.subr.bf16.mxu0 0
        %4818 = vmatpush1.bf16.msra.mxu0 0
        %4819 = vmatprep.subr.bf16.mxu0 0
        %4820 = vmatpush1.bf16.msra.mxu0 0
        %4821 = vmatprep.subr.bf16.mxu0 0
        %4822 = vmatpush1.bf16.msra.mxu0 0
        %4823 = vmatprep.subr.bf16.mxu0 0
        %4824 = vmatpush1.bf16.msra.mxu0 0
        %4825 = vmatprep.subr.bf16.mxu0 0
        %4826 = vmatpush1.bf16.msra.mxu0 0
        %4827 = vmatprep.subr.bf16.mxu0 0
        %4828 = vmatpush1.bf16.msra.mxu0 0
        %4829 = vmatprep.subr.bf16.mxu0 0
        %4830 = vmatpush1.bf16.msra.mxu0 0
        %4831 = vmatprep.subr.bf16.mxu0 0
        %4832 = vmatpush1.bf16.msra.mxu0 0
        %4833 = vmatprep.subr.bf16.mxu0 0
        %4834 = vmatpush1.bf16.msra.mxu0 0
        %4835 = vmatprep.subr.bf16.mxu0 0
        %4836 = vmatpush1.bf16.msra.mxu0 0
        %4837 = vmatprep.subr.bf16.mxu0 0
        %4838 = vmatpush1.bf16.msra.mxu0 0
        %4839 = vmatprep.subr.bf16.mxu0 0
        %4840 = vmatpush1.bf16.msra.mxu0 0
        %4841 = vmatprep.subr.bf16.mxu0 0
        %4842 = vmatpush1.bf16.msra.mxu0 0
        %4843 = vmatprep.subr.bf16.mxu0 0
        %4844 = vmatpush1.bf16.msra.mxu0 0
        %4845 = vmatprep.mubr.bf16.mxu0 0
        %4846 = vmatmul.mubr.bf16.gmra.mrb[0].mxu0 %v4787
        %v4847 = vpop.f32.mrb[0].mxu0
        %v4848 = vadd.f32 0.0, %v4847
        %v4849 = vpop.f32.mrb[0].mxu0
        %v4850 = vadd.f32 0.0, %v4849
        %v4851 = vpop.f32.mrb[0].mxu0
        %v4852 = vpop.f32.mrb[0].mxu0
        %4853 = vdwg.mxu0
        %4854 = vmatprep.subr.bf16.mxu0 %v4799
        %4855 = vmatpush1.bf16.msra.mxu0 %v4796
        %4856 = vmatprep.subr.bf16.mxu0 0
        %4857 = vmatpush1.bf16.msra.mxu0 0
        %4858 = vmatprep.subr.bf16.mxu0 0
        %4859 = vmatpush1.bf16.msra.mxu0 0
        %4860 = vmatprep.subr.bf16.mxu0 0
        %4861 = vmatpush1.bf16.msra.mxu0 0
        %4862 = vmatprep.subr.bf16.mxu0 0
        %4863 = vmatpush1.bf16.msra.mxu0 0
        %4864 = vmatprep.subr.bf16.mxu0 0
        %4865 = vmatpush1.bf16.msra.mxu0 0
        %4866 = vmatprep.subr.bf16.mxu0 0
        %4867 = vmatpush1.bf16.msra.mxu0 0
        %4868 = vmatprep.subr.bf16.mxu0 0
        %4869 = vmatpush1.bf16.msra.mxu0 0
        %4870 = vmatprep.subr.bf16.mxu0 0
        %4871 = vmatpush1.bf16.msra.mxu0 0
        %4872 = vmatprep.subr.bf16.mxu0 0
        %4873 = vmatpush1.bf16.msra.mxu0 0
        %4874 = vmatprep.subr.bf16.mxu0 0
        %4875 = vmatpush1.bf16.msra.mxu0 0
        %4876 = vmatprep.subr.bf16.mxu0 0
        %4877 = vmatpush1.bf16.msra.mxu0 0
        %4878 = vmatprep.subr.bf16.mxu0 0
        %4879 = vmatpush1.bf16.msra.mxu0 0
        %4880 = vmatprep.subr.bf16.mxu0 0
        %4881 = vmatpush1.bf16.msra.mxu0 0
        %4882 = vmatprep.subr.bf16.mxu0 0
        %4883 = vmatpush1.bf16.msra.mxu0 0
        %4884 = vmatprep.subr.bf16.mxu0 0
        %4885 = vmatpush1.bf16.msra.mxu0 0
        %4886 = vmatprep.mubr.bf16.mxu0 0
        %4887 = vmatmul.mubr.bf16.gmra.mrb[0].mxu0 %v4787
        %v4888 = vpop.f32.mrb[0].mxu0
        %v4889 = vadd.f32 0.0, %v4888
        %v4890 = vpop.f32.mrb[0].mxu0
        %v4891 = vadd.f32 0.0, %v4890
        %v4892 = vpop.f32.mrb[0].mxu0
        %v4893 = vpop.f32.mrb[0].mxu0
        %4894 = vdwg.mxu0
        %4895 = vmatprep.subr.bf16.mxu0 %v4805
        %4896 = vmatpush1.bf16.msra.mxu0 %v4802
        %4897 = vmatprep.subr.bf16.mxu0 0
        %4898 = vmatpush1.bf16.msra.mxu0 0
        %4899 = vmatprep.subr.bf16.mxu0 0
        %4900 = vmatpush1.bf16.msra.mxu0 0
        %4901 = vmatprep.subr.bf16.mxu0 0
        %4902 = vmatpush1.bf16.msra.mxu0 0
        %4903 = vmatprep.subr.bf16.mxu0 0
        %4904 = vmatpush1.bf16.msra.mxu0 0
        %4905 = vmatprep.subr.bf16.mxu0 0
        %4906 = vmatpush1.bf16.msra.mxu0 0
        %4907 = vmatprep.subr.bf16.mxu0 0
        %4908 = vmatpush1.bf16.msra.mxu0 0
        %4909 = vmatprep.subr.bf16.mxu0 0
        %4910 = vmatpush1.bf16.msra.mxu0 0
        %4911 = vmatprep.subr.bf16.mxu0 0
        %4912 = vmatpush1.bf16.msra.mxu0 0
        %4913 = vmatprep.subr.bf16.mxu0 0
        %4914 = vmatpush1.bf16.msra.mxu0 0
        %4915 = vmatprep.subr.bf16.mxu0 0
        %4916 = vmatpush1.bf16.msra.mxu0 0
        %4917 = vmatprep.subr.bf16.mxu0 0
        %4918 = vmatpush1.bf16.msra.mxu0 0
        %4919 = vmatprep.subr.bf16.mxu0 0
        %4920 = vmatpush1.bf16.msra.mxu0 0
        %4921 = vmatprep.subr.bf16.mxu0 0
        %4922 = vmatpush1.bf16.msra.mxu0 0
        %4923 = vmatprep.subr.bf16.mxu0 0
        %4924 = vmatpush1.bf16.msra.mxu0 0
        %4925 = vmatprep.subr.bf16.mxu0 0
        %4926 = vmatpush1.bf16.msra.mxu0 0
        %4927 = vmatprep.mubr.bf16.mxu0 0
        %4928 = vmatmul.mubr.bf16.gmra.mrb[0].mxu0 %v4787
        %v4929 = vpop.f32.mrb[0].mxu0
        %v4930 = vadd.f32 0.0, %v4929
        %v4931 = vpop.f32.mrb[0].mxu0
        %v4932 = vadd.f32 0.0, %v4931
        %v4933 = vpop.f32.mrb[0].mxu0
        %v4934 = vpop.f32.mrb[0].mxu0
        %4935 = vdwg.mxu0
        %4936 = vmatprep.subr.bf16.mxu0 %v4811
        %4937 = vmatpush1.bf16.msra.mxu0 %v4808
        %4938 = vmatprep.subr.bf16.mxu0 0
        %4939 = vmatpush1.bf16.msra.mxu0 0
        %4940 = vmatprep.subr.bf16.mxu0 0
        %4941 = vmatpush1.bf16.msra.mxu0 0
        %4942 = vmatprep.subr.bf16.mxu0 0
        %4943 = vmatpush1.bf16.msra.mxu0 0
        %4944 = vmatprep.subr.bf16.mxu0 0
        %4945 = vmatpush1.bf16.msra.mxu0 0
        %4946 = vmatprep.subr.bf16.mxu0 0
        %4947 = vmatpush1.bf16.msra.mxu0 0
        %4948 = vmatprep.subr.bf16.mxu0 0
        %4949 = vmatpush1.bf16.msra.mxu0 0
        %4950 = vmatprep.subr.bf16.mxu0 0
        %4951 = vmatpush1.bf16.msra.mxu0 0
        %4952 = vmatprep.subr.bf16.mxu0 0
        %4953 = vmatpush1.bf16.msra.mxu0 0
        %4954 = vmatprep.subr.bf16.mxu0 0
        %4955 = vmatpush1.bf16.msra.mxu0 0
        %4956 = vmatprep.subr.bf16.mxu0 0
        %4957 = vmatpush1.bf16.msra.mxu0 0
        %4958 = vmatprep.subr.bf16.mxu0 0
        %4959 = vmatpush1.bf16.msra.mxu0 0
        %4960 = vmatprep.subr.bf16.mxu0 0
        %4961 = vmatpush1.bf16.msra.mxu0 0
        %4962 = vmatprep.subr.bf16.mxu0 0
        %4963 = vmatpush1.bf16.msra.mxu0 0
        %4964 = vmatprep.subr.bf16.mxu0 0
        %4965 = vmatpush1.bf16.msra.mxu0 0
        %4966 = vmatprep.subr.bf16.mxu0 0
        %4967 = vmatpush1.bf16.msra.mxu0 0
        %4968 = vmatprep.mubr.bf16.mxu0 0
        %4969 = vmatmul.mubr.bf16.gmra.mrb[0].mxu0 %v4787
        %v4970 = vpop.f32.mrb[0].mxu0
        %v4971 = vadd.f32 0.0, %v4970
        %v4972 = vpop.f32.mrb[0].mxu0
        %v4973 = vadd.f32 0.0, %v4972
        %v4974 = vpop.f32.mrb[0].mxu0
        %v4975 = vpop.f32.mrb[0].mxu0
        %4976 = vdwg.mxu0
        %v4977 = vadd.f32 %v4769, %v4848
        %v4978 = vadd.f32 %v4770, %v4850
        %v4979 = vadd.f32 %v4771, %v4889
        %v4980 = vadd.f32 %v4772, %v4891
        %v4981 = vadd.f32 %v4773, %v4930
        %v4982 = vadd.f32 %v4774, %v4932
        %v4983 = vadd.f32 %v4775, %v4971
        %v4984 = vadd.f32 %v4776, %v4973
        %v4985 = vpack.c.bf16 %v3127, %v3127
        %v4986 = vpack.c.bf16 %v3486, %v3486
        %v4987 = vpack.c.bf16 %v3487, %v3487
        %v4988 = vpack.c.bf16 %v3488, %v3488
        %v4989 = vpack.c.bf16 %v3489, %v3489
        %v4990 = vpack.c.bf16 %v3490, %v3490
        %v4991 = vpack.c.bf16 %v3491, %v3491
        %v4992 = vpack.c.bf16 %v3492, %v3492
        %v4993 = vpack.c.bf16 %v3493, %v3493
        %v4995 = vsel %vm3561, %v4985, 0
        %v4998 = vsel %vm3565, %v4986, 0
        %v5001 = vsel %vm3565, %v4987, 0
        %v5004 = vsel %vm3565, %v4988, 0
        %v5007 = vsel %vm3565, %v4989, 0
        %v5010 = vsel %vm3565, %v4990, 0
        %v5013 = vsel %vm3565, %v4991, 0
        %v5016 = vsel %vm3565, %v4992, 0
        %v5019 = vsel %vm3565, %v4993, 0
        %5021 = vmatprep.subr.bf16.mxu0 %v5001
        %5022 = vmatpush1.bf16.msra.mxu0 %v4998
        %5023 = vmatprep.subr.bf16.mxu0 0
        %5024 = vmatpush1.bf16.msra.mxu0 0
        %5025 = vmatprep.subr.bf16.mxu0 0
        %5026 = vmatpush1.bf16.msra.mxu0 0
        %5027 = vmatprep.subr.bf16.mxu0 0
        %5028 = vmatpush1.bf16.msra.mxu0 0
        %5029 = vmatprep.subr.bf16.mxu0 0
        %5030 = vmatpush1.bf16.msra.mxu0 0
        %5031 = vmatprep.subr.bf16.mxu0 0
        %5032 = vmatpush1.bf16.msra.mxu0 0
        %5033 = vmatprep.subr.bf16.mxu0 0
        %5034 = vmatpush1.bf16.msra.mxu0 0
        %5035 = vmatprep.subr.bf16.mxu0 0
        %5036 = vmatpush1.bf16.msra.mxu0 0
        %5037 = vmatprep.subr.bf16.mxu0 0
        %5038 = vmatpush1.bf16.msra.mxu0 0
        %5039 = vmatprep.subr.bf16.mxu0 0
        %5040 = vmatpush1.bf16.msra.mxu0 0
        %5041 = vmatprep.subr.bf16.mxu0 0
        %5042 = vmatpush1.bf16.msra.mxu0 0
        %5043 = vmatprep.subr.bf16.mxu0 0
        %5044 = vmatpush1.bf16.msra.mxu0 0
        %5045 = vmatprep.subr.bf16.mxu0 0
        %5046 = vmatpush1.bf16.msra.mxu0 0
        %5047 = vmatprep.subr.bf16.mxu0 0
        %5048 = vmatpush1.bf16.msra.mxu0 0
        %5049 = vmatprep.subr.bf16.mxu0 0
        %5050 = vmatpush1.bf16.msra.mxu0 0
        %5051 = vmatprep.subr.bf16.mxu0 0
        %5052 = vmatpush1.bf16.msra.mxu0 0
        %5053 = vmatprep.mubr.bf16.mxu0 0
        %5054 = vmatmul.mubr.bf16.gmra.mrb[0].mxu0 %v4995
        %v5055 = vpop.f32.mrb[0].mxu0
        %v5056 = vadd.f32 0.0, %v5055
        %v5057 = vpop.f32.mrb[0].mxu0
        %v5058 = vadd.f32 0.0, %v5057
        %v5059 = vpop.f32.mrb[0].mxu0
        %v5060 = vpop.f32.mrb[0].mxu0
        %5061 = vdwg.mxu0
        %5062 = vmatprep.subr.bf16.mxu0 %v5007
        %5063 = vmatpush1.bf16.msra.mxu0 %v5004
        %5064 = vmatprep.subr.bf16.mxu0 0
        %5065 = vmatpush1.bf16.msra.mxu0 0
        %5066 = vmatprep.subr.bf16.mxu0 0
        %5067 = vmatpush1.bf16.msra.mxu0 0
        %5068 = vmatprep.subr.bf16.mxu0 0
        %5069 = vmatpush1.bf16.msra.mxu0 0
        %5070 = vmatprep.subr.bf16.mxu0 0
        %5071 = vmatpush1.bf16.msra.mxu0 0
        %5072 = vmatprep.subr.bf16.mxu0 0
        %5073 = vmatpush1.bf16.msra.mxu0 0
        %5074 = vmatprep.subr.bf16.mxu0 0
        %5075 = vmatpush1.bf16.msra.mxu0 0
        %5076 = vmatprep.subr.bf16.mxu0 0
        %5077 = vmatpush1.bf16.msra.mxu0 0
        %5078 = vmatprep.subr.bf16.mxu0 0
        %5079 = vmatpush1.bf16.msra.mxu0 0
        %5080 = vmatprep.subr.bf16.mxu0 0
        %5081 = vmatpush1.bf16.msra.mxu0 0
        %5082 = vmatprep.subr.bf16.mxu0 0
        %5083 = vmatpush1.bf16.msra.mxu0 0
        %5084 = vmatprep.subr.bf16.mxu0 0
        %5085 = vmatpush1.bf16.msra.mxu0 0
        %5086 = vmatprep.subr.bf16.mxu0 0
        %5087 = vmatpush1.bf16.msra.mxu0 0
        %5088 = vmatprep.subr.bf16.mxu0 0
        %5089 = vmatpush1.bf16.msra.mxu0 0
        %5090 = vmatprep.subr.bf16.mxu0 0
        %5091 = vmatpush1.bf16.msra.mxu0 0
        %5092 = vmatprep.subr.bf16.mxu0 0
        %5093 = vmatpush1.bf16.msra.mxu0 0
        %5094 = vmatprep.mubr.bf16.mxu0 0
        %5095 = vmatmul.mubr.bf16.gmra.mrb[0].mxu0 %v4995
        %v5096 = vpop.f32.mrb[0].mxu0
        %v5097 = vadd.f32 0.0, %v5096
        %v5098 = vpop.f32.mrb[0].mxu0
        %v5099 = vadd.f32 0.0, %v5098
        %v5100 = vpop.f32.mrb[0].mxu0
        %v5101 = vpop.f32.mrb[0].mxu0
        %5102 = vdwg.mxu0
        %5103 = vmatprep.subr.bf16.mxu0 %v5013
        %5104 = vmatpush1.bf16.msra.mxu0 %v5010
        %5105 = vmatprep.subr.bf16.mxu0 0
        %5106 = vmatpush1.bf16.msra.mxu0 0
        %5107 = vmatprep.subr.bf16.mxu0 0
        %5108 = vmatpush1.bf16.msra.mxu0 0
        %5109 = vmatprep.subr.bf16.mxu0 0
        %5110 = vmatpush1.bf16.msra.mxu0 0
        %5111 = vmatprep.subr.bf16.mxu0 0
        %5112 = vmatpush1.bf16.msra.mxu0 0
        %5113 = vmatprep.subr.bf16.mxu0 0
        %5114 = vmatpush1.bf16.msra.mxu0 0
        %5115 = vmatprep.subr.bf16.mxu0 0
        %5116 = vmatpush1.bf16.msra.mxu0 0
        %5117 = vmatprep.subr.bf16.mxu0 0
        %5118 = vmatpush1.bf16.msra.mxu0 0
        %5119 = vmatprep.subr.bf16.mxu0 0
        %5120 = vmatpush1.bf16.msra.mxu0 0
        %5121 = vmatprep.subr.bf16.mxu0 0
        %5122 = vmatpush1.bf16.msra.mxu0 0
        %5123 = vmatprep.subr.bf16.mxu0 0
        %5124 = vmatpush1.bf16.msra.mxu0 0
        %5125 = vmatprep.subr.bf16.mxu0 0
        %5126 = vmatpush1.bf16.msra.mxu0 0
        %5127 = vmatprep.subr.bf16.mxu0 0
        %5128 = vmatpush1.bf16.msra.mxu0 0
        %5129 = vmatprep.subr.bf16.mxu0 0
        %5130 = vmatpush1.bf16.msra.mxu0 0
        %5131 = vmatprep.subr.bf16.mxu0 0
        %5132 = vmatpush1.bf16.msra.mxu0 0
        %5133 = vmatprep.subr.bf16.mxu0 0
        %5134 = vmatpush1.bf16.msra.mxu0 0
        %5135 = vmatprep.mubr.bf16.mxu0 0
        %5136 = vmatmul.mubr.bf16.gmra.mrb[0].mxu0 %v4995
        %v5137 = vpop.f32.mrb[0].mxu0
        %v5138 = vadd.f32 0.0, %v5137
        %v5139 = vpop.f32.mrb[0].mxu0
        %v5140 = vadd.f32 0.0, %v5139
        %v5141 = vpop.f32.mrb[0].mxu0
        %v5142 = vpop.f32.mrb[0].mxu0
        %5143 = vdwg.mxu0
        %5144 = vmatprep.subr.bf16.mxu0 %v5019
        %5145 = vmatpush1.bf16.msra.mxu0 %v5016
        %5146 = vmatprep.subr.bf16.mxu0 0
        %5147 = vmatpush1.bf16.msra.mxu0 0
        %5148 = vmatprep.subr.bf16.mxu0 0
        %5149 = vmatpush1.bf16.msra.mxu0 0
        %5150 = vmatprep.subr.bf16.mxu0 0
        %5151 = vmatpush1.bf16.msra.mxu0 0
        %5152 = vmatprep.subr.bf16.mxu0 0
        %5153 = vmatpush1.bf16.msra.mxu0 0
        %5154 = vmatprep.subr.bf16.mxu0 0
        %5155 = vmatpush1.bf16.msra.mxu0 0
        %5156 = vmatprep.subr.bf16.mxu0 0
        %5157 = vmatpush1.bf16.msra.mxu0 0
        %5158 = vmatprep.subr.bf16.mxu0 0
        %5159 = vmatpush1.bf16.msra.mxu0 0
        %5160 = vmatprep.subr.bf16.mxu0 0
        %5161 = vmatpush1.bf16.msra.mxu0 0
        %5162 = vmatprep.subr.bf16.mxu0 0
        %5163 = vmatpush1.bf16.msra.mxu0 0
        %5164 = vmatprep.subr.bf16.mxu0 0
        %5165 = vmatpush1.bf16.msra.mxu0 0
        %5166 = vmatprep.subr.bf16.mxu0 0
        %5167 = vmatpush1.bf16.msra.mxu0 0
        %5168 = vmatprep.subr.bf16.mxu0 0
        %5169 = vmatpush1.bf16.msra.mxu0 0
        %5170 = vmatprep.subr.bf16.mxu0 0
        %5171 = vmatpush1.bf16.msra.mxu0 0
        %5172 = vmatprep.subr.bf16.mxu0 0
        %5173 = vmatpush1.bf16.msra.mxu0 0
        %5174 = vmatprep.subr.bf16.mxu0 0
        %5175 = vmatpush1.bf16.msra.mxu0 0
        %5176 = vmatprep.mubr.bf16.mxu0 0
        %5177 = vmatmul.mubr.bf16.gmra.mrb[0].mxu0 %v4995
        %v5178 = vpop.f32.mrb[0].mxu0
        %v5179 = vadd.f32 0.0, %v5178
        %v5180 = vpop.f32.mrb[0].mxu0
        %v5181 = vadd.f32 0.0, %v5180
        %v5182 = vpop.f32.mrb[0].mxu0
        %v5183 = vpop.f32.mrb[0].mxu0
        %5184 = vdwg.mxu0
        %v5185 = vadd.f32 %v4977, %v5056
        %v5186 = vadd.f32 %v4978, %v5058
        %v5187 = vadd.f32 %v4979, %v5097
        %v5188 = vadd.f32 %v4980, %v5099
        %v5189 = vadd.f32 %v4981, %v5138
        %v5190 = vadd.f32 %v4982, %v5140
        %v5191 = vadd.f32 %v4983, %v5179
        %v5192 = vadd.f32 %v4984, %v5181
        %v5193 = vpack.c.bf16 %v3128, %v3128
        %v5194 = vpack.c.bf16 %v3535, %v3535
        %v5195 = vpack.c.bf16 %v3536, %v3536
        %v5196 = vpack.c.bf16 %v3537, %v3537
        %v5197 = vpack.c.bf16 %v3538, %v3538
        %v5198 = vpack.c.bf16 %v3539, %v3539
        %v5199 = vpack.c.bf16 %v3540, %v3540
        %v5200 = vpack.c.bf16 %v3541, %v3541
        %v5201 = vpack.c.bf16 %v3542, %v3542
        %v5203 = vsel %vm3561, %v5193, 0
        %v5206 = vsel %vm3565, %v5194, 0
        %v5209 = vsel %vm3565, %v5195, 0
        %v5212 = vsel %vm3565, %v5196, 0
        %v5215 = vsel %vm3565, %v5197, 0
        %v5218 = vsel %vm3565, %v5198, 0
        %v5221 = vsel %vm3565, %v5199, 0
        %v5224 = vsel %vm3565, %v5200, 0
        %v5227 = vsel %vm3565, %v5201, 0
        %5229 = vmatprep.subr.bf16.mxu0 %v5209
        %5230 = vmatpush1.bf16.msra.mxu0 %v5206
        %5231 = vmatprep.subr.bf16.mxu0 0
        %5232 = vmatpush1.bf16.msra.mxu0 0
        %5233 = vmatprep.subr.bf16.mxu0 0
        %5234 = vmatpush1.bf16.msra.mxu0 0
        %5235 = vmatprep.subr.bf16.mxu0 0
        %5236 = vmatpush1.bf16.msra.mxu0 0
        %5237 = vmatprep.subr.bf16.mxu0 0
        %5238 = vmatpush1.bf16.msra.mxu0 0
        %5239 = vmatprep.subr.bf16.mxu0 0
        %5240 = vmatpush1.bf16.msra.mxu0 0
        %5241 = vmatprep.subr.bf16.mxu0 0
        %5242 = vmatpush1.bf16.msra.mxu0 0
        %5243 = vmatprep.subr.bf16.mxu0 0
        %5244 = vmatpush1.bf16.msra.mxu0 0
        %5245 = vmatprep.subr.bf16.mxu0 0
        %5246 = vmatpush1.bf16.msra.mxu0 0
        %5247 = vmatprep.subr.bf16.mxu0 0
        %5248 = vmatpush1.bf16.msra.mxu0 0
        %5249 = vmatprep.subr.bf16.mxu0 0
        %5250 = vmatpush1.bf16.msra.mxu0 0
        %5251 = vmatprep.subr.bf16.mxu0 0
        %5252 = vmatpush1.bf16.msra.mxu0 0
        %5253 = vmatprep.subr.bf16.mxu0 0
        %5254 = vmatpush1.bf16.msra.mxu0 0
        %5255 = vmatprep.subr.bf16.mxu0 0
        %5256 = vmatpush1.bf16.msra.mxu0 0
        %5257 = vmatprep.subr.bf16.mxu0 0
        %5258 = vmatpush1.bf16.msra.mxu0 0
        %5259 = vmatprep.subr.bf16.mxu0 0
        %5260 = vmatpush1.bf16.msra.mxu0 0
        %5261 = vmatprep.mubr.bf16.mxu0 0
        %5262 = vmatmul.mubr.bf16.gmra.mrb[0].mxu0 %v5203
        %v5263 = vpop.f32.mrb[0].mxu0
        %v5264 = vadd.f32 0.0, %v5263
        %v5265 = vpop.f32.mrb[0].mxu0
        %v5266 = vadd.f32 0.0, %v5265
        %v5267 = vpop.f32.mrb[0].mxu0
        %v5268 = vpop.f32.mrb[0].mxu0
        %5269 = vdwg.mxu0
        %5270 = vmatprep.subr.bf16.mxu0 %v5215
        %5271 = vmatpush1.bf16.msra.mxu0 %v5212
        %5272 = vmatprep.subr.bf16.mxu0 0
        %5273 = vmatpush1.bf16.msra.mxu0 0
        %5274 = vmatprep.subr.bf16.mxu0 0
        %5275 = vmatpush1.bf16.msra.mxu0 0
        %5276 = vmatprep.subr.bf16.mxu0 0
        %5277 = vmatpush1.bf16.msra.mxu0 0
        %5278 = vmatprep.subr.bf16.mxu0 0
        %5279 = vmatpush1.bf16.msra.mxu0 0
        %5280 = vmatprep.subr.bf16.mxu0 0
        %5281 = vmatpush1.bf16.msra.mxu0 0
        %5282 = vmatprep.subr.bf16.mxu0 0
        %5283 = vmatpush1.bf16.msra.mxu0 0
        %5284 = vmatprep.subr.bf16.mxu0 0
        %5285 = vmatpush1.bf16.msra.mxu0 0
        %5286 = vmatprep.subr.bf16.mxu0 0
        %5287 = vmatpush1.bf16.msra.mxu0 0
        %5288 = vmatprep.subr.bf16.mxu0 0
        %5289 = vmatpush1.bf16.msra.mxu0 0
        %5290 = vmatprep.subr.bf16.mxu0 0
        %5291 = vmatpush1.bf16.msra.mxu0 0
        %5292 = vmatprep.subr.bf16.mxu0 0
        %5293 = vmatpush1.bf16.msra.mxu0 0
        %5294 = vmatprep.subr.bf16.mxu0 0
        %5295 = vmatpush1.bf16.msra.mxu0 0
        %5296 = vmatprep.subr.bf16.mxu0 0
        %5297 = vmatpush1.bf16.msra.mxu0 0
        %5298 = vmatprep.subr.bf16.mxu0 0
        %5299 = vmatpush1.bf16.msra.mxu0 0
        %5300 = vmatprep.subr.bf16.mxu0 0
        %5301 = vmatpush1.bf16.msra.mxu0 0
        %5302 = vmatprep.mubr.bf16.mxu0 0
        %5303 = vmatmul.mubr.bf16.gmra.mrb[0].mxu0 %v5203
        %v5304 = vpop.f32.mrb[0].mxu0
        %v5305 = vadd.f32 0.0, %v5304
        %v5306 = vpop.f32.mrb[0].mxu0
        %v5307 = vadd.f32 0.0, %v5306
        %v5308 = vpop.f32.mrb[0].mxu0
        %v5309 = vpop.f32.mrb[0].mxu0
        %5310 = vdwg.mxu0
        %5311 = vmatprep.subr.bf16.mxu0 %v5221
        %5312 = vmatpush1.bf16.msra.mxu0 %v5218
        %5313 = vmatprep.subr.bf16.mxu0 0
        %5314 = vmatpush1.bf16.msra.mxu0 0
        %5315 = vmatprep.subr.bf16.mxu0 0
        %5316 = vmatpush1.bf16.msra.mxu0 0
        %5317 = vmatprep.subr.bf16.mxu0 0
        %5318 = vmatpush1.bf16.msra.mxu0 0
        %5319 = vmatprep.subr.bf16.mxu0 0
        %5320 = vmatpush1.bf16.msra.mxu0 0
        %5321 = vmatprep.subr.bf16.mxu0 0
        %5322 = vmatpush1.bf16.msra.mxu0 0
        %5323 = vmatprep.subr.bf16.mxu0 0
        %5324 = vmatpush1.bf16.msra.mxu0 0
        %5325 = vmatprep.subr.bf16.mxu0 0
        %5326 = vmatpush1.bf16.msra.mxu0 0
        %5327 = vmatprep.subr.bf16.mxu0 0
        %5328 = vmatpush1.bf16.msra.mxu0 0
        %5329 = vmatprep.subr.bf16.mxu0 0
        %5330 = vmatpush1.bf16.msra.mxu0 0
        %5331 = vmatprep.subr.bf16.mxu0 0
        %5332 = vmatpush1.bf16.msra.mxu0 0
        %5333 = vmatprep.subr.bf16.mxu0 0
        %5334 = vmatpush1.bf16.msra.mxu0 0
        %5335 = vmatprep.subr.bf16.mxu0 0
        %5336 = vmatpush1.bf16.msra.mxu0 0
        %5337 = vmatprep.subr.bf16.mxu0 0
        %5338 = vmatpush1.bf16.msra.mxu0 0
        %5339 = vmatprep.subr.bf16.mxu0 0
        %5340 = vmatpush1.bf16.msra.mxu0 0
        %5341 = vmatprep.subr.bf16.mxu0 0
        %5342 = vmatpush1.bf16.msra.mxu0 0
        %5343 = vmatprep.mubr.bf16.mxu0 0
        %5344 = vmatmul.mubr.bf16.gmra.mrb[0].mxu0 %v5203
        %v5345 = vpop.f32.mrb[0].mxu0
        %v5346 = vadd.f32 0.0, %v5345
        %v5347 = vpop.f32.mrb[0].mxu0
        %v5348 = vadd.f32 0.0, %v5347
        %v5349 = vpop.f32.mrb[0].mxu0
        %v5350 = vpop.f32.mrb[0].mxu0
        %5351 = vdwg.mxu0
        %5352 = vmatprep.subr.bf16.mxu0 %v5227
        %5353 = vmatpush1.bf16.msra.mxu0 %v5224
        %5354 = vmatprep.subr.bf16.mxu0 0
        %5355 = vmatpush1.bf16.msra.mxu0 0
        %5356 = vmatprep.subr.bf16.mxu0 0
        %5357 = vmatpush1.bf16.msra.mxu0 0
        %5358 = vmatprep.subr.bf16.mxu0 0
        %5359 = vmatpush1.bf16.msra.mxu0 0
        %5360 = vmatprep.subr.bf16.mxu0 0
        %5361 = vmatpush1.bf16.msra.mxu0 0
        %5362 = vmatprep.subr.bf16.mxu0 0
        %5363 = vmatpush1.bf16.msra.mxu0 0
        %5364 = vmatprep.subr.bf16.mxu0 0
        %5365 = vmatpush1.bf16.msra.mxu0 0
        %5366 = vmatprep.subr.bf16.mxu0 0
        %5367 = vmatpush1.bf16.msra.mxu0 0
        %5368 = vmatprep.subr.bf16.mxu0 0
        %5369 = vmatpush1.bf16.msra.mxu0 0
        %5370 = vmatprep.subr.bf16.mxu0 0
        %5371 = vmatpush1.bf16.msra.mxu0 0
        %5372 = vmatprep.subr.bf16.mxu0 0
        %5373 = vmatpush1.bf16.msra.mxu0 0
        %5374 = vmatprep.subr.bf16.mxu0 0
        %5375 = vmatpush1.bf16.msra.mxu0 0
        %5376 = vmatprep.subr.bf16.mxu0 0
        %5377 = vmatpush1.bf16.msra.mxu0 0
        %5378 = vmatprep.subr.bf16.mxu0 0
        %5379 = vmatpush1.bf16.msra.mxu0 0
        %5380 = vmatprep.subr.bf16.mxu0 0
        %5381 = vmatpush1.bf16.msra.mxu0 0
        %5382 = vmatprep.subr.bf16.mxu0 0
        %5383 = vmatpush1.bf16.msra.mxu0 0
        %5384 = vmatprep.mubr.bf16.mxu0 0
        %5385 = vmatmul.mubr.bf16.gmra.mrb[0].mxu0 %v5203
        %v5386 = vpop.f32.mrb[0].mxu0
        %v5387 = vadd.f32 0.0, %v5386
        %v5388 = vpop.f32.mrb[0].mxu0
        %v5389 = vadd.f32 0.0, %v5388
        %v5390 = vpop.f32.mrb[0].mxu0
        %v5391 = vpop.f32.mrb[0].mxu0
        %5392 = vdwg.mxu0
        %v5393 = vadd.f32 %v5185, %v5264
        %v5394 = vadd.f32 %v5186, %v5266
        %v5395 = vadd.f32 %v5187, %v5305
        %v5396 = vadd.f32 %v5188, %v5307
        %v5397 = vadd.f32 %v5189, %v5346
        %v5398 = vadd.f32 %v5190, %v5348
        %v5399 = vadd.f32 %v5191, %v5387
        %v5400 = vadd.f32 %v5192, %v5389
        %5402 = vset.pattern.permute.xlu0 0
        %5403 = vperm.xlu0 %5402, %v2771
        %v5404 = vpop.permute.xlu0 %5403
        %v5406 = vadd.f32 %v5393, %v5404
        %v5407 = vadd.f32 %v5394, %v5404
        %v5408 = vadd.f32 %v5395, %v5404
        %v5409 = vadd.f32 %v5396, %v5404
        %v5410 = vadd.f32 %v5397, %v5404
        %v5411 = vadd.f32 %v5398, %v5404
        %v5412 = vadd.f32 %v5399, %v5404
        %v5413 = vadd.f32 %v5400, %v5404
        %v5414 = vsel %vm1782, %v5406, 0.0
        %v5415 = vsel %vm1782, %v5407, 0.0
        %v5416 = vadd.f32 %v5414, %v5415
        %v5417 = vsel %vm1782, %v5408, 0.0
        %v5418 = vadd.f32 %v5416, %v5417
        %v5419 = vsel %vm1782, %v5409, 0.0
        %v5420 = vadd.f32 %v5418, %v5419
        %v5421 = vsel %vm1782, %v5410, 0.0
        %v5422 = vadd.f32 %v5420, %v5421
        %v5423 = vsel %vm1782, %v5411, 0.0
        %v5424 = vadd.f32 %v5422, %v5423
        %v5425 = vsel %vm1782, %v5412, 0.0
        %v5426 = vadd.f32 %v5424, %v5425
        %v5427 = vsel %vm1782, %v5413, 0.0
        %v5428 = vadd.f32 %v5426, %v5427
        %5429 = vadd.xlane.f32.xlu0 %v5428
        %v5430 = vpop.xlane.xlu0 %5429
        %v5431 = vrot.slane %v5430, 4
        %v5432 = vadd.f32 %v5430, %v5431
        %v5433 = vrot.slane %v5432, 2
        %v5434 = vadd.f32 %v5432, %v5433
        %v5435 = vrot.slane %v5434, 1
        %v5436 = vadd.f32 %v5434, %v5435
        %s5437 = vtos %v5436
        %v5438 = vrcp.pop 4096.0
        %s5439 = vtos %v5438
        %s5440 = smul.f32 %s5437, %s5439
        %v5441 = vmul.f32 %v5406, %v5406
        %v5442 = vmul.f32 %v5407, %v5407
        %v5443 = vmul.f32 %v5408, %v5408
        %v5444 = vmul.f32 %v5409, %v5409
        %v5445 = vmul.f32 %v5410, %v5410
        %v5446 = vmul.f32 %v5411, %v5411
        %v5447 = vmul.f32 %v5412, %v5412
        %v5448 = vmul.f32 %v5413, %v5413
        %v5449 = vsel %vm1782, %v5441, 0.0
        %v5450 = vsel %vm1782, %v5442, 0.0
        %v5451 = vadd.f32 %v5449, %v5450
        %v5452 = vsel %vm1782, %v5443, 0.0
        %v5453 = vadd.f32 %v5451, %v5452
        %v5454 = vsel %vm1782, %v5444, 0.0
        %v5455 = vadd.f32 %v5453, %v5454
        %v5456 = vsel %vm1782, %v5445, 0.0
        %v5457 = vadd.f32 %v5455, %v5456
        %v5458 = vsel %vm1782, %v5446, 0.0
        %v5459 = vadd.f32 %v5457, %v5458
        %v5460 = vsel %vm1782, %v5447, 0.0
        %v5461 = vadd.f32 %v5459, %v5460
        %v5462 = vsel %vm1782, %v5448, 0.0
        %v5463 = vadd.f32 %v5461, %v5462
        %5464 = vadd.xlane.f32.xlu0 %v5463
        %v5465 = vpop.xlane.xlu0 %5464
        %v5466 = vrot.slane %v5465, 4
        %v5467 = vadd.f32 %v5465, %v5466
        %v5468 = vrot.slane %v5467, 2
        %v5469 = vadd.f32 %v5467, %v5468
        %v5470 = vrot.slane %v5469, 1
        %v5471 = vadd.f32 %v5469, %v5470
        %s5472 = vtos %v5471
        %v5473 = vrcp.pop 4096.0
        %s5474 = vtos %v5473
        %s5475 = smul.f32 %s5472, %s5474
        %s5476 = smul.f32 %s5440, %s5440
        %s5477 = ssub.f32 %s5475, %s5476
        %s5478 = smax.f32 %s5477, 0.0
        %v5479 = vstv %s5440
        %v5480 = vsub.f32 %v5406, %v5479
        %v5481 = vsub.f32 %v5407, %v5479
        %v5482 = vsub.f32 %v5408, %v5479
        %v5483 = vsub.f32 %v5409, %v5479
        %v5484 = vsub.f32 %v5410, %v5479
        %v5485 = vsub.f32 %v5411, %v5479
        %v5486 = vsub.f32 %v5412, %v5479
        %v5487 = vsub.f32 %v5413, %v5479
        %s5488 = sadd.f32 %s5478, 1e-05
        %v5489 = vstv %s5488
        %v5490 = vrsqrt.pop %v5489
        %s5491 = vtos %v5490
        %v5492 = vstv %s5491
        %v5493 = vmul.f32 %v5480, %v5492
        %v5494 = vmul.f32 %v5481, %v5492
        %v5495 = vmul.f32 %v5482, %v5492
        %v5496 = vmul.f32 %v5483, %v5492
        %v5497 = vmul.f32 %v5484, %v5492
        %v5498 = vmul.f32 %v5485, %v5492
        %v5499 = vmul.f32 %v5486, %v5492
        %v5500 = vmul.f32 %v5487, %v5492
        %5501 = vset.pattern.permute.xlu0 1
        %5502 = vperm.xlu0 %5501, %v2771
        %v5503 = vpop.permute.xlu0 %5502
        %v5505 = vmul.f32 %v5493, %v5503
        %v5506 = vmul.f32 %v5494, %v5503
        %v5507 = vmul.f32 %v5495, %v5503
        %v5508 = vmul.f32 %v5496, %v5503
        %v5509 = vmul.f32 %v5497, %v5503
        %v5510 = vmul.f32 %v5498, %v5503
        %v5511 = vmul.f32 %v5499, %v5503
        %v5512 = vmul.f32 %v5500, %v5503
        %5513 = vset.pattern.permute.xlu0 2
        %5514 = vperm.xlu0 %5513, %v2771
        %v5515 = vpop.permute.xlu0 %5514
        %v5517 = vadd.f32 %v5505, %v5515
        %v5518 = vadd.f32 %v5506, %v5515
        %v5519 = vadd.f32 %v5507, %v5515
        %v5520 = vadd.f32 %v5508, %v5515
        %v5521 = vadd.f32 %v5509, %v5515
        %v5522 = vadd.f32 %v5510, %v5515
        %v5523 = vadd.f32 %v5511, %v5515
        %v5524 = vadd.f32 %v5512, %v5515
        %v5525 = vmul.f32 %v5517, %v5517
        %v5526 = vmul.f32 %v5518, %v5518
        %v5527 = vmul.f32 %v5519, %v5519
        %v5528 = vmul.f32 %v5520, %v5520
        %v5529 = vmul.f32 %v5521, %v5521
        %v5530 = vmul.f32 %v5522, %v5522
        %v5531 = vmul.f32 %v5523, %v5523
        %v5532 = vmul.f32 %v5524, %v5524
        %v5533 = vmul.f32 %v5517, %v5525
        %v5534 = vmul.f32 %v5518, %v5526
        %v5535 = vmul.f32 %v5519, %v5527
        %v5536 = vmul.f32 %v5520, %v5528
        %v5537 = vmul.f32 %v5521, %v5529
        %v5538 = vmul.f32 %v5522, %v5530
        %v5539 = vmul.f32 %v5523, %v5531
        %v5540 = vmul.f32 %v5524, %v5532
        %v5541 = vmul.f32 %v5533, 0.044715
        %v5542 = vmul.f32 %v5534, 0.044715
        %v5543 = vmul.f32 %v5535, 0.044715
        %v5544 = vmul.f32 %v5536, 0.044715
        %v5545 = vmul.f32 %v5537, 0.044715
        %v5546 = vmul.f32 %v5538, 0.044715
        %v5547 = vmul.f32 %v5539, 0.044715
        %v5548 = vmul.f32 %v5540, 0.044715
        %v5549 = vadd.f32 %v5517, %v5541
        %v5550 = vadd.f32 %v5518, %v5542
        %v5551 = vadd.f32 %v5519, %v5543
        %v5552 = vadd.f32 %v5520, %v5544
        %v5553 = vadd.f32 %v5521, %v5545
        %v5554 = vadd.f32 %v5522, %v5546
        %v5555 = vadd.f32 %v5523, %v5547
        %v5556 = vadd.f32 %v5524, %v5548
        %v5557 = vmul.f32 %v5549, 0.7978846
        %v5558 = vmul.f32 %v5550, 0.7978846
        %v5559 = vmul.f32 %v5551, 0.7978846
        %v5560 = vmul.f32 %v5552, 0.7978846
        %v5561 = vmul.f32 %v5553, 0.7978846
        %v5562 = vmul.f32 %v5554, 0.7978846
        %v5563 = vmul.f32 %v5555, 0.7978846
        %v5564 = vmul.f32 %v5556, 0.7978846
        %v5565 = vtanh.pop %v5557
        %v5566 = vtanh.pop %v5558
        %v5567 = vtanh.pop %v5559
        %v5568 = vtanh.pop %v5560
        %v5569 = vtanh.pop %v5561
        %v5570 = vtanh.pop %v5562
        %v5571 = vtanh.pop %v5563
        %v5572 = vtanh.pop %v5564
        %v5573 = vadd.f32 %v5565, 1.0
        %v5574 = vadd.f32 %v5566, 1.0
        %v5575 = vadd.f32 %v5567, 1.0
        %v5576 = vadd.f32 %v5568, 1.0
        %v5577 = vadd.f32 %v5569, 1.0
        %v5578 = vadd.f32 %v5570, 1.0
        %v5579 = vadd.f32 %v5571, 1.0
        %v5580 = vadd.f32 %v5572, 1.0
        %v5581 = vmul.f32 %v5573, 0.5
        %v5582 = vmul.f32 %v5574, 0.5
        %v5583 = vmul.f32 %v5575, 0.5
        %v5584 = vmul.f32 %v5576, 0.5
        %v5585 = vmul.f32 %v5577, 0.5
        %v5586 = vmul.f32 %v5578, 0.5
        %v5587 = vmul.f32 %v5579, 0.5
        %v5588 = vmul.f32 %v5580, 0.5
        %v5589 = vmul.f32 %v5517, %v5581
        %v5590 = vmul.f32 %v5518, %v5582
        %v5591 = vmul.f32 %v5519, %v5583
        %v5592 = vmul.f32 %v5520, %v5584
        %v5593 = vmul.f32 %v5521, %v5585
        %v5594 = vmul.f32 %v5522, %v5586
        %v5595 = vmul.f32 %v5523, %v5587
        %v5596 = vmul.f32 %v5524, %v5588
        %v5597 = vld [vmem:[#allocation18] sm:$0xf]
        %v5598 = vpack.c.bf16 %v5597, %v5597
        %v5599 = vpack.c.bf16 %v5589, %v5589
        %v5600 = vpack.c.bf16 %v5590, %v5590
        %v5601 = vpack.c.bf16 %v5591, %v5591
        %v5602 = vpack.c.bf16 %v5592, %v5592
        %v5603 = vpack.c.bf16 %v5593, %v5593
        %v5604 = vpack.c.bf16 %v5594, %v5594
        %v5605 = vpack.c.bf16 %v5595, %v5595
        %v5606 = vpack.c.bf16 %v5596, %v5596
        %v5607 = vld [vmem:[#allocation19] sm:$0xf]
        %5609 = vset.pattern.permute.xlu0 0
        %5610 = vperm.xlu0 %5609, %v5607
        %v5611 = vpop.permute.xlu0 %5610
        %v5614 = vsel %vm3561, %v5598, 0
        %v5617 = vsel %vm3565, %v5599, 0
        %v5620 = vsel %vm3565, %v5600, 0
        %v5623 = vsel %vm3565, %v5601, 0
        %v5626 = vsel %vm3565, %v5602, 0
        %v5629 = vsel %vm3565, %v5603, 0
        %v5632 = vsel %vm3565, %v5604, 0
        %v5635 = vsel %vm3565, %v5605, 0
        %v5638 = vsel %vm3565, %v5606, 0
        %5640 = vmatprep.subr.bf16.mxu0 %v5620
        %5641 = vmatpush1.bf16.msra.mxu0 %v5617
        %5642 = vmatprep.subr.bf16.mxu0 0
        %5643 = vmatpush1.bf16.msra.mxu0 0
        %5644 = vmatprep.subr.bf16.mxu0 0
        %5645 = vmatpush1.bf16.msra.mxu0 0
        %5646 = vmatprep.subr.bf16.mxu0 0
        %5647 = vmatpush1.bf16.msra.mxu0 0
        %5648 = vmatprep.subr.bf16.mxu0 0
        %5649 = vmatpush1.bf16.msra.mxu0 0
        %5650 = vmatprep.subr.bf16.mxu0 0
        %5651 = vmatpush1.bf16.msra.mxu0 0
        %5652 = vmatprep.subr.bf16.mxu0 0
        %5653 = vmatpush1.bf16.msra.mxu0 0
        %5654 = vmatprep.subr.bf16.mxu0 0
        %5655 = vmatpush1.bf16.msra.mxu0 0
        %5656 = vmatprep.subr.bf16.mxu0 0
        %5657 = vmatpush1.bf16.msra.mxu0 0
        %5658 = vmatprep.subr.bf16.mxu0 0
        %5659 = vmatpush1.bf16.msra.mxu0 0
        %5660 = vmatprep.subr.bf16.mxu0 0
        %5661 = vmatpush1.bf16.msra.mxu0 0
        %5662 = vmatprep.subr.bf16.mxu0 0
        %5663 = vmatpush1.bf16.msra.mxu0 0
        %5664 = vmatprep.subr.bf16.mxu0 0
        %5665 = vmatpush1.bf16.msra.mxu0 0
        %5666 = vmatprep.subr.bf16.mxu0 0
        %5667 = vmatpush1.bf16.msra.mxu0 0
        %5668 = vmatprep.subr.bf16.mxu0 0
        %5669 = vmatpush1.bf16.msra.mxu0 0
        %5670 = vmatprep.subr.bf16.mxu0 0
        %5671 = vmatpush1.bf16.msra.mxu0 0
        %5672 = vmatprep.mubr.bf16.mxu0 0
        %5673 = vmatmul.mubr.bf16.gmra.mrb[0].mxu0 %v5614
        %v5674 = vpop.f32.mrb[0].mxu0
        %v5675 = vadd.f32 %v5611, %v5674
        %v5676 = vpop.f32.mrb[0].mxu0
        %v5677 = vadd.f32 %v5611, %v5676
        %v5678 = vpop.f32.mrb[0].mxu0
        %v5679 = vpop.f32.mrb[0].mxu0
        %5680 = vdwg.mxu0
        %5681 = vmatprep.subr.bf16.mxu0 %v5626
        %5682 = vmatpush1.bf16.msra.mxu0 %v5623
        %5683 = vmatprep.subr.bf16.mxu0 0
        %5684 = vmatpush1.bf16.msra.mxu0 0
        %5685 = vmatprep.subr.bf16.mxu0 0
        %5686 = vmatpush1.bf16.msra.mxu0 0
        %5687 = vmatprep.subr.bf16.mxu0 0
        %5688 = vmatpush1.bf16.msra.mxu0 0
        %5689 = vmatprep.subr.bf16.mxu0 0
        %5690 = vmatpush1.bf16.msra.mxu0 0
        %5691 = vmatprep.subr.bf16.mxu0 0
        %5692 = vmatpush1.bf16.msra.mxu0 0
        %5693 = vmatprep.subr.bf16.mxu0 0
        %5694 = vmatpush1.bf16.msra.mxu0 0
        %5695 = vmatprep.subr.bf16.mxu0 0
        %5696 = vmatpush1.bf16.msra.mxu0 0
        %5697 = vmatprep.subr.bf16.mxu0 0
        %5698 = vmatpush1.bf16.msra.mxu0 0
        %5699 = vmatprep.subr.bf16.mxu0 0
        %5700 = vmatpush1.bf16.msra.mxu0 0
        %5701 = vmatprep.subr.bf16.mxu0 0
        %5702 = vmatpush1.bf16.msra.mxu0 0
        %5703 = vmatprep.subr.bf16.mxu0 0
        %5704 = vmatpush1.bf16.msra.mxu0 0
        %5705 = vmatprep.subr.bf16.mxu0 0
        %5706 = vmatpush1.bf16.msra.mxu0 0
        %5707 = vmatprep.subr.bf16.mxu0 0
        %5708 = vmatpush1.bf16.msra.mxu0 0
        %5709 = vmatprep.subr.bf16.mxu0 0
        %5710 = vmatpush1.bf16.msra.mxu0 0
        %5711 = vmatprep.subr.bf16.mxu0 0
        %5712 = vmatpush1.bf16.msra.mxu0 0
        %5713 = vmatprep.mubr.bf16.mxu0 0
        %5714 = vmatmul.mubr.bf16.gmra.mrb[0].mxu0 %v5614
        %v5715 = vpop.f32.mrb[0].mxu0
        %v5716 = vadd.f32 %v5611, %v5715
        %v5717 = vpop.f32.mrb[0].mxu0
        %v5718 = vadd.f32 %v5611, %v5717
        %v5719 = vpop.f32.mrb[0].mxu0
        %v5720 = vpop.f32.mrb[0].mxu0
        %5721 = vdwg.mxu0
        %5722 = vmatprep.subr.bf16.mxu0 %v5632
        %5723 = vmatpush1.bf16.msra.mxu0 %v5629
        %5724 = vmatprep.subr.bf16.mxu0 0
        %5725 = vmatpush1.bf16.msra.mxu0 0
        %5726 = vmatprep.subr.bf16.mxu0 0
        %5727 = vmatpush1.bf16.msra.mxu0 0
        %5728 = vmatprep.subr.bf16.mxu0 0
        %5729 = vmatpush1.bf16.msra.mxu0 0
        %5730 = vmatprep.subr.bf16.mxu0 0
        %5731 = vmatpush1.bf16.msra.mxu0 0
        %5732 = vmatprep.subr.bf16.mxu0 0
        %5733 = vmatpush1.bf16.msra.mxu0 0
        %5734 = vmatprep.subr.bf16.mxu0 0
        %5735 = vmatpush1.bf16.msra.mxu0 0
        %5736 = vmatprep.subr.bf16.mxu0 0
        %5737 = vmatpush1.bf16.msra.mxu0 0
        %5738 = vmatprep.subr.bf16.mxu0 0
        %5739 = vmatpush1.bf16.msra.mxu0 0
        %5740 = vmatprep.subr.bf16.mxu0 0
        %5741 = vmatpush1.bf16.msra.mxu0 0
        %5742 = vmatprep.subr.bf16.mxu0 0
        %5743 = vmatpush1.bf16.msra.mxu0 0
        %5744 = vmatprep.subr.bf16.mxu0 0
        %5745 = vmatpush1.bf16.msra.mxu0 0
        %5746 = vmatprep.subr.bf16.mxu0 0
        %5747 = vmatpush1.bf16.msra.mxu0 0
        %5748 = vmatprep.subr.bf16.mxu0 0
        %5749 = vmatpush1.bf16.msra.mxu0 0
        %5750 = vmatprep.subr.bf16.mxu0 0
        %5751 = vmatpush1.bf16.msra.mxu0 0
        %5752 = vmatprep.subr.bf16.mxu0 0
        %5753 = vmatpush1.bf16.msra.mxu0 0
        %5754 = vmatprep.mubr.bf16.mxu0 0
        %5755 = vmatmul.mubr.bf16.gmra.mrb[0].mxu0 %v5614
        %v5756 = vpop.f32.mrb[0].mxu0
        %v5757 = vadd.f32 %v5611, %v5756
        %v5758 = vpop.f32.mrb[0].mxu0
        %v5759 = vadd.f32 %v5611, %v5758
        %v5760 = vpop.f32.mrb[0].mxu0
        %v5761 = vpop.f32.mrb[0].mxu0
        %5762 = vdwg.mxu0
        %5763 = vmatprep.subr.bf16.mxu0 %v5638
        %5764 = vmatpush1.bf16.msra.mxu0 %v5635
        %5765 = vmatprep.subr.bf16.mxu0 0
        %5766 = vmatpush1.bf16.msra.mxu0 0
        %5767 = vmatprep.subr.bf16.mxu0 0
        %5768 = vmatpush1.bf16.msra.mxu0 0
        %5769 = vmatprep.subr.bf16.mxu0 0
        %5770 = vmatpush1.bf16.msra.mxu0 0
        %5771 = vmatprep.subr.bf16.mxu0 0
        %5772 = vmatpush1.bf16.msra.mxu0 0
        %5773 = vmatprep.subr.bf16.mxu0 0
        %5774 = vmatpush1.bf16.msra.mxu0 0
        %5775 = vmatprep.subr.bf16.mxu0 0
        %5776 = vmatpush1.bf16.msra.mxu0 0
        %5777 = vmatprep.subr.bf16.mxu0 0
        %5778 = vmatpush1.bf16.msra.mxu0 0
        %5779 = vmatprep.subr.bf16.mxu0 0
        %5780 = vmatpush1.bf16.msra.mxu0 0
        %5781 = vmatprep.subr.bf16.mxu0 0
        %5782 = vmatpush1.bf16.msra.mxu0 0
        %5783 = vmatprep.subr.bf16.mxu0 0
        %5784 = vmatpush1.bf16.msra.mxu0 0
        %5785 = vmatprep.subr.bf16.mxu0 0
        %5786 = vmatpush1.bf16.msra.mxu0 0
        %5787 = vmatprep.subr.bf16.mxu0 0
        %5788 = vmatpush1.bf16.msra.mxu0 0
        %5789 = vmatprep.subr.bf16.mxu0 0
        %5790 = vmatpush1.bf16.msra.mxu0 0
        %5791 = vmatprep.subr.bf16.mxu0 0
        %5792 = vmatpush1.bf16.msra.mxu0 0
        %5793 = vmatprep.subr.bf16.mxu0 0
        %5794 = vmatpush1.bf16.msra.mxu0 0
        %5795 = vmatprep.mubr.bf16.mxu0 0
        %5796 = vmatmul.mubr.bf16.gmra.mrb[0].mxu0 %v5614
        %v5797 = vpop.f32.mrb[0].mxu0
        %v5798 = vadd.f32 %v5611, %v5797
        %v5799 = vpop.f32.mrb[0].mxu0
        %v5800 = vadd.f32 %v5611, %v5799
        %v5801 = vpop.f32.mrb[0].mxu0
        %v5802 = vpop.f32.mrb[0].mxu0
        %5803 = vdwg.mxu0
        %v5812 = vcombine.low %v5675, %v5677
        %v5813 = vcombine.low %v5716, %v5718
        %v5814 = vcombine.low %v5757, %v5759
        %v5815 = vcombine.low %v5798, %v5800
        %5820 = vst [vmem:[%s777] sm:$0xff] %v5812
        %5821 = vst [vmem:[%s777 + $0x8] sm:$0xff] %v5813
        %5822 = vst [vmem:[%s777 + $0x10] sm:$0xff] %v5814
        %5823 = vst [vmem:[%s777 + $0x18] sm:$0xff] %v5815
        %p5824 = scmp.lt.s32.totalorder %s37, 1
        %s5825 = scalar_select %p5824, %s37, 1
        %s5826 = smul.addr %s5825, 8
        %s5827 = smul.addr %s5826, 4
        %s5828 = scalar_lea.vmem %s19, %s5827
        // Predicated region
        $region145: #{decoder_forward.1} parent=95 // pred_check
          %p5829 = pneg %p464
        $region146: #{decoder_forward.1} parent=95 // pred_check_branch
          %5831 = sbr.rel (%p5829) target = $region148
        $region147: #{decoder_forward.1} parent=95 // pred_region
          _
        $region148: #{decoder_forward.1} parent=95 // pred_fallthru
          _
      $region96: #{decoder_forward.1} parent=5 // pred_fallthru
        _
      %p5832 = scmp.le.s32.totalorder 2, %s32
      // Predicated region
      $region149: #{decoder_forward.1} parent=5 // pred_check
        %p5833 = pneg %p5832
      $region150: #{decoder_forward.1} parent=5 // pred_check_branch
        %5835 = sbr.rel (%p5833) target = $region152
      $region151: #{decoder_forward.1} parent=5 // pred_region
        %s5836 = ssub.s32 %s32, 2
        // Predicated region
        $region153: #{decoder_forward.1} parent=151 // pred_check
          %p5837 = pneg %p470
        $region154: #{decoder_forward.1} parent=151 // pred_check_branch
          %5839 = sbr.rel (%p5837) target = $region156
        $region155: #{decoder_forward.1} parent=151 // pred_region
          %p5840 = scmp.lt.s32.totalorder %s38, 1
          %s5841 = scalar_select %p5840, %s38, 1
          %s5842 = smul.addr %s5841, 8
          %s5843 = smul.addr %s5842, 4
          %s5844 = scalar_lea.vmem %s19, %s5843
        $region156: #{decoder_forward.1} parent=151 // pred_fallthru
          _
      $region152: #{decoder_forward.1} parent=5 // pred_fallthru
        _
    $region6: #{decoder_forward.1} parent=1 // loop_footer
      %s36 = sadd.s32 1, %s32
    $region7: #{decoder_forward.1} parent=1 // loop_footer_branch
      %31 = sbr.rel target = $region3
    $region8: #{decoder_forward.1} parent=1 // loop_exit
      _
    %5845 = vsyncpa [#allocation3], 1
    %s5846 = scalar_lea.sflag [#allocation3], 1
    %5847 = vsyncpa %s5846, 1
    %5848 = vsyncpa [#allocation5], 1
    %5849 = vsyncpa [#allocation8], 1
    %5850 = vsyncpa [#allocation11], 1
    %5851 = vsyncpa [#allocation14], 1
    %5852 = vsyncpa [#allocation17], 1
    %5853 = vsyncpa [#allocation20], 1

</llo_original>
